<compile_context>
chip_gen: v5e
topology: v5e:2x2
jax: 0.10.0
libtpu: 0.0.40
codegen_flags: <defaults>
</compile_context>

<pallas_src>
import functools

import numpy as np
import jax
import jax.numpy as jnp
from jax.experimental import pallas as pl
from jax.experimental.pallas import tpu as pltpu


# -----------------------------------------------------------------------------
# Host-side parameter packing: everything goes into ONE (rows, 128) f32 slab.
# -----------------------------------------------------------------------------
class _SlabPacker:
    """Packs 2-D parameter tiles into a single (R, 128) slab, 8-row aligned."""

    def __init__(self):
        self._chunks = []
        self._off = 0
        self.layout = {}     # name -> (row_offset, rows, cols)  (all static ints)

    def add(self, name, arr):
        arr = np.asarray(arr, np.float32)
        if arr.ndim == 1:
            arr = arr[None, :]
        r, c = arr.shape
        assert c <= 128, f"{name}: lane width {c} > 128"
        r8 = ((r + 7) // 8) * 8
        buf = np.zeros((r8, 128), np.float32)
        buf[:r, :c] = arr
        self.layout[name] = (self._off, r, c)
        self._chunks.append(buf)
        self._off += r8

    def finalize(self):
        return np.concatenate(self._chunks, axis=0)


def sinusoidal_pe(length, dim, n=10000.0):
    # TODO(synk): PositionalEncoding class not provided in the source file;
    # implementing the standard sinusoidal table of shape (w_size, d_size).
    pos = np.arange(length, dtype=np.float32)[:, None]
    i = np.arange(dim // 2, dtype=np.float32)[None, :]
    angle = pos / (n ** (2.0 * i / dim))
    pe = np.zeros((length, dim), np.float32)
    pe[:, 0::2] = np.sin(angle)
    pe[:, 1::2] = np.cos(angle)
    return pe


def _pack_attn(packer, prefix, p, nh):
    """Pack one attention+norm layer.

    Host-side transforms (free, one-time):
      * fold 1/sqrt(dh) into wq / bq,
      * transpose to (in, out),
      * pack q/k/v columns grouped per head: [q_h | k_h | v_h] blocks of 3*dh.
    """
    e = np.asarray(p['wq']).shape[0]
    dh = e // nh
    scale = 1.0 / np.sqrt(dh)

    wq_t = (np.asarray(p['wq'], np.float32) * scale).T     # (in, out)
    wk_t = np.asarray(p['wk'], np.float32).T
    wv_t = np.asarray(p['wv'], np.float32).T
    bq = np.asarray(p['bq'], np.float32).reshape(-1) * scale
    bk = np.asarray(p['bk'], np.float32).reshape(-1)
    bv = np.asarray(p['bv'], np.float32).reshape(-1)

    cols_w, cols_b = [], []
    for h in range(nh):
        sl = slice(h * dh, (h + 1) * dh)
        cols_w += [wq_t[:, sl], wk_t[:, sl], wv_t[:, sl]]
        cols_b += [bq[sl], bk[sl], bv[sl]]
    wqkv = np.concatenate(cols_w, axis=1)           # (e, 3e), per-head grouped
    bqkv = np.concatenate(cols_b, axis=0)[None, :]  # (1, 3e)

    packer.add(prefix + '/wqkv', wqkv)
    packer.add(prefix + '/bqkv', bqkv)
    packer.add(prefix + '/wo', np.asarray(p['wo'], np.float32).T)   # (in, out)
    packer.add(prefix + '/bo', np.asarray(p['bo'], np.float32).reshape(1, -1))
    packer.add(prefix + '/gamma', np.asarray(p['gamma'], np.float32).reshape(1, -1))
    packer.add(prefix + '/beta', np.asarray(p['beta'], np.float32).reshape(1, -1))


def _pack_ff(packer, prefix, p):
    packer.add(prefix + '/w', np.asarray(p['w'], np.float32).T)     # (in, out)
    packer.add(prefix + '/b', np.asarray(p['b'], np.float32).reshape(1, -1))


def _encoder_ops(prefix, heads):
    h1, h2, h3 = heads
    return (('attn', prefix + '/attn1', h1),
            ('ff', prefix + '/ff1'),
            ('attn', prefix + '/attn2', h2),
            ('ff', prefix + '/ff2'),
            ('attn', prefix + '/attn3', h3))


def _decoder_ops(prefix, heads):
    h1, h2, h3 = heads
    return (('attn', prefix + '/attn3', h3),
            ('ff', prefix + '/ff2'),
            ('attn', prefix + '/attn2', h2),
            ('ff', prefix + '/ff1'),
            ('attn', prefix + '/attn1', h1))


def pack_params(params, seq_len, embed_dim, num_heads):
    """One-time host-side pack of all weights + PE table into a single slab."""
    heads = (num_heads, num_heads // 2, max(num_heads // 4, 1))
    packer = _SlabPacker()
    packer.add('pe', sinusoidal_pe(seq_len, embed_dim))

    def pack_encoder(prefix, p):
        _pack_attn(packer, prefix + '/attn1', p['attn1'], heads[0])
        _pack_ff(packer, prefix + '/ff1', p['ff1'])
        _pack_attn(packer, prefix + '/attn2', p['attn2'], heads[1])
        _pack_ff(packer, prefix + '/ff2', p['ff2'])
        _pack_attn(packer, prefix + '/attn3', p['attn3'], heads[2])

    def pack_decoder(prefix, p):
        _pack_attn(packer, prefix + '/attn3', p['attn3'], heads[2])
        _pack_ff(packer, prefix + '/ff2', p['ff2'])
        _pack_attn(packer, prefix + '/attn2', p['attn2'], heads[1])
        _pack_ff(packer, prefix + '/ff1', p['ff1'])
        _pack_attn(packer, prefix + '/attn1', p['attn1'], heads[0])

    pack_encoder('enc', params['encoder'])
    pack_decoder('dec1', params['decoder1'])
    pack_decoder('dec2', params['decoder2'])

    # forward graph: z = enc(x); w1 = dec1(z); w3 = dec2(enc(w1)).
    # NOTE: the torch forward also computes w2 = decoder2(z) and discards it
    # (dead compute w.r.t. the returned w3) -- intentionally skipped here.
    program = (_encoder_ops('enc', heads),
               _decoder_ops('dec1', heads),
               _encoder_ops('enc', heads),    # encoder weights shared (2nd pass)
               _decoder_ops('dec2', heads))

    slab = jnp.asarray(packer.finalize())     # (R, 128) f32
    return slab, packer.layout, program


# -----------------------------------------------------------------------------
# Fused Pallas kernel: whole UMAA forward in one body (20 sub-layers).
# -----------------------------------------------------------------------------
def umaa_kernel(x_ref, slab_ref, o_ref, *, layout, program, dims):
    B, L, E = dims

    def read(name):
        off, r, c = layout[name]                  # static python ints
        return slab_ref[off:off + r, 0:c]         # 8-row-aligned static slice

    def attn_ln(x, prefix, nh):
        """y = LayerNorm(x + MultiheadSelfAttention(x)); x: (B, L, e) f32."""
        bsz, seq, e = x.shape
        dh = e // nh

        wqkv = read(prefix + '/wqkv')             # (e, 3e), cols grouped per head
        bqkv = read(prefix + '/bqkv')             # (1, 3e)
        wo = read(prefix + '/wo')                 # (e, e)  (in, out)
        bo = read(prefix + '/bo')                 # (1, e)
        gamma = read(prefix + '/gamma')           # (1, e)
        beta = read(prefix + '/beta')             # (1, e)

        # ONE fused QKV matmul; contraction on the weight's leading axis.
        # 1/sqrt(dh) is already folded into the q columns / q bias.
        qkv = jnp.einsum('ble,ef->blf', x, wqkv,
                         preferred_element_type=jnp.float32) + bqkv   # (B,L,3e)

        # Fold heads into the leading (batch) axis.  Columns are already
        # grouped per head as [q_h | k_h | v_h] of width 3*dh, so the fold is
        # nh lane slices + ONE concat (vs. 3 per-tensor folds previously).
        if nh > 1:
            qkv = jnp.concatenate(
                [qkv[:, :, h * 3 * dh:(h + 1) * 3 * dh] for h in range(nh)],
                axis=0)                                                # (nh*B,L,3dh)
        qh = qkv[:, :, 0:dh]
        kh = qkv[:, :, dh:2 * dh]
        vh = qkv[:, :, 2 * dh:3 * dh]

        s = jnp.einsum('zqd,zkd->zqk', qh, kh,
                       preferred_element_type=jnp.float32)
        s = s - jnp.max(s, axis=-1, keepdims=True)
        p = jnp.exp(s)
        p = p / jnp.sum(p, axis=-1, keepdims=True)     # exact divide (parity)
        ctx = jnp.einsum('zqk,zkd->zqd', p, vh,
                         preferred_element_type=jnp.float32)

        # Unfold heads back into the lane dim: nh slices + ONE concat.
        if nh > 1:
            ctx = jnp.concatenate(
                [ctx[h * bsz:(h + 1) * bsz] for h in range(nh)], axis=-1)

        # Single full (e, e) output projection.
        attn = jnp.einsum('bld,df->blf', ctx, wo,
                          preferred_element_type=jnp.float32) + bo

        # Residual + LayerNorm (two-moment form; eps = PyTorch default 1e-5).
        y = x + attn
        mu = jnp.mean(y, axis=-1, keepdims=True)
        ms = jnp.mean(y * y, axis=-1, keepdims=True)
        var = ms - mu * mu
        return (y - mu) * jax.lax.rsqrt(var + 1e-5) * gamma + beta

    def ff_relu(x, prefix):
        w = read(prefix + '/w')                   # (in, out)
        bias = read(prefix + '/b')                # (1, out)
        y = jnp.einsum('bli,io->blo', x, w,
                       preferred_element_type=jnp.float32) + bias
        return jnp.maximum(y, 0.0)

    # (L, B, E) -> (B, L, E) folded into the kernel: per-batch strided ref
    # loads (no wrapper-side transpose dispatch / HBM round trip).
    x = jnp.concatenate([x_ref[:, bi, :][None, :, :] for bi in range(B)], axis=0)
    x = x + read('pe')                            # (L, E) broadcasts over batch

    # Dropout layers are inference-mode identity.
    for ops in program:
        for op in ops:
            if op[0] == 'attn':
                x = attn_ln(x, op[1], op[2])
            else:
                x = ff_relu(x, op[1])

    # (B, L, E) -> (L, B, E) folded into the store.
    for bi in range(B):
        o_ref[:, bi, :] = x[bi]


# -----------------------------------------------------------------------------
# Public forward (sequence-first (L, B, E), like the PyTorch module).
# -----------------------------------------------------------------------------
def build_umaa_forward(layout, program, L, B, E):
    kernel = functools.partial(umaa_kernel, layout=layout, program=program,
                               dims=(B, L, E))

    @jax.jit
    def fwd(x_lbe, slab):
        return pl.pallas_call(
            kernel,
            out_shape=jax.ShapeDtypeStruct((L, B, E), jnp.float32),
            compiler_params=pltpu.CompilerParams(
                vmem_limit_bytes=32 * 1024 * 1024),
        )(x_lbe, slab)

    return fwd


# -----------------------------------------------------------------------------
# Deterministic synthetic parameters (nn.MultiheadAttention / Linear / LayerNorm
# conventions: weights stored (out, in), as in PyTorch).
# -----------------------------------------------------------------------------
def init_attn(key, e):
    ks = jax.random.split(key, 8)
    s = 0.1
    f32 = jnp.float32
    return dict(
        wq=s * jax.random.normal(ks[0], (e, e), f32),
        wk=s * jax.random.normal(ks[1], (e, e), f32),
        wv=s * jax.random.normal(ks[2], (e, e), f32),
        wo=s * jax.random.normal(ks[3], (e, e), f32),
        bq=s * jax.random.normal(ks[4], (1, e), f32),
        bk=s * jax.random.normal(ks[5], (1, e), f32),
        bv=s * jax.random.normal(ks[6], (1, e), f32),
        bo=s * jax.random.normal(ks[7], (1, e), f32),
        gamma=jnp.ones((1, e), f32),
        beta=jnp.zeros((1, e), f32),
    )


def init_ff(key, din, dout):
    k0, k1 = jax.random.split(key)
    s = 0.1
    return dict(
        w=s * jax.random.normal(k0, (dout, din), jnp.float32),
        b=s * jax.random.normal(k1, (1, dout), jnp.float32),
    )


def init_encoder(key, e):
    ks = jax.random.split(key, 5)
    return dict(
        attn1=init_attn(ks[0], e),
        ff1=init_ff(ks[1], e, e // 2),
        attn2=init_attn(ks[2], e // 2),
        ff2=init_ff(ks[3], e // 2, e // 4),
        attn3=init_attn(ks[4], e // 4),
    )


def init_decoder(key, e):
    ks = jax.random.split(key, 5)
    return dict(
        attn3=init_attn(ks[0], e // 4),
        ff2=init_ff(ks[1], e // 4, e // 2),
        attn2=init_attn(ks[2], e // 2),
        ff1=init_ff(ks[3], e // 2, e),
        attn1=init_attn(ks[4], e),
    )


if __name__ == "__main__":
    # Small shapes: seq L=8, batch B=2, embed_dim E=32, num_heads=4
    # (head dim is 8 at every attention width: 32/4, 16/2, 8/1).
    L, B, E, H = 8, 2, 32, 4

    root = jax.random.PRNGKey(0)
    kx, kenc, kdec1, kdec2 = jax.random.split(root, 4)

    params = dict(
        encoder=init_encoder(kenc, E),
        decoder1=init_decoder(kdec1, E),
        decoder2=init_decoder(kdec2, E),
    )

    # One-time host-side packing of all weights + PE table into one slab.
    slab, layout, program = pack_params(params, L, E, H)
    umaa_forward = build_umaa_forward(layout, program, L, B, E)

    x = jax.random.normal(kx, (L, B, E), jnp.float32)   # (seq, batch, embed)

    out = umaa_forward(x, slab)
    out = jax.block_until_ready(out)
    assert out.shape == (L, B, E) and out.dtype == jnp.float32
    assert bool(jnp.all(jnp.isfinite(out)))
    print("KERNEL_OK")
</pallas_src>

<mosaic_0001>
module attributes {stable_mosaic.version = 11 : i64} {
  func.func @umaa_kernel(%arg0: memref<8x2x32xf32, #tpu.memory_space<vmem>>, %arg1: memref<776x128xf32, #tpu.memory_space<vmem>>, %arg2: memref<8x2x32xf32, #tpu.memory_space<vmem>>) attributes {dimension_semantics = [], scalar_prefetch = 0 : i64, scratch_operands = 0 : i64, tpu.core_type = #tpu.core_type<tc>} {
    %c0 = arith.constant 0 : index
    %c0_0 = arith.constant 0 : index
    %c0_1 = arith.constant 0 : index
    %0 = vector.load %arg0[%c0, %c0_0, %c0_1] : memref<8x2x32xf32, #tpu.memory_space<vmem>>, vector<8x1x32xf32>
    %1 = vector.shape_cast %0 : vector<8x1x32xf32> to vector<8x32xf32>
    %2 = vector.shape_cast %1 : vector<8x32xf32> to vector<1x8x32xf32>
    %c0_2 = arith.constant 0 : index
    %c1 = arith.constant 1 : index
    %c0_3 = arith.constant 0 : index
    %3 = vector.load %arg0[%c0_2, %c1, %c0_3] : memref<8x2x32xf32, #tpu.memory_space<vmem>>, vector<8x1x32xf32>
    %4 = vector.shape_cast %3 : vector<8x1x32xf32> to vector<8x32xf32>
    %5 = vector.shape_cast %4 : vector<8x32xf32> to vector<1x8x32xf32>
    %6 = tpu.concatenate %2, %5 in 0 : vector<1x8x32xf32>, vector<1x8x32xf32> -> vector<2x8x32xf32>
    %c0_4 = arith.constant 0 : index
    %c0_5 = arith.constant 0 : index
    %7 = vector.load %arg1[%c0_4, %c0_5] : memref<776x128xf32, #tpu.memory_space<vmem>>, vector<8x32xf32>
    %8 = vector.shape_cast %7 : vector<8x32xf32> to vector<1x8x32xf32>
    %9 = vector.broadcast %8 : vector<1x8x32xf32> to vector<2x8x32xf32>
    %10 = arith.addf %6, %9 : vector<2x8x32xf32>
    %c8 = arith.constant 8 : index
    %c0_6 = arith.constant 0 : index
    %11 = vector.load %arg1[%c8, %c0_6] : memref<776x128xf32, #tpu.memory_space<vmem>>, vector<32x96xf32>
    %c40 = arith.constant 40 : index
    %c0_7 = arith.constant 0 : index
    %12 = vector.load %arg1[%c40, %c0_7] : memref<776x128xf32, #tpu.memory_space<vmem>>, vector<1x96xf32>
    %c48 = arith.constant 48 : index
    %c0_8 = arith.constant 0 : index
    %13 = vector.load %arg1[%c48, %c0_8] : memref<776x128xf32, #tpu.memory_space<vmem>>, vector<32x32xf32>
    %c80 = arith.constant 80 : index
    %c0_9 = arith.constant 0 : index
    %14 = vector.load %arg1[%c80, %c0_9] : memref<776x128xf32, #tpu.memory_space<vmem>>, vector<1x32xf32>
    %c88 = arith.constant 88 : index
    %c0_10 = arith.constant 0 : index
    %15 = vector.load %arg1[%c88, %c0_10] : memref<776x128xf32, #tpu.memory_space<vmem>>, vector<1x32xf32>
    %c96 = arith.constant 96 : index
    %c0_11 = arith.constant 0 : index
    %16 = vector.load %arg1[%c96, %c0_11] : memref<776x128xf32, #tpu.memory_space<vmem>>, vector<1x32xf32>
    "tpu.trace_start"() <{level = 10 : i32, message = "ble,ef->blf"}> : () -> ()
    %cst = arith.constant dense<0.000000e+00> : vector<2x8x96xf32>
    %17 = tpu.matmul %10, %11, %cst {dimension_numbers = #tpu.dot_dimension_numbers<[2], [0], [0, 1], [1], [0, 0, 0, 1, 1, 1], [], []>} : vector<2x8x32xf32>, vector<32x96xf32>, vector<2x8x96xf32> -> vector<2x8x96xf32>
    "tpu.trace_stop"() : () -> ()
    %18 = vector.shape_cast %12 : vector<1x96xf32> to vector<1x1x96xf32>
    %19 = vector.broadcast %18 : vector<1x1x96xf32> to vector<2x8x96xf32>
    %20 = arith.addf %17, %19 : vector<2x8x96xf32>
    %21 = vector.extract_strided_slice %20 {offsets = [0, 0, 0], sizes = [2, 8, 24], strides = [1, 1, 1]} : vector<2x8x96xf32> to vector<2x8x24xf32>
    %22 = vector.extract_strided_slice %20 {offsets = [0, 0, 24], sizes = [2, 8, 24], strides = [1, 1, 1]} : vector<2x8x96xf32> to vector<2x8x24xf32>
    %23 = vector.extract_strided_slice %20 {offsets = [0, 0, 48], sizes = [2, 8, 24], strides = [1, 1, 1]} : vector<2x8x96xf32> to vector<2x8x24xf32>
    %24 = vector.extract_strided_slice %20 {offsets = [0, 0, 72], sizes = [2, 8, 24], strides = [1, 1, 1]} : vector<2x8x96xf32> to vector<2x8x24xf32>
    %25 = tpu.concatenate %21, %22, %23, %24 in 0 : vector<2x8x24xf32>, vector<2x8x24xf32>, vector<2x8x24xf32>, vector<2x8x24xf32> -> vector<8x8x24xf32>
    %26 = vector.extract_strided_slice %25 {offsets = [0, 0, 0], sizes = [8, 8, 8], strides = [1, 1, 1]} : vector<8x8x24xf32> to vector<8x8x8xf32>
    %27 = vector.extract_strided_slice %25 {offsets = [0, 0, 8], sizes = [8, 8, 8], strides = [1, 1, 1]} : vector<8x8x24xf32> to vector<8x8x8xf32>
    %28 = vector.extract_strided_slice %25 {offsets = [0, 0, 16], sizes = [8, 8, 8], strides = [1, 1, 1]} : vector<8x8x24xf32> to vector<8x8x8xf32>
    "tpu.trace_start"() <{level = 10 : i32, message = "zqd,zkd->zqk"}> : () -> ()
    %cst_12 = arith.constant dense<0.000000e+00> : vector<8x8x8xf32>
    %29 = tpu.matmul %26, %27, %cst_12 {dimension_numbers = #tpu.dot_dimension_numbers<[2], [2], [1], [1], [0, 0, 0, 1, 1, 1], [0], [0]>} : vector<8x8x8xf32>, vector<8x8x8xf32>, vector<8x8x8xf32> -> vector<8x8x8xf32>
    "tpu.trace_stop"() : () -> ()
    %cst_13 = arith.constant dense<0xFF800000> : vector<8x8xf32>
    %30 = vector.multi_reduction <maximumf>, %29, %cst_13 [2] : vector<8x8x8xf32> to vector<8x8xf32>
    %31 = vector.shape_cast %30 : vector<8x8xf32> to vector<8x8x1xf32>
    %32 = vector.broadcast %31 : vector<8x8x1xf32> to vector<8x8x8xf32>
    %33 = arith.subf %29, %32 : vector<8x8x8xf32>
    %34 = math.exp %33 : vector<8x8x8xf32>
    %cst_14 = arith.constant dense<0.000000e+00> : vector<8x8xf32>
    %35 = vector.multi_reduction <add>, %34, %cst_14 [2] : vector<8x8x8xf32> to vector<8x8xf32>
    %36 = vector.shape_cast %35 : vector<8x8xf32> to vector<8x8x1xf32>
    %37 = vector.broadcast %36 : vector<8x8x1xf32> to vector<8x8x8xf32>
    %38 = arith.divf %34, %37 : vector<8x8x8xf32>
    "tpu.trace_start"() <{level = 10 : i32, message = "zqk,zkd->zqd"}> : () -> ()
    %cst_15 = arith.constant dense<0.000000e+00> : vector<8x8x8xf32>
    %39 = tpu.matmul %38, %28, %cst_15 {dimension_numbers = #tpu.dot_dimension_numbers<[2], [1], [1], [2], [0, 0, 0, 1, 1, 2], [0], [0]>} : vector<8x8x8xf32>, vector<8x8x8xf32>, vector<8x8x8xf32> -> vector<8x8x8xf32>
    "tpu.trace_stop"() : () -> ()
    %40 = vector.extract_strided_slice %39 {offsets = [0, 0, 0], sizes = [2, 8, 8], strides = [1, 1, 1]} : vector<8x8x8xf32> to vector<2x8x8xf32>
    %41 = vector.extract_strided_slice %39 {offsets = [2, 0, 0], sizes = [2, 8, 8], strides = [1, 1, 1]} : vector<8x8x8xf32> to vector<2x8x8xf32>
    %42 = vector.extract_strided_slice %39 {offsets = [4, 0, 0], sizes = [2, 8, 8], strides = [1, 1, 1]} : vector<8x8x8xf32> to vector<2x8x8xf32>
    %43 = vector.extract_strided_slice %39 {offsets = [6, 0, 0], sizes = [2, 8, 8], strides = [1, 1, 1]} : vector<8x8x8xf32> to vector<2x8x8xf32>
    %44 = tpu.concatenate %40, %41, %42, %43 in 2 : vector<2x8x8xf32>, vector<2x8x8xf32>, vector<2x8x8xf32>, vector<2x8x8xf32> -> vector<2x8x32xf32>
    "tpu.trace_start"() <{level = 10 : i32, message = "bld,df->blf"}> : () -> ()
    %cst_16 = arith.constant dense<0.000000e+00> : vector<2x8x32xf32>
    %45 = tpu.matmul %44, %13, %cst_16 {dimension_numbers = #tpu.dot_dimension_numbers<[2], [0], [0, 1], [1], [0, 0, 0, 1, 1, 1], [], []>} : vector<2x8x32xf32>, vector<32x32xf32>, vector<2x8x32xf32> -> vector<2x8x32xf32>
    "tpu.trace_stop"() : () -> ()
    %46 = vector.shape_cast %14 : vector<1x32xf32> to vector<1x1x32xf32>
    %47 = vector.broadcast %46 : vector<1x1x32xf32> to vector<2x8x32xf32>
    %48 = arith.addf %45, %47 : vector<2x8x32xf32>
    %49 = arith.addf %10, %48 : vector<2x8x32xf32>
    %cst_17 = arith.constant dense<0.000000e+00> : vector<2x8xf32>
    %50 = vector.multi_reduction <add>, %49, %cst_17 [2] : vector<2x8x32xf32> to vector<2x8xf32>
    %51 = vector.shape_cast %50 : vector<2x8xf32> to vector<2x8x1xf32>
    %cst_18 = arith.constant 3.200000e+01 : f32
    %52 = vector.broadcast %cst_18 : f32 to vector<2x8x1xf32>
    %53 = arith.divf %51, %52 : vector<2x8x1xf32>
    %54 = arith.mulf %49, %49 : vector<2x8x32xf32>
    %cst_19 = arith.constant dense<0.000000e+00> : vector<2x8xf32>
    %55 = vector.multi_reduction <add>, %54, %cst_19 [2] : vector<2x8x32xf32> to vector<2x8xf32>
    %56 = vector.shape_cast %55 : vector<2x8xf32> to vector<2x8x1xf32>
    %cst_20 = arith.constant 3.200000e+01 : f32
    %57 = vector.broadcast %cst_20 : f32 to vector<2x8x1xf32>
    %58 = arith.divf %56, %57 : vector<2x8x1xf32>
    %59 = arith.mulf %53, %53 : vector<2x8x1xf32>
    %60 = arith.subf %58, %59 : vector<2x8x1xf32>
    %61 = vector.broadcast %53 : vector<2x8x1xf32> to vector<2x8x32xf32>
    %62 = arith.subf %49, %61 : vector<2x8x32xf32>
    %cst_21 = arith.constant 9.99999974E-6 : f32
    %63 = vector.broadcast %cst_21 : f32 to vector<2x8x1xf32>
    %64 = arith.addf %60, %63 : vector<2x8x1xf32>
    %65 = math.rsqrt %64 : vector<2x8x1xf32>
    %66 = vector.broadcast %65 : vector<2x8x1xf32> to vector<2x8x32xf32>
    %67 = arith.mulf %62, %66 : vector<2x8x32xf32>
    %68 = vector.shape_cast %15 : vector<1x32xf32> to vector<1x1x32xf32>
    %69 = vector.broadcast %68 : vector<1x1x32xf32> to vector<2x8x32xf32>
    %70 = arith.mulf %67, %69 : vector<2x8x32xf32>
    %71 = vector.shape_cast %16 : vector<1x32xf32> to vector<1x1x32xf32>
    %72 = vector.broadcast %71 : vector<1x1x32xf32> to vector<2x8x32xf32>
    %73 = arith.addf %70, %72 : vector<2x8x32xf32>
    %c104 = arith.constant 104 : index
    %c0_22 = arith.constant 0 : index
    %74 = vector.load %arg1[%c104, %c0_22] : memref<776x128xf32, #tpu.memory_space<vmem>>, vector<32x16xf32>
    %c136 = arith.constant 136 : index
    %c0_23 = arith.constant 0 : index
    %75 = vector.load %arg1[%c136, %c0_23] : memref<776x128xf32, #tpu.memory_space<vmem>>, vector<1x16xf32>
    "tpu.trace_start"() <{level = 10 : i32, message = "bli,io->blo"}> : () -> ()
    %cst_24 = arith.constant dense<0.000000e+00> : vector<2x8x16xf32>
    %76 = tpu.matmul %73, %74, %cst_24 {dimension_numbers = #tpu.dot_dimension_numbers<[2], [0], [0, 1], [1], [0, 0, 0, 1, 1, 1], [], []>} : vector<2x8x32xf32>, vector<32x16xf32>, vector<2x8x16xf32> -> vector<2x8x16xf32>
    "tpu.trace_stop"() : () -> ()
    %77 = vector.shape_cast %75 : vector<1x16xf32> to vector<1x1x16xf32>
    %78 = vector.broadcast %77 : vector<1x1x16xf32> to vector<2x8x16xf32>
    %79 = arith.addf %76, %78 : vector<2x8x16xf32>
    %cst_25 = arith.constant 0.000000e+00 : f32
    %80 = vector.broadcast %cst_25 : f32 to vector<2x8x16xf32>
    %81 = arith.maximumf %79, %80 : vector<2x8x16xf32>
    %c144 = arith.constant 144 : index
    %c0_26 = arith.constant 0 : index
    %82 = vector.load %arg1[%c144, %c0_26] : memref<776x128xf32, #tpu.memory_space<vmem>>, vector<16x48xf32>
    %c160 = arith.constant 160 : index
    %c0_27 = arith.constant 0 : index
    %83 = vector.load %arg1[%c160, %c0_27] : memref<776x128xf32, #tpu.memory_space<vmem>>, vector<1x48xf32>
    %c168 = arith.constant 168 : index
    %c0_28 = arith.constant 0 : index
    %84 = vector.load %arg1[%c168, %c0_28] : memref<776x128xf32, #tpu.memory_space<vmem>>, vector<16x16xf32>
    %c184 = arith.constant 184 : index
    %c0_29 = arith.constant 0 : index
    %85 = vector.load %arg1[%c184, %c0_29] : memref<776x128xf32, #tpu.memory_space<vmem>>, vector<1x16xf32>
    %c192 = arith.constant 192 : index
    %c0_30 = arith.constant 0 : index
    %86 = vector.load %arg1[%c192, %c0_30] : memref<776x128xf32, #tpu.memory_space<vmem>>, vector<1x16xf32>
    %c200 = arith.constant 200 : index
    %c0_31 = arith.constant 0 : index
    %87 = vector.load %arg1[%c200, %c0_31] : memref<776x128xf32, #tpu.memory_space<vmem>>, vector<1x16xf32>
    "tpu.trace_start"() <{level = 10 : i32, message = "ble,ef->blf"}> : () -> ()
    %cst_32 = arith.constant dense<0.000000e+00> : vector<2x8x48xf32>
    %88 = tpu.matmul %81, %82, %cst_32 {dimension_numbers = #tpu.dot_dimension_numbers<[2], [0], [0, 1], [1], [0, 0, 0, 1, 1, 1], [], []>} : vector<2x8x16xf32>, vector<16x48xf32>, vector<2x8x48xf32> -> vector<2x8x48xf32>
    "tpu.trace_stop"() : () -> ()
    %89 = vector.shape_cast %83 : vector<1x48xf32> to vector<1x1x48xf32>
    %90 = vector.broadcast %89 : vector<1x1x48xf32> to vector<2x8x48xf32>
    %91 = arith.addf %88, %90 : vector<2x8x48xf32>
    %92 = vector.extract_strided_slice %91 {offsets = [0, 0, 0], sizes = [2, 8, 24], strides = [1, 1, 1]} : vector<2x8x48xf32> to vector<2x8x24xf32>
    %93 = vector.extract_strided_slice %91 {offsets = [0, 0, 24], sizes = [2, 8, 24], strides = [1, 1, 1]} : vector<2x8x48xf32> to vector<2x8x24xf32>
    %94 = tpu.concatenate %92, %93 in 0 : vector<2x8x24xf32>, vector<2x8x24xf32> -> vector<4x8x24xf32>
    %95 = vector.extract_strided_slice %94 {offsets = [0, 0, 0], sizes = [4, 8, 8], strides = [1, 1, 1]} : vector<4x8x24xf32> to vector<4x8x8xf32>
    %96 = vector.extract_strided_slice %94 {offsets = [0, 0, 8], sizes = [4, 8, 8], strides = [1, 1, 1]} : vector<4x8x24xf32> to vector<4x8x8xf32>
    %97 = vector.extract_strided_slice %94 {offsets = [0, 0, 16], sizes = [4, 8, 8], strides = [1, 1, 1]} : vector<4x8x24xf32> to vector<4x8x8xf32>
    "tpu.trace_start"() <{level = 10 : i32, message = "zqd,zkd->zqk"}> : () -> ()
    %cst_33 = arith.constant dense<0.000000e+00> : vector<4x8x8xf32>
    %98 = tpu.matmul %95, %96, %cst_33 {dimension_numbers = #tpu.dot_dimension_numbers<[2], [2], [1], [1], [0, 0, 0, 1, 1, 1], [0], [0]>} : vector<4x8x8xf32>, vector<4x8x8xf32>, vector<4x8x8xf32> -> vector<4x8x8xf32>
    "tpu.trace_stop"() : () -> ()
    %cst_34 = arith.constant dense<0xFF800000> : vector<4x8xf32>
    %99 = vector.multi_reduction <maximumf>, %98, %cst_34 [2] : vector<4x8x8xf32> to vector<4x8xf32>
    %100 = vector.shape_cast %99 : vector<4x8xf32> to vector<4x8x1xf32>
    %101 = vector.broadcast %100 : vector<4x8x1xf32> to vector<4x8x8xf32>
    %102 = arith.subf %98, %101 : vector<4x8x8xf32>
    %103 = math.exp %102 : vector<4x8x8xf32>
    %cst_35 = arith.constant dense<0.000000e+00> : vector<4x8xf32>
    %104 = vector.multi_reduction <add>, %103, %cst_35 [2] : vector<4x8x8xf32> to vector<4x8xf32>
    %105 = vector.shape_cast %104 : vector<4x8xf32> to vector<4x8x1xf32>
    %106 = vector.broadcast %105 : vector<4x8x1xf32> to vector<4x8x8xf32>
    %107 = arith.divf %103, %106 : vector<4x8x8xf32>
    "tpu.trace_start"() <{level = 10 : i32, message = "zqk,zkd->zqd"}> : () -> ()
    %cst_36 = arith.constant dense<0.000000e+00> : vector<4x8x8xf32>
    %108 = tpu.matmul %107, %97, %cst_36 {dimension_numbers = #tpu.dot_dimension_numbers<[2], [1], [1], [2], [0, 0, 0, 1, 1, 2], [0], [0]>} : vector<4x8x8xf32>, vector<4x8x8xf32>, vector<4x8x8xf32> -> vector<4x8x8xf32>
    "tpu.trace_stop"() : () -> ()
    %109 = vector.extract_strided_slice %108 {offsets = [0, 0, 0], sizes = [2, 8, 8], strides = [1, 1, 1]} : vector<4x8x8xf32> to vector<2x8x8xf32>
    %110 = vector.extract_strided_slice %108 {offsets = [2, 0, 0], sizes = [2, 8, 8], strides = [1, 1, 1]} : vector<4x8x8xf32> to vector<2x8x8xf32>
    %111 = tpu.concatenate %109, %110 in 2 : vector<2x8x8xf32>, vector<2x8x8xf32> -> vector<2x8x16xf32>
    "tpu.trace_start"() <{level = 10 : i32, message = "bld,df->blf"}> : () -> ()
    %cst_37 = arith.constant dense<0.000000e+00> : vector<2x8x16xf32>
    %112 = tpu.matmul %111, %84, %cst_37 {dimension_numbers = #tpu.dot_dimension_numbers<[2], [0], [0, 1], [1], [0, 0, 0, 1, 1, 1], [], []>} : vector<2x8x16xf32>, vector<16x16xf32>, vector<2x8x16xf32> -> vector<2x8x16xf32>
    "tpu.trace_stop"() : () -> ()
    %113 = vector.shape_cast %85 : vector<1x16xf32> to vector<1x1x16xf32>
    %114 = vector.broadcast %113 : vector<1x1x16xf32> to vector<2x8x16xf32>
    %115 = arith.addf %112, %114 : vector<2x8x16xf32>
    %116 = arith.addf %81, %115 : vector<2x8x16xf32>
    %cst_38 = arith.constant dense<0.000000e+00> : vector<2x8xf32>
    %117 = vector.multi_reduction <add>, %116, %cst_38 [2] : vector<2x8x16xf32> to vector<2x8xf32>
    %118 = vector.shape_cast %117 : vector<2x8xf32> to vector<2x8x1xf32>
    %cst_39 = arith.constant 1.600000e+01 : f32
    %119 = vector.broadcast %cst_39 : f32 to vector<2x8x1xf32>
    %120 = arith.divf %118, %119 : vector<2x8x1xf32>
    %121 = arith.mulf %116, %116 : vector<2x8x16xf32>
    %cst_40 = arith.constant dense<0.000000e+00> : vector<2x8xf32>
    %122 = vector.multi_reduction <add>, %121, %cst_40 [2] : vector<2x8x16xf32> to vector<2x8xf32>
    %123 = vector.shape_cast %122 : vector<2x8xf32> to vector<2x8x1xf32>
    %cst_41 = arith.constant 1.600000e+01 : f32
    %124 = vector.broadcast %cst_41 : f32 to vector<2x8x1xf32>
    %125 = arith.divf %123, %124 : vector<2x8x1xf32>
    %126 = arith.mulf %120, %120 : vector<2x8x1xf32>
    %127 = arith.subf %125, %126 : vector<2x8x1xf32>
    %128 = vector.broadcast %120 : vector<2x8x1xf32> to vector<2x8x16xf32>
    %129 = arith.subf %116, %128 : vector<2x8x16xf32>
    %cst_42 = arith.constant 9.99999974E-6 : f32
    %130 = vector.broadcast %cst_42 : f32 to vector<2x8x1xf32>
    %131 = arith.addf %127, %130 : vector<2x8x1xf32>
    %132 = math.rsqrt %131 : vector<2x8x1xf32>
    %133 = vector.broadcast %132 : vector<2x8x1xf32> to vector<2x8x16xf32>
    %134 = arith.mulf %129, %133 : vector<2x8x16xf32>
    %135 = vector.shape_cast %86 : vector<1x16xf32> to vector<1x1x16xf32>
    %136 = vector.broadcast %135 : vector<1x1x16xf32> to vector<2x8x16xf32>
    %137 = arith.mulf %134, %136 : vector<2x8x16xf32>
    %138 = vector.shape_cast %87 : vector<1x16xf32> to vector<1x1x16xf32>
    %139 = vector.broadcast %138 : vector<1x1x16xf32> to vector<2x8x16xf32>
    %140 = arith.addf %137, %139 : vector<2x8x16xf32>
    %c208 = arith.constant 208 : index
    %c0_43 = arith.constant 0 : index
    %141 = vector.load %arg1[%c208, %c0_43] : memref<776x128xf32, #tpu.memory_space<vmem>>, vector<16x8xf32>
    %c224 = arith.constant 224 : index
    %c0_44 = arith.constant 0 : index
    %142 = vector.load %arg1[%c224, %c0_44] : memref<776x128xf32, #tpu.memory_space<vmem>>, vector<1x8xf32>
    "tpu.trace_start"() <{level = 10 : i32, message = "bli,io->blo"}> : () -> ()
    %cst_45 = arith.constant dense<0.000000e+00> : vector<2x8x8xf32>
    %143 = tpu.matmul %140, %141, %cst_45 {dimension_numbers = #tpu.dot_dimension_numbers<[2], [0], [0, 1], [1], [0, 0, 0, 1, 1, 1], [], []>} : vector<2x8x16xf32>, vector<16x8xf32>, vector<2x8x8xf32> -> vector<2x8x8xf32>
    "tpu.trace_stop"() : () -> ()
    %144 = vector.shape_cast %142 : vector<1x8xf32> to vector<1x1x8xf32>
    %145 = vector.broadcast %144 : vector<1x1x8xf32> to vector<2x8x8xf32>
    %146 = arith.addf %143, %145 : vector<2x8x8xf32>
    %cst_46 = arith.constant 0.000000e+00 : f32
    %147 = vector.broadcast %cst_46 : f32 to vector<2x8x8xf32>
    %148 = arith.maximumf %146, %147 : vector<2x8x8xf32>
    %c232 = arith.constant 232 : index
    %c0_47 = arith.constant 0 : index
    %149 = vector.load %arg1[%c232, %c0_47] : memref<776x128xf32, #tpu.memory_space<vmem>>, vector<8x24xf32>
    %c240 = arith.constant 240 : index
    %c0_48 = arith.constant 0 : index
    %150 = vector.load %arg1[%c240, %c0_48] : memref<776x128xf32, #tpu.memory_space<vmem>>, vector<1x24xf32>
    %c248 = arith.constant 248 : index
    %c0_49 = arith.constant 0 : index
    %151 = vector.load %arg1[%c248, %c0_49] : memref<776x128xf32, #tpu.memory_space<vmem>>, vector<8x8xf32>
    %c256 = arith.constant 256 : index
    %c0_50 = arith.constant 0 : index
    %152 = vector.load %arg1[%c256, %c0_50] : memref<776x128xf32, #tpu.memory_space<vmem>>, vector<1x8xf32>
    %c264 = arith.constant 264 : index
    %c0_51 = arith.constant 0 : index
    %153 = vector.load %arg1[%c264, %c0_51] : memref<776x128xf32, #tpu.memory_space<vmem>>, vector<1x8xf32>
    %c272 = arith.constant 272 : index
    %c0_52 = arith.constant 0 : index
    %154 = vector.load %arg1[%c272, %c0_52] : memref<776x128xf32, #tpu.memory_space<vmem>>, vector<1x8xf32>
    "tpu.trace_start"() <{level = 10 : i32, message = "ble,ef->blf"}> : () -> ()
    %cst_53 = arith.constant dense<0.000000e+00> : vector<2x8x24xf32>
    %155 = tpu.matmul %148, %149, %cst_53 {dimension_numbers = #tpu.dot_dimension_numbers<[2], [0], [0, 1], [1], [0, 0, 0, 1, 1, 1], [], []>} : vector<2x8x8xf32>, vector<8x24xf32>, vector<2x8x24xf32> -> vector<2x8x24xf32>
    "tpu.trace_stop"() : () -> ()
    %156 = vector.shape_cast %150 : vector<1x24xf32> to vector<1x1x24xf32>
    %157 = vector.broadcast %156 : vector<1x1x24xf32> to vector<2x8x24xf32>
    %158 = arith.addf %155, %157 : vector<2x8x24xf32>
    %159 = vector.extract_strided_slice %158 {offsets = [0, 0, 0], sizes = [2, 8, 8], strides = [1, 1, 1]} : vector<2x8x24xf32> to vector<2x8x8xf32>
    %160 = vector.extract_strided_slice %158 {offsets = [0, 0, 8], sizes = [2, 8, 8], strides = [1, 1, 1]} : vector<2x8x24xf32> to vector<2x8x8xf32>
    %161 = vector.extract_strided_slice %158 {offsets = [0, 0, 16], sizes = [2, 8, 8], strides = [1, 1, 1]} : vector<2x8x24xf32> to vector<2x8x8xf32>
    "tpu.trace_start"() <{level = 10 : i32, message = "zqd,zkd->zqk"}> : () -> ()
    %cst_54 = arith.constant dense<0.000000e+00> : vector<2x8x8xf32>
    %162 = tpu.matmul %159, %160, %cst_54 {dimension_numbers = #tpu.dot_dimension_numbers<[2], [2], [1], [1], [0, 0, 0, 1, 1, 1], [0], [0]>} : vector<2x8x8xf32>, vector<2x8x8xf32>, vector<2x8x8xf32> -> vector<2x8x8xf32>
    "tpu.trace_stop"() : () -> ()
    %cst_55 = arith.constant dense<0xFF800000> : vector<2x8xf32>
    %163 = vector.multi_reduction <maximumf>, %162, %cst_55 [2] : vector<2x8x8xf32> to vector<2x8xf32>
    %164 = vector.shape_cast %163 : vector<2x8xf32> to vector<2x8x1xf32>
    %165 = vector.broadcast %164 : vector<2x8x1xf32> to vector<2x8x8xf32>
    %166 = arith.subf %162, %165 : vector<2x8x8xf32>
    %167 = math.exp %166 : vector<2x8x8xf32>
    %cst_56 = arith.constant dense<0.000000e+00> : vector<2x8xf32>
    %168 = vector.multi_reduction <add>, %167, %cst_56 [2] : vector<2x8x8xf32> to vector<2x8xf32>
    %169 = vector.shape_cast %168 : vector<2x8xf32> to vector<2x8x1xf32>
    %170 = vector.broadcast %169 : vector<2x8x1xf32> to vector<2x8x8xf32>
    %171 = arith.divf %167, %170 : vector<2x8x8xf32>
    "tpu.trace_start"() <{level = 10 : i32, message = "zqk,zkd->zqd"}> : () -> ()
    %cst_57 = arith.constant dense<0.000000e+00> : vector<2x8x8xf32>
    %172 = tpu.matmul %171, %161, %cst_57 {dimension_numbers = #tpu.dot_dimension_numbers<[2], [1], [1], [2], [0, 0, 0, 1, 1, 2], [0], [0]>} : vector<2x8x8xf32>, vector<2x8x8xf32>, vector<2x8x8xf32> -> vector<2x8x8xf32>
    "tpu.trace_stop"() : () -> ()
    "tpu.trace_start"() <{level = 10 : i32, message = "bld,df->blf"}> : () -> ()
    %cst_58 = arith.constant dense<0.000000e+00> : vector<2x8x8xf32>
    %173 = tpu.matmul %172, %151, %cst_58 {dimension_numbers = #tpu.dot_dimension_numbers<[2], [0], [0, 1], [1], [0, 0, 0, 1, 1, 1], [], []>} : vector<2x8x8xf32>, vector<8x8xf32>, vector<2x8x8xf32> -> vector<2x8x8xf32>
    "tpu.trace_stop"() : () -> ()
    %174 = vector.shape_cast %152 : vector<1x8xf32> to vector<1x1x8xf32>
    %175 = vector.broadcast %174 : vector<1x1x8xf32> to vector<2x8x8xf32>
    %176 = arith.addf %173, %175 : vector<2x8x8xf32>
    %177 = arith.addf %148, %176 : vector<2x8x8xf32>
    %cst_59 = arith.constant dense<0.000000e+00> : vector<2x8xf32>
    %178 = vector.multi_reduction <add>, %177, %cst_59 [2] : vector<2x8x8xf32> to vector<2x8xf32>
    %179 = vector.shape_cast %178 : vector<2x8xf32> to vector<2x8x1xf32>
    %cst_60 = arith.constant 8.000000e+00 : f32
    %180 = vector.broadcast %cst_60 : f32 to vector<2x8x1xf32>
    %181 = arith.divf %179, %180 : vector<2x8x1xf32>
    %182 = arith.mulf %177, %177 : vector<2x8x8xf32>
    %cst_61 = arith.constant dense<0.000000e+00> : vector<2x8xf32>
    %183 = vector.multi_reduction <add>, %182, %cst_61 [2] : vector<2x8x8xf32> to vector<2x8xf32>
    %184 = vector.shape_cast %183 : vector<2x8xf32> to vector<2x8x1xf32>
    %cst_62 = arith.constant 8.000000e+00 : f32
    %185 = vector.broadcast %cst_62 : f32 to vector<2x8x1xf32>
    %186 = arith.divf %184, %185 : vector<2x8x1xf32>
    %187 = arith.mulf %181, %181 : vector<2x8x1xf32>
    %188 = arith.subf %186, %187 : vector<2x8x1xf32>
    %189 = vector.broadcast %181 : vector<2x8x1xf32> to vector<2x8x8xf32>
    %190 = arith.subf %177, %189 : vector<2x8x8xf32>
    %cst_63 = arith.constant 9.99999974E-6 : f32
    %191 = vector.broadcast %cst_63 : f32 to vector<2x8x1xf32>
    %192 = arith.addf %188, %191 : vector<2x8x1xf32>
    %193 = math.rsqrt %192 : vector<2x8x1xf32>
    %194 = vector.broadcast %193 : vector<2x8x1xf32> to vector<2x8x8xf32>
    %195 = arith.mulf %190, %194 : vector<2x8x8xf32>
    %196 = vector.shape_cast %153 : vector<1x8xf32> to vector<1x1x8xf32>
    %197 = vector.broadcast %196 : vector<1x1x8xf32> to vector<2x8x8xf32>
    %198 = arith.mulf %195, %197 : vector<2x8x8xf32>
    %199 = vector.shape_cast %154 : vector<1x8xf32> to vector<1x1x8xf32>
    %200 = vector.broadcast %199 : vector<1x1x8xf32> to vector<2x8x8xf32>
    %201 = arith.addf %198, %200 : vector<2x8x8xf32>
    %c280 = arith.constant 280 : index
    %c0_64 = arith.constant 0 : index
    %202 = vector.load %arg1[%c280, %c0_64] : memref<776x128xf32, #tpu.memory_space<vmem>>, vector<8x24xf32>
    %c288 = arith.constant 288 : index
    %c0_65 = arith.constant 0 : index
    %203 = vector.load %arg1[%c288, %c0_65] : memref<776x128xf32, #tpu.memory_space<vmem>>, vector<1x24xf32>
    %c296 = arith.constant 296 : index
    %c0_66 = arith.constant 0 : index
    %204 = vector.load %arg1[%c296, %c0_66] : memref<776x128xf32, #tpu.memory_space<vmem>>, vector<8x8xf32>
    %c304 = arith.constant 304 : index
    %c0_67 = arith.constant 0 : index
    %205 = vector.load %arg1[%c304, %c0_67] : memref<776x128xf32, #tpu.memory_space<vmem>>, vector<1x8xf32>
    %c312 = arith.constant 312 : index
    %c0_68 = arith.constant 0 : index
    %206 = vector.load %arg1[%c312, %c0_68] : memref<776x128xf32, #tpu.memory_space<vmem>>, vector<1x8xf32>
    %c320 = arith.constant 320 : index
    %c0_69 = arith.constant 0 : index
    %207 = vector.load %arg1[%c320, %c0_69] : memref<776x128xf32, #tpu.memory_space<vmem>>, vector<1x8xf32>
    "tpu.trace_start"() <{level = 10 : i32, message = "ble,ef->blf"}> : () -> ()
    %cst_70 = arith.constant dense<0.000000e+00> : vector<2x8x24xf32>
    %208 = tpu.matmul %201, %202, %cst_70 {dimension_numbers = #tpu.dot_dimension_numbers<[2], [0], [0, 1], [1], [0, 0, 0, 1, 1, 1], [], []>} : vector<2x8x8xf32>, vector<8x24xf32>, vector<2x8x24xf32> -> vector<2x8x24xf32>
    "tpu.trace_stop"() : () -> ()
    %209 = vector.shape_cast %203 : vector<1x24xf32> to vector<1x1x24xf32>
    %210 = vector.broadcast %209 : vector<1x1x24xf32> to vector<2x8x24xf32>
    %211 = arith.addf %208, %210 : vector<2x8x24xf32>
    %212 = vector.extract_strided_slice %211 {offsets = [0, 0, 0], sizes = [2, 8, 8], strides = [1, 1, 1]} : vector<2x8x24xf32> to vector<2x8x8xf32>
    %213 = vector.extract_strided_slice %211 {offsets = [0, 0, 8], sizes = [2, 8, 8], strides = [1, 1, 1]} : vector<2x8x24xf32> to vector<2x8x8xf32>
    %214 = vector.extract_strided_slice %211 {offsets = [0, 0, 16], sizes = [2, 8, 8], strides = [1, 1, 1]} : vector<2x8x24xf32> to vector<2x8x8xf32>
    "tpu.trace_start"() <{level = 10 : i32, message = "zqd,zkd->zqk"}> : () -> ()
    %cst_71 = arith.constant dense<0.000000e+00> : vector<2x8x8xf32>
    %215 = tpu.matmul %212, %213, %cst_71 {dimension_numbers = #tpu.dot_dimension_numbers<[2], [2], [1], [1], [0, 0, 0, 1, 1, 1], [0], [0]>} : vector<2x8x8xf32>, vector<2x8x8xf32>, vector<2x8x8xf32> -> vector<2x8x8xf32>
    "tpu.trace_stop"() : () -> ()
    %cst_72 = arith.constant dense<0xFF800000> : vector<2x8xf32>
    %216 = vector.multi_reduction <maximumf>, %215, %cst_72 [2] : vector<2x8x8xf32> to vector<2x8xf32>
    %217 = vector.shape_cast %216 : vector<2x8xf32> to vector<2x8x1xf32>
    %218 = vector.broadcast %217 : vector<2x8x1xf32> to vector<2x8x8xf32>
    %219 = arith.subf %215, %218 : vector<2x8x8xf32>
    %220 = math.exp %219 : vector<2x8x8xf32>
    %cst_73 = arith.constant dense<0.000000e+00> : vector<2x8xf32>
    %221 = vector.multi_reduction <add>, %220, %cst_73 [2] : vector<2x8x8xf32> to vector<2x8xf32>
    %222 = vector.shape_cast %221 : vector<2x8xf32> to vector<2x8x1xf32>
    %223 = vector.broadcast %222 : vector<2x8x1xf32> to vector<2x8x8xf32>
    %224 = arith.divf %220, %223 : vector<2x8x8xf32>
    "tpu.trace_start"() <{level = 10 : i32, message = "zqk,zkd->zqd"}> : () -> ()
    %cst_74 = arith.constant dense<0.000000e+00> : vector<2x8x8xf32>
    %225 = tpu.matmul %224, %214, %cst_74 {dimension_numbers = #tpu.dot_dimension_numbers<[2], [1], [1], [2], [0, 0, 0, 1, 1, 2], [0], [0]>} : vector<2x8x8xf32>, vector<2x8x8xf32>, vector<2x8x8xf32> -> vector<2x8x8xf32>
    "tpu.trace_stop"() : () -> ()
    "tpu.trace_start"() <{level = 10 : i32, message = "bld,df->blf"}> : () -> ()
    %cst_75 = arith.constant dense<0.000000e+00> : vector<2x8x8xf32>
    %226 = tpu.matmul %225, %204, %cst_75 {dimension_numbers = #tpu.dot_dimension_numbers<[2], [0], [0, 1], [1], [0, 0, 0, 1, 1, 1], [], []>} : vector<2x8x8xf32>, vector<8x8xf32>, vector<2x8x8xf32> -> vector<2x8x8xf32>
    "tpu.trace_stop"() : () -> ()
    %227 = vector.shape_cast %205 : vector<1x8xf32> to vector<1x1x8xf32>
    %228 = vector.broadcast %227 : vector<1x1x8xf32> to vector<2x8x8xf32>
    %229 = arith.addf %226, %228 : vector<2x8x8xf32>
    %230 = arith.addf %201, %229 : vector<2x8x8xf32>
    %cst_76 = arith.constant dense<0.000000e+00> : vector<2x8xf32>
    %231 = vector.multi_reduction <add>, %230, %cst_76 [2] : vector<2x8x8xf32> to vector<2x8xf32>
    %232 = vector.shape_cast %231 : vector<2x8xf32> to vector<2x8x1xf32>
    %cst_77 = arith.constant 8.000000e+00 : f32
    %233 = vector.broadcast %cst_77 : f32 to vector<2x8x1xf32>
    %234 = arith.divf %232, %233 : vector<2x8x1xf32>
    %235 = arith.mulf %230, %230 : vector<2x8x8xf32>
    %cst_78 = arith.constant dense<0.000000e+00> : vector<2x8xf32>
    %236 = vector.multi_reduction <add>, %235, %cst_78 [2] : vector<2x8x8xf32> to vector<2x8xf32>
    %237 = vector.shape_cast %236 : vector<2x8xf32> to vector<2x8x1xf32>
    %cst_79 = arith.constant 8.000000e+00 : f32
    %238 = vector.broadcast %cst_79 : f32 to vector<2x8x1xf32>
    %239 = arith.divf %237, %238 : vector<2x8x1xf32>
    %240 = arith.mulf %234, %234 : vector<2x8x1xf32>
    %241 = arith.subf %239, %240 : vector<2x8x1xf32>
    %242 = vector.broadcast %234 : vector<2x8x1xf32> to vector<2x8x8xf32>
    %243 = arith.subf %230, %242 : vector<2x8x8xf32>
    %cst_80 = arith.constant 9.99999974E-6 : f32
    %244 = vector.broadcast %cst_80 : f32 to vector<2x8x1xf32>
    %245 = arith.addf %241, %244 : vector<2x8x1xf32>
    %246 = math.rsqrt %245 : vector<2x8x1xf32>
    %247 = vector.broadcast %246 : vector<2x8x1xf32> to vector<2x8x8xf32>
    %248 = arith.mulf %243, %247 : vector<2x8x8xf32>
    %249 = vector.shape_cast %206 : vector<1x8xf32> to vector<1x1x8xf32>
    %250 = vector.broadcast %249 : vector<1x1x8xf32> to vector<2x8x8xf32>
    %251 = arith.mulf %248, %250 : vector<2x8x8xf32>
    %252 = vector.shape_cast %207 : vector<1x8xf32> to vector<1x1x8xf32>
    %253 = vector.broadcast %252 : vector<1x1x8xf32> to vector<2x8x8xf32>
    %254 = arith.addf %251, %253 : vector<2x8x8xf32>
    %c328 = arith.constant 328 : index
    %c0_81 = arith.constant 0 : index
    %255 = vector.load %arg1[%c328, %c0_81] : memref<776x128xf32, #tpu.memory_space<vmem>>, vector<8x16xf32>
    %c336 = arith.constant 336 : index
    %c0_82 = arith.constant 0 : index
    %256 = vector.load %arg1[%c336, %c0_82] : memref<776x128xf32, #tpu.memory_space<vmem>>, vector<1x16xf32>
    "tpu.trace_start"() <{level = 10 : i32, message = "bli,io->blo"}> : () -> ()
    %cst_83 = arith.constant dense<0.000000e+00> : vector<2x8x16xf32>
    %257 = tpu.matmul %254, %255, %cst_83 {dimension_numbers = #tpu.dot_dimension_numbers<[2], [0], [0, 1], [1], [0, 0, 0, 1, 1, 1], [], []>} : vector<2x8x8xf32>, vector<8x16xf32>, vector<2x8x16xf32> -> vector<2x8x16xf32>
    "tpu.trace_stop"() : () -> ()
    %258 = vector.shape_cast %256 : vector<1x16xf32> to vector<1x1x16xf32>
    %259 = vector.broadcast %258 : vector<1x1x16xf32> to vector<2x8x16xf32>
    %260 = arith.addf %257, %259 : vector<2x8x16xf32>
    %cst_84 = arith.constant 0.000000e+00 : f32
    %261 = vector.broadcast %cst_84 : f32 to vector<2x8x16xf32>
    %262 = arith.maximumf %260, %261 : vector<2x8x16xf32>
    %c344 = arith.constant 344 : index
    %c0_85 = arith.constant 0 : index
    %263 = vector.load %arg1[%c344, %c0_85] : memref<776x128xf32, #tpu.memory_space<vmem>>, vector<16x48xf32>
    %c360 = arith.constant 360 : index
    %c0_86 = arith.constant 0 : index
    %264 = vector.load %arg1[%c360, %c0_86] : memref<776x128xf32, #tpu.memory_space<vmem>>, vector<1x48xf32>
    %c368 = arith.constant 368 : index
    %c0_87 = arith.constant 0 : index
    %265 = vector.load %arg1[%c368, %c0_87] : memref<776x128xf32, #tpu.memory_space<vmem>>, vector<16x16xf32>
    %c384 = arith.constant 384 : index
    %c0_88 = arith.constant 0 : index
    %266 = vector.load %arg1[%c384, %c0_88] : memref<776x128xf32, #tpu.memory_space<vmem>>, vector<1x16xf32>
    %c392 = arith.constant 392 : index
    %c0_89 = arith.constant 0 : index
    %267 = vector.load %arg1[%c392, %c0_89] : memref<776x128xf32, #tpu.memory_space<vmem>>, vector<1x16xf32>
    %c400 = arith.constant 400 : index
    %c0_90 = arith.constant 0 : index
    %268 = vector.load %arg1[%c400, %c0_90] : memref<776x128xf32, #tpu.memory_space<vmem>>, vector<1x16xf32>
    "tpu.trace_start"() <{level = 10 : i32, message = "ble,ef->blf"}> : () -> ()
    %cst_91 = arith.constant dense<0.000000e+00> : vector<2x8x48xf32>
    %269 = tpu.matmul %262, %263, %cst_91 {dimension_numbers = #tpu.dot_dimension_numbers<[2], [0], [0, 1], [1], [0, 0, 0, 1, 1, 1], [], []>} : vector<2x8x16xf32>, vector<16x48xf32>, vector<2x8x48xf32> -> vector<2x8x48xf32>
    "tpu.trace_stop"() : () -> ()
    %270 = vector.shape_cast %264 : vector<1x48xf32> to vector<1x1x48xf32>
    %271 = vector.broadcast %270 : vector<1x1x48xf32> to vector<2x8x48xf32>
    %272 = arith.addf %269, %271 : vector<2x8x48xf32>
    %273 = vector.extract_strided_slice %272 {offsets = [0, 0, 0], sizes = [2, 8, 24], strides = [1, 1, 1]} : vector<2x8x48xf32> to vector<2x8x24xf32>
    %274 = vector.extract_strided_slice %272 {offsets = [0, 0, 24], sizes = [2, 8, 24], strides = [1, 1, 1]} : vector<2x8x48xf32> to vector<2x8x24xf32>
    %275 = tpu.concatenate %273, %274 in 0 : vector<2x8x24xf32>, vector<2x8x24xf32> -> vector<4x8x24xf32>
    %276 = vector.extract_strided_slice %275 {offsets = [0, 0, 0], sizes = [4, 8, 8], strides = [1, 1, 1]} : vector<4x8x24xf32> to vector<4x8x8xf32>
    %277 = vector.extract_strided_slice %275 {offsets = [0, 0, 8], sizes = [4, 8, 8], strides = [1, 1, 1]} : vector<4x8x24xf32> to vector<4x8x8xf32>
    %278 = vector.extract_strided_slice %275 {offsets = [0, 0, 16], sizes = [4, 8, 8], strides = [1, 1, 1]} : vector<4x8x24xf32> to vector<4x8x8xf32>
    "tpu.trace_start"() <{level = 10 : i32, message = "zqd,zkd->zqk"}> : () -> ()
    %cst_92 = arith.constant dense<0.000000e+00> : vector<4x8x8xf32>
    %279 = tpu.matmul %276, %277, %cst_92 {dimension_numbers = #tpu.dot_dimension_numbers<[2], [2], [1], [1], [0, 0, 0, 1, 1, 1], [0], [0]>} : vector<4x8x8xf32>, vector<4x8x8xf32>, vector<4x8x8xf32> -> vector<4x8x8xf32>
    "tpu.trace_stop"() : () -> ()
    %cst_93 = arith.constant dense<0xFF800000> : vector<4x8xf32>
    %280 = vector.multi_reduction <maximumf>, %279, %cst_93 [2] : vector<4x8x8xf32> to vector<4x8xf32>
    %281 = vector.shape_cast %280 : vector<4x8xf32> to vector<4x8x1xf32>
    %282 = vector.broadcast %281 : vector<4x8x1xf32> to vector<4x8x8xf32>
    %283 = arith.subf %279, %282 : vector<4x8x8xf32>
    %284 = math.exp %283 : vector<4x8x8xf32>
    %cst_94 = arith.constant dense<0.000000e+00> : vector<4x8xf32>
    %285 = vector.multi_reduction <add>, %284, %cst_94 [2] : vector<4x8x8xf32> to vector<4x8xf32>
    %286 = vector.shape_cast %285 : vector<4x8xf32> to vector<4x8x1xf32>
    %287 = vector.broadcast %286 : vector<4x8x1xf32> to vector<4x8x8xf32>
    %288 = arith.divf %284, %287 : vector<4x8x8xf32>
    "tpu.trace_start"() <{level = 10 : i32, message = "zqk,zkd->zqd"}> : () -> ()
    %cst_95 = arith.constant dense<0.000000e+00> : vector<4x8x8xf32>
    %289 = tpu.matmul %288, %278, %cst_95 {dimension_numbers = #tpu.dot_dimension_numbers<[2], [1], [1], [2], [0, 0, 0, 1, 1, 2], [0], [0]>} : vector<4x8x8xf32>, vector<4x8x8xf32>, vector<4x8x8xf32> -> vector<4x8x8xf32>
    "tpu.trace_stop"() : () -> ()
    %290 = vector.extract_strided_slice %289 {offsets = [0, 0, 0], sizes = [2, 8, 8], strides = [1, 1, 1]} : vector<4x8x8xf32> to vector<2x8x8xf32>
    %291 = vector.extract_strided_slice %289 {offsets = [2, 0, 0], sizes = [2, 8, 8], strides = [1, 1, 1]} : vector<4x8x8xf32> to vector<2x8x8xf32>
    %292 = tpu.concatenate %290, %291 in 2 : vector<2x8x8xf32>, vector<2x8x8xf32> -> vector<2x8x16xf32>
    "tpu.trace_start"() <{level = 10 : i32, message = "bld,df->blf"}> : () -> ()
    %cst_96 = arith.constant dense<0.000000e+00> : vector<2x8x16xf32>
    %293 = tpu.matmul %292, %265, %cst_96 {dimension_numbers = #tpu.dot_dimension_numbers<[2], [0], [0, 1], [1], [0, 0, 0, 1, 1, 1], [], []>} : vector<2x8x16xf32>, vector<16x16xf32>, vector<2x8x16xf32> -> vector<2x8x16xf32>
    "tpu.trace_stop"() : () -> ()
    %294 = vector.shape_cast %266 : vector<1x16xf32> to vector<1x1x16xf32>
    %295 = vector.broadcast %294 : vector<1x1x16xf32> to vector<2x8x16xf32>
    %296 = arith.addf %293, %295 : vector<2x8x16xf32>
    %297 = arith.addf %262, %296 : vector<2x8x16xf32>
    %cst_97 = arith.constant dense<0.000000e+00> : vector<2x8xf32>
    %298 = vector.multi_reduction <add>, %297, %cst_97 [2] : vector<2x8x16xf32> to vector<2x8xf32>
    %299 = vector.shape_cast %298 : vector<2x8xf32> to vector<2x8x1xf32>
    %cst_98 = arith.constant 1.600000e+01 : f32
    %300 = vector.broadcast %cst_98 : f32 to vector<2x8x1xf32>
    %301 = arith.divf %299, %300 : vector<2x8x1xf32>
    %302 = arith.mulf %297, %297 : vector<2x8x16xf32>
    %cst_99 = arith.constant dense<0.000000e+00> : vector<2x8xf32>
    %303 = vector.multi_reduction <add>, %302, %cst_99 [2] : vector<2x8x16xf32> to vector<2x8xf32>
    %304 = vector.shape_cast %303 : vector<2x8xf32> to vector<2x8x1xf32>
    %cst_100 = arith.constant 1.600000e+01 : f32
    %305 = vector.broadcast %cst_100 : f32 to vector<2x8x1xf32>
    %306 = arith.divf %304, %305 : vector<2x8x1xf32>
    %307 = arith.mulf %301, %301 : vector<2x8x1xf32>
    %308 = arith.subf %306, %307 : vector<2x8x1xf32>
    %309 = vector.broadcast %301 : vector<2x8x1xf32> to vector<2x8x16xf32>
    %310 = arith.subf %297, %309 : vector<2x8x16xf32>
    %cst_101 = arith.constant 9.99999974E-6 : f32
    %311 = vector.broadcast %cst_101 : f32 to vector<2x8x1xf32>
    %312 = arith.addf %308, %311 : vector<2x8x1xf32>
    %313 = math.rsqrt %312 : vector<2x8x1xf32>
    %314 = vector.broadcast %313 : vector<2x8x1xf32> to vector<2x8x16xf32>
    %315 = arith.mulf %310, %314 : vector<2x8x16xf32>
    %316 = vector.shape_cast %267 : vector<1x16xf32> to vector<1x1x16xf32>
    %317 = vector.broadcast %316 : vector<1x1x16xf32> to vector<2x8x16xf32>
    %318 = arith.mulf %315, %317 : vector<2x8x16xf32>
    %319 = vector.shape_cast %268 : vector<1x16xf32> to vector<1x1x16xf32>
    %320 = vector.broadcast %319 : vector<1x1x16xf32> to vector<2x8x16xf32>
    %321 = arith.addf %318, %320 : vector<2x8x16xf32>
    %c408 = arith.constant 408 : index
    %c0_102 = arith.constant 0 : index
    %322 = vector.load %arg1[%c408, %c0_102] : memref<776x128xf32, #tpu.memory_space<vmem>>, vector<16x32xf32>
    %c424 = arith.constant 424 : index
    %c0_103 = arith.constant 0 : index
    %323 = vector.load %arg1[%c424, %c0_103] : memref<776x128xf32, #tpu.memory_space<vmem>>, vector<1x32xf32>
    "tpu.trace_start"() <{level = 10 : i32, message = "bli,io->blo"}> : () -> ()
    %cst_104 = arith.constant dense<0.000000e+00> : vector<2x8x32xf32>
    %324 = tpu.matmul %321, %322, %cst_104 {dimension_numbers = #tpu.dot_dimension_numbers<[2], [0], [0, 1], [1], [0, 0, 0, 1, 1, 1], [], []>} : vector<2x8x16xf32>, vector<16x32xf32>, vector<2x8x32xf32> -> vector<2x8x32xf32>
    "tpu.trace_stop"() : () -> ()
    %325 = vector.shape_cast %323 : vector<1x32xf32> to vector<1x1x32xf32>
    %326 = vector.broadcast %325 : vector<1x1x32xf32> to vector<2x8x32xf32>
    %327 = arith.addf %324, %326 : vector<2x8x32xf32>
    %cst_105 = arith.constant 0.000000e+00 : f32
    %328 = vector.broadcast %cst_105 : f32 to vector<2x8x32xf32>
    %329 = arith.maximumf %327, %328 : vector<2x8x32xf32>
    %c432 = arith.constant 432 : index
    %c0_106 = arith.constant 0 : index
    %330 = vector.load %arg1[%c432, %c0_106] : memref<776x128xf32, #tpu.memory_space<vmem>>, vector<32x96xf32>
    %c464 = arith.constant 464 : index
    %c0_107 = arith.constant 0 : index
    %331 = vector.load %arg1[%c464, %c0_107] : memref<776x128xf32, #tpu.memory_space<vmem>>, vector<1x96xf32>
    %c472 = arith.constant 472 : index
    %c0_108 = arith.constant 0 : index
    %332 = vector.load %arg1[%c472, %c0_108] : memref<776x128xf32, #tpu.memory_space<vmem>>, vector<32x32xf32>
    %c504 = arith.constant 504 : index
    %c0_109 = arith.constant 0 : index
    %333 = vector.load %arg1[%c504, %c0_109] : memref<776x128xf32, #tpu.memory_space<vmem>>, vector<1x32xf32>
    %c512 = arith.constant 512 : index
    %c0_110 = arith.constant 0 : index
    %334 = vector.load %arg1[%c512, %c0_110] : memref<776x128xf32, #tpu.memory_space<vmem>>, vector<1x32xf32>
    %c520 = arith.constant 520 : index
    %c0_111 = arith.constant 0 : index
    %335 = vector.load %arg1[%c520, %c0_111] : memref<776x128xf32, #tpu.memory_space<vmem>>, vector<1x32xf32>
    "tpu.trace_start"() <{level = 10 : i32, message = "ble,ef->blf"}> : () -> ()
    %cst_112 = arith.constant dense<0.000000e+00> : vector<2x8x96xf32>
    %336 = tpu.matmul %329, %330, %cst_112 {dimension_numbers = #tpu.dot_dimension_numbers<[2], [0], [0, 1], [1], [0, 0, 0, 1, 1, 1], [], []>} : vector<2x8x32xf32>, vector<32x96xf32>, vector<2x8x96xf32> -> vector<2x8x96xf32>
    "tpu.trace_stop"() : () -> ()
    %337 = vector.shape_cast %331 : vector<1x96xf32> to vector<1x1x96xf32>
    %338 = vector.broadcast %337 : vector<1x1x96xf32> to vector<2x8x96xf32>
    %339 = arith.addf %336, %338 : vector<2x8x96xf32>
    %340 = vector.extract_strided_slice %339 {offsets = [0, 0, 0], sizes = [2, 8, 24], strides = [1, 1, 1]} : vector<2x8x96xf32> to vector<2x8x24xf32>
    %341 = vector.extract_strided_slice %339 {offsets = [0, 0, 24], sizes = [2, 8, 24], strides = [1, 1, 1]} : vector<2x8x96xf32> to vector<2x8x24xf32>
    %342 = vector.extract_strided_slice %339 {offsets = [0, 0, 48], sizes = [2, 8, 24], strides = [1, 1, 1]} : vector<2x8x96xf32> to vector<2x8x24xf32>
    %343 = vector.extract_strided_slice %339 {offsets = [0, 0, 72], sizes = [2, 8, 24], strides = [1, 1, 1]} : vector<2x8x96xf32> to vector<2x8x24xf32>
    %344 = tpu.concatenate %340, %341, %342, %343 in 0 : vector<2x8x24xf32>, vector<2x8x24xf32>, vector<2x8x24xf32>, vector<2x8x24xf32> -> vector<8x8x24xf32>
    %345 = vector.extract_strided_slice %344 {offsets = [0, 0, 0], sizes = [8, 8, 8], strides = [1, 1, 1]} : vector<8x8x24xf32> to vector<8x8x8xf32>
    %346 = vector.extract_strided_slice %344 {offsets = [0, 0, 8], sizes = [8, 8, 8], strides = [1, 1, 1]} : vector<8x8x24xf32> to vector<8x8x8xf32>
    %347 = vector.extract_strided_slice %344 {offsets = [0, 0, 16], sizes = [8, 8, 8], strides = [1, 1, 1]} : vector<8x8x24xf32> to vector<8x8x8xf32>
    "tpu.trace_start"() <{level = 10 : i32, message = "zqd,zkd->zqk"}> : () -> ()
    %cst_113 = arith.constant dense<0.000000e+00> : vector<8x8x8xf32>
    %348 = tpu.matmul %345, %346, %cst_113 {dimension_numbers = #tpu.dot_dimension_numbers<[2], [2], [1], [1], [0, 0, 0, 1, 1, 1], [0], [0]>} : vector<8x8x8xf32>, vector<8x8x8xf32>, vector<8x8x8xf32> -> vector<8x8x8xf32>
    "tpu.trace_stop"() : () -> ()
    %cst_114 = arith.constant dense<0xFF800000> : vector<8x8xf32>
    %349 = vector.multi_reduction <maximumf>, %348, %cst_114 [2] : vector<8x8x8xf32> to vector<8x8xf32>
    %350 = vector.shape_cast %349 : vector<8x8xf32> to vector<8x8x1xf32>
    %351 = vector.broadcast %350 : vector<8x8x1xf32> to vector<8x8x8xf32>
    %352 = arith.subf %348, %351 : vector<8x8x8xf32>
    %353 = math.exp %352 : vector<8x8x8xf32>
    %cst_115 = arith.constant dense<0.000000e+00> : vector<8x8xf32>
    %354 = vector.multi_reduction <add>, %353, %cst_115 [2] : vector<8x8x8xf32> to vector<8x8xf32>
    %355 = vector.shape_cast %354 : vector<8x8xf32> to vector<8x8x1xf32>
    %356 = vector.broadcast %355 : vector<8x8x1xf32> to vector<8x8x8xf32>
    %357 = arith.divf %353, %356 : vector<8x8x8xf32>
    "tpu.trace_start"() <{level = 10 : i32, message = "zqk,zkd->zqd"}> : () -> ()
    %cst_116 = arith.constant dense<0.000000e+00> : vector<8x8x8xf32>
    %358 = tpu.matmul %357, %347, %cst_116 {dimension_numbers = #tpu.dot_dimension_numbers<[2], [1], [1], [2], [0, 0, 0, 1, 1, 2], [0], [0]>} : vector<8x8x8xf32>, vector<8x8x8xf32>, vector<8x8x8xf32> -> vector<8x8x8xf32>
    "tpu.trace_stop"() : () -> ()
    %359 = vector.extract_strided_slice %358 {offsets = [0, 0, 0], sizes = [2, 8, 8], strides = [1, 1, 1]} : vector<8x8x8xf32> to vector<2x8x8xf32>
    %360 = vector.extract_strided_slice %358 {offsets = [2, 0, 0], sizes = [2, 8, 8], strides = [1, 1, 1]} : vector<8x8x8xf32> to vector<2x8x8xf32>
    %361 = vector.extract_strided_slice %358 {offsets = [4, 0, 0], sizes = [2, 8, 8], strides = [1, 1, 1]} : vector<8x8x8xf32> to vector<2x8x8xf32>
    %362 = vector.extract_strided_slice %358 {offsets = [6, 0, 0], sizes = [2, 8, 8], strides = [1, 1, 1]} : vector<8x8x8xf32> to vector<2x8x8xf32>
    %363 = tpu.concatenate %359, %360, %361, %362 in 2 : vector<2x8x8xf32>, vector<2x8x8xf32>, vector<2x8x8xf32>, vector<2x8x8xf32> -> vector<2x8x32xf32>
    "tpu.trace_start"() <{level = 10 : i32, message = "bld,df->blf"}> : () -> ()
    %cst_117 = arith.constant dense<0.000000e+00> : vector<2x8x32xf32>
    %364 = tpu.matmul %363, %332, %cst_117 {dimension_numbers = #tpu.dot_dimension_numbers<[2], [0], [0, 1], [1], [0, 0, 0, 1, 1, 1], [], []>} : vector<2x8x32xf32>, vector<32x32xf32>, vector<2x8x32xf32> -> vector<2x8x32xf32>
    "tpu.trace_stop"() : () -> ()
    %365 = vector.shape_cast %333 : vector<1x32xf32> to vector<1x1x32xf32>
    %366 = vector.broadcast %365 : vector<1x1x32xf32> to vector<2x8x32xf32>
    %367 = arith.addf %364, %366 : vector<2x8x32xf32>
    %368 = arith.addf %329, %367 : vector<2x8x32xf32>
    %cst_118 = arith.constant dense<0.000000e+00> : vector<2x8xf32>
    %369 = vector.multi_reduction <add>, %368, %cst_118 [2] : vector<2x8x32xf32> to vector<2x8xf32>
    %370 = vector.shape_cast %369 : vector<2x8xf32> to vector<2x8x1xf32>
    %cst_119 = arith.constant 3.200000e+01 : f32
    %371 = vector.broadcast %cst_119 : f32 to vector<2x8x1xf32>
    %372 = arith.divf %370, %371 : vector<2x8x1xf32>
    %373 = arith.mulf %368, %368 : vector<2x8x32xf32>
    %cst_120 = arith.constant dense<0.000000e+00> : vector<2x8xf32>
    %374 = vector.multi_reduction <add>, %373, %cst_120 [2] : vector<2x8x32xf32> to vector<2x8xf32>
    %375 = vector.shape_cast %374 : vector<2x8xf32> to vector<2x8x1xf32>
    %cst_121 = arith.constant 3.200000e+01 : f32
    %376 = vector.broadcast %cst_121 : f32 to vector<2x8x1xf32>
    %377 = arith.divf %375, %376 : vector<2x8x1xf32>
    %378 = arith.mulf %372, %372 : vector<2x8x1xf32>
    %379 = arith.subf %377, %378 : vector<2x8x1xf32>
    %380 = vector.broadcast %372 : vector<2x8x1xf32> to vector<2x8x32xf32>
    %381 = arith.subf %368, %380 : vector<2x8x32xf32>
    %cst_122 = arith.constant 9.99999974E-6 : f32
    %382 = vector.broadcast %cst_122 : f32 to vector<2x8x1xf32>
    %383 = arith.addf %379, %382 : vector<2x8x1xf32>
    %384 = math.rsqrt %383 : vector<2x8x1xf32>
    %385 = vector.broadcast %384 : vector<2x8x1xf32> to vector<2x8x32xf32>
    %386 = arith.mulf %381, %385 : vector<2x8x32xf32>
    %387 = vector.shape_cast %334 : vector<1x32xf32> to vector<1x1x32xf32>
    %388 = vector.broadcast %387 : vector<1x1x32xf32> to vector<2x8x32xf32>
    %389 = arith.mulf %386, %388 : vector<2x8x32xf32>
    %390 = vector.shape_cast %335 : vector<1x32xf32> to vector<1x1x32xf32>
    %391 = vector.broadcast %390 : vector<1x1x32xf32> to vector<2x8x32xf32>
    %392 = arith.addf %389, %391 : vector<2x8x32xf32>
    %c8_123 = arith.constant 8 : index
    %c0_124 = arith.constant 0 : index
    %393 = vector.load %arg1[%c8_123, %c0_124] : memref<776x128xf32, #tpu.memory_space<vmem>>, vector<32x96xf32>
    %c40_125 = arith.constant 40 : index
    %c0_126 = arith.constant 0 : index
    %394 = vector.load %arg1[%c40_125, %c0_126] : memref<776x128xf32, #tpu.memory_space<vmem>>, vector<1x96xf32>
    %c48_127 = arith.constant 48 : index
    %c0_128 = arith.constant 0 : index
    %395 = vector.load %arg1[%c48_127, %c0_128] : memref<776x128xf32, #tpu.memory_space<vmem>>, vector<32x32xf32>
    %c80_129 = arith.constant 80 : index
    %c0_130 = arith.constant 0 : index
    %396 = vector.load %arg1[%c80_129, %c0_130] : memref<776x128xf32, #tpu.memory_space<vmem>>, vector<1x32xf32>
    %c88_131 = arith.constant 88 : index
    %c0_132 = arith.constant 0 : index
    %397 = vector.load %arg1[%c88_131, %c0_132] : memref<776x128xf32, #tpu.memory_space<vmem>>, vector<1x32xf32>
    %c96_133 = arith.constant 96 : index
    %c0_134 = arith.constant 0 : index
    %398 = vector.load %arg1[%c96_133, %c0_134] : memref<776x128xf32, #tpu.memory_space<vmem>>, vector<1x32xf32>
    "tpu.trace_start"() <{level = 10 : i32, message = "ble,ef->blf"}> : () -> ()
    %cst_135 = arith.constant dense<0.000000e+00> : vector<2x8x96xf32>
    %399 = tpu.matmul %392, %393, %cst_135 {dimension_numbers = #tpu.dot_dimension_numbers<[2], [0], [0, 1], [1], [0, 0, 0, 1, 1, 1], [], []>} : vector<2x8x32xf32>, vector<32x96xf32>, vector<2x8x96xf32> -> vector<2x8x96xf32>
    "tpu.trace_stop"() : () -> ()
    %400 = vector.shape_cast %394 : vector<1x96xf32> to vector<1x1x96xf32>
    %401 = vector.broadcast %400 : vector<1x1x96xf32> to vector<2x8x96xf32>
    %402 = arith.addf %399, %401 : vector<2x8x96xf32>
    %403 = vector.extract_strided_slice %402 {offsets = [0, 0, 0], sizes = [2, 8, 24], strides = [1, 1, 1]} : vector<2x8x96xf32> to vector<2x8x24xf32>
    %404 = vector.extract_strided_slice %402 {offsets = [0, 0, 24], sizes = [2, 8, 24], strides = [1, 1, 1]} : vector<2x8x96xf32> to vector<2x8x24xf32>
    %405 = vector.extract_strided_slice %402 {offsets = [0, 0, 48], sizes = [2, 8, 24], strides = [1, 1, 1]} : vector<2x8x96xf32> to vector<2x8x24xf32>
    %406 = vector.extract_strided_slice %402 {offsets = [0, 0, 72], sizes = [2, 8, 24], strides = [1, 1, 1]} : vector<2x8x96xf32> to vector<2x8x24xf32>
    %407 = tpu.concatenate %403, %404, %405, %406 in 0 : vector<2x8x24xf32>, vector<2x8x24xf32>, vector<2x8x24xf32>, vector<2x8x24xf32> -> vector<8x8x24xf32>
    %408 = vector.extract_strided_slice %407 {offsets = [0, 0, 0], sizes = [8, 8, 8], strides = [1, 1, 1]} : vector<8x8x24xf32> to vector<8x8x8xf32>
    %409 = vector.extract_strided_slice %407 {offsets = [0, 0, 8], sizes = [8, 8, 8], strides = [1, 1, 1]} : vector<8x8x24xf32> to vector<8x8x8xf32>
    %410 = vector.extract_strided_slice %407 {offsets = [0, 0, 16], sizes = [8, 8, 8], strides = [1, 1, 1]} : vector<8x8x24xf32> to vector<8x8x8xf32>
    "tpu.trace_start"() <{level = 10 : i32, message = "zqd,zkd->zqk"}> : () -> ()
    %cst_136 = arith.constant dense<0.000000e+00> : vector<8x8x8xf32>
    %411 = tpu.matmul %408, %409, %cst_136 {dimension_numbers = #tpu.dot_dimension_numbers<[2], [2], [1], [1], [0, 0, 0, 1, 1, 1], [0], [0]>} : vector<8x8x8xf32>, vector<8x8x8xf32>, vector<8x8x8xf32> -> vector<8x8x8xf32>
    "tpu.trace_stop"() : () -> ()
    %cst_137 = arith.constant dense<0xFF800000> : vector<8x8xf32>
    %412 = vector.multi_reduction <maximumf>, %411, %cst_137 [2] : vector<8x8x8xf32> to vector<8x8xf32>
    %413 = vector.shape_cast %412 : vector<8x8xf32> to vector<8x8x1xf32>
    %414 = vector.broadcast %413 : vector<8x8x1xf32> to vector<8x8x8xf32>
    %415 = arith.subf %411, %414 : vector<8x8x8xf32>
    %416 = math.exp %415 : vector<8x8x8xf32>
    %cst_138 = arith.constant dense<0.000000e+00> : vector<8x8xf32>
    %417 = vector.multi_reduction <add>, %416, %cst_138 [2] : vector<8x8x8xf32> to vector<8x8xf32>
    %418 = vector.shape_cast %417 : vector<8x8xf32> to vector<8x8x1xf32>
    %419 = vector.broadcast %418 : vector<8x8x1xf32> to vector<8x8x8xf32>
    %420 = arith.divf %416, %419 : vector<8x8x8xf32>
    "tpu.trace_start"() <{level = 10 : i32, message = "zqk,zkd->zqd"}> : () -> ()
    %cst_139 = arith.constant dense<0.000000e+00> : vector<8x8x8xf32>
    %421 = tpu.matmul %420, %410, %cst_139 {dimension_numbers = #tpu.dot_dimension_numbers<[2], [1], [1], [2], [0, 0, 0, 1, 1, 2], [0], [0]>} : vector<8x8x8xf32>, vector<8x8x8xf32>, vector<8x8x8xf32> -> vector<8x8x8xf32>
    "tpu.trace_stop"() : () -> ()
    %422 = vector.extract_strided_slice %421 {offsets = [0, 0, 0], sizes = [2, 8, 8], strides = [1, 1, 1]} : vector<8x8x8xf32> to vector<2x8x8xf32>
    %423 = vector.extract_strided_slice %421 {offsets = [2, 0, 0], sizes = [2, 8, 8], strides = [1, 1, 1]} : vector<8x8x8xf32> to vector<2x8x8xf32>
    %424 = vector.extract_strided_slice %421 {offsets = [4, 0, 0], sizes = [2, 8, 8], strides = [1, 1, 1]} : vector<8x8x8xf32> to vector<2x8x8xf32>
    %425 = vector.extract_strided_slice %421 {offsets = [6, 0, 0], sizes = [2, 8, 8], strides = [1, 1, 1]} : vector<8x8x8xf32> to vector<2x8x8xf32>
    %426 = tpu.concatenate %422, %423, %424, %425 in 2 : vector<2x8x8xf32>, vector<2x8x8xf32>, vector<2x8x8xf32>, vector<2x8x8xf32> -> vector<2x8x32xf32>
    "tpu.trace_start"() <{level = 10 : i32, message = "bld,df->blf"}> : () -> ()
    %cst_140 = arith.constant dense<0.000000e+00> : vector<2x8x32xf32>
    %427 = tpu.matmul %426, %395, %cst_140 {dimension_numbers = #tpu.dot_dimension_numbers<[2], [0], [0, 1], [1], [0, 0, 0, 1, 1, 1], [], []>} : vector<2x8x32xf32>, vector<32x32xf32>, vector<2x8x32xf32> -> vector<2x8x32xf32>
    "tpu.trace_stop"() : () -> ()
    %428 = vector.shape_cast %396 : vector<1x32xf32> to vector<1x1x32xf32>
    %429 = vector.broadcast %428 : vector<1x1x32xf32> to vector<2x8x32xf32>
    %430 = arith.addf %427, %429 : vector<2x8x32xf32>
    %431 = arith.addf %392, %430 : vector<2x8x32xf32>
    %cst_141 = arith.constant dense<0.000000e+00> : vector<2x8xf32>
    %432 = vector.multi_reduction <add>, %431, %cst_141 [2] : vector<2x8x32xf32> to vector<2x8xf32>
    %433 = vector.shape_cast %432 : vector<2x8xf32> to vector<2x8x1xf32>
    %cst_142 = arith.constant 3.200000e+01 : f32
    %434 = vector.broadcast %cst_142 : f32 to vector<2x8x1xf32>
    %435 = arith.divf %433, %434 : vector<2x8x1xf32>
    %436 = arith.mulf %431, %431 : vector<2x8x32xf32>
    %cst_143 = arith.constant dense<0.000000e+00> : vector<2x8xf32>
    %437 = vector.multi_reduction <add>, %436, %cst_143 [2] : vector<2x8x32xf32> to vector<2x8xf32>
    %438 = vector.shape_cast %437 : vector<2x8xf32> to vector<2x8x1xf32>
    %cst_144 = arith.constant 3.200000e+01 : f32
    %439 = vector.broadcast %cst_144 : f32 to vector<2x8x1xf32>
    %440 = arith.divf %438, %439 : vector<2x8x1xf32>
    %441 = arith.mulf %435, %435 : vector<2x8x1xf32>
    %442 = arith.subf %440, %441 : vector<2x8x1xf32>
    %443 = vector.broadcast %435 : vector<2x8x1xf32> to vector<2x8x32xf32>
    %444 = arith.subf %431, %443 : vector<2x8x32xf32>
    %cst_145 = arith.constant 9.99999974E-6 : f32
    %445 = vector.broadcast %cst_145 : f32 to vector<2x8x1xf32>
    %446 = arith.addf %442, %445 : vector<2x8x1xf32>
    %447 = math.rsqrt %446 : vector<2x8x1xf32>
    %448 = vector.broadcast %447 : vector<2x8x1xf32> to vector<2x8x32xf32>
    %449 = arith.mulf %444, %448 : vector<2x8x32xf32>
    %450 = vector.shape_cast %397 : vector<1x32xf32> to vector<1x1x32xf32>
    %451 = vector.broadcast %450 : vector<1x1x32xf32> to vector<2x8x32xf32>
    %452 = arith.mulf %449, %451 : vector<2x8x32xf32>
    %453 = vector.shape_cast %398 : vector<1x32xf32> to vector<1x1x32xf32>
    %454 = vector.broadcast %453 : vector<1x1x32xf32> to vector<2x8x32xf32>
    %455 = arith.addf %452, %454 : vector<2x8x32xf32>
    %c104_146 = arith.constant 104 : index
    %c0_147 = arith.constant 0 : index
    %456 = vector.load %arg1[%c104_146, %c0_147] : memref<776x128xf32, #tpu.memory_space<vmem>>, vector<32x16xf32>
    %c136_148 = arith.constant 136 : index
    %c0_149 = arith.constant 0 : index
    %457 = vector.load %arg1[%c136_148, %c0_149] : memref<776x128xf32, #tpu.memory_space<vmem>>, vector<1x16xf32>
    "tpu.trace_start"() <{level = 10 : i32, message = "bli,io->blo"}> : () -> ()
    %cst_150 = arith.constant dense<0.000000e+00> : vector<2x8x16xf32>
    %458 = tpu.matmul %455, %456, %cst_150 {dimension_numbers = #tpu.dot_dimension_numbers<[2], [0], [0, 1], [1], [0, 0, 0, 1, 1, 1], [], []>} : vector<2x8x32xf32>, vector<32x16xf32>, vector<2x8x16xf32> -> vector<2x8x16xf32>
    "tpu.trace_stop"() : () -> ()
    %459 = vector.shape_cast %457 : vector<1x16xf32> to vector<1x1x16xf32>
    %460 = vector.broadcast %459 : vector<1x1x16xf32> to vector<2x8x16xf32>
    %461 = arith.addf %458, %460 : vector<2x8x16xf32>
    %cst_151 = arith.constant 0.000000e+00 : f32
    %462 = vector.broadcast %cst_151 : f32 to vector<2x8x16xf32>
    %463 = arith.maximumf %461, %462 : vector<2x8x16xf32>
    %c144_152 = arith.constant 144 : index
    %c0_153 = arith.constant 0 : index
    %464 = vector.load %arg1[%c144_152, %c0_153] : memref<776x128xf32, #tpu.memory_space<vmem>>, vector<16x48xf32>
    %c160_154 = arith.constant 160 : index
    %c0_155 = arith.constant 0 : index
    %465 = vector.load %arg1[%c160_154, %c0_155] : memref<776x128xf32, #tpu.memory_space<vmem>>, vector<1x48xf32>
    %c168_156 = arith.constant 168 : index
    %c0_157 = arith.constant 0 : index
    %466 = vector.load %arg1[%c168_156, %c0_157] : memref<776x128xf32, #tpu.memory_space<vmem>>, vector<16x16xf32>
    %c184_158 = arith.constant 184 : index
    %c0_159 = arith.constant 0 : index
    %467 = vector.load %arg1[%c184_158, %c0_159] : memref<776x128xf32, #tpu.memory_space<vmem>>, vector<1x16xf32>
    %c192_160 = arith.constant 192 : index
    %c0_161 = arith.constant 0 : index
    %468 = vector.load %arg1[%c192_160, %c0_161] : memref<776x128xf32, #tpu.memory_space<vmem>>, vector<1x16xf32>
    %c200_162 = arith.constant 200 : index
    %c0_163 = arith.constant 0 : index
    %469 = vector.load %arg1[%c200_162, %c0_163] : memref<776x128xf32, #tpu.memory_space<vmem>>, vector<1x16xf32>
    "tpu.trace_start"() <{level = 10 : i32, message = "ble,ef->blf"}> : () -> ()
    %cst_164 = arith.constant dense<0.000000e+00> : vector<2x8x48xf32>
    %470 = tpu.matmul %463, %464, %cst_164 {dimension_numbers = #tpu.dot_dimension_numbers<[2], [0], [0, 1], [1], [0, 0, 0, 1, 1, 1], [], []>} : vector<2x8x16xf32>, vector<16x48xf32>, vector<2x8x48xf32> -> vector<2x8x48xf32>
    "tpu.trace_stop"() : () -> ()
    %471 = vector.shape_cast %465 : vector<1x48xf32> to vector<1x1x48xf32>
    %472 = vector.broadcast %471 : vector<1x1x48xf32> to vector<2x8x48xf32>
    %473 = arith.addf %470, %472 : vector<2x8x48xf32>
    %474 = vector.extract_strided_slice %473 {offsets = [0, 0, 0], sizes = [2, 8, 24], strides = [1, 1, 1]} : vector<2x8x48xf32> to vector<2x8x24xf32>
    %475 = vector.extract_strided_slice %473 {offsets = [0, 0, 24], sizes = [2, 8, 24], strides = [1, 1, 1]} : vector<2x8x48xf32> to vector<2x8x24xf32>
    %476 = tpu.concatenate %474, %475 in 0 : vector<2x8x24xf32>, vector<2x8x24xf32> -> vector<4x8x24xf32>
    %477 = vector.extract_strided_slice %476 {offsets = [0, 0, 0], sizes = [4, 8, 8], strides = [1, 1, 1]} : vector<4x8x24xf32> to vector<4x8x8xf32>
    %478 = vector.extract_strided_slice %476 {offsets = [0, 0, 8], sizes = [4, 8, 8], strides = [1, 1, 1]} : vector<4x8x24xf32> to vector<4x8x8xf32>
    %479 = vector.extract_strided_slice %476 {offsets = [0, 0, 16], sizes = [4, 8, 8], strides = [1, 1, 1]} : vector<4x8x24xf32> to vector<4x8x8xf32>
    "tpu.trace_start"() <{level = 10 : i32, message = "zqd,zkd->zqk"}> : () -> ()
    %cst_165 = arith.constant dense<0.000000e+00> : vector<4x8x8xf32>
    %480 = tpu.matmul %477, %478, %cst_165 {dimension_numbers = #tpu.dot_dimension_numbers<[2], [2], [1], [1], [0, 0, 0, 1, 1, 1], [0], [0]>} : vector<4x8x8xf32>, vector<4x8x8xf32>, vector<4x8x8xf32> -> vector<4x8x8xf32>
    "tpu.trace_stop"() : () -> ()
    %cst_166 = arith.constant dense<0xFF800000> : vector<4x8xf32>
    %481 = vector.multi_reduction <maximumf>, %480, %cst_166 [2] : vector<4x8x8xf32> to vector<4x8xf32>
    %482 = vector.shape_cast %481 : vector<4x8xf32> to vector<4x8x1xf32>
    %483 = vector.broadcast %482 : vector<4x8x1xf32> to vector<4x8x8xf32>
    %484 = arith.subf %480, %483 : vector<4x8x8xf32>
    %485 = math.exp %484 : vector<4x8x8xf32>
    %cst_167 = arith.constant dense<0.000000e+00> : vector<4x8xf32>
    %486 = vector.multi_reduction <add>, %485, %cst_167 [2] : vector<4x8x8xf32> to vector<4x8xf32>
    %487 = vector.shape_cast %486 : vector<4x8xf32> to vector<4x8x1xf32>
    %488 = vector.broadcast %487 : vector<4x8x1xf32> to vector<4x8x8xf32>
    %489 = arith.divf %485, %488 : vector<4x8x8xf32>
    "tpu.trace_start"() <{level = 10 : i32, message = "zqk,zkd->zqd"}> : () -> ()
    %cst_168 = arith.constant dense<0.000000e+00> : vector<4x8x8xf32>
    %490 = tpu.matmul %489, %479, %cst_168 {dimension_numbers = #tpu.dot_dimension_numbers<[2], [1], [1], [2], [0, 0, 0, 1, 1, 2], [0], [0]>} : vector<4x8x8xf32>, vector<4x8x8xf32>, vector<4x8x8xf32> -> vector<4x8x8xf32>
    "tpu.trace_stop"() : () -> ()
    %491 = vector.extract_strided_slice %490 {offsets = [0, 0, 0], sizes = [2, 8, 8], strides = [1, 1, 1]} : vector<4x8x8xf32> to vector<2x8x8xf32>
    %492 = vector.extract_strided_slice %490 {offsets = [2, 0, 0], sizes = [2, 8, 8], strides = [1, 1, 1]} : vector<4x8x8xf32> to vector<2x8x8xf32>
    %493 = tpu.concatenate %491, %492 in 2 : vector<2x8x8xf32>, vector<2x8x8xf32> -> vector<2x8x16xf32>
    "tpu.trace_start"() <{level = 10 : i32, message = "bld,df->blf"}> : () -> ()
    %cst_169 = arith.constant dense<0.000000e+00> : vector<2x8x16xf32>
    %494 = tpu.matmul %493, %466, %cst_169 {dimension_numbers = #tpu.dot_dimension_numbers<[2], [0], [0, 1], [1], [0, 0, 0, 1, 1, 1], [], []>} : vector<2x8x16xf32>, vector<16x16xf32>, vector<2x8x16xf32> -> vector<2x8x16xf32>
    "tpu.trace_stop"() : () -> ()
    %495 = vector.shape_cast %467 : vector<1x16xf32> to vector<1x1x16xf32>
    %496 = vector.broadcast %495 : vector<1x1x16xf32> to vector<2x8x16xf32>
    %497 = arith.addf %494, %496 : vector<2x8x16xf32>
    %498 = arith.addf %463, %497 : vector<2x8x16xf32>
    %cst_170 = arith.constant dense<0.000000e+00> : vector<2x8xf32>
    %499 = vector.multi_reduction <add>, %498, %cst_170 [2] : vector<2x8x16xf32> to vector<2x8xf32>
    %500 = vector.shape_cast %499 : vector<2x8xf32> to vector<2x8x1xf32>
    %cst_171 = arith.constant 1.600000e+01 : f32
    %501 = vector.broadcast %cst_171 : f32 to vector<2x8x1xf32>
    %502 = arith.divf %500, %501 : vector<2x8x1xf32>
    %503 = arith.mulf %498, %498 : vector<2x8x16xf32>
    %cst_172 = arith.constant dense<0.000000e+00> : vector<2x8xf32>
    %504 = vector.multi_reduction <add>, %503, %cst_172 [2] : vector<2x8x16xf32> to vector<2x8xf32>
    %505 = vector.shape_cast %504 : vector<2x8xf32> to vector<2x8x1xf32>
    %cst_173 = arith.constant 1.600000e+01 : f32
    %506 = vector.broadcast %cst_173 : f32 to vector<2x8x1xf32>
    %507 = arith.divf %505, %506 : vector<2x8x1xf32>
    %508 = arith.mulf %502, %502 : vector<2x8x1xf32>
    %509 = arith.subf %507, %508 : vector<2x8x1xf32>
    %510 = vector.broadcast %502 : vector<2x8x1xf32> to vector<2x8x16xf32>
    %511 = arith.subf %498, %510 : vector<2x8x16xf32>
    %cst_174 = arith.constant 9.99999974E-6 : f32
    %512 = vector.broadcast %cst_174 : f32 to vector<2x8x1xf32>
    %513 = arith.addf %509, %512 : vector<2x8x1xf32>
    %514 = math.rsqrt %513 : vector<2x8x1xf32>
    %515 = vector.broadcast %514 : vector<2x8x1xf32> to vector<2x8x16xf32>
    %516 = arith.mulf %511, %515 : vector<2x8x16xf32>
    %517 = vector.shape_cast %468 : vector<1x16xf32> to vector<1x1x16xf32>
    %518 = vector.broadcast %517 : vector<1x1x16xf32> to vector<2x8x16xf32>
    %519 = arith.mulf %516, %518 : vector<2x8x16xf32>
    %520 = vector.shape_cast %469 : vector<1x16xf32> to vector<1x1x16xf32>
    %521 = vector.broadcast %520 : vector<1x1x16xf32> to vector<2x8x16xf32>
    %522 = arith.addf %519, %521 : vector<2x8x16xf32>
    %c208_175 = arith.constant 208 : index
    %c0_176 = arith.constant 0 : index
    %523 = vector.load %arg1[%c208_175, %c0_176] : memref<776x128xf32, #tpu.memory_space<vmem>>, vector<16x8xf32>
    %c224_177 = arith.constant 224 : index
    %c0_178 = arith.constant 0 : index
    %524 = vector.load %arg1[%c224_177, %c0_178] : memref<776x128xf32, #tpu.memory_space<vmem>>, vector<1x8xf32>
    "tpu.trace_start"() <{level = 10 : i32, message = "bli,io->blo"}> : () -> ()
    %cst_179 = arith.constant dense<0.000000e+00> : vector<2x8x8xf32>
    %525 = tpu.matmul %522, %523, %cst_179 {dimension_numbers = #tpu.dot_dimension_numbers<[2], [0], [0, 1], [1], [0, 0, 0, 1, 1, 1], [], []>} : vector<2x8x16xf32>, vector<16x8xf32>, vector<2x8x8xf32> -> vector<2x8x8xf32>
    "tpu.trace_stop"() : () -> ()
    %526 = vector.shape_cast %524 : vector<1x8xf32> to vector<1x1x8xf32>
    %527 = vector.broadcast %526 : vector<1x1x8xf32> to vector<2x8x8xf32>
    %528 = arith.addf %525, %527 : vector<2x8x8xf32>
    %cst_180 = arith.constant 0.000000e+00 : f32
    %529 = vector.broadcast %cst_180 : f32 to vector<2x8x8xf32>
    %530 = arith.maximumf %528, %529 : vector<2x8x8xf32>
    %c232_181 = arith.constant 232 : index
    %c0_182 = arith.constant 0 : index
    %531 = vector.load %arg1[%c232_181, %c0_182] : memref<776x128xf32, #tpu.memory_space<vmem>>, vector<8x24xf32>
    %c240_183 = arith.constant 240 : index
    %c0_184 = arith.constant 0 : index
    %532 = vector.load %arg1[%c240_183, %c0_184] : memref<776x128xf32, #tpu.memory_space<vmem>>, vector<1x24xf32>
    %c248_185 = arith.constant 248 : index
    %c0_186 = arith.constant 0 : index
    %533 = vector.load %arg1[%c248_185, %c0_186] : memref<776x128xf32, #tpu.memory_space<vmem>>, vector<8x8xf32>
    %c256_187 = arith.constant 256 : index
    %c0_188 = arith.constant 0 : index
    %534 = vector.load %arg1[%c256_187, %c0_188] : memref<776x128xf32, #tpu.memory_space<vmem>>, vector<1x8xf32>
    %c264_189 = arith.constant 264 : index
    %c0_190 = arith.constant 0 : index
    %535 = vector.load %arg1[%c264_189, %c0_190] : memref<776x128xf32, #tpu.memory_space<vmem>>, vector<1x8xf32>
    %c272_191 = arith.constant 272 : index
    %c0_192 = arith.constant 0 : index
    %536 = vector.load %arg1[%c272_191, %c0_192] : memref<776x128xf32, #tpu.memory_space<vmem>>, vector<1x8xf32>
    "tpu.trace_start"() <{level = 10 : i32, message = "ble,ef->blf"}> : () -> ()
    %cst_193 = arith.constant dense<0.000000e+00> : vector<2x8x24xf32>
    %537 = tpu.matmul %530, %531, %cst_193 {dimension_numbers = #tpu.dot_dimension_numbers<[2], [0], [0, 1], [1], [0, 0, 0, 1, 1, 1], [], []>} : vector<2x8x8xf32>, vector<8x24xf32>, vector<2x8x24xf32> -> vector<2x8x24xf32>
    "tpu.trace_stop"() : () -> ()
    %538 = vector.shape_cast %532 : vector<1x24xf32> to vector<1x1x24xf32>
    %539 = vector.broadcast %538 : vector<1x1x24xf32> to vector<2x8x24xf32>
    %540 = arith.addf %537, %539 : vector<2x8x24xf32>
    %541 = vector.extract_strided_slice %540 {offsets = [0, 0, 0], sizes = [2, 8, 8], strides = [1, 1, 1]} : vector<2x8x24xf32> to vector<2x8x8xf32>
    %542 = vector.extract_strided_slice %540 {offsets = [0, 0, 8], sizes = [2, 8, 8], strides = [1, 1, 1]} : vector<2x8x24xf32> to vector<2x8x8xf32>
    %543 = vector.extract_strided_slice %540 {offsets = [0, 0, 16], sizes = [2, 8, 8], strides = [1, 1, 1]} : vector<2x8x24xf32> to vector<2x8x8xf32>
    "tpu.trace_start"() <{level = 10 : i32, message = "zqd,zkd->zqk"}> : () -> ()
    %cst_194 = arith.constant dense<0.000000e+00> : vector<2x8x8xf32>
    %544 = tpu.matmul %541, %542, %cst_194 {dimension_numbers = #tpu.dot_dimension_numbers<[2], [2], [1], [1], [0, 0, 0, 1, 1, 1], [0], [0]>} : vector<2x8x8xf32>, vector<2x8x8xf32>, vector<2x8x8xf32> -> vector<2x8x8xf32>
    "tpu.trace_stop"() : () -> ()
    %cst_195 = arith.constant dense<0xFF800000> : vector<2x8xf32>
    %545 = vector.multi_reduction <maximumf>, %544, %cst_195 [2] : vector<2x8x8xf32> to vector<2x8xf32>
    %546 = vector.shape_cast %545 : vector<2x8xf32> to vector<2x8x1xf32>
    %547 = vector.broadcast %546 : vector<2x8x1xf32> to vector<2x8x8xf32>
    %548 = arith.subf %544, %547 : vector<2x8x8xf32>
    %549 = math.exp %548 : vector<2x8x8xf32>
    %cst_196 = arith.constant dense<0.000000e+00> : vector<2x8xf32>
    %550 = vector.multi_reduction <add>, %549, %cst_196 [2] : vector<2x8x8xf32> to vector<2x8xf32>
    %551 = vector.shape_cast %550 : vector<2x8xf32> to vector<2x8x1xf32>
    %552 = vector.broadcast %551 : vector<2x8x1xf32> to vector<2x8x8xf32>
    %553 = arith.divf %549, %552 : vector<2x8x8xf32>
    "tpu.trace_start"() <{level = 10 : i32, message = "zqk,zkd->zqd"}> : () -> ()
    %cst_197 = arith.constant dense<0.000000e+00> : vector<2x8x8xf32>
    %554 = tpu.matmul %553, %543, %cst_197 {dimension_numbers = #tpu.dot_dimension_numbers<[2], [1], [1], [2], [0, 0, 0, 1, 1, 2], [0], [0]>} : vector<2x8x8xf32>, vector<2x8x8xf32>, vector<2x8x8xf32> -> vector<2x8x8xf32>
    "tpu.trace_stop"() : () -> ()
    "tpu.trace_start"() <{level = 10 : i32, message = "bld,df->blf"}> : () -> ()
    %cst_198 = arith.constant dense<0.000000e+00> : vector<2x8x8xf32>
    %555 = tpu.matmul %554, %533, %cst_198 {dimension_numbers = #tpu.dot_dimension_numbers<[2], [0], [0, 1], [1], [0, 0, 0, 1, 1, 1], [], []>} : vector<2x8x8xf32>, vector<8x8xf32>, vector<2x8x8xf32> -> vector<2x8x8xf32>
    "tpu.trace_stop"() : () -> ()
    %556 = vector.shape_cast %534 : vector<1x8xf32> to vector<1x1x8xf32>
    %557 = vector.broadcast %556 : vector<1x1x8xf32> to vector<2x8x8xf32>
    %558 = arith.addf %555, %557 : vector<2x8x8xf32>
    %559 = arith.addf %530, %558 : vector<2x8x8xf32>
    %cst_199 = arith.constant dense<0.000000e+00> : vector<2x8xf32>
    %560 = vector.multi_reduction <add>, %559, %cst_199 [2] : vector<2x8x8xf32> to vector<2x8xf32>
    %561 = vector.shape_cast %560 : vector<2x8xf32> to vector<2x8x1xf32>
    %cst_200 = arith.constant 8.000000e+00 : f32
    %562 = vector.broadcast %cst_200 : f32 to vector<2x8x1xf32>
    %563 = arith.divf %561, %562 : vector<2x8x1xf32>
    %564 = arith.mulf %559, %559 : vector<2x8x8xf32>
    %cst_201 = arith.constant dense<0.000000e+00> : vector<2x8xf32>
    %565 = vector.multi_reduction <add>, %564, %cst_201 [2] : vector<2x8x8xf32> to vector<2x8xf32>
    %566 = vector.shape_cast %565 : vector<2x8xf32> to vector<2x8x1xf32>
    %cst_202 = arith.constant 8.000000e+00 : f32
    %567 = vector.broadcast %cst_202 : f32 to vector<2x8x1xf32>
    %568 = arith.divf %566, %567 : vector<2x8x1xf32>
    %569 = arith.mulf %563, %563 : vector<2x8x1xf32>
    %570 = arith.subf %568, %569 : vector<2x8x1xf32>
    %571 = vector.broadcast %563 : vector<2x8x1xf32> to vector<2x8x8xf32>
    %572 = arith.subf %559, %571 : vector<2x8x8xf32>
    %cst_203 = arith.constant 9.99999974E-6 : f32
    %573 = vector.broadcast %cst_203 : f32 to vector<2x8x1xf32>
    %574 = arith.addf %570, %573 : vector<2x8x1xf32>
    %575 = math.rsqrt %574 : vector<2x8x1xf32>
    %576 = vector.broadcast %575 : vector<2x8x1xf32> to vector<2x8x8xf32>
    %577 = arith.mulf %572, %576 : vector<2x8x8xf32>
    %578 = vector.shape_cast %535 : vector<1x8xf32> to vector<1x1x8xf32>
    %579 = vector.broadcast %578 : vector<1x1x8xf32> to vector<2x8x8xf32>
    %580 = arith.mulf %577, %579 : vector<2x8x8xf32>
    %581 = vector.shape_cast %536 : vector<1x8xf32> to vector<1x1x8xf32>
    %582 = vector.broadcast %581 : vector<1x1x8xf32> to vector<2x8x8xf32>
    %583 = arith.addf %580, %582 : vector<2x8x8xf32>
    %c528 = arith.constant 528 : index
    %c0_204 = arith.constant 0 : index
    %584 = vector.load %arg1[%c528, %c0_204] : memref<776x128xf32, #tpu.memory_space<vmem>>, vector<8x24xf32>
    %c536 = arith.constant 536 : index
    %c0_205 = arith.constant 0 : index
    %585 = vector.load %arg1[%c536, %c0_205] : memref<776x128xf32, #tpu.memory_space<vmem>>, vector<1x24xf32>
    %c544 = arith.constant 544 : index
    %c0_206 = arith.constant 0 : index
    %586 = vector.load %arg1[%c544, %c0_206] : memref<776x128xf32, #tpu.memory_space<vmem>>, vector<8x8xf32>
    %c552 = arith.constant 552 : index
    %c0_207 = arith.constant 0 : index
    %587 = vector.load %arg1[%c552, %c0_207] : memref<776x128xf32, #tpu.memory_space<vmem>>, vector<1x8xf32>
    %c560 = arith.constant 560 : index
    %c0_208 = arith.constant 0 : index
    %588 = vector.load %arg1[%c560, %c0_208] : memref<776x128xf32, #tpu.memory_space<vmem>>, vector<1x8xf32>
    %c568 = arith.constant 568 : index
    %c0_209 = arith.constant 0 : index
    %589 = vector.load %arg1[%c568, %c0_209] : memref<776x128xf32, #tpu.memory_space<vmem>>, vector<1x8xf32>
    "tpu.trace_start"() <{level = 10 : i32, message = "ble,ef->blf"}> : () -> ()
    %cst_210 = arith.constant dense<0.000000e+00> : vector<2x8x24xf32>
    %590 = tpu.matmul %583, %584, %cst_210 {dimension_numbers = #tpu.dot_dimension_numbers<[2], [0], [0, 1], [1], [0, 0, 0, 1, 1, 1], [], []>} : vector<2x8x8xf32>, vector<8x24xf32>, vector<2x8x24xf32> -> vector<2x8x24xf32>
    "tpu.trace_stop"() : () -> ()
    %591 = vector.shape_cast %585 : vector<1x24xf32> to vector<1x1x24xf32>
    %592 = vector.broadcast %591 : vector<1x1x24xf32> to vector<2x8x24xf32>
    %593 = arith.addf %590, %592 : vector<2x8x24xf32>
    %594 = vector.extract_strided_slice %593 {offsets = [0, 0, 0], sizes = [2, 8, 8], strides = [1, 1, 1]} : vector<2x8x24xf32> to vector<2x8x8xf32>
    %595 = vector.extract_strided_slice %593 {offsets = [0, 0, 8], sizes = [2, 8, 8], strides = [1, 1, 1]} : vector<2x8x24xf32> to vector<2x8x8xf32>
    %596 = vector.extract_strided_slice %593 {offsets = [0, 0, 16], sizes = [2, 8, 8], strides = [1, 1, 1]} : vector<2x8x24xf32> to vector<2x8x8xf32>
    "tpu.trace_start"() <{level = 10 : i32, message = "zqd,zkd->zqk"}> : () -> ()
    %cst_211 = arith.constant dense<0.000000e+00> : vector<2x8x8xf32>
    %597 = tpu.matmul %594, %595, %cst_211 {dimension_numbers = #tpu.dot_dimension_numbers<[2], [2], [1], [1], [0, 0, 0, 1, 1, 1], [0], [0]>} : vector<2x8x8xf32>, vector<2x8x8xf32>, vector<2x8x8xf32> -> vector<2x8x8xf32>
    "tpu.trace_stop"() : () -> ()
    %cst_212 = arith.constant dense<0xFF800000> : vector<2x8xf32>
    %598 = vector.multi_reduction <maximumf>, %597, %cst_212 [2] : vector<2x8x8xf32> to vector<2x8xf32>
    %599 = vector.shape_cast %598 : vector<2x8xf32> to vector<2x8x1xf32>
    %600 = vector.broadcast %599 : vector<2x8x1xf32> to vector<2x8x8xf32>
    %601 = arith.subf %597, %600 : vector<2x8x8xf32>
    %602 = math.exp %601 : vector<2x8x8xf32>
    %cst_213 = arith.constant dense<0.000000e+00> : vector<2x8xf32>
    %603 = vector.multi_reduction <add>, %602, %cst_213 [2] : vector<2x8x8xf32> to vector<2x8xf32>
    %604 = vector.shape_cast %603 : vector<2x8xf32> to vector<2x8x1xf32>
    %605 = vector.broadcast %604 : vector<2x8x1xf32> to vector<2x8x8xf32>
    %606 = arith.divf %602, %605 : vector<2x8x8xf32>
    "tpu.trace_start"() <{level = 10 : i32, message = "zqk,zkd->zqd"}> : () -> ()
    %cst_214 = arith.constant dense<0.000000e+00> : vector<2x8x8xf32>
    %607 = tpu.matmul %606, %596, %cst_214 {dimension_numbers = #tpu.dot_dimension_numbers<[2], [1], [1], [2], [0, 0, 0, 1, 1, 2], [0], [0]>} : vector<2x8x8xf32>, vector<2x8x8xf32>, vector<2x8x8xf32> -> vector<2x8x8xf32>
    "tpu.trace_stop"() : () -> ()
    "tpu.trace_start"() <{level = 10 : i32, message = "bld,df->blf"}> : () -> ()
    %cst_215 = arith.constant dense<0.000000e+00> : vector<2x8x8xf32>
    %608 = tpu.matmul %607, %586, %cst_215 {dimension_numbers = #tpu.dot_dimension_numbers<[2], [0], [0, 1], [1], [0, 0, 0, 1, 1, 1], [], []>} : vector<2x8x8xf32>, vector<8x8xf32>, vector<2x8x8xf32> -> vector<2x8x8xf32>
    "tpu.trace_stop"() : () -> ()
    %609 = vector.shape_cast %587 : vector<1x8xf32> to vector<1x1x8xf32>
    %610 = vector.broadcast %609 : vector<1x1x8xf32> to vector<2x8x8xf32>
    %611 = arith.addf %608, %610 : vector<2x8x8xf32>
    %612 = arith.addf %583, %611 : vector<2x8x8xf32>
    %cst_216 = arith.constant dense<0.000000e+00> : vector<2x8xf32>
    %613 = vector.multi_reduction <add>, %612, %cst_216 [2] : vector<2x8x8xf32> to vector<2x8xf32>
    %614 = vector.shape_cast %613 : vector<2x8xf32> to vector<2x8x1xf32>
    %cst_217 = arith.constant 8.000000e+00 : f32
    %615 = vector.broadcast %cst_217 : f32 to vector<2x8x1xf32>
    %616 = arith.divf %614, %615 : vector<2x8x1xf32>
    %617 = arith.mulf %612, %612 : vector<2x8x8xf32>
    %cst_218 = arith.constant dense<0.000000e+00> : vector<2x8xf32>
    %618 = vector.multi_reduction <add>, %617, %cst_218 [2] : vector<2x8x8xf32> to vector<2x8xf32>
    %619 = vector.shape_cast %618 : vector<2x8xf32> to vector<2x8x1xf32>
    %cst_219 = arith.constant 8.000000e+00 : f32
    %620 = vector.broadcast %cst_219 : f32 to vector<2x8x1xf32>
    %621 = arith.divf %619, %620 : vector<2x8x1xf32>
    %622 = arith.mulf %616, %616 : vector<2x8x1xf32>
    %623 = arith.subf %621, %622 : vector<2x8x1xf32>
    %624 = vector.broadcast %616 : vector<2x8x1xf32> to vector<2x8x8xf32>
    %625 = arith.subf %612, %624 : vector<2x8x8xf32>
    %cst_220 = arith.constant 9.99999974E-6 : f32
    %626 = vector.broadcast %cst_220 : f32 to vector<2x8x1xf32>
    %627 = arith.addf %623, %626 : vector<2x8x1xf32>
    %628 = math.rsqrt %627 : vector<2x8x1xf32>
    %629 = vector.broadcast %628 : vector<2x8x1xf32> to vector<2x8x8xf32>
    %630 = arith.mulf %625, %629 : vector<2x8x8xf32>
    %631 = vector.shape_cast %588 : vector<1x8xf32> to vector<1x1x8xf32>
    %632 = vector.broadcast %631 : vector<1x1x8xf32> to vector<2x8x8xf32>
    %633 = arith.mulf %630, %632 : vector<2x8x8xf32>
    %634 = vector.shape_cast %589 : vector<1x8xf32> to vector<1x1x8xf32>
    %635 = vector.broadcast %634 : vector<1x1x8xf32> to vector<2x8x8xf32>
    %636 = arith.addf %633, %635 : vector<2x8x8xf32>
    %c576 = arith.constant 576 : index
    %c0_221 = arith.constant 0 : index
    %637 = vector.load %arg1[%c576, %c0_221] : memref<776x128xf32, #tpu.memory_space<vmem>>, vector<8x16xf32>
    %c584 = arith.constant 584 : index
    %c0_222 = arith.constant 0 : index
    %638 = vector.load %arg1[%c584, %c0_222] : memref<776x128xf32, #tpu.memory_space<vmem>>, vector<1x16xf32>
    "tpu.trace_start"() <{level = 10 : i32, message = "bli,io->blo"}> : () -> ()
    %cst_223 = arith.constant dense<0.000000e+00> : vector<2x8x16xf32>
    %639 = tpu.matmul %636, %637, %cst_223 {dimension_numbers = #tpu.dot_dimension_numbers<[2], [0], [0, 1], [1], [0, 0, 0, 1, 1, 1], [], []>} : vector<2x8x8xf32>, vector<8x16xf32>, vector<2x8x16xf32> -> vector<2x8x16xf32>
    "tpu.trace_stop"() : () -> ()
    %640 = vector.shape_cast %638 : vector<1x16xf32> to vector<1x1x16xf32>
    %641 = vector.broadcast %640 : vector<1x1x16xf32> to vector<2x8x16xf32>
    %642 = arith.addf %639, %641 : vector<2x8x16xf32>
    %cst_224 = arith.constant 0.000000e+00 : f32
    %643 = vector.broadcast %cst_224 : f32 to vector<2x8x16xf32>
    %644 = arith.maximumf %642, %643 : vector<2x8x16xf32>
    %c592 = arith.constant 592 : index
    %c0_225 = arith.constant 0 : index
    %645 = vector.load %arg1[%c592, %c0_225] : memref<776x128xf32, #tpu.memory_space<vmem>>, vector<16x48xf32>
    %c608 = arith.constant 608 : index
    %c0_226 = arith.constant 0 : index
    %646 = vector.load %arg1[%c608, %c0_226] : memref<776x128xf32, #tpu.memory_space<vmem>>, vector<1x48xf32>
    %c616 = arith.constant 616 : index
    %c0_227 = arith.constant 0 : index
    %647 = vector.load %arg1[%c616, %c0_227] : memref<776x128xf32, #tpu.memory_space<vmem>>, vector<16x16xf32>
    %c632 = arith.constant 632 : index
    %c0_228 = arith.constant 0 : index
    %648 = vector.load %arg1[%c632, %c0_228] : memref<776x128xf32, #tpu.memory_space<vmem>>, vector<1x16xf32>
    %c640 = arith.constant 640 : index
    %c0_229 = arith.constant 0 : index
    %649 = vector.load %arg1[%c640, %c0_229] : memref<776x128xf32, #tpu.memory_space<vmem>>, vector<1x16xf32>
    %c648 = arith.constant 648 : index
    %c0_230 = arith.constant 0 : index
    %650 = vector.load %arg1[%c648, %c0_230] : memref<776x128xf32, #tpu.memory_space<vmem>>, vector<1x16xf32>
    "tpu.trace_start"() <{level = 10 : i32, message = "ble,ef->blf"}> : () -> ()
    %cst_231 = arith.constant dense<0.000000e+00> : vector<2x8x48xf32>
    %651 = tpu.matmul %644, %645, %cst_231 {dimension_numbers = #tpu.dot_dimension_numbers<[2], [0], [0, 1], [1], [0, 0, 0, 1, 1, 1], [], []>} : vector<2x8x16xf32>, vector<16x48xf32>, vector<2x8x48xf32> -> vector<2x8x48xf32>
    "tpu.trace_stop"() : () -> ()
    %652 = vector.shape_cast %646 : vector<1x48xf32> to vector<1x1x48xf32>
    %653 = vector.broadcast %652 : vector<1x1x48xf32> to vector<2x8x48xf32>
    %654 = arith.addf %651, %653 : vector<2x8x48xf32>
    %655 = vector.extract_strided_slice %654 {offsets = [0, 0, 0], sizes = [2, 8, 24], strides = [1, 1, 1]} : vector<2x8x48xf32> to vector<2x8x24xf32>
    %656 = vector.extract_strided_slice %654 {offsets = [0, 0, 24], sizes = [2, 8, 24], strides = [1, 1, 1]} : vector<2x8x48xf32> to vector<2x8x24xf32>
    %657 = tpu.concatenate %655, %656 in 0 : vector<2x8x24xf32>, vector<2x8x24xf32> -> vector<4x8x24xf32>
    %658 = vector.extract_strided_slice %657 {offsets = [0, 0, 0], sizes = [4, 8, 8], strides = [1, 1, 1]} : vector<4x8x24xf32> to vector<4x8x8xf32>
    %659 = vector.extract_strided_slice %657 {offsets = [0, 0, 8], sizes = [4, 8, 8], strides = [1, 1, 1]} : vector<4x8x24xf32> to vector<4x8x8xf32>
    %660 = vector.extract_strided_slice %657 {offsets = [0, 0, 16], sizes = [4, 8, 8], strides = [1, 1, 1]} : vector<4x8x24xf32> to vector<4x8x8xf32>
    "tpu.trace_start"() <{level = 10 : i32, message = "zqd,zkd->zqk"}> : () -> ()
    %cst_232 = arith.constant dense<0.000000e+00> : vector<4x8x8xf32>
    %661 = tpu.matmul %658, %659, %cst_232 {dimension_numbers = #tpu.dot_dimension_numbers<[2], [2], [1], [1], [0, 0, 0, 1, 1, 1], [0], [0]>} : vector<4x8x8xf32>, vector<4x8x8xf32>, vector<4x8x8xf32> -> vector<4x8x8xf32>
    "tpu.trace_stop"() : () -> ()
    %cst_233 = arith.constant dense<0xFF800000> : vector<4x8xf32>
    %662 = vector.multi_reduction <maximumf>, %661, %cst_233 [2] : vector<4x8x8xf32> to vector<4x8xf32>
    %663 = vector.shape_cast %662 : vector<4x8xf32> to vector<4x8x1xf32>
    %664 = vector.broadcast %663 : vector<4x8x1xf32> to vector<4x8x8xf32>
    %665 = arith.subf %661, %664 : vector<4x8x8xf32>
    %666 = math.exp %665 : vector<4x8x8xf32>
    %cst_234 = arith.constant dense<0.000000e+00> : vector<4x8xf32>
    %667 = vector.multi_reduction <add>, %666, %cst_234 [2] : vector<4x8x8xf32> to vector<4x8xf32>
    %668 = vector.shape_cast %667 : vector<4x8xf32> to vector<4x8x1xf32>
    %669 = vector.broadcast %668 : vector<4x8x1xf32> to vector<4x8x8xf32>
    %670 = arith.divf %666, %669 : vector<4x8x8xf32>
    "tpu.trace_start"() <{level = 10 : i32, message = "zqk,zkd->zqd"}> : () -> ()
    %cst_235 = arith.constant dense<0.000000e+00> : vector<4x8x8xf32>
    %671 = tpu.matmul %670, %660, %cst_235 {dimension_numbers = #tpu.dot_dimension_numbers<[2], [1], [1], [2], [0, 0, 0, 1, 1, 2], [0], [0]>} : vector<4x8x8xf32>, vector<4x8x8xf32>, vector<4x8x8xf32> -> vector<4x8x8xf32>
    "tpu.trace_stop"() : () -> ()
    %672 = vector.extract_strided_slice %671 {offsets = [0, 0, 0], sizes = [2, 8, 8], strides = [1, 1, 1]} : vector<4x8x8xf32> to vector<2x8x8xf32>
    %673 = vector.extract_strided_slice %671 {offsets = [2, 0, 0], sizes = [2, 8, 8], strides = [1, 1, 1]} : vector<4x8x8xf32> to vector<2x8x8xf32>
    %674 = tpu.concatenate %672, %673 in 2 : vector<2x8x8xf32>, vector<2x8x8xf32> -> vector<2x8x16xf32>
    "tpu.trace_start"() <{level = 10 : i32, message = "bld,df->blf"}> : () -> ()
    %cst_236 = arith.constant dense<0.000000e+00> : vector<2x8x16xf32>
    %675 = tpu.matmul %674, %647, %cst_236 {dimension_numbers = #tpu.dot_dimension_numbers<[2], [0], [0, 1], [1], [0, 0, 0, 1, 1, 1], [], []>} : vector<2x8x16xf32>, vector<16x16xf32>, vector<2x8x16xf32> -> vector<2x8x16xf32>
    "tpu.trace_stop"() : () -> ()
    %676 = vector.shape_cast %648 : vector<1x16xf32> to vector<1x1x16xf32>
    %677 = vector.broadcast %676 : vector<1x1x16xf32> to vector<2x8x16xf32>
    %678 = arith.addf %675, %677 : vector<2x8x16xf32>
    %679 = arith.addf %644, %678 : vector<2x8x16xf32>
    %cst_237 = arith.constant dense<0.000000e+00> : vector<2x8xf32>
    %680 = vector.multi_reduction <add>, %679, %cst_237 [2] : vector<2x8x16xf32> to vector<2x8xf32>
    %681 = vector.shape_cast %680 : vector<2x8xf32> to vector<2x8x1xf32>
    %cst_238 = arith.constant 1.600000e+01 : f32
    %682 = vector.broadcast %cst_238 : f32 to vector<2x8x1xf32>
    %683 = arith.divf %681, %682 : vector<2x8x1xf32>
    %684 = arith.mulf %679, %679 : vector<2x8x16xf32>
    %cst_239 = arith.constant dense<0.000000e+00> : vector<2x8xf32>
    %685 = vector.multi_reduction <add>, %684, %cst_239 [2] : vector<2x8x16xf32> to vector<2x8xf32>
    %686 = vector.shape_cast %685 : vector<2x8xf32> to vector<2x8x1xf32>
    %cst_240 = arith.constant 1.600000e+01 : f32
    %687 = vector.broadcast %cst_240 : f32 to vector<2x8x1xf32>
    %688 = arith.divf %686, %687 : vector<2x8x1xf32>
    %689 = arith.mulf %683, %683 : vector<2x8x1xf32>
    %690 = arith.subf %688, %689 : vector<2x8x1xf32>
    %691 = vector.broadcast %683 : vector<2x8x1xf32> to vector<2x8x16xf32>
    %692 = arith.subf %679, %691 : vector<2x8x16xf32>
    %cst_241 = arith.constant 9.99999974E-6 : f32
    %693 = vector.broadcast %cst_241 : f32 to vector<2x8x1xf32>
    %694 = arith.addf %690, %693 : vector<2x8x1xf32>
    %695 = math.rsqrt %694 : vector<2x8x1xf32>
    %696 = vector.broadcast %695 : vector<2x8x1xf32> to vector<2x8x16xf32>
    %697 = arith.mulf %692, %696 : vector<2x8x16xf32>
    %698 = vector.shape_cast %649 : vector<1x16xf32> to vector<1x1x16xf32>
    %699 = vector.broadcast %698 : vector<1x1x16xf32> to vector<2x8x16xf32>
    %700 = arith.mulf %697, %699 : vector<2x8x16xf32>
    %701 = vector.shape_cast %650 : vector<1x16xf32> to vector<1x1x16xf32>
    %702 = vector.broadcast %701 : vector<1x1x16xf32> to vector<2x8x16xf32>
    %703 = arith.addf %700, %702 : vector<2x8x16xf32>
    %c656 = arith.constant 656 : index
    %c0_242 = arith.constant 0 : index
    %704 = vector.load %arg1[%c656, %c0_242] : memref<776x128xf32, #tpu.memory_space<vmem>>, vector<16x32xf32>
    %c672 = arith.constant 672 : index
    %c0_243 = arith.constant 0 : index
    %705 = vector.load %arg1[%c672, %c0_243] : memref<776x128xf32, #tpu.memory_space<vmem>>, vector<1x32xf32>
    "tpu.trace_start"() <{level = 10 : i32, message = "bli,io->blo"}> : () -> ()
    %cst_244 = arith.constant dense<0.000000e+00> : vector<2x8x32xf32>
    %706 = tpu.matmul %703, %704, %cst_244 {dimension_numbers = #tpu.dot_dimension_numbers<[2], [0], [0, 1], [1], [0, 0, 0, 1, 1, 1], [], []>} : vector<2x8x16xf32>, vector<16x32xf32>, vector<2x8x32xf32> -> vector<2x8x32xf32>
    "tpu.trace_stop"() : () -> ()
    %707 = vector.shape_cast %705 : vector<1x32xf32> to vector<1x1x32xf32>
    %708 = vector.broadcast %707 : vector<1x1x32xf32> to vector<2x8x32xf32>
    %709 = arith.addf %706, %708 : vector<2x8x32xf32>
    %cst_245 = arith.constant 0.000000e+00 : f32
    %710 = vector.broadcast %cst_245 : f32 to vector<2x8x32xf32>
    %711 = arith.maximumf %709, %710 : vector<2x8x32xf32>
    %c680 = arith.constant 680 : index
    %c0_246 = arith.constant 0 : index
    %712 = vector.load %arg1[%c680, %c0_246] : memref<776x128xf32, #tpu.memory_space<vmem>>, vector<32x96xf32>
    %c712 = arith.constant 712 : index
    %c0_247 = arith.constant 0 : index
    %713 = vector.load %arg1[%c712, %c0_247] : memref<776x128xf32, #tpu.memory_space<vmem>>, vector<1x96xf32>
    %c720 = arith.constant 720 : index
    %c0_248 = arith.constant 0 : index
    %714 = vector.load %arg1[%c720, %c0_248] : memref<776x128xf32, #tpu.memory_space<vmem>>, vector<32x32xf32>
    %c752 = arith.constant 752 : index
    %c0_249 = arith.constant 0 : index
    %715 = vector.load %arg1[%c752, %c0_249] : memref<776x128xf32, #tpu.memory_space<vmem>>, vector<1x32xf32>
    %c760 = arith.constant 760 : index
    %c0_250 = arith.constant 0 : index
    %716 = vector.load %arg1[%c760, %c0_250] : memref<776x128xf32, #tpu.memory_space<vmem>>, vector<1x32xf32>
    %c768 = arith.constant 768 : index
    %c0_251 = arith.constant 0 : index
    %717 = vector.load %arg1[%c768, %c0_251] : memref<776x128xf32, #tpu.memory_space<vmem>>, vector<1x32xf32>
    "tpu.trace_start"() <{level = 10 : i32, message = "ble,ef->blf"}> : () -> ()
    %cst_252 = arith.constant dense<0.000000e+00> : vector<2x8x96xf32>
    %718 = tpu.matmul %711, %712, %cst_252 {dimension_numbers = #tpu.dot_dimension_numbers<[2], [0], [0, 1], [1], [0, 0, 0, 1, 1, 1], [], []>} : vector<2x8x32xf32>, vector<32x96xf32>, vector<2x8x96xf32> -> vector<2x8x96xf32>
    "tpu.trace_stop"() : () -> ()
    %719 = vector.shape_cast %713 : vector<1x96xf32> to vector<1x1x96xf32>
    %720 = vector.broadcast %719 : vector<1x1x96xf32> to vector<2x8x96xf32>
    %721 = arith.addf %718, %720 : vector<2x8x96xf32>
    %722 = vector.extract_strided_slice %721 {offsets = [0, 0, 0], sizes = [2, 8, 24], strides = [1, 1, 1]} : vector<2x8x96xf32> to vector<2x8x24xf32>
    %723 = vector.extract_strided_slice %721 {offsets = [0, 0, 24], sizes = [2, 8, 24], strides = [1, 1, 1]} : vector<2x8x96xf32> to vector<2x8x24xf32>
    %724 = vector.extract_strided_slice %721 {offsets = [0, 0, 48], sizes = [2, 8, 24], strides = [1, 1, 1]} : vector<2x8x96xf32> to vector<2x8x24xf32>
    %725 = vector.extract_strided_slice %721 {offsets = [0, 0, 72], sizes = [2, 8, 24], strides = [1, 1, 1]} : vector<2x8x96xf32> to vector<2x8x24xf32>
    %726 = tpu.concatenate %722, %723, %724, %725 in 0 : vector<2x8x24xf32>, vector<2x8x24xf32>, vector<2x8x24xf32>, vector<2x8x24xf32> -> vector<8x8x24xf32>
    %727 = vector.extract_strided_slice %726 {offsets = [0, 0, 0], sizes = [8, 8, 8], strides = [1, 1, 1]} : vector<8x8x24xf32> to vector<8x8x8xf32>
    %728 = vector.extract_strided_slice %726 {offsets = [0, 0, 8], sizes = [8, 8, 8], strides = [1, 1, 1]} : vector<8x8x24xf32> to vector<8x8x8xf32>
    %729 = vector.extract_strided_slice %726 {offsets = [0, 0, 16], sizes = [8, 8, 8], strides = [1, 1, 1]} : vector<8x8x24xf32> to vector<8x8x8xf32>
    "tpu.trace_start"() <{level = 10 : i32, message = "zqd,zkd->zqk"}> : () -> ()
    %cst_253 = arith.constant dense<0.000000e+00> : vector<8x8x8xf32>
    %730 = tpu.matmul %727, %728, %cst_253 {dimension_numbers = #tpu.dot_dimension_numbers<[2], [2], [1], [1], [0, 0, 0, 1, 1, 1], [0], [0]>} : vector<8x8x8xf32>, vector<8x8x8xf32>, vector<8x8x8xf32> -> vector<8x8x8xf32>
    "tpu.trace_stop"() : () -> ()
    %cst_254 = arith.constant dense<0xFF800000> : vector<8x8xf32>
    %731 = vector.multi_reduction <maximumf>, %730, %cst_254 [2] : vector<8x8x8xf32> to vector<8x8xf32>
    %732 = vector.shape_cast %731 : vector<8x8xf32> to vector<8x8x1xf32>
    %733 = vector.broadcast %732 : vector<8x8x1xf32> to vector<8x8x8xf32>
    %734 = arith.subf %730, %733 : vector<8x8x8xf32>
    %735 = math.exp %734 : vector<8x8x8xf32>
    %cst_255 = arith.constant dense<0.000000e+00> : vector<8x8xf32>
    %736 = vector.multi_reduction <add>, %735, %cst_255 [2] : vector<8x8x8xf32> to vector<8x8xf32>
    %737 = vector.shape_cast %736 : vector<8x8xf32> to vector<8x8x1xf32>
    %738 = vector.broadcast %737 : vector<8x8x1xf32> to vector<8x8x8xf32>
    %739 = arith.divf %735, %738 : vector<8x8x8xf32>
    "tpu.trace_start"() <{level = 10 : i32, message = "zqk,zkd->zqd"}> : () -> ()
    %cst_256 = arith.constant dense<0.000000e+00> : vector<8x8x8xf32>
    %740 = tpu.matmul %739, %729, %cst_256 {dimension_numbers = #tpu.dot_dimension_numbers<[2], [1], [1], [2], [0, 0, 0, 1, 1, 2], [0], [0]>} : vector<8x8x8xf32>, vector<8x8x8xf32>, vector<8x8x8xf32> -> vector<8x8x8xf32>
    "tpu.trace_stop"() : () -> ()
    %741 = vector.extract_strided_slice %740 {offsets = [0, 0, 0], sizes = [2, 8, 8], strides = [1, 1, 1]} : vector<8x8x8xf32> to vector<2x8x8xf32>
    %742 = vector.extract_strided_slice %740 {offsets = [2, 0, 0], sizes = [2, 8, 8], strides = [1, 1, 1]} : vector<8x8x8xf32> to vector<2x8x8xf32>
    %743 = vector.extract_strided_slice %740 {offsets = [4, 0, 0], sizes = [2, 8, 8], strides = [1, 1, 1]} : vector<8x8x8xf32> to vector<2x8x8xf32>
    %744 = vector.extract_strided_slice %740 {offsets = [6, 0, 0], sizes = [2, 8, 8], strides = [1, 1, 1]} : vector<8x8x8xf32> to vector<2x8x8xf32>
    %745 = tpu.concatenate %741, %742, %743, %744 in 2 : vector<2x8x8xf32>, vector<2x8x8xf32>, vector<2x8x8xf32>, vector<2x8x8xf32> -> vector<2x8x32xf32>
    "tpu.trace_start"() <{level = 10 : i32, message = "bld,df->blf"}> : () -> ()
    %cst_257 = arith.constant dense<0.000000e+00> : vector<2x8x32xf32>
    %746 = tpu.matmul %745, %714, %cst_257 {dimension_numbers = #tpu.dot_dimension_numbers<[2], [0], [0, 1], [1], [0, 0, 0, 1, 1, 1], [], []>} : vector<2x8x32xf32>, vector<32x32xf32>, vector<2x8x32xf32> -> vector<2x8x32xf32>
    "tpu.trace_stop"() : () -> ()
    %747 = vector.shape_cast %715 : vector<1x32xf32> to vector<1x1x32xf32>
    %748 = vector.broadcast %747 : vector<1x1x32xf32> to vector<2x8x32xf32>
    %749 = arith.addf %746, %748 : vector<2x8x32xf32>
    %750 = arith.addf %711, %749 : vector<2x8x32xf32>
    %cst_258 = arith.constant dense<0.000000e+00> : vector<2x8xf32>
    %751 = vector.multi_reduction <add>, %750, %cst_258 [2] : vector<2x8x32xf32> to vector<2x8xf32>
    %752 = vector.shape_cast %751 : vector<2x8xf32> to vector<2x8x1xf32>
    %cst_259 = arith.constant 3.200000e+01 : f32
    %753 = vector.broadcast %cst_259 : f32 to vector<2x8x1xf32>
    %754 = arith.divf %752, %753 : vector<2x8x1xf32>
    %755 = arith.mulf %750, %750 : vector<2x8x32xf32>
    %cst_260 = arith.constant dense<0.000000e+00> : vector<2x8xf32>
    %756 = vector.multi_reduction <add>, %755, %cst_260 [2] : vector<2x8x32xf32> to vector<2x8xf32>
    %757 = vector.shape_cast %756 : vector<2x8xf32> to vector<2x8x1xf32>
    %cst_261 = arith.constant 3.200000e+01 : f32
    %758 = vector.broadcast %cst_261 : f32 to vector<2x8x1xf32>
    %759 = arith.divf %757, %758 : vector<2x8x1xf32>
    %760 = arith.mulf %754, %754 : vector<2x8x1xf32>
    %761 = arith.subf %759, %760 : vector<2x8x1xf32>
    %762 = vector.broadcast %754 : vector<2x8x1xf32> to vector<2x8x32xf32>
    %763 = arith.subf %750, %762 : vector<2x8x32xf32>
    %cst_262 = arith.constant 9.99999974E-6 : f32
    %764 = vector.broadcast %cst_262 : f32 to vector<2x8x1xf32>
    %765 = arith.addf %761, %764 : vector<2x8x1xf32>
    %766 = math.rsqrt %765 : vector<2x8x1xf32>
    %767 = vector.broadcast %766 : vector<2x8x1xf32> to vector<2x8x32xf32>
    %768 = arith.mulf %763, %767 : vector<2x8x32xf32>
    %769 = vector.shape_cast %716 : vector<1x32xf32> to vector<1x1x32xf32>
    %770 = vector.broadcast %769 : vector<1x1x32xf32> to vector<2x8x32xf32>
    %771 = arith.mulf %768, %770 : vector<2x8x32xf32>
    %772 = vector.shape_cast %717 : vector<1x32xf32> to vector<1x1x32xf32>
    %773 = vector.broadcast %772 : vector<1x1x32xf32> to vector<2x8x32xf32>
    %774 = arith.addf %771, %773 : vector<2x8x32xf32>
    %775 = vector.extract_strided_slice %774 {offsets = [0, 0, 0], sizes = [1, 8, 32], strides = [1, 1, 1]} : vector<2x8x32xf32> to vector<1x8x32xf32>
    %776 = vector.shape_cast %775 : vector<1x8x32xf32> to vector<8x32xf32>
    %c0_263 = arith.constant 0 : index
    %c0_264 = arith.constant 0 : index
    %c0_265 = arith.constant 0 : index
    %777 = vector.load %arg2[%c0_263, %c0_264, %c0_265] : memref<8x2x32xf32, #tpu.memory_space<vmem>>, vector<8x1x32xf32>
    %778 = vector.shape_cast %777 : vector<8x1x32xf32> to vector<8x32xf32>
    %779 = vector.shape_cast %776 : vector<8x32xf32> to vector<8x1x32xf32>
    tpu.vector_store %arg2[%c0_263, %c0_264, %c0_265], %779 {strides = array<i32>} : memref<8x2x32xf32, #tpu.memory_space<vmem>>, vector<8x1x32xf32>,
    %780 = vector.extract_strided_slice %774 {offsets = [1, 0, 0], sizes = [1, 8, 32], strides = [1, 1, 1]} : vector<2x8x32xf32> to vector<1x8x32xf32>
    %781 = vector.shape_cast %780 : vector<1x8x32xf32> to vector<8x32xf32>
    %c0_266 = arith.constant 0 : index
    %c1_267 = arith.constant 1 : index
    %c0_268 = arith.constant 0 : index
    %782 = vector.load %arg2[%c0_266, %c1_267, %c0_268] : memref<8x2x32xf32, #tpu.memory_space<vmem>>, vector<8x1x32xf32>
    %783 = vector.shape_cast %782 : vector<8x1x32xf32> to vector<8x32xf32>
    %784 = vector.shape_cast %781 : vector<8x32xf32> to vector<8x1x32xf32>
    tpu.vector_store %arg2[%c0_266, %c1_267, %c0_268], %784 {strides = array<i32>} : memref<8x2x32xf32, #tpu.memory_space<vmem>>, vector<8x1x32xf32>,
    return
  }
}

</mosaic_0001>

<llo_original>
// kernel: fwd.1
$region0: #{fwd.1}
  #allocation0 [shape = 'u32[]', space=smem, size = 0x4, offset = 0x4, fixed_abs, tag = 'smem constant byte address 0x4 - core index']
  #allocation1 [shape = 'u32[72,128]{1,0:T(1,128)}', space=vmem, size = 0x9000, scoped, tag = 'internal scratch']
  %s0 = inlined_call_operand.hbm [shape: f32[8,2,32], index: 0, kind: input, shape index: {}]
  %s1 = inlined_call_operand.hbm [shape: f32[776,128], index: 1, kind: input, shape index: {}]
  %s2 = inlined_call_operand.hbm [shape: f32[8,2,32], index: 2, kind: output, shape index: {}]
  %s3 = sld [smem:[#allocation0]]
  $region26: #{fwd.1} parent=0
    _
  %s5 = ssub.s32 1, %s3
  %s6 = scalar_select 0, %s5, %s3
  $region1: #{fwd.1} parent=0
    #allocation2 [shape = 'u8[8192]{0}', space=vmem, size = 0x2000, scoped, tag = 'input window, operand 0, single buffered']
    #allocation3 [shape = 's32[1]{0}', space=sflag, size = 0x4, scoped, tag = 'scoped memory for fwd.1']
    #allocation4 [shape = 's32[1]{0}', space=sflag, size = 0x4, scoped, tag = 'scoped memory for fwd.1']
    #allocation5 [shape = 'u8[397312]{0}', space=vmem, size = 0x61000, scoped, tag = 'input window, operand 1, single buffered']
    #allocation6 [shape = 's32[1]{0}', space=sflag, size = 0x4, scoped, tag = 'scoped memory for fwd.1']
    #allocation7 [shape = 'u8[8192]{0}', space=vmem, size = 0x2000, scoped, tag = 'output window, operand 0, single buffered']
    %7 = vsyncpa [#allocation3], 0
    %8 = vsyncpa [#allocation6], 0
    %9 = vsyncpa [#allocation4], 0
    // Predicated region
    $region2: #{fwd.1} parent=1 // pred_check
      _
    $region3: #{fwd.1} parent=1 // pred_check_branch
      %11 = sbr.rel (0) target = $region5
    $region4: #{fwd.1} parent=1 // pred_region
      %13 = vsyncadd [#allocation3], 0
      %s14 = sshll.u32 %s0, 4
      %s15 = int_to_ptr.hbm [resolvable:$true] %s14
      %s16 = sshll.u32 [#allocation2], 4
      %s17 = int_to_ptr.vmem [resolvable:$true] %s16
      %22 = dma.hbm_to_vmem [thread:$0]  %s15, 256, %s17, [#allocation3], 32, 32, 2
    $region5: #{fwd.1} parent=1 // pred_fallthru
      _
    // Predicated region
    $region6: #{fwd.1} parent=1 // pred_check
      _
    $region7: #{fwd.1} parent=1 // pred_check_branch
      %24 = sbr.rel (0) target = $region9
    $region8: #{fwd.1} parent=1 // pred_region
      %26 = vsyncadd [#allocation6], 0
      %s27 = sshll.u32 %s1, 4
      %s28 = int_to_ptr.hbm [resolvable:$true] %s27
      %s29 = sshll.u32 [#allocation5], 4
      %s30 = int_to_ptr.vmem [resolvable:$true] %s29
      %35 = dma.hbm_to_vmem [thread:$0]  %s28, 12416, %s30, [#allocation6], 128, 128, 8
    $region9: #{fwd.1} parent=1 // pred_fallthru
      _
    // Predicated region
    $region10: #{fwd.1} parent=1 // pred_check
      _
    $region11: #{fwd.1} parent=1 // pred_check_branch
      %37 = sbr.rel (0) target = $region13
    $region12: #{fwd.1} parent=1 // pred_region
      %39 = dma.done [#allocation3], 256
    $region13: #{fwd.1} parent=1 // pred_fallthru
      _
    // Predicated region
    $region14: #{fwd.1} parent=1 // pred_check
      _
    $region15: #{fwd.1} parent=1 // pred_check_branch
      %41 = sbr.rel (0) target = $region17
    $region16: #{fwd.1} parent=1 // pred_region
      %43 = dma.done [#allocation6], 12416
    $region17: #{fwd.1} parent=1 // pred_fallthru
      _
    %v44 = vld [vmem:[#allocation2] sm:$0x1]
    %v45 = vld [vmem:[#allocation2 + $0x2] sm:$0x1]
    %v46 = vld [vmem:[#allocation2 + $0x4] sm:$0x1]
    %v47 = vld [vmem:[#allocation2 + $0x6] sm:$0x1]
    %v48 = vld [vmem:[#allocation2 + $0x8] sm:$0x1]
    %v49 = vld [vmem:[#allocation2 + $0xa] sm:$0x1]
    %v50 = vld [vmem:[#allocation2 + $0xc] sm:$0x1]
    %v51 = vld [vmem:[#allocation2 + $0xe] sm:$0x1]
    %v52 = vld [vmem:[#allocation2 + $0x1] sm:$0x1]
    %v53 = vld [vmem:[#allocation2 + $0x3] sm:$0x1]
    %v54 = vld [vmem:[#allocation2 + $0x5] sm:$0x1]
    %v55 = vld [vmem:[#allocation2 + $0x7] sm:$0x1]
    %v56 = vld [vmem:[#allocation2 + $0x9] sm:$0x1]
    %v57 = vld [vmem:[#allocation2 + $0xb] sm:$0x1]
    %v58 = vld [vmem:[#allocation2 + $0xd] sm:$0x1]
    %v59 = vld [vmem:[#allocation2 + $0xf] sm:$0x1]
    %v60 = vld [vmem:[#allocation5] sm:$0xff]
    %v62 = vrot.slane %v60, 1
    %v63 = vrot.slane %v60, 2
    %v64 = vrot.slane %v60, 3
    %v65 = vrot.slane %v60, 4
    %v66 = vrot.slane %v60, 5
    %v67 = vrot.slane %v60, 6
    %v68 = vrot.slane %v60, 7
    %v77 = vadd.f32 %v44, %v60
    %v78 = vadd.f32 %v45, %v62
    %v79 = vadd.f32 %v46, %v63
    %v80 = vadd.f32 %v47, %v64
    %v81 = vadd.f32 %v48, %v65
    %v82 = vadd.f32 %v49, %v66
    %v83 = vadd.f32 %v50, %v67
    %v84 = vadd.f32 %v51, %v68
    %v85 = vadd.f32 %v52, %v60
    %v86 = vadd.f32 %v53, %v62
    %v87 = vadd.f32 %v54, %v63
    %v88 = vadd.f32 %v55, %v64
    %v89 = vadd.f32 %v56, %v65
    %v90 = vadd.f32 %v57, %v66
    %v91 = vadd.f32 %v58, %v67
    %v92 = vadd.f32 %v59, %v68
    %v93 = vld [vmem:[#allocation5 + $0x8] sm:$0xff]
    %v94 = vld [vmem:[#allocation5 + $0x10] sm:$0xff]
    %v95 = vld [vmem:[#allocation5 + $0x18] sm:$0xff]
    %v96 = vld [vmem:[#allocation5 + $0x20] sm:$0xff]
    %v97 = vld [vmem:[#allocation5 + $0x28] sm:$0x1]
    %v98 = vld [vmem:[#allocation5 + $0x30] sm:$0xff]
    %v99 = vld [vmem:[#allocation5 + $0x38] sm:$0xff]
    %v100 = vld [vmem:[#allocation5 + $0x40] sm:$0xff]
    %v101 = vld [vmem:[#allocation5 + $0x48] sm:$0xff]
    %v102 = vld [vmem:[#allocation5 + $0x50] sm:$0x1]
    %v103 = vld [vmem:[#allocation5 + $0x58] sm:$0x1]
    %v104 = vld [vmem:[#allocation5 + $0x60] sm:$0x1]
    %v105 = vperm.slane %v97, 0
    %v122 = vrot.slane %v78, 7
    %vm123 = vcmask 1041409
    %v124 = vsel %vm123, %v122, %v77
    %v125 = vrot.slane %v79, 6
    %vm126 = vcmask 1042434
    %v127 = vsel %vm126, %v125, %v124
    %v128 = vrot.slane %v80, 5
    %vm129 = vcmask 1043459
    %v130 = vsel %vm129, %v128, %v127
    %v131 = vrot.slane %v81, 4
    %vm132 = vcmask 1044484
    %v133 = vsel %vm132, %v131, %v130
    %v134 = vrot.slane %v82, 3
    %vm135 = vcmask 1045509
    %v136 = vsel %vm135, %v134, %v133
    %v137 = vrot.slane %v83, 2
    %vm138 = vcmask 1046534
    %v139 = vsel %vm138, %v137, %v136
    %v140 = vrot.slane %v84, 1
    %vm141 = vcmask 1047559
    %v142 = vsel %vm141, %v140, %v139
    %v143 = vrot.slane %v86, 7
    %v144 = vsel %vm123, %v143, %v85
    %v145 = vrot.slane %v87, 6
    %v146 = vsel %vm126, %v145, %v144
    %v147 = vrot.slane %v88, 5
    %v148 = vsel %vm129, %v147, %v146
    %v149 = vrot.slane %v89, 4
    %v150 = vsel %vm132, %v149, %v148
    %v151 = vrot.slane %v90, 3
    %v152 = vsel %vm135, %v151, %v150
    %v153 = vrot.slane %v91, 2
    %v154 = vsel %vm138, %v153, %v152
    %v155 = vrot.slane %v92, 1
    %v156 = vsel %vm141, %v155, %v154
    %vm157 = vcmask 261120
    %v158 = vsel %vm157, %v142, 0
    %v160 = vsel %vm157, %v156, 0
    %162 = vmatpush.msra.mxu0 0.0
    %163 = vmatpush.msra.mxu0 0.0
    %164 = vmatpush.msra.mxu0 0.0
    %165 = vmatpush.msra.mxu0 0.0
    %166 = vmatpush.msra.mxu0 0.0
    %167 = vmatpush.msra.mxu0 0.0
    %168 = vmatpush.msra.mxu0 0.0
    %169 = vmatpush.msra.mxu0 0.0
    %170 = vmatpush.msra.mxu0 0.0
    %171 = vmatpush.msra.mxu0 0.0
    %172 = vmatpush.msra.mxu0 0.0
    %173 = vmatpush.msra.mxu0 0.0
    %174 = vmatpush.msra.mxu0 %v96
    %175 = vmatpush.msra.mxu0 %v95
    %176 = vmatpush.msra.mxu0 %v94
    %177 = vmatpush.msra.mxu0 %v93
    %178 = vmatmul.f32.gmra.mxu0 %v158
    %v179 = vpop.f32.mrf.mxu0
    %v180 = vadd.f32 %v105, %v179
    %181 = vmatmul.f32.gmra.mxu0 %v160
    %v182 = vpop.f32.mrf.mxu0
    %v183 = vadd.f32 %v105, %v182
    %184 = vdwg.mxu0
    %187 = vrot.lane.b32.xlu0 %v180, 104
    %v188 = vpop.permute.xlu0 %187
    %189 = vrot.lane.b32.xlu0 %v183, 104
    %v190 = vpop.permute.xlu0 %189
    %191 = vrot.lane.b32.xlu0 %v180, 80
    %v192 = vpop.permute.xlu0 %191
    %193 = vrot.lane.b32.xlu0 %v183, 80
    %v194 = vpop.permute.xlu0 %193
    %195 = vrot.lane.b32.xlu0 %v180, 56
    %v196 = vpop.permute.xlu0 %195
    %197 = vrot.lane.b32.xlu0 %v183, 56
    %v198 = vpop.permute.xlu0 %197
    %199 = vrot.lane.b32.xlu0 %v180, 120
    %v200 = vpop.permute.xlu0 %199
    %vm201 = vcmask 64512
    %v202 = vsel %vm201, %v180, 0
    %v204 = vsel %vm201, %v200, 0
    %206 = vmatpush.xpose.msra.mxu0 0.0
    %207 = vmatpush.xpose.msra.mxu0 0.0
    %208 = vmatpush.xpose.msra.mxu0 0.0
    %209 = vmatpush.xpose.msra.mxu0 0.0
    %210 = vmatpush.xpose.msra.mxu0 0.0
    %211 = vmatpush.xpose.msra.mxu0 0.0
    %212 = vmatpush.xpose.msra.mxu0 0.0
    %213 = vmatpush.xpose.msra.mxu0 0.0
    %214 = vmatpush.xpose.msra.mxu0 0.0
    %215 = vmatpush.xpose.msra.mxu0 0.0
    %216 = vmatpush.xpose.msra.mxu0 0.0
    %217 = vmatpush.xpose.msra.mxu0 0.0
    %218 = vmatpush.xpose.msra.mxu0 0.0
    %219 = vmatpush.xpose.msra.mxu0 0.0
    %220 = vmatpush.xpose.msra.mxu0 0.0
    %221 = vmatpush.xpose.msra.mxu0 %v204
    %222 = vmatmul.f32.gmra.mxu0 %v202
    %v223 = vpop.f32.mrf.mxu0
    %v224 = vadd.f32 0.0, %v223
    %225 = vdwg.mxu0
    %226 = vrot.lane.b32.xlu0 %v183, 120
    %v227 = vpop.permute.xlu0 %226
    %v228 = vsel %vm201, %v183, 0
    %v230 = vsel %vm201, %v227, 0
    %232 = vmatpush.xpose.msra.mxu0 0.0
    %233 = vmatpush.xpose.msra.mxu0 0.0
    %234 = vmatpush.xpose.msra.mxu0 0.0
    %235 = vmatpush.xpose.msra.mxu0 0.0
    %236 = vmatpush.xpose.msra.mxu0 0.0
    %237 = vmatpush.xpose.msra.mxu0 0.0
    %238 = vmatpush.xpose.msra.mxu0 0.0
    %239 = vmatpush.xpose.msra.mxu0 0.0
    %240 = vmatpush.xpose.msra.mxu0 0.0
    %241 = vmatpush.xpose.msra.mxu0 0.0
    %242 = vmatpush.xpose.msra.mxu0 0.0
    %243 = vmatpush.xpose.msra.mxu0 0.0
    %244 = vmatpush.xpose.msra.mxu0 0.0
    %245 = vmatpush.xpose.msra.mxu0 0.0
    %246 = vmatpush.xpose.msra.mxu0 0.0
    %247 = vmatpush.xpose.msra.mxu0 %v230
    %248 = vmatmul.f32.gmra.mxu0 %v228
    %v249 = vpop.f32.mrf.mxu0
    %v250 = vadd.f32 0.0, %v249
    %251 = vdwg.mxu0
    %252 = vrot.lane.b32.xlu0 %v188, 120
    %v253 = vpop.permute.xlu0 %252
    %v254 = vsel %vm201, %v188, 0
    %v256 = vsel %vm201, %v253, 0
    %258 = vmatpush.xpose.msra.mxu0 0.0
    %259 = vmatpush.xpose.msra.mxu0 0.0
    %260 = vmatpush.xpose.msra.mxu0 0.0
    %261 = vmatpush.xpose.msra.mxu0 0.0
    %262 = vmatpush.xpose.msra.mxu0 0.0
    %263 = vmatpush.xpose.msra.mxu0 0.0
    %264 = vmatpush.xpose.msra.mxu0 0.0
    %265 = vmatpush.xpose.msra.mxu0 0.0
    %266 = vmatpush.xpose.msra.mxu0 0.0
    %267 = vmatpush.xpose.msra.mxu0 0.0
    %268 = vmatpush.xpose.msra.mxu0 0.0
    %269 = vmatpush.xpose.msra.mxu0 0.0
    %270 = vmatpush.xpose.msra.mxu0 0.0
    %271 = vmatpush.xpose.msra.mxu0 0.0
    %272 = vmatpush.xpose.msra.mxu0 0.0
    %273 = vmatpush.xpose.msra.mxu0 %v256
    %274 = vmatmul.f32.gmra.mxu0 %v254
    %v275 = vpop.f32.mrf.mxu0
    %v276 = vadd.f32 0.0, %v275
    %277 = vdwg.mxu0
    %278 = vrot.lane.b32.xlu0 %v190, 120
    %v279 = vpop.permute.xlu0 %278
    %v280 = vsel %vm201, %v190, 0
    %v282 = vsel %vm201, %v279, 0
    %284 = vmatpush.xpose.msra.mxu0 0.0
    %285 = vmatpush.xpose.msra.mxu0 0.0
    %286 = vmatpush.xpose.msra.mxu0 0.0
    %287 = vmatpush.xpose.msra.mxu0 0.0
    %288 = vmatpush.xpose.msra.mxu0 0.0
    %289 = vmatpush.xpose.msra.mxu0 0.0
    %290 = vmatpush.xpose.msra.mxu0 0.0
    %291 = vmatpush.xpose.msra.mxu0 0.0
    %292 = vmatpush.xpose.msra.mxu0 0.0
    %293 = vmatpush.xpose.msra.mxu0 0.0
    %294 = vmatpush.xpose.msra.mxu0 0.0
    %295 = vmatpush.xpose.msra.mxu0 0.0
    %296 = vmatpush.xpose.msra.mxu0 0.0
    %297 = vmatpush.xpose.msra.mxu0 0.0
    %298 = vmatpush.xpose.msra.mxu0 0.0
    %299 = vmatpush.xpose.msra.mxu0 %v282
    %300 = vmatmul.f32.gmra.mxu0 %v280
    %v301 = vpop.f32.mrf.mxu0
    %v302 = vadd.f32 0.0, %v301
    %303 = vdwg.mxu0
    %304 = vrot.lane.b32.xlu0 %v192, 120
    %v305 = vpop.permute.xlu0 %304
    %v306 = vsel %vm201, %v192, 0
    %v308 = vsel %vm201, %v305, 0
    %310 = vmatpush.xpose.msra.mxu0 0.0
    %311 = vmatpush.xpose.msra.mxu0 0.0
    %312 = vmatpush.xpose.msra.mxu0 0.0
    %313 = vmatpush.xpose.msra.mxu0 0.0
    %314 = vmatpush.xpose.msra.mxu0 0.0
    %315 = vmatpush.xpose.msra.mxu0 0.0
    %316 = vmatpush.xpose.msra.mxu0 0.0
    %317 = vmatpush.xpose.msra.mxu0 0.0
    %318 = vmatpush.xpose.msra.mxu0 0.0
    %319 = vmatpush.xpose.msra.mxu0 0.0
    %320 = vmatpush.xpose.msra.mxu0 0.0
    %321 = vmatpush.xpose.msra.mxu0 0.0
    %322 = vmatpush.xpose.msra.mxu0 0.0
    %323 = vmatpush.xpose.msra.mxu0 0.0
    %324 = vmatpush.xpose.msra.mxu0 0.0
    %325 = vmatpush.xpose.msra.mxu0 %v308
    %326 = vmatmul.f32.gmra.mxu0 %v306
    %v327 = vpop.f32.mrf.mxu0
    %v328 = vadd.f32 0.0, %v327
    %329 = vdwg.mxu0
    %330 = vrot.lane.b32.xlu0 %v194, 120
    %v331 = vpop.permute.xlu0 %330
    %v332 = vsel %vm201, %v194, 0
    %v334 = vsel %vm201, %v331, 0
    %336 = vmatpush.xpose.msra.mxu0 0.0
    %337 = vmatpush.xpose.msra.mxu0 0.0
    %338 = vmatpush.xpose.msra.mxu0 0.0
    %339 = vmatpush.xpose.msra.mxu0 0.0
    %340 = vmatpush.xpose.msra.mxu0 0.0
    %341 = vmatpush.xpose.msra.mxu0 0.0
    %342 = vmatpush.xpose.msra.mxu0 0.0
    %343 = vmatpush.xpose.msra.mxu0 0.0
    %344 = vmatpush.xpose.msra.mxu0 0.0
    %345 = vmatpush.xpose.msra.mxu0 0.0
    %346 = vmatpush.xpose.msra.mxu0 0.0
    %347 = vmatpush.xpose.msra.mxu0 0.0
    %348 = vmatpush.xpose.msra.mxu0 0.0
    %349 = vmatpush.xpose.msra.mxu0 0.0
    %350 = vmatpush.xpose.msra.mxu0 0.0
    %351 = vmatpush.xpose.msra.mxu0 %v334
    %352 = vmatmul.f32.gmra.mxu0 %v332
    %v353 = vpop.f32.mrf.mxu0
    %v354 = vadd.f32 0.0, %v353
    %355 = vdwg.mxu0
    %356 = vrot.lane.b32.xlu0 %v196, 120
    %v357 = vpop.permute.xlu0 %356
    %v358 = vsel %vm201, %v196, 0
    %v360 = vsel %vm201, %v357, 0
    %362 = vmatpush.xpose.msra.mxu0 0.0
    %363 = vmatpush.xpose.msra.mxu0 0.0
    %364 = vmatpush.xpose.msra.mxu0 0.0
    %365 = vmatpush.xpose.msra.mxu0 0.0
    %366 = vmatpush.xpose.msra.mxu0 0.0
    %367 = vmatpush.xpose.msra.mxu0 0.0
    %368 = vmatpush.xpose.msra.mxu0 0.0
    %369 = vmatpush.xpose.msra.mxu0 0.0
    %370 = vmatpush.xpose.msra.mxu0 0.0
    %371 = vmatpush.xpose.msra.mxu0 0.0
    %372 = vmatpush.xpose.msra.mxu0 0.0
    %373 = vmatpush.xpose.msra.mxu0 0.0
    %374 = vmatpush.xpose.msra.mxu0 0.0
    %375 = vmatpush.xpose.msra.mxu0 0.0
    %376 = vmatpush.xpose.msra.mxu0 0.0
    %377 = vmatpush.xpose.msra.mxu0 %v360
    %378 = vmatmul.f32.gmra.mxu0 %v358
    %v379 = vpop.f32.mrf.mxu0
    %v380 = vadd.f32 0.0, %v379
    %381 = vdwg.mxu0
    %382 = vrot.lane.b32.xlu0 %v198, 120
    %v383 = vpop.permute.xlu0 %382
    %v384 = vsel %vm201, %v198, 0
    %v386 = vsel %vm201, %v383, 0
    %388 = vmatpush.xpose.msra.mxu0 0.0
    %389 = vmatpush.xpose.msra.mxu0 0.0
    %390 = vmatpush.xpose.msra.mxu0 0.0
    %391 = vmatpush.xpose.msra.mxu0 0.0
    %392 = vmatpush.xpose.msra.mxu0 0.0
    %393 = vmatpush.xpose.msra.mxu0 0.0
    %394 = vmatpush.xpose.msra.mxu0 0.0
    %395 = vmatpush.xpose.msra.mxu0 0.0
    %396 = vmatpush.xpose.msra.mxu0 0.0
    %397 = vmatpush.xpose.msra.mxu0 0.0
    %398 = vmatpush.xpose.msra.mxu0 0.0
    %399 = vmatpush.xpose.msra.mxu0 0.0
    %400 = vmatpush.xpose.msra.mxu0 0.0
    %401 = vmatpush.xpose.msra.mxu0 0.0
    %402 = vmatpush.xpose.msra.mxu0 0.0
    %403 = vmatpush.xpose.msra.mxu0 %v386
    %404 = vmatmul.f32.gmra.mxu0 %v384
    %v405 = vpop.f32.mrf.mxu0
    %v406 = vadd.f32 0.0, %v405
    %407 = vdwg.mxu0
    %v408 = vsel %vm201, %v224, -inf
    %409 = vmax.xlane.f32.xlu0 %v408
    %v410 = vpop.xlane.xlu0 %409
    %v411 = vsel %vm201, %v250, -inf
    %412 = vmax.xlane.f32.xlu0 %v411
    %v413 = vpop.xlane.xlu0 %412
    %v414 = vsel %vm201, %v276, -inf
    %415 = vmax.xlane.f32.xlu0 %v414
    %v416 = vpop.xlane.xlu0 %415
    %v417 = vsel %vm201, %v302, -inf
    %418 = vmax.xlane.f32.xlu0 %v417
    %v419 = vpop.xlane.xlu0 %418
    %v420 = vsel %vm201, %v328, -inf
    %421 = vmax.xlane.f32.xlu0 %v420
    %v422 = vpop.xlane.xlu0 %421
    %v423 = vsel %vm201, %v354, -inf
    %424 = vmax.xlane.f32.xlu0 %v423
    %v425 = vpop.xlane.xlu0 %424
    %v426 = vsel %vm201, %v380, -inf
    %427 = vmax.xlane.f32.xlu0 %v426
    %v428 = vpop.xlane.xlu0 %427
    %v429 = vsel %vm201, %v406, -inf
    %430 = vmax.xlane.f32.xlu0 %v429
    %v431 = vpop.xlane.xlu0 %430
    %v432 = vsub.f32 %v224, %v410
    %v433 = vsub.f32 %v250, %v413
    %v434 = vsub.f32 %v276, %v416
    %v435 = vsub.f32 %v302, %v419
    %v436 = vsub.f32 %v328, %v422
    %v437 = vsub.f32 %v354, %v425
    %v438 = vsub.f32 %v380, %v428
    %v439 = vsub.f32 %v406, %v431
    %v440 = vmul.f32 %v432, 1.442695
    %v441 = vpow.pop %v440
    %v442 = vmul.f32 %v433, 1.442695
    %v443 = vpow.pop %v442
    %v444 = vmul.f32 %v434, 1.442695
    %v445 = vpow.pop %v444
    %v446 = vmul.f32 %v435, 1.442695
    %v447 = vpow.pop %v446
    %v448 = vmul.f32 %v436, 1.442695
    %v449 = vpow.pop %v448
    %v450 = vmul.f32 %v437, 1.442695
    %v451 = vpow.pop %v450
    %v452 = vmul.f32 %v438, 1.442695
    %v453 = vpow.pop %v452
    %v454 = vmul.f32 %v439, 1.442695
    %v455 = vpow.pop %v454
    %v456 = vsel %vm201, %v441, 0.0
    %457 = vadd.xlane.f32.xlu0 %v456
    %v458 = vpop.xlane.xlu0 %457
    %v459 = vsel %vm201, %v443, 0.0
    %460 = vadd.xlane.f32.xlu0 %v459
    %v461 = vpop.xlane.xlu0 %460
    %v462 = vsel %vm201, %v445, 0.0
    %463 = vadd.xlane.f32.xlu0 %v462
    %v464 = vpop.xlane.xlu0 %463
    %v465 = vsel %vm201, %v447, 0.0
    %466 = vadd.xlane.f32.xlu0 %v465
    %v467 = vpop.xlane.xlu0 %466
    %v468 = vsel %vm201, %v449, 0.0
    %469 = vadd.xlane.f32.xlu0 %v468
    %v470 = vpop.xlane.xlu0 %469
    %v471 = vsel %vm201, %v451, 0.0
    %472 = vadd.xlane.f32.xlu0 %v471
    %v473 = vpop.xlane.xlu0 %472
    %v474 = vsel %vm201, %v453, 0.0
    %475 = vadd.xlane.f32.xlu0 %v474
    %v476 = vpop.xlane.xlu0 %475
    %v477 = vsel %vm201, %v455, 0.0
    %478 = vadd.xlane.f32.xlu0 %v477
    %v479 = vpop.xlane.xlu0 %478
    %v480 = vrcp.pop %v458
    %v481 = vmul.f32 %v458, %v480
    %v482 = vsub.f32 1.0, %v481
    %v483 = vmul.f32 %v480, %v482
    %v484 = vadd.f32 %v480, %v483
    %vm485 = vweird.f32 %v458
    %vm486 = vweird.f32 %v480
    %vm487 = vmor %vm485, %vm486
    %v488 = vsel %vm487, %v480, %v484
    %v489 = vand.u32 2147483647, %v458
    %vm490 = vcmp.eq.f32.partialorder %v489, 8.507059e+37
    %v491 = vand.u32 %v458, 2147483648
    %v492 = vor.u32 1.1754944e-38, %v491
    %v493 = vsel %vm490, %v492, %v488
    %v494 = vmul.f32 %v441, %v493
    %v495 = vrcp.pop %v461
    %v496 = vmul.f32 %v461, %v495
    %v497 = vsub.f32 1.0, %v496
    %v498 = vmul.f32 %v495, %v497
    %v499 = vadd.f32 %v495, %v498
    %vm500 = vweird.f32 %v461
    %vm501 = vweird.f32 %v495
    %vm502 = vmor %vm500, %vm501
    %v503 = vsel %vm502, %v495, %v499
    %v504 = vand.u32 2147483647, %v461
    %vm505 = vcmp.eq.f32.partialorder %v504, 8.507059e+37
    %v506 = vand.u32 %v461, 2147483648
    %v507 = vor.u32 1.1754944e-38, %v506
    %v508 = vsel %vm505, %v507, %v503
    %v509 = vmul.f32 %v443, %v508
    %v510 = vrcp.pop %v464
    %v511 = vmul.f32 %v464, %v510
    %v512 = vsub.f32 1.0, %v511
    %v513 = vmul.f32 %v510, %v512
    %v514 = vadd.f32 %v510, %v513
    %vm515 = vweird.f32 %v464
    %vm516 = vweird.f32 %v510
    %vm517 = vmor %vm515, %vm516
    %v518 = vsel %vm517, %v510, %v514
    %v519 = vand.u32 2147483647, %v464
    %vm520 = vcmp.eq.f32.partialorder %v519, 8.507059e+37
    %v521 = vand.u32 %v464, 2147483648
    %v522 = vor.u32 1.1754944e-38, %v521
    %v523 = vsel %vm520, %v522, %v518
    %v524 = vmul.f32 %v445, %v523
    %v525 = vrcp.pop %v467
    %v526 = vmul.f32 %v467, %v525
    %v527 = vsub.f32 1.0, %v526
    %v528 = vmul.f32 %v525, %v527
    %v529 = vadd.f32 %v525, %v528
    %vm530 = vweird.f32 %v467
    %vm531 = vweird.f32 %v525
    %vm532 = vmor %vm530, %vm531
    %v533 = vsel %vm532, %v525, %v529
    %v534 = vand.u32 2147483647, %v467
    %vm535 = vcmp.eq.f32.partialorder %v534, 8.507059e+37
    %v536 = vand.u32 %v467, 2147483648
    %v537 = vor.u32 1.1754944e-38, %v536
    %v538 = vsel %vm535, %v537, %v533
    %v539 = vmul.f32 %v447, %v538
    %v540 = vrcp.pop %v470
    %v541 = vmul.f32 %v470, %v540
    %v542 = vsub.f32 1.0, %v541
    %v543 = vmul.f32 %v540, %v542
    %v544 = vadd.f32 %v540, %v543
    %vm545 = vweird.f32 %v470
    %vm546 = vweird.f32 %v540
    %vm547 = vmor %vm545, %vm546
    %v548 = vsel %vm547, %v540, %v544
    %v549 = vand.u32 2147483647, %v470
    %vm550 = vcmp.eq.f32.partialorder %v549, 8.507059e+37
    %v551 = vand.u32 %v470, 2147483648
    %v552 = vor.u32 1.1754944e-38, %v551
    %v553 = vsel %vm550, %v552, %v548
    %v554 = vmul.f32 %v449, %v553
    %v555 = vrcp.pop %v473
    %v556 = vmul.f32 %v473, %v555
    %v557 = vsub.f32 1.0, %v556
    %v558 = vmul.f32 %v555, %v557
    %v559 = vadd.f32 %v555, %v558
    %vm560 = vweird.f32 %v473
    %vm561 = vweird.f32 %v555
    %vm562 = vmor %vm560, %vm561
    %v563 = vsel %vm562, %v555, %v559
    %v564 = vand.u32 2147483647, %v473
    %vm565 = vcmp.eq.f32.partialorder %v564, 8.507059e+37
    %v566 = vand.u32 %v473, 2147483648
    %v567 = vor.u32 1.1754944e-38, %v566
    %v568 = vsel %vm565, %v567, %v563
    %v569 = vmul.f32 %v451, %v568
    %v570 = vrcp.pop %v476
    %v571 = vmul.f32 %v476, %v570
    %v572 = vsub.f32 1.0, %v571
    %v573 = vmul.f32 %v570, %v572
    %v574 = vadd.f32 %v570, %v573
    %vm575 = vweird.f32 %v476
    %vm576 = vweird.f32 %v570
    %vm577 = vmor %vm575, %vm576
    %v578 = vsel %vm577, %v570, %v574
    %v579 = vand.u32 2147483647, %v476
    %vm580 = vcmp.eq.f32.partialorder %v579, 8.507059e+37
    %v581 = vand.u32 %v476, 2147483648
    %v582 = vor.u32 1.1754944e-38, %v581
    %v583 = vsel %vm580, %v582, %v578
    %v584 = vmul.f32 %v453, %v583
    %v585 = vrcp.pop %v479
    %v586 = vmul.f32 %v479, %v585
    %v587 = vsub.f32 1.0, %v586
    %v588 = vmul.f32 %v585, %v587
    %v589 = vadd.f32 %v585, %v588
    %vm590 = vweird.f32 %v479
    %vm591 = vweird.f32 %v585
    %vm592 = vmor %vm590, %vm591
    %v593 = vsel %vm592, %v585, %v589
    %v594 = vand.u32 2147483647, %v479
    %vm595 = vcmp.eq.f32.partialorder %v594, 8.507059e+37
    %v596 = vand.u32 %v479, 2147483648
    %v597 = vor.u32 1.1754944e-38, %v596
    %v598 = vsel %vm595, %v597, %v593
    %v599 = vmul.f32 %v455, %v598
    %600 = vrot.lane.b32.xlu0 %v180, 112
    %v601 = vpop.permute.xlu0 %600
    %v604 = vsel %vm201, %v494, 0
    %606 = vmatpush.msra.mxu0 0.0
    %607 = vmatpush.msra.mxu0 0.0
    %608 = vmatpush.msra.mxu0 0.0
    %609 = vmatpush.msra.mxu0 0.0
    %610 = vmatpush.msra.mxu0 0.0
    %611 = vmatpush.msra.mxu0 0.0
    %612 = vmatpush.msra.mxu0 0.0
    %613 = vmatpush.msra.mxu0 0.0
    %614 = vmatpush.msra.mxu0 0.0
    %615 = vmatpush.msra.mxu0 0.0
    %616 = vmatpush.msra.mxu0 0.0
    %617 = vmatpush.msra.mxu0 0.0
    %618 = vmatpush.msra.mxu0 0.0
    %619 = vmatpush.msra.mxu0 0.0
    %620 = vmatpush.msra.mxu0 0.0
    %621 = vmatpush.msra.mxu0 %v601
    %622 = vmatmul.f32.gmra.mxu0 %v604
    %v623 = vpop.f32.mrf.mxu0
    %v624 = vadd.f32 0.0, %v623
    %625 = vdwg.mxu0
    %626 = vrot.lane.b32.xlu0 %v183, 112
    %v627 = vpop.permute.xlu0 %626
    %v630 = vsel %vm201, %v509, 0
    %632 = vmatpush.msra.mxu0 0.0
    %633 = vmatpush.msra.mxu0 0.0
    %634 = vmatpush.msra.mxu0 0.0
    %635 = vmatpush.msra.mxu0 0.0
    %636 = vmatpush.msra.mxu0 0.0
    %637 = vmatpush.msra.mxu0 0.0
    %638 = vmatpush.msra.mxu0 0.0
    %639 = vmatpush.msra.mxu0 0.0
    %640 = vmatpush.msra.mxu0 0.0
    %641 = vmatpush.msra.mxu0 0.0
    %642 = vmatpush.msra.mxu0 0.0
    %643 = vmatpush.msra.mxu0 0.0
    %644 = vmatpush.msra.mxu0 0.0
    %645 = vmatpush.msra.mxu0 0.0
    %646 = vmatpush.msra.mxu0 0.0
    %647 = vmatpush.msra.mxu0 %v627
    %648 = vmatmul.f32.gmra.mxu0 %v630
    %v649 = vpop.f32.mrf.mxu0
    %v650 = vadd.f32 0.0, %v649
    %651 = vdwg.mxu0
    %652 = vrot.lane.b32.xlu0 %v188, 112
    %v653 = vpop.permute.xlu0 %652
    %v656 = vsel %vm201, %v524, 0
    %658 = vmatpush.msra.mxu0 0.0
    %659 = vmatpush.msra.mxu0 0.0
    %660 = vmatpush.msra.mxu0 0.0
    %661 = vmatpush.msra.mxu0 0.0
    %662 = vmatpush.msra.mxu0 0.0
    %663 = vmatpush.msra.mxu0 0.0
    %664 = vmatpush.msra.mxu0 0.0
    %665 = vmatpush.msra.mxu0 0.0
    %666 = vmatpush.msra.mxu0 0.0
    %667 = vmatpush.msra.mxu0 0.0
    %668 = vmatpush.msra.mxu0 0.0
    %669 = vmatpush.msra.mxu0 0.0
    %670 = vmatpush.msra.mxu0 0.0
    %671 = vmatpush.msra.mxu0 0.0
    %672 = vmatpush.msra.mxu0 0.0
    %673 = vmatpush.msra.mxu0 %v653
    %674 = vmatmul.f32.gmra.mxu0 %v656
    %v675 = vpop.f32.mrf.mxu0
    %v676 = vadd.f32 0.0, %v675
    %677 = vdwg.mxu0
    %678 = vrot.lane.b32.xlu0 %v190, 112
    %v679 = vpop.permute.xlu0 %678
    %v682 = vsel %vm201, %v539, 0
    %684 = vmatpush.msra.mxu0 0.0
    %685 = vmatpush.msra.mxu0 0.0
    %686 = vmatpush.msra.mxu0 0.0
    %687 = vmatpush.msra.mxu0 0.0
    %688 = vmatpush.msra.mxu0 0.0
    %689 = vmatpush.msra.mxu0 0.0
    %690 = vmatpush.msra.mxu0 0.0
    %691 = vmatpush.msra.mxu0 0.0
    %692 = vmatpush.msra.mxu0 0.0
    %693 = vmatpush.msra.mxu0 0.0
    %694 = vmatpush.msra.mxu0 0.0
    %695 = vmatpush.msra.mxu0 0.0
    %696 = vmatpush.msra.mxu0 0.0
    %697 = vmatpush.msra.mxu0 0.0
    %698 = vmatpush.msra.mxu0 0.0
    %699 = vmatpush.msra.mxu0 %v679
    %700 = vmatmul.f32.gmra.mxu0 %v682
    %v701 = vpop.f32.mrf.mxu0
    %v702 = vadd.f32 0.0, %v701
    %703 = vdwg.mxu0
    %704 = vrot.lane.b32.xlu0 %v192, 112
    %v705 = vpop.permute.xlu0 %704
    %v708 = vsel %vm201, %v554, 0
    %710 = vmatpush.msra.mxu0 0.0
    %711 = vmatpush.msra.mxu0 0.0
    %712 = vmatpush.msra.mxu0 0.0
    %713 = vmatpush.msra.mxu0 0.0
    %714 = vmatpush.msra.mxu0 0.0
    %715 = vmatpush.msra.mxu0 0.0
    %716 = vmatpush.msra.mxu0 0.0
    %717 = vmatpush.msra.mxu0 0.0
    %718 = vmatpush.msra.mxu0 0.0
    %719 = vmatpush.msra.mxu0 0.0
    %720 = vmatpush.msra.mxu0 0.0
    %721 = vmatpush.msra.mxu0 0.0
    %722 = vmatpush.msra.mxu0 0.0
    %723 = vmatpush.msra.mxu0 0.0
    %724 = vmatpush.msra.mxu0 0.0
    %725 = vmatpush.msra.mxu0 %v705
    %726 = vmatmul.f32.gmra.mxu0 %v708
    %v727 = vpop.f32.mrf.mxu0
    %v728 = vadd.f32 0.0, %v727
    %729 = vdwg.mxu0
    %730 = vrot.lane.b32.xlu0 %v194, 112
    %v731 = vpop.permute.xlu0 %730
    %v734 = vsel %vm201, %v569, 0
    %736 = vmatpush.msra.mxu0 0.0
    %737 = vmatpush.msra.mxu0 0.0
    %738 = vmatpush.msra.mxu0 0.0
    %739 = vmatpush.msra.mxu0 0.0
    %740 = vmatpush.msra.mxu0 0.0
    %741 = vmatpush.msra.mxu0 0.0
    %742 = vmatpush.msra.mxu0 0.0
    %743 = vmatpush.msra.mxu0 0.0
    %744 = vmatpush.msra.mxu0 0.0
    %745 = vmatpush.msra.mxu0 0.0
    %746 = vmatpush.msra.mxu0 0.0
    %747 = vmatpush.msra.mxu0 0.0
    %748 = vmatpush.msra.mxu0 0.0
    %749 = vmatpush.msra.mxu0 0.0
    %750 = vmatpush.msra.mxu0 0.0
    %751 = vmatpush.msra.mxu0 %v731
    %752 = vmatmul.f32.gmra.mxu0 %v734
    %v753 = vpop.f32.mrf.mxu0
    %v754 = vadd.f32 0.0, %v753
    %755 = vdwg.mxu0
    %756 = vrot.lane.b32.xlu0 %v196, 112
    %v757 = vpop.permute.xlu0 %756
    %v760 = vsel %vm201, %v584, 0
    %762 = vmatpush.msra.mxu0 0.0
    %763 = vmatpush.msra.mxu0 0.0
    %764 = vmatpush.msra.mxu0 0.0
    %765 = vmatpush.msra.mxu0 0.0
    %766 = vmatpush.msra.mxu0 0.0
    %767 = vmatpush.msra.mxu0 0.0
    %768 = vmatpush.msra.mxu0 0.0
    %769 = vmatpush.msra.mxu0 0.0
    %770 = vmatpush.msra.mxu0 0.0
    %771 = vmatpush.msra.mxu0 0.0
    %772 = vmatpush.msra.mxu0 0.0
    %773 = vmatpush.msra.mxu0 0.0
    %774 = vmatpush.msra.mxu0 0.0
    %775 = vmatpush.msra.mxu0 0.0
    %776 = vmatpush.msra.mxu0 0.0
    %777 = vmatpush.msra.mxu0 %v757
    %778 = vmatmul.f32.gmra.mxu0 %v760
    %v779 = vpop.f32.mrf.mxu0
    %v780 = vadd.f32 0.0, %v779
    %781 = vdwg.mxu0
    %782 = vrot.lane.b32.xlu0 %v198, 112
    %v783 = vpop.permute.xlu0 %782
    %v786 = vsel %vm201, %v599, 0
    %788 = vmatpush.msra.mxu0 0.0
    %789 = vmatpush.msra.mxu0 0.0
    %790 = vmatpush.msra.mxu0 0.0
    %791 = vmatpush.msra.mxu0 0.0
    %792 = vmatpush.msra.mxu0 0.0
    %793 = vmatpush.msra.mxu0 0.0
    %794 = vmatpush.msra.mxu0 0.0
    %795 = vmatpush.msra.mxu0 0.0
    %796 = vmatpush.msra.mxu0 0.0
    %797 = vmatpush.msra.mxu0 0.0
    %798 = vmatpush.msra.mxu0 0.0
    %799 = vmatpush.msra.mxu0 0.0
    %800 = vmatpush.msra.mxu0 0.0
    %801 = vmatpush.msra.mxu0 0.0
    %802 = vmatpush.msra.mxu0 0.0
    %803 = vmatpush.msra.mxu0 %v783
    %804 = vmatmul.f32.gmra.mxu0 %v786
    %v805 = vpop.f32.mrf.mxu0
    %v806 = vadd.f32 0.0, %v805
    %807 = vdwg.mxu0
    %810 = vrot.lane.b32.xlu0 %v676, 8
    %v811 = vpop.permute.xlu0 %810
    %812 = vrot.lane.b32.xlu0 %v702, 8
    %v813 = vpop.permute.xlu0 %812
    %818 = vrot.lane.b32.xlu0 %v728, 16
    %v819 = vpop.permute.xlu0 %818
    %820 = vrot.lane.b32.xlu0 %v754, 16
    %v821 = vpop.permute.xlu0 %820
    %826 = vrot.lane.b32.xlu0 %v780, 24
    %v827 = vpop.permute.xlu0 %826
    %828 = vrot.lane.b32.xlu0 %v806, 24
    %v829 = vpop.permute.xlu0 %828
    %v832 = vsel %vm201, %v624, %v811
    %v833 = vsel %vm201, %v650, %v813
    %vm834 = vcmask 130048
    %v835 = vsel %vm834, %v832, %v819
    %v836 = vsel %vm834, %v833, %v821
    %vm837 = vcmask 195584
    %v838 = vsel %vm837, %v835, %v827
    %v839 = vsel %vm837, %v836, %v829
    %v840 = vperm.slane %v102, 0
    %v842 = vsel %vm157, %v838, 0
    %v845 = vsel %vm157, %v839, 0
    %847 = vmatpush.msra.mxu0 0.0
    %848 = vmatpush.msra.mxu0 0.0
    %849 = vmatpush.msra.mxu0 0.0
    %850 = vmatpush.msra.mxu0 0.0
    %851 = vmatpush.msra.mxu0 0.0
    %852 = vmatpush.msra.mxu0 0.0
    %853 = vmatpush.msra.mxu0 0.0
    %854 = vmatpush.msra.mxu0 0.0
    %855 = vmatpush.msra.mxu0 0.0
    %856 = vmatpush.msra.mxu0 0.0
    %857 = vmatpush.msra.mxu0 0.0
    %858 = vmatpush.msra.mxu0 0.0
    %859 = vmatpush.msra.mxu0 %v101
    %860 = vmatpush.msra.mxu0 %v100
    %861 = vmatpush.msra.mxu0 %v99
    %862 = vmatpush.msra.mxu0 %v98
    %863 = vmatmul.f32.gmra.mxu0 %v842
    %v864 = vpop.f32.mrf.mxu0
    %v865 = vadd.f32 %v840, %v864
    %866 = vmatmul.f32.gmra.mxu0 %v845
    %v867 = vpop.f32.mrf.mxu0
    %v868 = vadd.f32 %v840, %v867
    %869 = vdwg.mxu0
    %v872 = vrot.slane %v865, 1
    %v873 = vrot.slane %v865, 2
    %v874 = vrot.slane %v865, 3
    %v875 = vrot.slane %v865, 4
    %v876 = vrot.slane %v865, 5
    %v877 = vrot.slane %v865, 6
    %v878 = vrot.slane %v865, 7
    %v879 = vrot.slane %v868, 1
    %v880 = vrot.slane %v868, 2
    %v881 = vrot.slane %v868, 3
    %v882 = vrot.slane %v868, 4
    %v883 = vrot.slane %v868, 5
    %v884 = vrot.slane %v868, 6
    %v885 = vrot.slane %v868, 7
    %v902 = vadd.f32 %v77, %v865
    %v903 = vadd.f32 %v78, %v872
    %v904 = vadd.f32 %v79, %v873
    %v905 = vadd.f32 %v80, %v874
    %v906 = vadd.f32 %v81, %v875
    %v907 = vadd.f32 %v82, %v876
    %v908 = vadd.f32 %v83, %v877
    %v909 = vadd.f32 %v84, %v878
    %v910 = vadd.f32 %v85, %v868
    %v911 = vadd.f32 %v86, %v879
    %v912 = vadd.f32 %v87, %v880
    %v913 = vadd.f32 %v88, %v881
    %v914 = vadd.f32 %v89, %v882
    %v915 = vadd.f32 %v90, %v883
    %v916 = vadd.f32 %v91, %v884
    %v917 = vadd.f32 %v92, %v885
    %v934 = vrot.slane %v903, 7
    %v935 = vsel %vm123, %v934, %v902
    %v936 = vrot.slane %v904, 6
    %v937 = vsel %vm126, %v936, %v935
    %v938 = vrot.slane %v905, 5
    %v939 = vsel %vm129, %v938, %v937
    %v940 = vrot.slane %v906, 4
    %v941 = vsel %vm132, %v940, %v939
    %v942 = vrot.slane %v907, 3
    %v943 = vsel %vm135, %v942, %v941
    %v944 = vrot.slane %v908, 2
    %v945 = vsel %vm138, %v944, %v943
    %v946 = vrot.slane %v909, 1
    %v947 = vsel %vm141, %v946, %v945
    %v948 = vrot.slane %v911, 7
    %v949 = vsel %vm123, %v948, %v910
    %v950 = vrot.slane %v912, 6
    %v951 = vsel %vm126, %v950, %v949
    %v952 = vrot.slane %v913, 5
    %v953 = vsel %vm129, %v952, %v951
    %v954 = vrot.slane %v914, 4
    %v955 = vsel %vm132, %v954, %v953
    %v956 = vrot.slane %v915, 3
    %v957 = vsel %vm135, %v956, %v955
    %v958 = vrot.slane %v916, 2
    %v959 = vsel %vm138, %v958, %v957
    %v960 = vrot.slane %v917, 1
    %v961 = vsel %vm141, %v960, %v959
    %v964 = vsel %vm157, %v947, 0.0
    %965 = vadd.xlane.f32.xlu0 %v964
    %v966 = vpop.xlane.xlu0 %965
    %v967 = vsel %vm157, %v961, 0.0
    %968 = vadd.xlane.f32.xlu0 %v967
    %v969 = vpop.xlane.xlu0 %968
    %v970 = vrcp.pop 32.0
    %v971 = vmul.f32 32.0, %v970
    %v972 = vsub.f32 1.0, %v971
    %v973 = vmul.f32 %v970, %v972
    %v974 = vadd.f32 %v970, %v973
    %vm975 = vweird.f32 %v970
    %v976 = vsel %vm975, %v970, %v974
    %v977 = vmul.f32 %v966, %v976
    %v978 = vmul.f32 %v969, %v976
    %v979 = vmul.f32 %v902, %v902
    %v980 = vmul.f32 %v903, %v903
    %v981 = vmul.f32 %v904, %v904
    %v982 = vmul.f32 %v905, %v905
    %v983 = vmul.f32 %v906, %v906
    %v984 = vmul.f32 %v907, %v907
    %v985 = vmul.f32 %v908, %v908
    %v986 = vmul.f32 %v909, %v909
    %v987 = vmul.f32 %v910, %v910
    %v988 = vmul.f32 %v911, %v911
    %v989 = vmul.f32 %v912, %v912
    %v990 = vmul.f32 %v913, %v913
    %v991 = vmul.f32 %v914, %v914
    %v992 = vmul.f32 %v915, %v915
    %v993 = vmul.f32 %v916, %v916
    %v994 = vmul.f32 %v917, %v917
    %v1011 = vrot.slane %v980, 7
    %v1012 = vsel %vm123, %v1011, %v979
    %v1013 = vrot.slane %v981, 6
    %v1014 = vsel %vm126, %v1013, %v1012
    %v1015 = vrot.slane %v982, 5
    %v1016 = vsel %vm129, %v1015, %v1014
    %v1017 = vrot.slane %v983, 4
    %v1018 = vsel %vm132, %v1017, %v1016
    %v1019 = vrot.slane %v984, 3
    %v1020 = vsel %vm135, %v1019, %v1018
    %v1021 = vrot.slane %v985, 2
    %v1022 = vsel %vm138, %v1021, %v1020
    %v1023 = vrot.slane %v986, 1
    %v1024 = vsel %vm141, %v1023, %v1022
    %v1025 = vrot.slane %v988, 7
    %v1026 = vsel %vm123, %v1025, %v987
    %v1027 = vrot.slane %v989, 6
    %v1028 = vsel %vm126, %v1027, %v1026
    %v1029 = vrot.slane %v990, 5
    %v1030 = vsel %vm129, %v1029, %v1028
    %v1031 = vrot.slane %v991, 4
    %v1032 = vsel %vm132, %v1031, %v1030
    %v1033 = vrot.slane %v992, 3
    %v1034 = vsel %vm135, %v1033, %v1032
    %v1035 = vrot.slane %v993, 2
    %v1036 = vsel %vm138, %v1035, %v1034
    %v1037 = vrot.slane %v994, 1
    %v1038 = vsel %vm141, %v1037, %v1036
    %v1041 = vsel %vm157, %v1024, 0.0
    %1042 = vadd.xlane.f32.xlu0 %v1041
    %v1043 = vpop.xlane.xlu0 %1042
    %v1044 = vsel %vm157, %v1038, 0.0
    %1045 = vadd.xlane.f32.xlu0 %v1044
    %v1046 = vpop.xlane.xlu0 %1045
    %v1047 = vmul.f32 %v1043, %v976
    %v1048 = vmul.f32 %v1046, %v976
    %v1049 = vmul.f32 %v977, %v977
    %v1050 = vmul.f32 %v978, %v978
    %v1051 = vsub.f32 %v1047, %v1049
    %v1052 = vsub.f32 %v1048, %v1050
    %v1055 = vrot.slane %v977, 1
    %v1056 = vrot.slane %v977, 2
    %v1057 = vrot.slane %v977, 3
    %v1058 = vrot.slane %v977, 4
    %v1059 = vrot.slane %v977, 5
    %v1060 = vrot.slane %v977, 6
    %v1061 = vrot.slane %v977, 7
    %v1062 = vrot.slane %v978, 1
    %v1063 = vrot.slane %v978, 2
    %v1064 = vrot.slane %v978, 3
    %v1065 = vrot.slane %v978, 4
    %v1066 = vrot.slane %v978, 5
    %v1067 = vrot.slane %v978, 6
    %v1068 = vrot.slane %v978, 7
    %v1085 = vsub.f32 %v902, %v977
    %v1086 = vsub.f32 %v903, %v1055
    %v1087 = vsub.f32 %v904, %v1056
    %v1088 = vsub.f32 %v905, %v1057
    %v1089 = vsub.f32 %v906, %v1058
    %v1090 = vsub.f32 %v907, %v1059
    %v1091 = vsub.f32 %v908, %v1060
    %v1092 = vsub.f32 %v909, %v1061
    %v1093 = vsub.f32 %v910, %v978
    %v1094 = vsub.f32 %v911, %v1062
    %v1095 = vsub.f32 %v912, %v1063
    %v1096 = vsub.f32 %v913, %v1064
    %v1097 = vsub.f32 %v914, %v1065
    %v1098 = vsub.f32 %v915, %v1066
    %v1099 = vsub.f32 %v916, %v1067
    %v1100 = vsub.f32 %v917, %v1068
    %v1101 = vadd.f32 %v1051, 1e-05
    %v1102 = vadd.f32 %v1052, 1e-05
    %v1103 = vrsqrt.pop %v1101
    %v1104 = vmul.f32 %v1103, %v1101
    %v1105 = vmul.f32 %v1104, %v1103
    %v1106 = vmul.f32 0.5, %v1105
    %v1107 = vsub.f32 1.5, %v1106
    %v1108 = vmul.f32 %v1103, %v1107
    %vm1109 = vweird.f32 %v1101
    %vm1110 = vweird.f32 %v1103
    %vm1111 = vmor %vm1109, %vm1110
    %v1112 = vsel %vm1111, %v1103, %v1108
    %v1113 = vrsqrt.pop %v1102
    %v1114 = vmul.f32 %v1113, %v1102
    %v1115 = vmul.f32 %v1114, %v1113
    %v1116 = vmul.f32 0.5, %v1115
    %v1117 = vsub.f32 1.5, %v1116
    %v1118 = vmul.f32 %v1113, %v1117
    %vm1119 = vweird.f32 %v1102
    %vm1120 = vweird.f32 %v1113
    %vm1121 = vmor %vm1119, %vm1120
    %v1122 = vsel %vm1121, %v1113, %v1118
    %v1125 = vrot.slane %v1112, 1
    %v1126 = vrot.slane %v1112, 2
    %v1127 = vrot.slane %v1112, 3
    %v1128 = vrot.slane %v1112, 4
    %v1129 = vrot.slane %v1112, 5
    %v1130 = vrot.slane %v1112, 6
    %v1131 = vrot.slane %v1112, 7
    %v1132 = vrot.slane %v1122, 1
    %v1133 = vrot.slane %v1122, 2
    %v1134 = vrot.slane %v1122, 3
    %v1135 = vrot.slane %v1122, 4
    %v1136 = vrot.slane %v1122, 5
    %v1137 = vrot.slane %v1122, 6
    %v1138 = vrot.slane %v1122, 7
    %v1155 = vmul.f32 %v1085, %v1112
    %v1156 = vmul.f32 %v1086, %v1125
    %v1157 = vmul.f32 %v1087, %v1126
    %v1158 = vmul.f32 %v1088, %v1127
    %v1159 = vmul.f32 %v1089, %v1128
    %v1160 = vmul.f32 %v1090, %v1129
    %v1161 = vmul.f32 %v1091, %v1130
    %v1162 = vmul.f32 %v1092, %v1131
    %v1163 = vmul.f32 %v1093, %v1122
    %v1164 = vmul.f32 %v1094, %v1132
    %v1165 = vmul.f32 %v1095, %v1133
    %v1166 = vmul.f32 %v1096, %v1134
    %v1167 = vmul.f32 %v1097, %v1135
    %v1168 = vmul.f32 %v1098, %v1136
    %v1169 = vmul.f32 %v1099, %v1137
    %v1170 = vmul.f32 %v1100, %v1138
    %v1171 = vperm.slane %v103, 0
    %v1172 = vmul.f32 %v1155, %v1171
    %v1173 = vmul.f32 %v1156, %v1171
    %v1174 = vmul.f32 %v1157, %v1171
    %v1175 = vmul.f32 %v1158, %v1171
    %v1176 = vmul.f32 %v1159, %v1171
    %v1177 = vmul.f32 %v1160, %v1171
    %v1178 = vmul.f32 %v1161, %v1171
    %v1179 = vmul.f32 %v1162, %v1171
    %v1180 = vmul.f32 %v1163, %v1171
    %v1181 = vmul.f32 %v1164, %v1171
    %v1182 = vmul.f32 %v1165, %v1171
    %v1183 = vmul.f32 %v1166, %v1171
    %v1184 = vmul.f32 %v1167, %v1171
    %v1185 = vmul.f32 %v1168, %v1171
    %v1186 = vmul.f32 %v1169, %v1171
    %v1187 = vmul.f32 %v1170, %v1171
    %v1188 = vperm.slane %v104, 0
    %v1189 = vadd.f32 %v1172, %v1188
    %v1190 = vadd.f32 %v1173, %v1188
    %v1191 = vadd.f32 %v1174, %v1188
    %v1192 = vadd.f32 %v1175, %v1188
    %v1193 = vadd.f32 %v1176, %v1188
    %v1194 = vadd.f32 %v1177, %v1188
    %v1195 = vadd.f32 %v1178, %v1188
    %v1196 = vadd.f32 %v1179, %v1188
    %v1197 = vadd.f32 %v1180, %v1188
    %v1198 = vadd.f32 %v1181, %v1188
    %v1199 = vadd.f32 %v1182, %v1188
    %v1200 = vadd.f32 %v1183, %v1188
    %v1201 = vadd.f32 %v1184, %v1188
    %v1202 = vadd.f32 %v1185, %v1188
    %v1203 = vadd.f32 %v1186, %v1188
    %v1204 = vadd.f32 %v1187, %v1188
    %v1205 = vld [vmem:[#allocation5 + $0x68] sm:$0xff]
    %v1206 = vld [vmem:[#allocation5 + $0x70] sm:$0xff]
    %v1207 = vld [vmem:[#allocation5 + $0x78] sm:$0xff]
    %v1208 = vld [vmem:[#allocation5 + $0x80] sm:$0xff]
    %v1209 = vld [vmem:[#allocation5 + $0x88] sm:$0x1]
    %v1210 = vperm.slane %v1209, 0
    %v1227 = vrot.slane %v1190, 7
    %v1228 = vsel %vm123, %v1227, %v1189
    %v1229 = vrot.slane %v1191, 6
    %v1230 = vsel %vm126, %v1229, %v1228
    %v1231 = vrot.slane %v1192, 5
    %v1232 = vsel %vm129, %v1231, %v1230
    %v1233 = vrot.slane %v1193, 4
    %v1234 = vsel %vm132, %v1233, %v1232
    %v1235 = vrot.slane %v1194, 3
    %v1236 = vsel %vm135, %v1235, %v1234
    %v1237 = vrot.slane %v1195, 2
    %v1238 = vsel %vm138, %v1237, %v1236
    %v1239 = vrot.slane %v1196, 1
    %v1240 = vsel %vm141, %v1239, %v1238
    %v1241 = vrot.slane %v1198, 7
    %v1242 = vsel %vm123, %v1241, %v1197
    %v1243 = vrot.slane %v1199, 6
    %v1244 = vsel %vm126, %v1243, %v1242
    %v1245 = vrot.slane %v1200, 5
    %v1246 = vsel %vm129, %v1245, %v1244
    %v1247 = vrot.slane %v1201, 4
    %v1248 = vsel %vm132, %v1247, %v1246
    %v1249 = vrot.slane %v1202, 3
    %v1250 = vsel %vm135, %v1249, %v1248
    %v1251 = vrot.slane %v1203, 2
    %v1252 = vsel %vm138, %v1251, %v1250
    %v1253 = vrot.slane %v1204, 1
    %v1254 = vsel %vm141, %v1253, %v1252
    %v1255 = vsel %vm157, %v1240, 0
    %v1257 = vsel %vm157, %v1254, 0
    %1259 = vmatpush.msra.mxu0 0.0
    %1260 = vmatpush.msra.mxu0 0.0
    %1261 = vmatpush.msra.mxu0 0.0
    %1262 = vmatpush.msra.mxu0 0.0
    %1263 = vmatpush.msra.mxu0 0.0
    %1264 = vmatpush.msra.mxu0 0.0
    %1265 = vmatpush.msra.mxu0 0.0
    %1266 = vmatpush.msra.mxu0 0.0
    %1267 = vmatpush.msra.mxu0 0.0
    %1268 = vmatpush.msra.mxu0 0.0
    %1269 = vmatpush.msra.mxu0 0.0
    %1270 = vmatpush.msra.mxu0 0.0
    %1271 = vmatpush.msra.mxu0 %v1208
    %1272 = vmatpush.msra.mxu0 %v1207
    %1273 = vmatpush.msra.mxu0 %v1206
    %1274 = vmatpush.msra.mxu0 %v1205
    %1275 = vmatmul.f32.gmra.mxu0 %v1255
    %v1276 = vpop.f32.mrf.mxu0
    %v1277 = vadd.f32 %v1210, %v1276
    %1278 = vmatmul.f32.gmra.mxu0 %v1257
    %v1279 = vpop.f32.mrf.mxu0
    %v1280 = vadd.f32 %v1210, %v1279
    %1281 = vdwg.mxu0
    %v1282 = vmax.f32 %v1277, 0.0
    %v1283 = vmax.f32 %v1280, 0.0
    %v1284 = vld [vmem:[#allocation5 + $0x90] sm:$0xff]
    %v1285 = vld [vmem:[#allocation5 + $0x98] sm:$0xff]
    %v1286 = vld [vmem:[#allocation5 + $0xa0] sm:$0x1]
    %v1287 = vld [vmem:[#allocation5 + $0xa8] sm:$0xff]
    %v1288 = vld [vmem:[#allocation5 + $0xb0] sm:$0xff]
    %v1289 = vld [vmem:[#allocation5 + $0xb8] sm:$0x1]
    %v1290 = vld [vmem:[#allocation5 + $0xc0] sm:$0x1]
    %v1291 = vld [vmem:[#allocation5 + $0xc8] sm:$0x1]
    %v1292 = vperm.slane %v1286, 0
    %v1294 = vsel %vm834, %v1282, 0
    %v1297 = vsel %vm834, %v1283, 0
    %1299 = vmatpush.msra.mxu0 0.0
    %1300 = vmatpush.msra.mxu0 0.0
    %1301 = vmatpush.msra.mxu0 0.0
    %1302 = vmatpush.msra.mxu0 0.0
    %1303 = vmatpush.msra.mxu0 0.0
    %1304 = vmatpush.msra.mxu0 0.0
    %1305 = vmatpush.msra.mxu0 0.0
    %1306 = vmatpush.msra.mxu0 0.0
    %1307 = vmatpush.msra.mxu0 0.0
    %1308 = vmatpush.msra.mxu0 0.0
    %1309 = vmatpush.msra.mxu0 0.0
    %1310 = vmatpush.msra.mxu0 0.0
    %1311 = vmatpush.msra.mxu0 0.0
    %1312 = vmatpush.msra.mxu0 0.0
    %1313 = vmatpush.msra.mxu0 %v1285
    %1314 = vmatpush.msra.mxu0 %v1284
    %1315 = vmatmul.f32.gmra.mxu0 %v1294
    %v1316 = vpop.f32.mrf.mxu0
    %v1317 = vadd.f32 %v1292, %v1316
    %1318 = vmatmul.f32.gmra.mxu0 %v1297
    %v1319 = vpop.f32.mrf.mxu0
    %v1320 = vadd.f32 %v1292, %v1319
    %1321 = vdwg.mxu0
    %1324 = vrot.lane.b32.xlu0 %v1317, 104
    %v1325 = vpop.permute.xlu0 %1324
    %1326 = vrot.lane.b32.xlu0 %v1320, 104
    %v1327 = vpop.permute.xlu0 %1326
    %1328 = vrot.lane.b32.xlu0 %v1317, 120
    %v1329 = vpop.permute.xlu0 %1328
    %v1330 = vsel %vm201, %v1317, 0
    %v1332 = vsel %vm201, %v1329, 0
    %1334 = vmatpush.xpose.msra.mxu0 0.0
    %1335 = vmatpush.xpose.msra.mxu0 0.0
    %1336 = vmatpush.xpose.msra.mxu0 0.0
    %1337 = vmatpush.xpose.msra.mxu0 0.0
    %1338 = vmatpush.xpose.msra.mxu0 0.0
    %1339 = vmatpush.xpose.msra.mxu0 0.0
    %1340 = vmatpush.xpose.msra.mxu0 0.0
    %1341 = vmatpush.xpose.msra.mxu0 0.0
    %1342 = vmatpush.xpose.msra.mxu0 0.0
    %1343 = vmatpush.xpose.msra.mxu0 0.0
    %1344 = vmatpush.xpose.msra.mxu0 0.0
    %1345 = vmatpush.xpose.msra.mxu0 0.0
    %1346 = vmatpush.xpose.msra.mxu0 0.0
    %1347 = vmatpush.xpose.msra.mxu0 0.0
    %1348 = vmatpush.xpose.msra.mxu0 0.0
    %1349 = vmatpush.xpose.msra.mxu0 %v1332
    %1350 = vmatmul.f32.gmra.mxu0 %v1330
    %v1351 = vpop.f32.mrf.mxu0
    %v1352 = vadd.f32 0.0, %v1351
    %1353 = vdwg.mxu0
    %1354 = vrot.lane.b32.xlu0 %v1320, 120
    %v1355 = vpop.permute.xlu0 %1354
    %v1356 = vsel %vm201, %v1320, 0
    %v1358 = vsel %vm201, %v1355, 0
    %1360 = vmatpush.xpose.msra.mxu0 0.0
    %1361 = vmatpush.xpose.msra.mxu0 0.0
    %1362 = vmatpush.xpose.msra.mxu0 0.0
    %1363 = vmatpush.xpose.msra.mxu0 0.0
    %1364 = vmatpush.xpose.msra.mxu0 0.0
    %1365 = vmatpush.xpose.msra.mxu0 0.0
    %1366 = vmatpush.xpose.msra.mxu0 0.0
    %1367 = vmatpush.xpose.msra.mxu0 0.0
    %1368 = vmatpush.xpose.msra.mxu0 0.0
    %1369 = vmatpush.xpose.msra.mxu0 0.0
    %1370 = vmatpush.xpose.msra.mxu0 0.0
    %1371 = vmatpush.xpose.msra.mxu0 0.0
    %1372 = vmatpush.xpose.msra.mxu0 0.0
    %1373 = vmatpush.xpose.msra.mxu0 0.0
    %1374 = vmatpush.xpose.msra.mxu0 0.0
    %1375 = vmatpush.xpose.msra.mxu0 %v1358
    %1376 = vmatmul.f32.gmra.mxu0 %v1356
    %v1377 = vpop.f32.mrf.mxu0
    %v1378 = vadd.f32 0.0, %v1377
    %1379 = vdwg.mxu0
    %1380 = vrot.lane.b32.xlu0 %v1325, 120
    %v1381 = vpop.permute.xlu0 %1380
    %v1382 = vsel %vm201, %v1325, 0
    %v1384 = vsel %vm201, %v1381, 0
    %1386 = vmatpush.xpose.msra.mxu0 0.0
    %1387 = vmatpush.xpose.msra.mxu0 0.0
    %1388 = vmatpush.xpose.msra.mxu0 0.0
    %1389 = vmatpush.xpose.msra.mxu0 0.0
    %1390 = vmatpush.xpose.msra.mxu0 0.0
    %1391 = vmatpush.xpose.msra.mxu0 0.0
    %1392 = vmatpush.xpose.msra.mxu0 0.0
    %1393 = vmatpush.xpose.msra.mxu0 0.0
    %1394 = vmatpush.xpose.msra.mxu0 0.0
    %1395 = vmatpush.xpose.msra.mxu0 0.0
    %1396 = vmatpush.xpose.msra.mxu0 0.0
    %1397 = vmatpush.xpose.msra.mxu0 0.0
    %1398 = vmatpush.xpose.msra.mxu0 0.0
    %1399 = vmatpush.xpose.msra.mxu0 0.0
    %1400 = vmatpush.xpose.msra.mxu0 0.0
    %1401 = vmatpush.xpose.msra.mxu0 %v1384
    %1402 = vmatmul.f32.gmra.mxu0 %v1382
    %v1403 = vpop.f32.mrf.mxu0
    %v1404 = vadd.f32 0.0, %v1403
    %1405 = vdwg.mxu0
    %1406 = vrot.lane.b32.xlu0 %v1327, 120
    %v1407 = vpop.permute.xlu0 %1406
    %v1408 = vsel %vm201, %v1327, 0
    %v1410 = vsel %vm201, %v1407, 0
    %1412 = vmatpush.xpose.msra.mxu0 0.0
    %1413 = vmatpush.xpose.msra.mxu0 0.0
    %1414 = vmatpush.xpose.msra.mxu0 0.0
    %1415 = vmatpush.xpose.msra.mxu0 0.0
    %1416 = vmatpush.xpose.msra.mxu0 0.0
    %1417 = vmatpush.xpose.msra.mxu0 0.0
    %1418 = vmatpush.xpose.msra.mxu0 0.0
    %1419 = vmatpush.xpose.msra.mxu0 0.0
    %1420 = vmatpush.xpose.msra.mxu0 0.0
    %1421 = vmatpush.xpose.msra.mxu0 0.0
    %1422 = vmatpush.xpose.msra.mxu0 0.0
    %1423 = vmatpush.xpose.msra.mxu0 0.0
    %1424 = vmatpush.xpose.msra.mxu0 0.0
    %1425 = vmatpush.xpose.msra.mxu0 0.0
    %1426 = vmatpush.xpose.msra.mxu0 0.0
    %1427 = vmatpush.xpose.msra.mxu0 %v1410
    %1428 = vmatmul.f32.gmra.mxu0 %v1408
    %v1429 = vpop.f32.mrf.mxu0
    %v1430 = vadd.f32 0.0, %v1429
    %1431 = vdwg.mxu0
    %v1432 = vsel %vm201, %v1352, -inf
    %1433 = vmax.xlane.f32.xlu0 %v1432
    %v1434 = vpop.xlane.xlu0 %1433
    %v1435 = vsel %vm201, %v1378, -inf
    %1436 = vmax.xlane.f32.xlu0 %v1435
    %v1437 = vpop.xlane.xlu0 %1436
    %v1438 = vsel %vm201, %v1404, -inf
    %1439 = vmax.xlane.f32.xlu0 %v1438
    %v1440 = vpop.xlane.xlu0 %1439
    %v1441 = vsel %vm201, %v1430, -inf
    %1442 = vmax.xlane.f32.xlu0 %v1441
    %v1443 = vpop.xlane.xlu0 %1442
    %v1444 = vsub.f32 %v1352, %v1434
    %v1445 = vsub.f32 %v1378, %v1437
    %v1446 = vsub.f32 %v1404, %v1440
    %v1447 = vsub.f32 %v1430, %v1443
    %v1448 = vmul.f32 %v1444, 1.442695
    %v1449 = vpow.pop %v1448
    %v1450 = vmul.f32 %v1445, 1.442695
    %v1451 = vpow.pop %v1450
    %v1452 = vmul.f32 %v1446, 1.442695
    %v1453 = vpow.pop %v1452
    %v1454 = vmul.f32 %v1447, 1.442695
    %v1455 = vpow.pop %v1454
    %v1456 = vsel %vm201, %v1449, 0.0
    %1457 = vadd.xlane.f32.xlu0 %v1456
    %v1458 = vpop.xlane.xlu0 %1457
    %v1459 = vsel %vm201, %v1451, 0.0
    %1460 = vadd.xlane.f32.xlu0 %v1459
    %v1461 = vpop.xlane.xlu0 %1460
    %v1462 = vsel %vm201, %v1453, 0.0
    %1463 = vadd.xlane.f32.xlu0 %v1462
    %v1464 = vpop.xlane.xlu0 %1463
    %v1465 = vsel %vm201, %v1455, 0.0
    %1466 = vadd.xlane.f32.xlu0 %v1465
    %v1467 = vpop.xlane.xlu0 %1466
    %v1468 = vrcp.pop %v1458
    %v1469 = vmul.f32 %v1458, %v1468
    %v1470 = vsub.f32 1.0, %v1469
    %v1471 = vmul.f32 %v1468, %v1470
    %v1472 = vadd.f32 %v1468, %v1471
    %vm1473 = vweird.f32 %v1458
    %vm1474 = vweird.f32 %v1468
    %vm1475 = vmor %vm1473, %vm1474
    %v1476 = vsel %vm1475, %v1468, %v1472
    %v1477 = vand.u32 2147483647, %v1458
    %vm1478 = vcmp.eq.f32.partialorder %v1477, 8.507059e+37
    %v1479 = vand.u32 %v1458, 2147483648
    %v1480 = vor.u32 1.1754944e-38, %v1479
    %v1481 = vsel %vm1478, %v1480, %v1476
    %v1482 = vmul.f32 %v1449, %v1481
    %v1483 = vrcp.pop %v1461
    %v1484 = vmul.f32 %v1461, %v1483
    %v1485 = vsub.f32 1.0, %v1484
    %v1486 = vmul.f32 %v1483, %v1485
    %v1487 = vadd.f32 %v1483, %v1486
    %vm1488 = vweird.f32 %v1461
    %vm1489 = vweird.f32 %v1483
    %vm1490 = vmor %vm1488, %vm1489
    %v1491 = vsel %vm1490, %v1483, %v1487
    %v1492 = vand.u32 2147483647, %v1461
    %vm1493 = vcmp.eq.f32.partialorder %v1492, 8.507059e+37
    %v1494 = vand.u32 %v1461, 2147483648
    %v1495 = vor.u32 1.1754944e-38, %v1494
    %v1496 = vsel %vm1493, %v1495, %v1491
    %v1497 = vmul.f32 %v1451, %v1496
    %v1498 = vrcp.pop %v1464
    %v1499 = vmul.f32 %v1464, %v1498
    %v1500 = vsub.f32 1.0, %v1499
    %v1501 = vmul.f32 %v1498, %v1500
    %v1502 = vadd.f32 %v1498, %v1501
    %vm1503 = vweird.f32 %v1464
    %vm1504 = vweird.f32 %v1498
    %vm1505 = vmor %vm1503, %vm1504
    %v1506 = vsel %vm1505, %v1498, %v1502
    %v1507 = vand.u32 2147483647, %v1464
    %vm1508 = vcmp.eq.f32.partialorder %v1507, 8.507059e+37
    %v1509 = vand.u32 %v1464, 2147483648
    %v1510 = vor.u32 1.1754944e-38, %v1509
    %v1511 = vsel %vm1508, %v1510, %v1506
    %v1512 = vmul.f32 %v1453, %v1511
    %v1513 = vrcp.pop %v1467
    %v1514 = vmul.f32 %v1467, %v1513
    %v1515 = vsub.f32 1.0, %v1514
    %v1516 = vmul.f32 %v1513, %v1515
    %v1517 = vadd.f32 %v1513, %v1516
    %vm1518 = vweird.f32 %v1467
    %vm1519 = vweird.f32 %v1513
    %vm1520 = vmor %vm1518, %vm1519
    %v1521 = vsel %vm1520, %v1513, %v1517
    %v1522 = vand.u32 2147483647, %v1467
    %vm1523 = vcmp.eq.f32.partialorder %v1522, 8.507059e+37
    %v1524 = vand.u32 %v1467, 2147483648
    %v1525 = vor.u32 1.1754944e-38, %v1524
    %v1526 = vsel %vm1523, %v1525, %v1521
    %v1527 = vmul.f32 %v1455, %v1526
    %1528 = vrot.lane.b32.xlu0 %v1317, 112
    %v1529 = vpop.permute.xlu0 %1528
    %v1532 = vsel %vm201, %v1482, 0
    %1534 = vmatpush.msra.mxu0 0.0
    %1535 = vmatpush.msra.mxu0 0.0
    %1536 = vmatpush.msra.mxu0 0.0
    %1537 = vmatpush.msra.mxu0 0.0
    %1538 = vmatpush.msra.mxu0 0.0
    %1539 = vmatpush.msra.mxu0 0.0
    %1540 = vmatpush.msra.mxu0 0.0
    %1541 = vmatpush.msra.mxu0 0.0
    %1542 = vmatpush.msra.mxu0 0.0
    %1543 = vmatpush.msra.mxu0 0.0
    %1544 = vmatpush.msra.mxu0 0.0
    %1545 = vmatpush.msra.mxu0 0.0
    %1546 = vmatpush.msra.mxu0 0.0
    %1547 = vmatpush.msra.mxu0 0.0
    %1548 = vmatpush.msra.mxu0 0.0
    %1549 = vmatpush.msra.mxu0 %v1529
    %1550 = vmatmul.f32.gmra.mxu0 %v1532
    %v1551 = vpop.f32.mrf.mxu0
    %v1552 = vadd.f32 0.0, %v1551
    %1553 = vdwg.mxu0
    %1554 = vrot.lane.b32.xlu0 %v1320, 112
    %v1555 = vpop.permute.xlu0 %1554
    %v1558 = vsel %vm201, %v1497, 0
    %1560 = vmatpush.msra.mxu0 0.0
    %1561 = vmatpush.msra.mxu0 0.0
    %1562 = vmatpush.msra.mxu0 0.0
    %1563 = vmatpush.msra.mxu0 0.0
    %1564 = vmatpush.msra.mxu0 0.0
    %1565 = vmatpush.msra.mxu0 0.0
    %1566 = vmatpush.msra.mxu0 0.0
    %1567 = vmatpush.msra.mxu0 0.0
    %1568 = vmatpush.msra.mxu0 0.0
    %1569 = vmatpush.msra.mxu0 0.0
    %1570 = vmatpush.msra.mxu0 0.0
    %1571 = vmatpush.msra.mxu0 0.0
    %1572 = vmatpush.msra.mxu0 0.0
    %1573 = vmatpush.msra.mxu0 0.0
    %1574 = vmatpush.msra.mxu0 0.0
    %1575 = vmatpush.msra.mxu0 %v1555
    %1576 = vmatmul.f32.gmra.mxu0 %v1558
    %v1577 = vpop.f32.mrf.mxu0
    %v1578 = vadd.f32 0.0, %v1577
    %1579 = vdwg.mxu0
    %1580 = vrot.lane.b32.xlu0 %v1325, 112
    %v1581 = vpop.permute.xlu0 %1580
    %v1584 = vsel %vm201, %v1512, 0
    %1586 = vmatpush.msra.mxu0 0.0
    %1587 = vmatpush.msra.mxu0 0.0
    %1588 = vmatpush.msra.mxu0 0.0
    %1589 = vmatpush.msra.mxu0 0.0
    %1590 = vmatpush.msra.mxu0 0.0
    %1591 = vmatpush.msra.mxu0 0.0
    %1592 = vmatpush.msra.mxu0 0.0
    %1593 = vmatpush.msra.mxu0 0.0
    %1594 = vmatpush.msra.mxu0 0.0
    %1595 = vmatpush.msra.mxu0 0.0
    %1596 = vmatpush.msra.mxu0 0.0
    %1597 = vmatpush.msra.mxu0 0.0
    %1598 = vmatpush.msra.mxu0 0.0
    %1599 = vmatpush.msra.mxu0 0.0
    %1600 = vmatpush.msra.mxu0 0.0
    %1601 = vmatpush.msra.mxu0 %v1581
    %1602 = vmatmul.f32.gmra.mxu0 %v1584
    %v1603 = vpop.f32.mrf.mxu0
    %v1604 = vadd.f32 0.0, %v1603
    %1605 = vdwg.mxu0
    %1606 = vrot.lane.b32.xlu0 %v1327, 112
    %v1607 = vpop.permute.xlu0 %1606
    %v1610 = vsel %vm201, %v1527, 0
    %1612 = vmatpush.msra.mxu0 0.0
    %1613 = vmatpush.msra.mxu0 0.0
    %1614 = vmatpush.msra.mxu0 0.0
    %1615 = vmatpush.msra.mxu0 0.0
    %1616 = vmatpush.msra.mxu0 0.0
    %1617 = vmatpush.msra.mxu0 0.0
    %1618 = vmatpush.msra.mxu0 0.0
    %1619 = vmatpush.msra.mxu0 0.0
    %1620 = vmatpush.msra.mxu0 0.0
    %1621 = vmatpush.msra.mxu0 0.0
    %1622 = vmatpush.msra.mxu0 0.0
    %1623 = vmatpush.msra.mxu0 0.0
    %1624 = vmatpush.msra.mxu0 0.0
    %1625 = vmatpush.msra.mxu0 0.0
    %1626 = vmatpush.msra.mxu0 0.0
    %1627 = vmatpush.msra.mxu0 %v1607
    %1628 = vmatmul.f32.gmra.mxu0 %v1610
    %v1629 = vpop.f32.mrf.mxu0
    %v1630 = vadd.f32 0.0, %v1629
    %1631 = vdwg.mxu0
    %1634 = vrot.lane.b32.xlu0 %v1604, 8
    %v1635 = vpop.permute.xlu0 %1634
    %1636 = vrot.lane.b32.xlu0 %v1630, 8
    %v1637 = vpop.permute.xlu0 %1636
    %v1640 = vsel %vm201, %v1552, %v1635
    %v1641 = vsel %vm201, %v1578, %v1637
    %v1642 = vperm.slane %v1289, 0
    %v1644 = vsel %vm834, %v1640, 0
    %v1647 = vsel %vm834, %v1641, 0
    %1649 = vmatpush.msra.mxu0 0.0
    %1650 = vmatpush.msra.mxu0 0.0
    %1651 = vmatpush.msra.mxu0 0.0
    %1652 = vmatpush.msra.mxu0 0.0
    %1653 = vmatpush.msra.mxu0 0.0
    %1654 = vmatpush.msra.mxu0 0.0
    %1655 = vmatpush.msra.mxu0 0.0
    %1656 = vmatpush.msra.mxu0 0.0
    %1657 = vmatpush.msra.mxu0 0.0
    %1658 = vmatpush.msra.mxu0 0.0
    %1659 = vmatpush.msra.mxu0 0.0
    %1660 = vmatpush.msra.mxu0 0.0
    %1661 = vmatpush.msra.mxu0 0.0
    %1662 = vmatpush.msra.mxu0 0.0
    %1663 = vmatpush.msra.mxu0 %v1288
    %1664 = vmatpush.msra.mxu0 %v1287
    %1665 = vmatmul.f32.gmra.mxu0 %v1644
    %v1666 = vpop.f32.mrf.mxu0
    %v1667 = vadd.f32 %v1642, %v1666
    %1668 = vmatmul.f32.gmra.mxu0 %v1647
    %v1669 = vpop.f32.mrf.mxu0
    %v1670 = vadd.f32 %v1642, %v1669
    %1671 = vdwg.mxu0
    %v1672 = vadd.f32 %v1282, %v1667
    %v1673 = vadd.f32 %v1283, %v1670
    %v1674 = vsel %vm834, %v1672, 0.0
    %1675 = vadd.xlane.f32.xlu0 %v1674
    %v1676 = vpop.xlane.xlu0 %1675
    %v1677 = vsel %vm834, %v1673, 0.0
    %1678 = vadd.xlane.f32.xlu0 %v1677
    %v1679 = vpop.xlane.xlu0 %1678
    %v1680 = vrcp.pop 16.0
    %v1681 = vmul.f32 16.0, %v1680
    %v1682 = vsub.f32 1.0, %v1681
    %v1683 = vmul.f32 %v1680, %v1682
    %v1684 = vadd.f32 %v1680, %v1683
    %vm1685 = vweird.f32 %v1680
    %v1686 = vsel %vm1685, %v1680, %v1684
    %v1687 = vmul.f32 %v1676, %v1686
    %v1688 = vmul.f32 %v1679, %v1686
    %v1689 = vmul.f32 %v1672, %v1672
    %v1690 = vmul.f32 %v1673, %v1673
    %v1691 = vsel %vm834, %v1689, 0.0
    %1692 = vadd.xlane.f32.xlu0 %v1691
    %v1693 = vpop.xlane.xlu0 %1692
    %v1694 = vsel %vm834, %v1690, 0.0
    %1695 = vadd.xlane.f32.xlu0 %v1694
    %v1696 = vpop.xlane.xlu0 %1695
    %v1697 = vmul.f32 %v1693, %v1686
    %v1698 = vmul.f32 %v1696, %v1686
    %v1699 = vmul.f32 %v1687, %v1687
    %v1700 = vmul.f32 %v1688, %v1688
    %v1701 = vsub.f32 %v1697, %v1699
    %v1702 = vsub.f32 %v1698, %v1700
    %v1703 = vsub.f32 %v1672, %v1687
    %v1704 = vsub.f32 %v1673, %v1688
    %v1705 = vadd.f32 %v1701, 1e-05
    %v1706 = vadd.f32 %v1702, 1e-05
    %v1707 = vrsqrt.pop %v1705
    %v1708 = vmul.f32 %v1707, %v1705
    %v1709 = vmul.f32 %v1708, %v1707
    %v1710 = vmul.f32 0.5, %v1709
    %v1711 = vsub.f32 1.5, %v1710
    %v1712 = vmul.f32 %v1707, %v1711
    %vm1713 = vweird.f32 %v1705
    %vm1714 = vweird.f32 %v1707
    %vm1715 = vmor %vm1713, %vm1714
    %v1716 = vsel %vm1715, %v1707, %v1712
    %v1717 = vrsqrt.pop %v1706
    %v1718 = vmul.f32 %v1717, %v1706
    %v1719 = vmul.f32 %v1718, %v1717
    %v1720 = vmul.f32 0.5, %v1719
    %v1721 = vsub.f32 1.5, %v1720
    %v1722 = vmul.f32 %v1717, %v1721
    %vm1723 = vweird.f32 %v1706
    %vm1724 = vweird.f32 %v1717
    %vm1725 = vmor %vm1723, %vm1724
    %v1726 = vsel %vm1725, %v1717, %v1722
    %v1727 = vmul.f32 %v1703, %v1716
    %v1728 = vmul.f32 %v1704, %v1726
    %v1729 = vperm.slane %v1290, 0
    %v1730 = vmul.f32 %v1727, %v1729
    %v1731 = vmul.f32 %v1728, %v1729
    %v1732 = vperm.slane %v1291, 0
    %v1733 = vadd.f32 %v1730, %v1732
    %v1734 = vadd.f32 %v1731, %v1732
    %v1735 = vld [vmem:[#allocation5 + $0xd0] sm:$0xff]
    %v1736 = vld [vmem:[#allocation5 + $0xd8] sm:$0xff]
    %v1737 = vld [vmem:[#allocation5 + $0xe0] sm:$0x1]
    %v1738 = vperm.slane %v1737, 0
    %v1740 = vsel %vm834, %v1733, 0
    %v1743 = vsel %vm834, %v1734, 0
    %1745 = vmatpush.msra.mxu0 0.0
    %1746 = vmatpush.msra.mxu0 0.0
    %1747 = vmatpush.msra.mxu0 0.0
    %1748 = vmatpush.msra.mxu0 0.0
    %1749 = vmatpush.msra.mxu0 0.0
    %1750 = vmatpush.msra.mxu0 0.0
    %1751 = vmatpush.msra.mxu0 0.0
    %1752 = vmatpush.msra.mxu0 0.0
    %1753 = vmatpush.msra.mxu0 0.0
    %1754 = vmatpush.msra.mxu0 0.0
    %1755 = vmatpush.msra.mxu0 0.0
    %1756 = vmatpush.msra.mxu0 0.0
    %1757 = vmatpush.msra.mxu0 0.0
    %1758 = vmatpush.msra.mxu0 0.0
    %1759 = vmatpush.msra.mxu0 %v1736
    %1760 = vmatpush.msra.mxu0 %v1735
    %1761 = vmatmul.f32.gmra.mxu0 %v1740
    %v1762 = vpop.f32.mrf.mxu0
    %v1763 = vadd.f32 %v1738, %v1762
    %1764 = vmatmul.f32.gmra.mxu0 %v1743
    %v1765 = vpop.f32.mrf.mxu0
    %v1766 = vadd.f32 %v1738, %v1765
    %1767 = vdwg.mxu0
    %v1768 = vmax.f32 %v1763, 0.0
    %v1769 = vmax.f32 %v1766, 0.0
    %v1770 = vld [vmem:[#allocation5 + $0xe8] sm:$0xff]
    %v1771 = vld [vmem:[#allocation5 + $0xf0] sm:$0x1]
    %v1772 = vld [vmem:[#allocation5 + $0xf8] sm:$0xff]
    %v1773 = vld [vmem:[#allocation5 + $0x100] sm:$0x1]
    %v1774 = vld [vmem:[#allocation5 + $0x108] sm:$0x1]
    %v1775 = vld [vmem:[#allocation5 + $0x110] sm:$0x1]
    %v1776 = vperm.slane %v1771, 0
    %v1778 = vsel %vm201, %v1768, 0
    %v1781 = vsel %vm201, %v1769, 0
    %1783 = vmatpush.msra.mxu0 0.0
    %1784 = vmatpush.msra.mxu0 0.0
    %1785 = vmatpush.msra.mxu0 0.0
    %1786 = vmatpush.msra.mxu0 0.0
    %1787 = vmatpush.msra.mxu0 0.0
    %1788 = vmatpush.msra.mxu0 0.0
    %1789 = vmatpush.msra.mxu0 0.0
    %1790 = vmatpush.msra.mxu0 0.0
    %1791 = vmatpush.msra.mxu0 0.0
    %1792 = vmatpush.msra.mxu0 0.0
    %1793 = vmatpush.msra.mxu0 0.0
    %1794 = vmatpush.msra.mxu0 0.0
    %1795 = vmatpush.msra.mxu0 0.0
    %1796 = vmatpush.msra.mxu0 0.0
    %1797 = vmatpush.msra.mxu0 0.0
    %1798 = vmatpush.msra.mxu0 %v1770
    %1799 = vmatmul.f32.gmra.mxu0 %v1778
    %v1800 = vpop.f32.mrf.mxu0
    %v1801 = vadd.f32 %v1776, %v1800
    %1802 = vmatmul.f32.gmra.mxu0 %v1781
    %v1803 = vpop.f32.mrf.mxu0
    %v1804 = vadd.f32 %v1776, %v1803
    %1805 = vdwg.mxu0
    %1807 = vrot.lane.b32.xlu0 %v1801, 120
    %v1808 = vpop.permute.xlu0 %1807
    %v1809 = vsel %vm201, %v1801, 0
    %v1811 = vsel %vm201, %v1808, 0
    %1813 = vmatpush.xpose.msra.mxu0 0.0
    %1814 = vmatpush.xpose.msra.mxu0 0.0
    %1815 = vmatpush.xpose.msra.mxu0 0.0
    %1816 = vmatpush.xpose.msra.mxu0 0.0
    %1817 = vmatpush.xpose.msra.mxu0 0.0
    %1818 = vmatpush.xpose.msra.mxu0 0.0
    %1819 = vmatpush.xpose.msra.mxu0 0.0
    %1820 = vmatpush.xpose.msra.mxu0 0.0
    %1821 = vmatpush.xpose.msra.mxu0 0.0
    %1822 = vmatpush.xpose.msra.mxu0 0.0
    %1823 = vmatpush.xpose.msra.mxu0 0.0
    %1824 = vmatpush.xpose.msra.mxu0 0.0
    %1825 = vmatpush.xpose.msra.mxu0 0.0
    %1826 = vmatpush.xpose.msra.mxu0 0.0
    %1827 = vmatpush.xpose.msra.mxu0 0.0
    %1828 = vmatpush.xpose.msra.mxu0 %v1811
    %1829 = vmatmul.f32.gmra.mxu0 %v1809
    %v1830 = vpop.f32.mrf.mxu0
    %v1831 = vadd.f32 0.0, %v1830
    %1832 = vdwg.mxu0
    %1834 = vrot.lane.b32.xlu0 %v1804, 120
    %v1835 = vpop.permute.xlu0 %1834
    %v1836 = vsel %vm201, %v1804, 0
    %v1838 = vsel %vm201, %v1835, 0
    %1840 = vmatpush.xpose.msra.mxu0 0.0
    %1841 = vmatpush.xpose.msra.mxu0 0.0
    %1842 = vmatpush.xpose.msra.mxu0 0.0
    %1843 = vmatpush.xpose.msra.mxu0 0.0
    %1844 = vmatpush.xpose.msra.mxu0 0.0
    %1845 = vmatpush.xpose.msra.mxu0 0.0
    %1846 = vmatpush.xpose.msra.mxu0 0.0
    %1847 = vmatpush.xpose.msra.mxu0 0.0
    %1848 = vmatpush.xpose.msra.mxu0 0.0
    %1849 = vmatpush.xpose.msra.mxu0 0.0
    %1850 = vmatpush.xpose.msra.mxu0 0.0
    %1851 = vmatpush.xpose.msra.mxu0 0.0
    %1852 = vmatpush.xpose.msra.mxu0 0.0
    %1853 = vmatpush.xpose.msra.mxu0 0.0
    %1854 = vmatpush.xpose.msra.mxu0 0.0
    %1855 = vmatpush.xpose.msra.mxu0 %v1838
    %1856 = vmatmul.f32.gmra.mxu0 %v1836
    %v1857 = vpop.f32.mrf.mxu0
    %v1858 = vadd.f32 0.0, %v1857
    %1859 = vdwg.mxu0
    %v1860 = vsel %vm201, %v1831, -inf
    %1861 = vmax.xlane.f32.xlu0 %v1860
    %v1862 = vpop.xlane.xlu0 %1861
    %v1863 = vsel %vm201, %v1858, -inf
    %1864 = vmax.xlane.f32.xlu0 %v1863
    %v1865 = vpop.xlane.xlu0 %1864
    %v1866 = vsub.f32 %v1831, %v1862
    %v1867 = vsub.f32 %v1858, %v1865
    %v1868 = vmul.f32 %v1866, 1.442695
    %v1869 = vpow.pop %v1868
    %v1870 = vmul.f32 %v1867, 1.442695
    %v1871 = vpow.pop %v1870
    %v1872 = vsel %vm201, %v1869, 0.0
    %1873 = vadd.xlane.f32.xlu0 %v1872
    %v1874 = vpop.xlane.xlu0 %1873
    %v1875 = vsel %vm201, %v1871, 0.0
    %1876 = vadd.xlane.f32.xlu0 %v1875
    %v1877 = vpop.xlane.xlu0 %1876
    %v1878 = vrcp.pop %v1874
    %v1879 = vmul.f32 %v1874, %v1878
    %v1880 = vsub.f32 1.0, %v1879
    %v1881 = vmul.f32 %v1878, %v1880
    %v1882 = vadd.f32 %v1878, %v1881
    %vm1883 = vweird.f32 %v1874
    %vm1884 = vweird.f32 %v1878
    %vm1885 = vmor %vm1883, %vm1884
    %v1886 = vsel %vm1885, %v1878, %v1882
    %v1887 = vand.u32 2147483647, %v1874
    %vm1888 = vcmp.eq.f32.partialorder %v1887, 8.507059e+37
    %v1889 = vand.u32 %v1874, 2147483648
    %v1890 = vor.u32 1.1754944e-38, %v1889
    %v1891 = vsel %vm1888, %v1890, %v1886
    %v1892 = vmul.f32 %v1869, %v1891
    %v1893 = vrcp.pop %v1877
    %v1894 = vmul.f32 %v1877, %v1893
    %v1895 = vsub.f32 1.0, %v1894
    %v1896 = vmul.f32 %v1893, %v1895
    %v1897 = vadd.f32 %v1893, %v1896
    %vm1898 = vweird.f32 %v1877
    %vm1899 = vweird.f32 %v1893
    %vm1900 = vmor %vm1898, %vm1899
    %v1901 = vsel %vm1900, %v1893, %v1897
    %v1902 = vand.u32 2147483647, %v1877
    %vm1903 = vcmp.eq.f32.partialorder %v1902, 8.507059e+37
    %v1904 = vand.u32 %v1877, 2147483648
    %v1905 = vor.u32 1.1754944e-38, %v1904
    %v1906 = vsel %vm1903, %v1905, %v1901
    %v1907 = vmul.f32 %v1871, %v1906
    %1908 = vrot.lane.b32.xlu0 %v1801, 112
    %v1909 = vpop.permute.xlu0 %1908
    %v1912 = vsel %vm201, %v1892, 0
    %1914 = vmatpush.msra.mxu0 0.0
    %1915 = vmatpush.msra.mxu0 0.0
    %1916 = vmatpush.msra.mxu0 0.0
    %1917 = vmatpush.msra.mxu0 0.0
    %1918 = vmatpush.msra.mxu0 0.0
    %1919 = vmatpush.msra.mxu0 0.0
    %1920 = vmatpush.msra.mxu0 0.0
    %1921 = vmatpush.msra.mxu0 0.0
    %1922 = vmatpush.msra.mxu0 0.0
    %1923 = vmatpush.msra.mxu0 0.0
    %1924 = vmatpush.msra.mxu0 0.0
    %1925 = vmatpush.msra.mxu0 0.0
    %1926 = vmatpush.msra.mxu0 0.0
    %1927 = vmatpush.msra.mxu0 0.0
    %1928 = vmatpush.msra.mxu0 0.0
    %1929 = vmatpush.msra.mxu0 %v1909
    %1930 = vmatmul.f32.gmra.mxu0 %v1912
    %v1931 = vpop.f32.mrf.mxu0
    %v1932 = vadd.f32 0.0, %v1931
    %1933 = vdwg.mxu0
    %1934 = vrot.lane.b32.xlu0 %v1804, 112
    %v1935 = vpop.permute.xlu0 %1934
    %v1938 = vsel %vm201, %v1907, 0
    %1940 = vmatpush.msra.mxu0 0.0
    %1941 = vmatpush.msra.mxu0 0.0
    %1942 = vmatpush.msra.mxu0 0.0
    %1943 = vmatpush.msra.mxu0 0.0
    %1944 = vmatpush.msra.mxu0 0.0
    %1945 = vmatpush.msra.mxu0 0.0
    %1946 = vmatpush.msra.mxu0 0.0
    %1947 = vmatpush.msra.mxu0 0.0
    %1948 = vmatpush.msra.mxu0 0.0
    %1949 = vmatpush.msra.mxu0 0.0
    %1950 = vmatpush.msra.mxu0 0.0
    %1951 = vmatpush.msra.mxu0 0.0
    %1952 = vmatpush.msra.mxu0 0.0
    %1953 = vmatpush.msra.mxu0 0.0
    %1954 = vmatpush.msra.mxu0 0.0
    %1955 = vmatpush.msra.mxu0 %v1935
    %1956 = vmatmul.f32.gmra.mxu0 %v1938
    %v1957 = vpop.f32.mrf.mxu0
    %v1958 = vadd.f32 0.0, %v1957
    %1959 = vdwg.mxu0
    %v1960 = vperm.slane %v1773, 0
    %v1962 = vsel %vm201, %v1932, 0
    %v1965 = vsel %vm201, %v1958, 0
    %1967 = vmatpush.msra.mxu0 0.0
    %1968 = vmatpush.msra.mxu0 0.0
    %1969 = vmatpush.msra.mxu0 0.0
    %1970 = vmatpush.msra.mxu0 0.0
    %1971 = vmatpush.msra.mxu0 0.0
    %1972 = vmatpush.msra.mxu0 0.0
    %1973 = vmatpush.msra.mxu0 0.0
    %1974 = vmatpush.msra.mxu0 0.0
    %1975 = vmatpush.msra.mxu0 0.0
    %1976 = vmatpush.msra.mxu0 0.0
    %1977 = vmatpush.msra.mxu0 0.0
    %1978 = vmatpush.msra.mxu0 0.0
    %1979 = vmatpush.msra.mxu0 0.0
    %1980 = vmatpush.msra.mxu0 0.0
    %1981 = vmatpush.msra.mxu0 0.0
    %1982 = vmatpush.msra.mxu0 %v1772
    %1983 = vmatmul.f32.gmra.mxu0 %v1962
    %v1984 = vpop.f32.mrf.mxu0
    %v1985 = vadd.f32 %v1960, %v1984
    %1986 = vmatmul.f32.gmra.mxu0 %v1965
    %v1987 = vpop.f32.mrf.mxu0
    %v1988 = vadd.f32 %v1960, %v1987
    %1989 = vdwg.mxu0
    %v1990 = vadd.f32 %v1768, %v1985
    %v1991 = vadd.f32 %v1769, %v1988
    %v1992 = vsel %vm201, %v1990, 0.0
    %1993 = vadd.xlane.f32.xlu0 %v1992
    %v1994 = vpop.xlane.xlu0 %1993
    %v1995 = vsel %vm201, %v1991, 0.0
    %1996 = vadd.xlane.f32.xlu0 %v1995
    %v1997 = vpop.xlane.xlu0 %1996
    %v1998 = vrcp.pop 8.0
    %v1999 = vmul.f32 8.0, %v1998
    %v2000 = vsub.f32 1.0, %v1999
    %v2001 = vmul.f32 %v1998, %v2000
    %v2002 = vadd.f32 %v1998, %v2001
    %vm2003 = vweird.f32 %v1998
    %v2004 = vsel %vm2003, %v1998, %v2002
    %v2005 = vmul.f32 %v1994, %v2004
    %v2006 = vmul.f32 %v1997, %v2004
    %v2007 = vmul.f32 %v1990, %v1990
    %v2008 = vmul.f32 %v1991, %v1991
    %v2009 = vsel %vm201, %v2007, 0.0
    %2010 = vadd.xlane.f32.xlu0 %v2009
    %v2011 = vpop.xlane.xlu0 %2010
    %v2012 = vsel %vm201, %v2008, 0.0
    %2013 = vadd.xlane.f32.xlu0 %v2012
    %v2014 = vpop.xlane.xlu0 %2013
    %v2015 = vmul.f32 %v2011, %v2004
    %v2016 = vmul.f32 %v2014, %v2004
    %v2017 = vmul.f32 %v2005, %v2005
    %v2018 = vmul.f32 %v2006, %v2006
    %v2019 = vsub.f32 %v2015, %v2017
    %v2020 = vsub.f32 %v2016, %v2018
    %v2021 = vsub.f32 %v1990, %v2005
    %v2022 = vsub.f32 %v1991, %v2006
    %v2023 = vadd.f32 %v2019, 1e-05
    %v2024 = vadd.f32 %v2020, 1e-05
    %v2025 = vrsqrt.pop %v2023
    %v2026 = vmul.f32 %v2025, %v2023
    %v2027 = vmul.f32 %v2026, %v2025
    %v2028 = vmul.f32 0.5, %v2027
    %v2029 = vsub.f32 1.5, %v2028
    %v2030 = vmul.f32 %v2025, %v2029
    %vm2031 = vweird.f32 %v2023
    %vm2032 = vweird.f32 %v2025
    %vm2033 = vmor %vm2031, %vm2032
    %v2034 = vsel %vm2033, %v2025, %v2030
    %v2035 = vrsqrt.pop %v2024
    %v2036 = vmul.f32 %v2035, %v2024
    %v2037 = vmul.f32 %v2036, %v2035
    %v2038 = vmul.f32 0.5, %v2037
    %v2039 = vsub.f32 1.5, %v2038
    %v2040 = vmul.f32 %v2035, %v2039
    %vm2041 = vweird.f32 %v2024
    %vm2042 = vweird.f32 %v2035
    %vm2043 = vmor %vm2041, %vm2042
    %v2044 = vsel %vm2043, %v2035, %v2040
    %v2045 = vmul.f32 %v2021, %v2034
    %v2046 = vmul.f32 %v2022, %v2044
    %v2047 = vperm.slane %v1774, 0
    %v2048 = vmul.f32 %v2045, %v2047
    %v2049 = vmul.f32 %v2046, %v2047
    %v2050 = vperm.slane %v1775, 0
    %v2051 = vadd.f32 %v2048, %v2050
    %v2052 = vadd.f32 %v2049, %v2050
    %v2053 = vld [vmem:[#allocation5 + $0x118] sm:$0xff]
    %v2054 = vld [vmem:[#allocation5 + $0x120] sm:$0x1]
    %v2055 = vld [vmem:[#allocation5 + $0x128] sm:$0xff]
    %v2056 = vld [vmem:[#allocation5 + $0x130] sm:$0x1]
    %v2057 = vld [vmem:[#allocation5 + $0x138] sm:$0x1]
    %v2058 = vld [vmem:[#allocation5 + $0x140] sm:$0x1]
    %v2059 = vperm.slane %v2054, 0
    %v2061 = vsel %vm201, %v2051, 0
    %v2064 = vsel %vm201, %v2052, 0
    %2066 = vmatpush.msra.mxu0 0.0
    %2067 = vmatpush.msra.mxu0 0.0
    %2068 = vmatpush.msra.mxu0 0.0
    %2069 = vmatpush.msra.mxu0 0.0
    %2070 = vmatpush.msra.mxu0 0.0
    %2071 = vmatpush.msra.mxu0 0.0
    %2072 = vmatpush.msra.mxu0 0.0
    %2073 = vmatpush.msra.mxu0 0.0
    %2074 = vmatpush.msra.mxu0 0.0
    %2075 = vmatpush.msra.mxu0 0.0
    %2076 = vmatpush.msra.mxu0 0.0
    %2077 = vmatpush.msra.mxu0 0.0
    %2078 = vmatpush.msra.mxu0 0.0
    %2079 = vmatpush.msra.mxu0 0.0
    %2080 = vmatpush.msra.mxu0 0.0
    %2081 = vmatpush.msra.mxu0 %v2053
    %2082 = vmatmul.f32.gmra.mxu0 %v2061
    %v2083 = vpop.f32.mrf.mxu0
    %v2084 = vadd.f32 %v2059, %v2083
    %2085 = vmatmul.f32.gmra.mxu0 %v2064
    %v2086 = vpop.f32.mrf.mxu0
    %v2087 = vadd.f32 %v2059, %v2086
    %2088 = vdwg.mxu0
    %2090 = vrot.lane.b32.xlu0 %v2084, 120
    %v2091 = vpop.permute.xlu0 %2090
    %v2092 = vsel %vm201, %v2084, 0
    %v2094 = vsel %vm201, %v2091, 0
    %2096 = vmatpush.xpose.msra.mxu0 0.0
    %2097 = vmatpush.xpose.msra.mxu0 0.0
    %2098 = vmatpush.xpose.msra.mxu0 0.0
    %2099 = vmatpush.xpose.msra.mxu0 0.0
    %2100 = vmatpush.xpose.msra.mxu0 0.0
    %2101 = vmatpush.xpose.msra.mxu0 0.0
    %2102 = vmatpush.xpose.msra.mxu0 0.0
    %2103 = vmatpush.xpose.msra.mxu0 0.0
    %2104 = vmatpush.xpose.msra.mxu0 0.0
    %2105 = vmatpush.xpose.msra.mxu0 0.0
    %2106 = vmatpush.xpose.msra.mxu0 0.0
    %2107 = vmatpush.xpose.msra.mxu0 0.0
    %2108 = vmatpush.xpose.msra.mxu0 0.0
    %2109 = vmatpush.xpose.msra.mxu0 0.0
    %2110 = vmatpush.xpose.msra.mxu0 0.0
    %2111 = vmatpush.xpose.msra.mxu0 %v2094
    %2112 = vmatmul.f32.gmra.mxu0 %v2092
    %v2113 = vpop.f32.mrf.mxu0
    %v2114 = vadd.f32 0.0, %v2113
    %2115 = vdwg.mxu0
    %2117 = vrot.lane.b32.xlu0 %v2087, 120
    %v2118 = vpop.permute.xlu0 %2117
    %v2119 = vsel %vm201, %v2087, 0
    %v2121 = vsel %vm201, %v2118, 0
    %2123 = vmatpush.xpose.msra.mxu0 0.0
    %2124 = vmatpush.xpose.msra.mxu0 0.0
    %2125 = vmatpush.xpose.msra.mxu0 0.0
    %2126 = vmatpush.xpose.msra.mxu0 0.0
    %2127 = vmatpush.xpose.msra.mxu0 0.0
    %2128 = vmatpush.xpose.msra.mxu0 0.0
    %2129 = vmatpush.xpose.msra.mxu0 0.0
    %2130 = vmatpush.xpose.msra.mxu0 0.0
    %2131 = vmatpush.xpose.msra.mxu0 0.0
    %2132 = vmatpush.xpose.msra.mxu0 0.0
    %2133 = vmatpush.xpose.msra.mxu0 0.0
    %2134 = vmatpush.xpose.msra.mxu0 0.0
    %2135 = vmatpush.xpose.msra.mxu0 0.0
    %2136 = vmatpush.xpose.msra.mxu0 0.0
    %2137 = vmatpush.xpose.msra.mxu0 0.0
    %2138 = vmatpush.xpose.msra.mxu0 %v2121
    %2139 = vmatmul.f32.gmra.mxu0 %v2119
    %v2140 = vpop.f32.mrf.mxu0
    %v2141 = vadd.f32 0.0, %v2140
    %2142 = vdwg.mxu0
    %v2143 = vsel %vm201, %v2114, -inf
    %2144 = vmax.xlane.f32.xlu0 %v2143
    %v2145 = vpop.xlane.xlu0 %2144
    %v2146 = vsel %vm201, %v2141, -inf
    %2147 = vmax.xlane.f32.xlu0 %v2146
    %v2148 = vpop.xlane.xlu0 %2147
    %v2149 = vsub.f32 %v2114, %v2145
    %v2150 = vsub.f32 %v2141, %v2148
    %v2151 = vmul.f32 %v2149, 1.442695
    %v2152 = vpow.pop %v2151
    %v2153 = vmul.f32 %v2150, 1.442695
    %v2154 = vpow.pop %v2153
    %v2155 = vsel %vm201, %v2152, 0.0
    %2156 = vadd.xlane.f32.xlu0 %v2155
    %v2157 = vpop.xlane.xlu0 %2156
    %v2158 = vsel %vm201, %v2154, 0.0
    %2159 = vadd.xlane.f32.xlu0 %v2158
    %v2160 = vpop.xlane.xlu0 %2159
    %v2161 = vrcp.pop %v2157
    %v2162 = vmul.f32 %v2157, %v2161
    %v2163 = vsub.f32 1.0, %v2162
    %v2164 = vmul.f32 %v2161, %v2163
    %v2165 = vadd.f32 %v2161, %v2164
    %vm2166 = vweird.f32 %v2157
    %vm2167 = vweird.f32 %v2161
    %vm2168 = vmor %vm2166, %vm2167
    %v2169 = vsel %vm2168, %v2161, %v2165
    %v2170 = vand.u32 2147483647, %v2157
    %vm2171 = vcmp.eq.f32.partialorder %v2170, 8.507059e+37
    %v2172 = vand.u32 %v2157, 2147483648
    %v2173 = vor.u32 1.1754944e-38, %v2172
    %v2174 = vsel %vm2171, %v2173, %v2169
    %v2175 = vmul.f32 %v2152, %v2174
    %v2176 = vrcp.pop %v2160
    %v2177 = vmul.f32 %v2160, %v2176
    %v2178 = vsub.f32 1.0, %v2177
    %v2179 = vmul.f32 %v2176, %v2178
    %v2180 = vadd.f32 %v2176, %v2179
    %vm2181 = vweird.f32 %v2160
    %vm2182 = vweird.f32 %v2176
    %vm2183 = vmor %vm2181, %vm2182
    %v2184 = vsel %vm2183, %v2176, %v2180
    %v2185 = vand.u32 2147483647, %v2160
    %vm2186 = vcmp.eq.f32.partialorder %v2185, 8.507059e+37
    %v2187 = vand.u32 %v2160, 2147483648
    %v2188 = vor.u32 1.1754944e-38, %v2187
    %v2189 = vsel %vm2186, %v2188, %v2184
    %v2190 = vmul.f32 %v2154, %v2189
    %2191 = vrot.lane.b32.xlu0 %v2084, 112
    %v2192 = vpop.permute.xlu0 %2191
    %v2195 = vsel %vm201, %v2175, 0
    %2197 = vmatpush.msra.mxu0 0.0
    %2198 = vmatpush.msra.mxu0 0.0
    %2199 = vmatpush.msra.mxu0 0.0
    %2200 = vmatpush.msra.mxu0 0.0
    %2201 = vmatpush.msra.mxu0 0.0
    %2202 = vmatpush.msra.mxu0 0.0
    %2203 = vmatpush.msra.mxu0 0.0
    %2204 = vmatpush.msra.mxu0 0.0
    %2205 = vmatpush.msra.mxu0 0.0
    %2206 = vmatpush.msra.mxu0 0.0
    %2207 = vmatpush.msra.mxu0 0.0
    %2208 = vmatpush.msra.mxu0 0.0
    %2209 = vmatpush.msra.mxu0 0.0
    %2210 = vmatpush.msra.mxu0 0.0
    %2211 = vmatpush.msra.mxu0 0.0
    %2212 = vmatpush.msra.mxu0 %v2192
    %2213 = vmatmul.f32.gmra.mxu0 %v2195
    %v2214 = vpop.f32.mrf.mxu0
    %v2215 = vadd.f32 0.0, %v2214
    %2216 = vdwg.mxu0
    %2217 = vrot.lane.b32.xlu0 %v2087, 112
    %v2218 = vpop.permute.xlu0 %2217
    %v2221 = vsel %vm201, %v2190, 0
    %2223 = vmatpush.msra.mxu0 0.0
    %2224 = vmatpush.msra.mxu0 0.0
    %2225 = vmatpush.msra.mxu0 0.0
    %2226 = vmatpush.msra.mxu0 0.0
    %2227 = vmatpush.msra.mxu0 0.0
    %2228 = vmatpush.msra.mxu0 0.0
    %2229 = vmatpush.msra.mxu0 0.0
    %2230 = vmatpush.msra.mxu0 0.0
    %2231 = vmatpush.msra.mxu0 0.0
    %2232 = vmatpush.msra.mxu0 0.0
    %2233 = vmatpush.msra.mxu0 0.0
    %2234 = vmatpush.msra.mxu0 0.0
    %2235 = vmatpush.msra.mxu0 0.0
    %2236 = vmatpush.msra.mxu0 0.0
    %2237 = vmatpush.msra.mxu0 0.0
    %2238 = vmatpush.msra.mxu0 %v2218
    %2239 = vmatmul.f32.gmra.mxu0 %v2221
    %v2240 = vpop.f32.mrf.mxu0
    %v2241 = vadd.f32 0.0, %v2240
    %2242 = vdwg.mxu0
    %v2243 = vperm.slane %v2056, 0
    %v2245 = vsel %vm201, %v2215, 0
    %v2248 = vsel %vm201, %v2241, 0
    %2250 = vmatpush.msra.mxu0 0.0
    %2251 = vmatpush.msra.mxu0 0.0
    %2252 = vmatpush.msra.mxu0 0.0
    %2253 = vmatpush.msra.mxu0 0.0
    %2254 = vmatpush.msra.mxu0 0.0
    %2255 = vmatpush.msra.mxu0 0.0
    %2256 = vmatpush.msra.mxu0 0.0
    %2257 = vmatpush.msra.mxu0 0.0
    %2258 = vmatpush.msra.mxu0 0.0
    %2259 = vmatpush.msra.mxu0 0.0
    %2260 = vmatpush.msra.mxu0 0.0
    %2261 = vmatpush.msra.mxu0 0.0
    %2262 = vmatpush.msra.mxu0 0.0
    %2263 = vmatpush.msra.mxu0 0.0
    %2264 = vmatpush.msra.mxu0 0.0
    %2265 = vmatpush.msra.mxu0 %v2055
    %2266 = vmatmul.f32.gmra.mxu0 %v2245
    %v2267 = vpop.f32.mrf.mxu0
    %v2268 = vadd.f32 %v2243, %v2267
    %2269 = vmatmul.f32.gmra.mxu0 %v2248
    %v2270 = vpop.f32.mrf.mxu0
    %v2271 = vadd.f32 %v2243, %v2270
    %2272 = vdwg.mxu0
    %v2273 = vadd.f32 %v2051, %v2268
    %v2274 = vadd.f32 %v2052, %v2271
    %v2275 = vsel %vm201, %v2273, 0.0
    %2276 = vadd.xlane.f32.xlu0 %v2275
    %v2277 = vpop.xlane.xlu0 %2276
    %v2278 = vsel %vm201, %v2274, 0.0
    %2279 = vadd.xlane.f32.xlu0 %v2278
    %v2280 = vpop.xlane.xlu0 %2279
    %v2281 = vmul.f32 %v2277, %v2004
    %v2282 = vmul.f32 %v2280, %v2004
    %v2283 = vmul.f32 %v2273, %v2273
    %v2284 = vmul.f32 %v2274, %v2274
    %v2285 = vsel %vm201, %v2283, 0.0
    %2286 = vadd.xlane.f32.xlu0 %v2285
    %v2287 = vpop.xlane.xlu0 %2286
    %v2288 = vsel %vm201, %v2284, 0.0
    %2289 = vadd.xlane.f32.xlu0 %v2288
    %v2290 = vpop.xlane.xlu0 %2289
    %v2291 = vmul.f32 %v2287, %v2004
    %v2292 = vmul.f32 %v2290, %v2004
    %v2293 = vmul.f32 %v2281, %v2281
    %v2294 = vmul.f32 %v2282, %v2282
    %v2295 = vsub.f32 %v2291, %v2293
    %v2296 = vsub.f32 %v2292, %v2294
    %v2297 = vsub.f32 %v2273, %v2281
    %v2298 = vsub.f32 %v2274, %v2282
    %v2299 = vadd.f32 %v2295, 1e-05
    %v2300 = vadd.f32 %v2296, 1e-05
    %v2301 = vrsqrt.pop %v2299
    %v2302 = vmul.f32 %v2301, %v2299
    %v2303 = vmul.f32 %v2302, %v2301
    %v2304 = vmul.f32 0.5, %v2303
    %v2305 = vsub.f32 1.5, %v2304
    %v2306 = vmul.f32 %v2301, %v2305
    %vm2307 = vweird.f32 %v2299
    %vm2308 = vweird.f32 %v2301
    %vm2309 = vmor %vm2307, %vm2308
    %v2310 = vsel %vm2309, %v2301, %v2306
    %v2311 = vrsqrt.pop %v2300
    %v2312 = vmul.f32 %v2311, %v2300
    %v2313 = vmul.f32 %v2312, %v2311
    %v2314 = vmul.f32 0.5, %v2313
    %v2315 = vsub.f32 1.5, %v2314
    %v2316 = vmul.f32 %v2311, %v2315
    %vm2317 = vweird.f32 %v2300
    %vm2318 = vweird.f32 %v2311
    %vm2319 = vmor %vm2317, %vm2318
    %v2320 = vsel %vm2319, %v2311, %v2316
    %v2321 = vmul.f32 %v2297, %v2310
    %v2322 = vmul.f32 %v2298, %v2320
    %v2323 = vperm.slane %v2057, 0
    %v2324 = vmul.f32 %v2321, %v2323
    %v2325 = vmul.f32 %v2322, %v2323
    %v2326 = vperm.slane %v2058, 0
    %v2327 = vadd.f32 %v2324, %v2326
    %v2328 = vadd.f32 %v2325, %v2326
    %v2329 = vld [vmem:[#allocation5 + $0x148] sm:$0xff]
    %v2330 = vld [vmem:[#allocation5 + $0x150] sm:$0x1]
    %v2331 = vperm.slane %v2330, 0
    %v2333 = vsel %vm201, %v2327, 0
    %v2336 = vsel %vm201, %v2328, 0
    %2338 = vmatpush.msra.mxu0 0.0
    %2339 = vmatpush.msra.mxu0 0.0
    %2340 = vmatpush.msra.mxu0 0.0
    %2341 = vmatpush.msra.mxu0 0.0
    %2342 = vmatpush.msra.mxu0 0.0
    %2343 = vmatpush.msra.mxu0 0.0
    %2344 = vmatpush.msra.mxu0 0.0
    %2345 = vmatpush.msra.mxu0 0.0
    %2346 = vmatpush.msra.mxu0 0.0
    %2347 = vmatpush.msra.mxu0 0.0
    %2348 = vmatpush.msra.mxu0 0.0
    %2349 = vmatpush.msra.mxu0 0.0
    %2350 = vmatpush.msra.mxu0 0.0
    %2351 = vmatpush.msra.mxu0 0.0
    %2352 = vmatpush.msra.mxu0 0.0
    %2353 = vmatpush.msra.mxu0 %v2329
    %2354 = vmatmul.f32.gmra.mxu0 %v2333
    %v2355 = vpop.f32.mrf.mxu0
    %v2356 = vadd.f32 %v2331, %v2355
    %2357 = vmatmul.f32.gmra.mxu0 %v2336
    %v2358 = vpop.f32.mrf.mxu0
    %v2359 = vadd.f32 %v2331, %v2358
    %2360 = vdwg.mxu0
    %v2361 = vmax.f32 %v2356, 0.0
    %v2362 = vmax.f32 %v2359, 0.0
    %v2363 = vld [vmem:[#allocation5 + $0x158] sm:$0xff]
    %v2364 = vld [vmem:[#allocation5 + $0x160] sm:$0xff]
    %v2365 = vld [vmem:[#allocation5 + $0x168] sm:$0x1]
    %v2366 = vld [vmem:[#allocation5 + $0x170] sm:$0xff]
    %v2367 = vld [vmem:[#allocation5 + $0x178] sm:$0xff]
    %v2368 = vld [vmem:[#allocation5 + $0x180] sm:$0x1]
    %v2369 = vld [vmem:[#allocation5 + $0x188] sm:$0x1]
    %v2370 = vld [vmem:[#allocation5 + $0x190] sm:$0x1]
    %v2371 = vperm.slane %v2365, 0
    %v2373 = vsel %vm834, %v2361, 0
    %v2376 = vsel %vm834, %v2362, 0
    %2378 = vmatpush.msra.mxu0 0.0
    %2379 = vmatpush.msra.mxu0 0.0
    %2380 = vmatpush.msra.mxu0 0.0
    %2381 = vmatpush.msra.mxu0 0.0
    %2382 = vmatpush.msra.mxu0 0.0
    %2383 = vmatpush.msra.mxu0 0.0
    %2384 = vmatpush.msra.mxu0 0.0
    %2385 = vmatpush.msra.mxu0 0.0
    %2386 = vmatpush.msra.mxu0 0.0
    %2387 = vmatpush.msra.mxu0 0.0
    %2388 = vmatpush.msra.mxu0 0.0
    %2389 = vmatpush.msra.mxu0 0.0
    %2390 = vmatpush.msra.mxu0 0.0
    %2391 = vmatpush.msra.mxu0 0.0
    %2392 = vmatpush.msra.mxu0 %v2364
    %2393 = vmatpush.msra.mxu0 %v2363
    %2394 = vmatmul.f32.gmra.mxu0 %v2373
    %v2395 = vpop.f32.mrf.mxu0
    %v2396 = vadd.f32 %v2371, %v2395
    %2397 = vmatmul.f32.gmra.mxu0 %v2376
    %v2398 = vpop.f32.mrf.mxu0
    %v2399 = vadd.f32 %v2371, %v2398
    %2400 = vdwg.mxu0
    %2403 = vrot.lane.b32.xlu0 %v2396, 104
    %v2404 = vpop.permute.xlu0 %2403
    %2405 = vrot.lane.b32.xlu0 %v2399, 104
    %v2406 = vpop.permute.xlu0 %2405
    %2407 = vrot.lane.b32.xlu0 %v2396, 120
    %v2408 = vpop.permute.xlu0 %2407
    %v2409 = vsel %vm201, %v2396, 0
    %v2411 = vsel %vm201, %v2408, 0
    %2413 = vmatpush.xpose.msra.mxu0 0.0
    %2414 = vmatpush.xpose.msra.mxu0 0.0
    %2415 = vmatpush.xpose.msra.mxu0 0.0
    %2416 = vmatpush.xpose.msra.mxu0 0.0
    %2417 = vmatpush.xpose.msra.mxu0 0.0
    %2418 = vmatpush.xpose.msra.mxu0 0.0
    %2419 = vmatpush.xpose.msra.mxu0 0.0
    %2420 = vmatpush.xpose.msra.mxu0 0.0
    %2421 = vmatpush.xpose.msra.mxu0 0.0
    %2422 = vmatpush.xpose.msra.mxu0 0.0
    %2423 = vmatpush.xpose.msra.mxu0 0.0
    %2424 = vmatpush.xpose.msra.mxu0 0.0
    %2425 = vmatpush.xpose.msra.mxu0 0.0
    %2426 = vmatpush.xpose.msra.mxu0 0.0
    %2427 = vmatpush.xpose.msra.mxu0 0.0
    %2428 = vmatpush.xpose.msra.mxu0 %v2411
    %2429 = vmatmul.f32.gmra.mxu0 %v2409
    %v2430 = vpop.f32.mrf.mxu0
    %v2431 = vadd.f32 0.0, %v2430
    %2432 = vdwg.mxu0
    %2433 = vrot.lane.b32.xlu0 %v2399, 120
    %v2434 = vpop.permute.xlu0 %2433
    %v2435 = vsel %vm201, %v2399, 0
    %v2437 = vsel %vm201, %v2434, 0
    %2439 = vmatpush.xpose.msra.mxu0 0.0
    %2440 = vmatpush.xpose.msra.mxu0 0.0
    %2441 = vmatpush.xpose.msra.mxu0 0.0
    %2442 = vmatpush.xpose.msra.mxu0 0.0
    %2443 = vmatpush.xpose.msra.mxu0 0.0
    %2444 = vmatpush.xpose.msra.mxu0 0.0
    %2445 = vmatpush.xpose.msra.mxu0 0.0
    %2446 = vmatpush.xpose.msra.mxu0 0.0
    %2447 = vmatpush.xpose.msra.mxu0 0.0
    %2448 = vmatpush.xpose.msra.mxu0 0.0
    %2449 = vmatpush.xpose.msra.mxu0 0.0
    %2450 = vmatpush.xpose.msra.mxu0 0.0
    %2451 = vmatpush.xpose.msra.mxu0 0.0
    %2452 = vmatpush.xpose.msra.mxu0 0.0
    %2453 = vmatpush.xpose.msra.mxu0 0.0
    %2454 = vmatpush.xpose.msra.mxu0 %v2437
    %2455 = vmatmul.f32.gmra.mxu0 %v2435
    %v2456 = vpop.f32.mrf.mxu0
    %v2457 = vadd.f32 0.0, %v2456
    %2458 = vdwg.mxu0
    %2459 = vrot.lane.b32.xlu0 %v2404, 120
    %v2460 = vpop.permute.xlu0 %2459
    %v2461 = vsel %vm201, %v2404, 0
    %v2463 = vsel %vm201, %v2460, 0
    %2465 = vmatpush.xpose.msra.mxu0 0.0
    %2466 = vmatpush.xpose.msra.mxu0 0.0
    %2467 = vmatpush.xpose.msra.mxu0 0.0
    %2468 = vmatpush.xpose.msra.mxu0 0.0
    %2469 = vmatpush.xpose.msra.mxu0 0.0
    %2470 = vmatpush.xpose.msra.mxu0 0.0
    %2471 = vmatpush.xpose.msra.mxu0 0.0
    %2472 = vmatpush.xpose.msra.mxu0 0.0
    %2473 = vmatpush.xpose.msra.mxu0 0.0
    %2474 = vmatpush.xpose.msra.mxu0 0.0
    %2475 = vmatpush.xpose.msra.mxu0 0.0
    %2476 = vmatpush.xpose.msra.mxu0 0.0
    %2477 = vmatpush.xpose.msra.mxu0 0.0
    %2478 = vmatpush.xpose.msra.mxu0 0.0
    %2479 = vmatpush.xpose.msra.mxu0 0.0
    %2480 = vmatpush.xpose.msra.mxu0 %v2463
    %2481 = vmatmul.f32.gmra.mxu0 %v2461
    %v2482 = vpop.f32.mrf.mxu0
    %v2483 = vadd.f32 0.0, %v2482
    %2484 = vdwg.mxu0
    %2485 = vrot.lane.b32.xlu0 %v2406, 120
    %v2486 = vpop.permute.xlu0 %2485
    %v2487 = vsel %vm201, %v2406, 0
    %v2489 = vsel %vm201, %v2486, 0
    %2491 = vmatpush.xpose.msra.mxu0 0.0
    %2492 = vmatpush.xpose.msra.mxu0 0.0
    %2493 = vmatpush.xpose.msra.mxu0 0.0
    %2494 = vmatpush.xpose.msra.mxu0 0.0
    %2495 = vmatpush.xpose.msra.mxu0 0.0
    %2496 = vmatpush.xpose.msra.mxu0 0.0
    %2497 = vmatpush.xpose.msra.mxu0 0.0
    %2498 = vmatpush.xpose.msra.mxu0 0.0
    %2499 = vmatpush.xpose.msra.mxu0 0.0
    %2500 = vmatpush.xpose.msra.mxu0 0.0
    %2501 = vmatpush.xpose.msra.mxu0 0.0
    %2502 = vmatpush.xpose.msra.mxu0 0.0
    %2503 = vmatpush.xpose.msra.mxu0 0.0
    %2504 = vmatpush.xpose.msra.mxu0 0.0
    %2505 = vmatpush.xpose.msra.mxu0 0.0
    %2506 = vmatpush.xpose.msra.mxu0 %v2489
    %2507 = vmatmul.f32.gmra.mxu0 %v2487
    %v2508 = vpop.f32.mrf.mxu0
    %v2509 = vadd.f32 0.0, %v2508
    %2510 = vdwg.mxu0
    %v2511 = vsel %vm201, %v2431, -inf
    %2512 = vmax.xlane.f32.xlu0 %v2511
    %v2513 = vpop.xlane.xlu0 %2512
    %v2514 = vsel %vm201, %v2457, -inf
    %2515 = vmax.xlane.f32.xlu0 %v2514
    %v2516 = vpop.xlane.xlu0 %2515
    %v2517 = vsel %vm201, %v2483, -inf
    %2518 = vmax.xlane.f32.xlu0 %v2517
    %v2519 = vpop.xlane.xlu0 %2518
    %v2520 = vsel %vm201, %v2509, -inf
    %2521 = vmax.xlane.f32.xlu0 %v2520
    %v2522 = vpop.xlane.xlu0 %2521
    %v2523 = vsub.f32 %v2431, %v2513
    %v2524 = vsub.f32 %v2457, %v2516
    %v2525 = vsub.f32 %v2483, %v2519
    %v2526 = vsub.f32 %v2509, %v2522
    %v2527 = vmul.f32 %v2523, 1.442695
    %v2528 = vpow.pop %v2527
    %v2529 = vmul.f32 %v2524, 1.442695
    %v2530 = vpow.pop %v2529
    %v2531 = vmul.f32 %v2525, 1.442695
    %v2532 = vpow.pop %v2531
    %v2533 = vmul.f32 %v2526, 1.442695
    %v2534 = vpow.pop %v2533
    %v2535 = vsel %vm201, %v2528, 0.0
    %2536 = vadd.xlane.f32.xlu0 %v2535
    %v2537 = vpop.xlane.xlu0 %2536
    %v2538 = vsel %vm201, %v2530, 0.0
    %2539 = vadd.xlane.f32.xlu0 %v2538
    %v2540 = vpop.xlane.xlu0 %2539
    %v2541 = vsel %vm201, %v2532, 0.0
    %2542 = vadd.xlane.f32.xlu0 %v2541
    %v2543 = vpop.xlane.xlu0 %2542
    %v2544 = vsel %vm201, %v2534, 0.0
    %2545 = vadd.xlane.f32.xlu0 %v2544
    %v2546 = vpop.xlane.xlu0 %2545
    %v2547 = vrcp.pop %v2537
    %v2548 = vmul.f32 %v2537, %v2547
    %v2549 = vsub.f32 1.0, %v2548
    %v2550 = vmul.f32 %v2547, %v2549
    %v2551 = vadd.f32 %v2547, %v2550
    %vm2552 = vweird.f32 %v2537
    %vm2553 = vweird.f32 %v2547
    %vm2554 = vmor %vm2552, %vm2553
    %v2555 = vsel %vm2554, %v2547, %v2551
    %v2556 = vand.u32 2147483647, %v2537
    %vm2557 = vcmp.eq.f32.partialorder %v2556, 8.507059e+37
    %v2558 = vand.u32 %v2537, 2147483648
    %v2559 = vor.u32 1.1754944e-38, %v2558
    %v2560 = vsel %vm2557, %v2559, %v2555
    %v2561 = vmul.f32 %v2528, %v2560
    %v2562 = vrcp.pop %v2540
    %v2563 = vmul.f32 %v2540, %v2562
    %v2564 = vsub.f32 1.0, %v2563
    %v2565 = vmul.f32 %v2562, %v2564
    %v2566 = vadd.f32 %v2562, %v2565
    %vm2567 = vweird.f32 %v2540
    %vm2568 = vweird.f32 %v2562
    %vm2569 = vmor %vm2567, %vm2568
    %v2570 = vsel %vm2569, %v2562, %v2566
    %v2571 = vand.u32 2147483647, %v2540
    %vm2572 = vcmp.eq.f32.partialorder %v2571, 8.507059e+37
    %v2573 = vand.u32 %v2540, 2147483648
    %v2574 = vor.u32 1.1754944e-38, %v2573
    %v2575 = vsel %vm2572, %v2574, %v2570
    %v2576 = vmul.f32 %v2530, %v2575
    %v2577 = vrcp.pop %v2543
    %v2578 = vmul.f32 %v2543, %v2577
    %v2579 = vsub.f32 1.0, %v2578
    %v2580 = vmul.f32 %v2577, %v2579
    %v2581 = vadd.f32 %v2577, %v2580
    %vm2582 = vweird.f32 %v2543
    %vm2583 = vweird.f32 %v2577
    %vm2584 = vmor %vm2582, %vm2583
    %v2585 = vsel %vm2584, %v2577, %v2581
    %v2586 = vand.u32 2147483647, %v2543
    %vm2587 = vcmp.eq.f32.partialorder %v2586, 8.507059e+37
    %v2588 = vand.u32 %v2543, 2147483648
    %v2589 = vor.u32 1.1754944e-38, %v2588
    %v2590 = vsel %vm2587, %v2589, %v2585
    %v2591 = vmul.f32 %v2532, %v2590
    %v2592 = vrcp.pop %v2546
    %v2593 = vmul.f32 %v2546, %v2592
    %v2594 = vsub.f32 1.0, %v2593
    %v2595 = vmul.f32 %v2592, %v2594
    %v2596 = vadd.f32 %v2592, %v2595
    %vm2597 = vweird.f32 %v2546
    %vm2598 = vweird.f32 %v2592
    %vm2599 = vmor %vm2597, %vm2598
    %v2600 = vsel %vm2599, %v2592, %v2596
    %v2601 = vand.u32 2147483647, %v2546
    %vm2602 = vcmp.eq.f32.partialorder %v2601, 8.507059e+37
    %v2603 = vand.u32 %v2546, 2147483648
    %v2604 = vor.u32 1.1754944e-38, %v2603
    %v2605 = vsel %vm2602, %v2604, %v2600
    %v2606 = vmul.f32 %v2534, %v2605
    %2607 = vrot.lane.b32.xlu0 %v2396, 112
    %v2608 = vpop.permute.xlu0 %2607
    %v2611 = vsel %vm201, %v2561, 0
    %2613 = vmatpush.msra.mxu0 0.0
    %2614 = vmatpush.msra.mxu0 0.0
    %2615 = vmatpush.msra.mxu0 0.0
    %2616 = vmatpush.msra.mxu0 0.0
    %2617 = vmatpush.msra.mxu0 0.0
    %2618 = vmatpush.msra.mxu0 0.0
    %2619 = vmatpush.msra.mxu0 0.0
    %2620 = vmatpush.msra.mxu0 0.0
    %2621 = vmatpush.msra.mxu0 0.0
    %2622 = vmatpush.msra.mxu0 0.0
    %2623 = vmatpush.msra.mxu0 0.0
    %2624 = vmatpush.msra.mxu0 0.0
    %2625 = vmatpush.msra.mxu0 0.0
    %2626 = vmatpush.msra.mxu0 0.0
    %2627 = vmatpush.msra.mxu0 0.0
    %2628 = vmatpush.msra.mxu0 %v2608
    %2629 = vmatmul.f32.gmra.mxu0 %v2611
    %v2630 = vpop.f32.mrf.mxu0
    %v2631 = vadd.f32 0.0, %v2630
    %2632 = vdwg.mxu0
    %2633 = vrot.lane.b32.xlu0 %v2399, 112
    %v2634 = vpop.permute.xlu0 %2633
    %v2637 = vsel %vm201, %v2576, 0
    %2639 = vmatpush.msra.mxu0 0.0
    %2640 = vmatpush.msra.mxu0 0.0
    %2641 = vmatpush.msra.mxu0 0.0
    %2642 = vmatpush.msra.mxu0 0.0
    %2643 = vmatpush.msra.mxu0 0.0
    %2644 = vmatpush.msra.mxu0 0.0
    %2645 = vmatpush.msra.mxu0 0.0
    %2646 = vmatpush.msra.mxu0 0.0
    %2647 = vmatpush.msra.mxu0 0.0
    %2648 = vmatpush.msra.mxu0 0.0
    %2649 = vmatpush.msra.mxu0 0.0
    %2650 = vmatpush.msra.mxu0 0.0
    %2651 = vmatpush.msra.mxu0 0.0
    %2652 = vmatpush.msra.mxu0 0.0
    %2653 = vmatpush.msra.mxu0 0.0
    %2654 = vmatpush.msra.mxu0 %v2634
    %2655 = vmatmul.f32.gmra.mxu0 %v2637
    %v2656 = vpop.f32.mrf.mxu0
    %v2657 = vadd.f32 0.0, %v2656
    %2658 = vdwg.mxu0
    %2659 = vrot.lane.b32.xlu0 %v2404, 112
    %v2660 = vpop.permute.xlu0 %2659
    %v2663 = vsel %vm201, %v2591, 0
    %2665 = vmatpush.msra.mxu0 0.0
    %2666 = vmatpush.msra.mxu0 0.0
    %2667 = vmatpush.msra.mxu0 0.0
    %2668 = vmatpush.msra.mxu0 0.0
    %2669 = vmatpush.msra.mxu0 0.0
    %2670 = vmatpush.msra.mxu0 0.0
    %2671 = vmatpush.msra.mxu0 0.0
    %2672 = vmatpush.msra.mxu0 0.0
    %2673 = vmatpush.msra.mxu0 0.0
    %2674 = vmatpush.msra.mxu0 0.0
    %2675 = vmatpush.msra.mxu0 0.0
    %2676 = vmatpush.msra.mxu0 0.0
    %2677 = vmatpush.msra.mxu0 0.0
    %2678 = vmatpush.msra.mxu0 0.0
    %2679 = vmatpush.msra.mxu0 0.0
    %2680 = vmatpush.msra.mxu0 %v2660
    %2681 = vmatmul.f32.gmra.mxu0 %v2663
    %v2682 = vpop.f32.mrf.mxu0
    %v2683 = vadd.f32 0.0, %v2682
    %2684 = vdwg.mxu0
    %2685 = vrot.lane.b32.xlu0 %v2406, 112
    %v2686 = vpop.permute.xlu0 %2685
    %v2689 = vsel %vm201, %v2606, 0
    %2691 = vmatpush.msra.mxu0 0.0
    %2692 = vmatpush.msra.mxu0 0.0
    %2693 = vmatpush.msra.mxu0 0.0
    %2694 = vmatpush.msra.mxu0 0.0
    %2695 = vmatpush.msra.mxu0 0.0
    %2696 = vmatpush.msra.mxu0 0.0
    %2697 = vmatpush.msra.mxu0 0.0
    %2698 = vmatpush.msra.mxu0 0.0
    %2699 = vmatpush.msra.mxu0 0.0
    %2700 = vmatpush.msra.mxu0 0.0
    %2701 = vmatpush.msra.mxu0 0.0
    %2702 = vmatpush.msra.mxu0 0.0
    %2703 = vmatpush.msra.mxu0 0.0
    %2704 = vmatpush.msra.mxu0 0.0
    %2705 = vmatpush.msra.mxu0 0.0
    %2706 = vmatpush.msra.mxu0 %v2686
    %2707 = vmatmul.f32.gmra.mxu0 %v2689
    %v2708 = vpop.f32.mrf.mxu0
    %v2709 = vadd.f32 0.0, %v2708
    %2710 = vdwg.mxu0
    %2713 = vrot.lane.b32.xlu0 %v2683, 8
    %v2714 = vpop.permute.xlu0 %2713
    %2715 = vrot.lane.b32.xlu0 %v2709, 8
    %v2716 = vpop.permute.xlu0 %2715
    %v2719 = vsel %vm201, %v2631, %v2714
    %v2720 = vsel %vm201, %v2657, %v2716
    %v2721 = vperm.slane %v2368, 0
    %v2723 = vsel %vm834, %v2719, 0
    %v2726 = vsel %vm834, %v2720, 0
    %2728 = vmatpush.msra.mxu0 0.0
    %2729 = vmatpush.msra.mxu0 0.0
    %2730 = vmatpush.msra.mxu0 0.0
    %2731 = vmatpush.msra.mxu0 0.0
    %2732 = vmatpush.msra.mxu0 0.0
    %2733 = vmatpush.msra.mxu0 0.0
    %2734 = vmatpush.msra.mxu0 0.0
    %2735 = vmatpush.msra.mxu0 0.0
    %2736 = vmatpush.msra.mxu0 0.0
    %2737 = vmatpush.msra.mxu0 0.0
    %2738 = vmatpush.msra.mxu0 0.0
    %2739 = vmatpush.msra.mxu0 0.0
    %2740 = vmatpush.msra.mxu0 0.0
    %2741 = vmatpush.msra.mxu0 0.0
    %2742 = vmatpush.msra.mxu0 %v2367
    %2743 = vmatpush.msra.mxu0 %v2366
    %2744 = vmatmul.f32.gmra.mxu0 %v2723
    %v2745 = vpop.f32.mrf.mxu0
    %v2746 = vadd.f32 %v2721, %v2745
    %2747 = vmatmul.f32.gmra.mxu0 %v2726
    %v2748 = vpop.f32.mrf.mxu0
    %v2749 = vadd.f32 %v2721, %v2748
    %2750 = vdwg.mxu0
    %v2751 = vadd.f32 %v2361, %v2746
    %v2752 = vadd.f32 %v2362, %v2749
    %v2753 = vsel %vm834, %v2751, 0.0
    %2754 = vadd.xlane.f32.xlu0 %v2753
    %v2755 = vpop.xlane.xlu0 %2754
    %v2756 = vsel %vm834, %v2752, 0.0
    %2757 = vadd.xlane.f32.xlu0 %v2756
    %v2758 = vpop.xlane.xlu0 %2757
    %v2759 = vmul.f32 %v2755, %v1686
    %v2760 = vmul.f32 %v2758, %v1686
    %v2761 = vmul.f32 %v2751, %v2751
    %v2762 = vmul.f32 %v2752, %v2752
    %v2763 = vsel %vm834, %v2761, 0.0
    %2764 = vadd.xlane.f32.xlu0 %v2763
    %v2765 = vpop.xlane.xlu0 %2764
    %v2766 = vsel %vm834, %v2762, 0.0
    %2767 = vadd.xlane.f32.xlu0 %v2766
    %v2768 = vpop.xlane.xlu0 %2767
    %v2769 = vmul.f32 %v2765, %v1686
    %v2770 = vmul.f32 %v2768, %v1686
    %v2771 = vmul.f32 %v2759, %v2759
    %v2772 = vmul.f32 %v2760, %v2760
    %v2773 = vsub.f32 %v2769, %v2771
    %v2774 = vsub.f32 %v2770, %v2772
    %v2775 = vsub.f32 %v2751, %v2759
    %v2776 = vsub.f32 %v2752, %v2760
    %v2777 = vadd.f32 %v2773, 1e-05
    %v2778 = vadd.f32 %v2774, 1e-05
    %v2779 = vrsqrt.pop %v2777
    %v2780 = vmul.f32 %v2779, %v2777
    %v2781 = vmul.f32 %v2780, %v2779
    %v2782 = vmul.f32 0.5, %v2781
    %v2783 = vsub.f32 1.5, %v2782
    %v2784 = vmul.f32 %v2779, %v2783
    %vm2785 = vweird.f32 %v2777
    %vm2786 = vweird.f32 %v2779
    %vm2787 = vmor %vm2785, %vm2786
    %v2788 = vsel %vm2787, %v2779, %v2784
    %v2789 = vrsqrt.pop %v2778
    %v2790 = vmul.f32 %v2789, %v2778
    %v2791 = vmul.f32 %v2790, %v2789
    %v2792 = vmul.f32 0.5, %v2791
    %v2793 = vsub.f32 1.5, %v2792
    %v2794 = vmul.f32 %v2789, %v2793
    %vm2795 = vweird.f32 %v2778
    %vm2796 = vweird.f32 %v2789
    %vm2797 = vmor %vm2795, %vm2796
    %v2798 = vsel %vm2797, %v2789, %v2794
    %v2799 = vmul.f32 %v2775, %v2788
    %v2800 = vmul.f32 %v2776, %v2798
    %v2801 = vperm.slane %v2369, 0
    %v2802 = vmul.f32 %v2799, %v2801
    %v2803 = vmul.f32 %v2800, %v2801
    %v2804 = vperm.slane %v2370, 0
    %v2805 = vadd.f32 %v2802, %v2804
    %v2806 = vadd.f32 %v2803, %v2804
    %v2807 = vld [vmem:[#allocation5 + $0x198] sm:$0xff]
    %v2808 = vld [vmem:[#allocation5 + $0x1a0] sm:$0xff]
    %v2809 = vld [vmem:[#allocation5 + $0x1a8] sm:$0x1]
    %v2810 = vperm.slane %v2809, 0
    %v2812 = vsel %vm834, %v2805, 0
    %v2815 = vsel %vm834, %v2806, 0
    %2817 = vmatpush.msra.mxu0 0.0
    %2818 = vmatpush.msra.mxu0 0.0
    %2819 = vmatpush.msra.mxu0 0.0
    %2820 = vmatpush.msra.mxu0 0.0
    %2821 = vmatpush.msra.mxu0 0.0
    %2822 = vmatpush.msra.mxu0 0.0
    %2823 = vmatpush.msra.mxu0 0.0
    %2824 = vmatpush.msra.mxu0 0.0
    %2825 = vmatpush.msra.mxu0 0.0
    %2826 = vmatpush.msra.mxu0 0.0
    %2827 = vmatpush.msra.mxu0 0.0
    %2828 = vmatpush.msra.mxu0 0.0
    %2829 = vmatpush.msra.mxu0 0.0
    %2830 = vmatpush.msra.mxu0 0.0
    %2831 = vmatpush.msra.mxu0 %v2808
    %2832 = vmatpush.msra.mxu0 %v2807
    %2833 = vmatmul.f32.gmra.mxu0 %v2812
    %v2834 = vpop.f32.mrf.mxu0
    %v2835 = vadd.f32 %v2810, %v2834
    %2836 = vmatmul.f32.gmra.mxu0 %v2815
    %v2837 = vpop.f32.mrf.mxu0
    %v2838 = vadd.f32 %v2810, %v2837
    %2839 = vdwg.mxu0
    %v2840 = vmax.f32 %v2835, 0.0
    %v2841 = vmax.f32 %v2838, 0.0
    %v2842 = vld [vmem:[#allocation5 + $0x1b0] sm:$0xff]
    %v2843 = vld [vmem:[#allocation5 + $0x1b8] sm:$0xff]
    %v2844 = vld [vmem:[#allocation5 + $0x1c0] sm:$0xff]
    %v2845 = vld [vmem:[#allocation5 + $0x1c8] sm:$0xff]
    %v2846 = vld [vmem:[#allocation5 + $0x1d0] sm:$0x1]
    %v2847 = vld [vmem:[#allocation5 + $0x1d8] sm:$0xff]
    %v2848 = vld [vmem:[#allocation5 + $0x1e0] sm:$0xff]
    %v2849 = vld [vmem:[#allocation5 + $0x1e8] sm:$0xff]
    %v2850 = vld [vmem:[#allocation5 + $0x1f0] sm:$0xff]
    %v2851 = vld [vmem:[#allocation5 + $0x1f8] sm:$0x1]
    %v2852 = vld [vmem:[#allocation5 + $0x200] sm:$0x1]
    %v2853 = vld [vmem:[#allocation5 + $0x208] sm:$0x1]
    %v2854 = vperm.slane %v2846, 0
    %v2856 = vsel %vm157, %v2840, 0
    %v2859 = vsel %vm157, %v2841, 0
    %2861 = vmatpush.msra.mxu0 0.0
    %2862 = vmatpush.msra.mxu0 0.0
    %2863 = vmatpush.msra.mxu0 0.0
    %2864 = vmatpush.msra.mxu0 0.0
    %2865 = vmatpush.msra.mxu0 0.0
    %2866 = vmatpush.msra.mxu0 0.0
    %2867 = vmatpush.msra.mxu0 0.0
    %2868 = vmatpush.msra.mxu0 0.0
    %2869 = vmatpush.msra.mxu0 0.0
    %2870 = vmatpush.msra.mxu0 0.0
    %2871 = vmatpush.msra.mxu0 0.0
    %2872 = vmatpush.msra.mxu0 0.0
    %2873 = vmatpush.msra.mxu0 %v2845
    %2874 = vmatpush.msra.mxu0 %v2844
    %2875 = vmatpush.msra.mxu0 %v2843
    %2876 = vmatpush.msra.mxu0 %v2842
    %2877 = vmatmul.f32.gmra.mxu0 %v2856
    %v2878 = vpop.f32.mrf.mxu0
    %v2879 = vadd.f32 %v2854, %v2878
    %2880 = vmatmul.f32.gmra.mxu0 %v2859
    %v2881 = vpop.f32.mrf.mxu0
    %v2882 = vadd.f32 %v2854, %v2881
    %2883 = vdwg.mxu0
    %2886 = vrot.lane.b32.xlu0 %v2879, 104
    %v2887 = vpop.permute.xlu0 %2886
    %2888 = vrot.lane.b32.xlu0 %v2882, 104
    %v2889 = vpop.permute.xlu0 %2888
    %2890 = vrot.lane.b32.xlu0 %v2879, 80
    %v2891 = vpop.permute.xlu0 %2890
    %2892 = vrot.lane.b32.xlu0 %v2882, 80
    %v2893 = vpop.permute.xlu0 %2892
    %2894 = vrot.lane.b32.xlu0 %v2879, 56
    %v2895 = vpop.permute.xlu0 %2894
    %2896 = vrot.lane.b32.xlu0 %v2882, 56
    %v2897 = vpop.permute.xlu0 %2896
    %2898 = vrot.lane.b32.xlu0 %v2879, 120
    %v2899 = vpop.permute.xlu0 %2898
    %v2900 = vsel %vm201, %v2879, 0
    %v2902 = vsel %vm201, %v2899, 0
    %2904 = vmatpush.xpose.msra.mxu0 0.0
    %2905 = vmatpush.xpose.msra.mxu0 0.0
    %2906 = vmatpush.xpose.msra.mxu0 0.0
    %2907 = vmatpush.xpose.msra.mxu0 0.0
    %2908 = vmatpush.xpose.msra.mxu0 0.0
    %2909 = vmatpush.xpose.msra.mxu0 0.0
    %2910 = vmatpush.xpose.msra.mxu0 0.0
    %2911 = vmatpush.xpose.msra.mxu0 0.0
    %2912 = vmatpush.xpose.msra.mxu0 0.0
    %2913 = vmatpush.xpose.msra.mxu0 0.0
    %2914 = vmatpush.xpose.msra.mxu0 0.0
    %2915 = vmatpush.xpose.msra.mxu0 0.0
    %2916 = vmatpush.xpose.msra.mxu0 0.0
    %2917 = vmatpush.xpose.msra.mxu0 0.0
    %2918 = vmatpush.xpose.msra.mxu0 0.0
    %2919 = vmatpush.xpose.msra.mxu0 %v2902
    %2920 = vmatmul.f32.gmra.mxu0 %v2900
    %v2921 = vpop.f32.mrf.mxu0
    %v2922 = vadd.f32 0.0, %v2921
    %2923 = vdwg.mxu0
    %2924 = vrot.lane.b32.xlu0 %v2882, 120
    %v2925 = vpop.permute.xlu0 %2924
    %v2926 = vsel %vm201, %v2882, 0
    %v2928 = vsel %vm201, %v2925, 0
    %2930 = vmatpush.xpose.msra.mxu0 0.0
    %2931 = vmatpush.xpose.msra.mxu0 0.0
    %2932 = vmatpush.xpose.msra.mxu0 0.0
    %2933 = vmatpush.xpose.msra.mxu0 0.0
    %2934 = vmatpush.xpose.msra.mxu0 0.0
    %2935 = vmatpush.xpose.msra.mxu0 0.0
    %2936 = vmatpush.xpose.msra.mxu0 0.0
    %2937 = vmatpush.xpose.msra.mxu0 0.0
    %2938 = vmatpush.xpose.msra.mxu0 0.0
    %2939 = vmatpush.xpose.msra.mxu0 0.0
    %2940 = vmatpush.xpose.msra.mxu0 0.0
    %2941 = vmatpush.xpose.msra.mxu0 0.0
    %2942 = vmatpush.xpose.msra.mxu0 0.0
    %2943 = vmatpush.xpose.msra.mxu0 0.0
    %2944 = vmatpush.xpose.msra.mxu0 0.0
    %2945 = vmatpush.xpose.msra.mxu0 %v2928
    %2946 = vmatmul.f32.gmra.mxu0 %v2926
    %v2947 = vpop.f32.mrf.mxu0
    %v2948 = vadd.f32 0.0, %v2947
    %2949 = vdwg.mxu0
    %2950 = vrot.lane.b32.xlu0 %v2887, 120
    %v2951 = vpop.permute.xlu0 %2950
    %v2952 = vsel %vm201, %v2887, 0
    %v2954 = vsel %vm201, %v2951, 0
    %2956 = vmatpush.xpose.msra.mxu0 0.0
    %2957 = vmatpush.xpose.msra.mxu0 0.0
    %2958 = vmatpush.xpose.msra.mxu0 0.0
    %2959 = vmatpush.xpose.msra.mxu0 0.0
    %2960 = vmatpush.xpose.msra.mxu0 0.0
    %2961 = vmatpush.xpose.msra.mxu0 0.0
    %2962 = vmatpush.xpose.msra.mxu0 0.0
    %2963 = vmatpush.xpose.msra.mxu0 0.0
    %2964 = vmatpush.xpose.msra.mxu0 0.0
    %2965 = vmatpush.xpose.msra.mxu0 0.0
    %2966 = vmatpush.xpose.msra.mxu0 0.0
    %2967 = vmatpush.xpose.msra.mxu0 0.0
    %2968 = vmatpush.xpose.msra.mxu0 0.0
    %2969 = vmatpush.xpose.msra.mxu0 0.0
    %2970 = vmatpush.xpose.msra.mxu0 0.0
    %2971 = vmatpush.xpose.msra.mxu0 %v2954
    %2972 = vmatmul.f32.gmra.mxu0 %v2952
    %v2973 = vpop.f32.mrf.mxu0
    %v2974 = vadd.f32 0.0, %v2973
    %2975 = vdwg.mxu0
    %2976 = vrot.lane.b32.xlu0 %v2889, 120
    %v2977 = vpop.permute.xlu0 %2976
    %v2978 = vsel %vm201, %v2889, 0
    %v2980 = vsel %vm201, %v2977, 0
    %2982 = vmatpush.xpose.msra.mxu0 0.0
    %2983 = vmatpush.xpose.msra.mxu0 0.0
    %2984 = vmatpush.xpose.msra.mxu0 0.0
    %2985 = vmatpush.xpose.msra.mxu0 0.0
    %2986 = vmatpush.xpose.msra.mxu0 0.0
    %2987 = vmatpush.xpose.msra.mxu0 0.0
    %2988 = vmatpush.xpose.msra.mxu0 0.0
    %2989 = vmatpush.xpose.msra.mxu0 0.0
    %2990 = vmatpush.xpose.msra.mxu0 0.0
    %2991 = vmatpush.xpose.msra.mxu0 0.0
    %2992 = vmatpush.xpose.msra.mxu0 0.0
    %2993 = vmatpush.xpose.msra.mxu0 0.0
    %2994 = vmatpush.xpose.msra.mxu0 0.0
    %2995 = vmatpush.xpose.msra.mxu0 0.0
    %2996 = vmatpush.xpose.msra.mxu0 0.0
    %2997 = vmatpush.xpose.msra.mxu0 %v2980
    %2998 = vmatmul.f32.gmra.mxu0 %v2978
    %v2999 = vpop.f32.mrf.mxu0
    %v3000 = vadd.f32 0.0, %v2999
    %3001 = vdwg.mxu0
    %3002 = vrot.lane.b32.xlu0 %v2891, 120
    %v3003 = vpop.permute.xlu0 %3002
    %v3004 = vsel %vm201, %v2891, 0
    %v3006 = vsel %vm201, %v3003, 0
    %3008 = vmatpush.xpose.msra.mxu0 0.0
    %3009 = vmatpush.xpose.msra.mxu0 0.0
    %3010 = vmatpush.xpose.msra.mxu0 0.0
    %3011 = vmatpush.xpose.msra.mxu0 0.0
    %3012 = vmatpush.xpose.msra.mxu0 0.0
    %3013 = vmatpush.xpose.msra.mxu0 0.0
    %3014 = vmatpush.xpose.msra.mxu0 0.0
    %3015 = vmatpush.xpose.msra.mxu0 0.0
    %3016 = vmatpush.xpose.msra.mxu0 0.0
    %3017 = vmatpush.xpose.msra.mxu0 0.0
    %3018 = vmatpush.xpose.msra.mxu0 0.0
    %3019 = vmatpush.xpose.msra.mxu0 0.0
    %3020 = vmatpush.xpose.msra.mxu0 0.0
    %3021 = vmatpush.xpose.msra.mxu0 0.0
    %3022 = vmatpush.xpose.msra.mxu0 0.0
    %3023 = vmatpush.xpose.msra.mxu0 %v3006
    %3024 = vmatmul.f32.gmra.mxu0 %v3004
    %v3025 = vpop.f32.mrf.mxu0
    %v3026 = vadd.f32 0.0, %v3025
    %3027 = vdwg.mxu0
    %3028 = vrot.lane.b32.xlu0 %v2893, 120
    %v3029 = vpop.permute.xlu0 %3028
    %v3030 = vsel %vm201, %v2893, 0
    %v3032 = vsel %vm201, %v3029, 0
    %3034 = vmatpush.xpose.msra.mxu0 0.0
    %3035 = vmatpush.xpose.msra.mxu0 0.0
    %3036 = vmatpush.xpose.msra.mxu0 0.0
    %3037 = vmatpush.xpose.msra.mxu0 0.0
    %3038 = vmatpush.xpose.msra.mxu0 0.0
    %3039 = vmatpush.xpose.msra.mxu0 0.0
    %3040 = vmatpush.xpose.msra.mxu0 0.0
    %3041 = vmatpush.xpose.msra.mxu0 0.0
    %3042 = vmatpush.xpose.msra.mxu0 0.0
    %3043 = vmatpush.xpose.msra.mxu0 0.0
    %3044 = vmatpush.xpose.msra.mxu0 0.0
    %3045 = vmatpush.xpose.msra.mxu0 0.0
    %3046 = vmatpush.xpose.msra.mxu0 0.0
    %3047 = vmatpush.xpose.msra.mxu0 0.0
    %3048 = vmatpush.xpose.msra.mxu0 0.0
    %3049 = vmatpush.xpose.msra.mxu0 %v3032
    %3050 = vmatmul.f32.gmra.mxu0 %v3030
    %v3051 = vpop.f32.mrf.mxu0
    %v3052 = vadd.f32 0.0, %v3051
    %3053 = vdwg.mxu0
    %3054 = vrot.lane.b32.xlu0 %v2895, 120
    %v3055 = vpop.permute.xlu0 %3054
    %v3056 = vsel %vm201, %v2895, 0
    %v3058 = vsel %vm201, %v3055, 0
    %3060 = vmatpush.xpose.msra.mxu0 0.0
    %3061 = vmatpush.xpose.msra.mxu0 0.0
    %3062 = vmatpush.xpose.msra.mxu0 0.0
    %3063 = vmatpush.xpose.msra.mxu0 0.0
    %3064 = vmatpush.xpose.msra.mxu0 0.0
    %3065 = vmatpush.xpose.msra.mxu0 0.0
    %3066 = vmatpush.xpose.msra.mxu0 0.0
    %3067 = vmatpush.xpose.msra.mxu0 0.0
    %3068 = vmatpush.xpose.msra.mxu0 0.0
    %3069 = vmatpush.xpose.msra.mxu0 0.0
    %3070 = vmatpush.xpose.msra.mxu0 0.0
    %3071 = vmatpush.xpose.msra.mxu0 0.0
    %3072 = vmatpush.xpose.msra.mxu0 0.0
    %3073 = vmatpush.xpose.msra.mxu0 0.0
    %3074 = vmatpush.xpose.msra.mxu0 0.0
    %3075 = vmatpush.xpose.msra.mxu0 %v3058
    %3076 = vmatmul.f32.gmra.mxu0 %v3056
    %v3077 = vpop.f32.mrf.mxu0
    %v3078 = vadd.f32 0.0, %v3077
    %3079 = vdwg.mxu0
    %3080 = vrot.lane.b32.xlu0 %v2897, 120
    %v3081 = vpop.permute.xlu0 %3080
    %v3082 = vsel %vm201, %v2897, 0
    %v3084 = vsel %vm201, %v3081, 0
    %3086 = vmatpush.xpose.msra.mxu0 0.0
    %3087 = vmatpush.xpose.msra.mxu0 0.0
    %3088 = vmatpush.xpose.msra.mxu0 0.0
    %3089 = vmatpush.xpose.msra.mxu0 0.0
    %3090 = vmatpush.xpose.msra.mxu0 0.0
    %3091 = vmatpush.xpose.msra.mxu0 0.0
    %3092 = vmatpush.xpose.msra.mxu0 0.0
    %3093 = vmatpush.xpose.msra.mxu0 0.0
    %3094 = vmatpush.xpose.msra.mxu0 0.0
    %3095 = vmatpush.xpose.msra.mxu0 0.0
    %3096 = vmatpush.xpose.msra.mxu0 0.0
    %3097 = vmatpush.xpose.msra.mxu0 0.0
    %3098 = vmatpush.xpose.msra.mxu0 0.0
    %3099 = vmatpush.xpose.msra.mxu0 0.0
    %3100 = vmatpush.xpose.msra.mxu0 0.0
    %3101 = vmatpush.xpose.msra.mxu0 %v3084
    %3102 = vmatmul.f32.gmra.mxu0 %v3082
    %v3103 = vpop.f32.mrf.mxu0
    %v3104 = vadd.f32 0.0, %v3103
    %3105 = vdwg.mxu0
    %v3106 = vsel %vm201, %v2922, -inf
    %3107 = vmax.xlane.f32.xlu0 %v3106
    %v3108 = vpop.xlane.xlu0 %3107
    %v3109 = vsel %vm201, %v2948, -inf
    %3110 = vmax.xlane.f32.xlu0 %v3109
    %v3111 = vpop.xlane.xlu0 %3110
    %v3112 = vsel %vm201, %v2974, -inf
    %3113 = vmax.xlane.f32.xlu0 %v3112
    %v3114 = vpop.xlane.xlu0 %3113
    %v3115 = vsel %vm201, %v3000, -inf
    %3116 = vmax.xlane.f32.xlu0 %v3115
    %v3117 = vpop.xlane.xlu0 %3116
    %v3118 = vsel %vm201, %v3026, -inf
    %3119 = vmax.xlane.f32.xlu0 %v3118
    %v3120 = vpop.xlane.xlu0 %3119
    %v3121 = vsel %vm201, %v3052, -inf
    %3122 = vmax.xlane.f32.xlu0 %v3121
    %v3123 = vpop.xlane.xlu0 %3122
    %v3124 = vsel %vm201, %v3078, -inf
    %3125 = vmax.xlane.f32.xlu0 %v3124
    %v3126 = vpop.xlane.xlu0 %3125
    %v3127 = vsel %vm201, %v3104, -inf
    %3128 = vmax.xlane.f32.xlu0 %v3127
    %v3129 = vpop.xlane.xlu0 %3128
    %v3130 = vsub.f32 %v2922, %v3108
    %v3131 = vsub.f32 %v2948, %v3111
    %v3132 = vsub.f32 %v2974, %v3114
    %v3133 = vsub.f32 %v3000, %v3117
    %v3134 = vsub.f32 %v3026, %v3120
    %v3135 = vsub.f32 %v3052, %v3123
    %v3136 = vsub.f32 %v3078, %v3126
    %v3137 = vsub.f32 %v3104, %v3129
    %v3138 = vmul.f32 %v3130, 1.442695
    %v3139 = vpow.pop %v3138
    %v3140 = vmul.f32 %v3131, 1.442695
    %v3141 = vpow.pop %v3140
    %v3142 = vmul.f32 %v3132, 1.442695
    %v3143 = vpow.pop %v3142
    %v3144 = vmul.f32 %v3133, 1.442695
    %v3145 = vpow.pop %v3144
    %v3146 = vmul.f32 %v3134, 1.442695
    %v3147 = vpow.pop %v3146
    %v3148 = vmul.f32 %v3135, 1.442695
    %v3149 = vpow.pop %v3148
    %v3150 = vmul.f32 %v3136, 1.442695
    %v3151 = vpow.pop %v3150
    %v3152 = vmul.f32 %v3137, 1.442695
    %v3153 = vpow.pop %v3152
    %v3154 = vsel %vm201, %v3139, 0.0
    %3155 = vadd.xlane.f32.xlu0 %v3154
    %v3156 = vpop.xlane.xlu0 %3155
    %v3157 = vsel %vm201, %v3141, 0.0
    %3158 = vadd.xlane.f32.xlu0 %v3157
    %v3159 = vpop.xlane.xlu0 %3158
    %v3160 = vsel %vm201, %v3143, 0.0
    %3161 = vadd.xlane.f32.xlu0 %v3160
    %v3162 = vpop.xlane.xlu0 %3161
    %v3163 = vsel %vm201, %v3145, 0.0
    %3164 = vadd.xlane.f32.xlu0 %v3163
    %v3165 = vpop.xlane.xlu0 %3164
    %v3166 = vsel %vm201, %v3147, 0.0
    %3167 = vadd.xlane.f32.xlu0 %v3166
    %v3168 = vpop.xlane.xlu0 %3167
    %v3169 = vsel %vm201, %v3149, 0.0
    %3170 = vadd.xlane.f32.xlu0 %v3169
    %v3171 = vpop.xlane.xlu0 %3170
    %v3172 = vsel %vm201, %v3151, 0.0
    %3173 = vadd.xlane.f32.xlu0 %v3172
    %v3174 = vpop.xlane.xlu0 %3173
    %v3175 = vsel %vm201, %v3153, 0.0
    %3176 = vadd.xlane.f32.xlu0 %v3175
    %v3177 = vpop.xlane.xlu0 %3176
    %v3178 = vrcp.pop %v3156
    %v3179 = vmul.f32 %v3156, %v3178
    %v3180 = vsub.f32 1.0, %v3179
    %v3181 = vmul.f32 %v3178, %v3180
    %v3182 = vadd.f32 %v3178, %v3181
    %vm3183 = vweird.f32 %v3156
    %vm3184 = vweird.f32 %v3178
    %vm3185 = vmor %vm3183, %vm3184
    %v3186 = vsel %vm3185, %v3178, %v3182
    %v3187 = vand.u32 2147483647, %v3156
    %vm3188 = vcmp.eq.f32.partialorder %v3187, 8.507059e+37
    %v3189 = vand.u32 %v3156, 2147483648
    %v3190 = vor.u32 1.1754944e-38, %v3189
    %v3191 = vsel %vm3188, %v3190, %v3186
    %v3192 = vmul.f32 %v3139, %v3191
    %v3193 = vrcp.pop %v3159
    %v3194 = vmul.f32 %v3159, %v3193
    %v3195 = vsub.f32 1.0, %v3194
    %v3196 = vmul.f32 %v3193, %v3195
    %v3197 = vadd.f32 %v3193, %v3196
    %vm3198 = vweird.f32 %v3159
    %vm3199 = vweird.f32 %v3193
    %vm3200 = vmor %vm3198, %vm3199
    %v3201 = vsel %vm3200, %v3193, %v3197
    %v3202 = vand.u32 2147483647, %v3159
    %vm3203 = vcmp.eq.f32.partialorder %v3202, 8.507059e+37
    %v3204 = vand.u32 %v3159, 2147483648
    %v3205 = vor.u32 1.1754944e-38, %v3204
    %v3206 = vsel %vm3203, %v3205, %v3201
    %v3207 = vmul.f32 %v3141, %v3206
    %v3208 = vrcp.pop %v3162
    %v3209 = vmul.f32 %v3162, %v3208
    %v3210 = vsub.f32 1.0, %v3209
    %v3211 = vmul.f32 %v3208, %v3210
    %v3212 = vadd.f32 %v3208, %v3211
    %vm3213 = vweird.f32 %v3162
    %vm3214 = vweird.f32 %v3208
    %vm3215 = vmor %vm3213, %vm3214
    %v3216 = vsel %vm3215, %v3208, %v3212
    %v3217 = vand.u32 2147483647, %v3162
    %vm3218 = vcmp.eq.f32.partialorder %v3217, 8.507059e+37
    %v3219 = vand.u32 %v3162, 2147483648
    %v3220 = vor.u32 1.1754944e-38, %v3219
    %v3221 = vsel %vm3218, %v3220, %v3216
    %v3222 = vmul.f32 %v3143, %v3221
    %v3223 = vrcp.pop %v3165
    %v3224 = vmul.f32 %v3165, %v3223
    %v3225 = vsub.f32 1.0, %v3224
    %v3226 = vmul.f32 %v3223, %v3225
    %v3227 = vadd.f32 %v3223, %v3226
    %vm3228 = vweird.f32 %v3165
    %vm3229 = vweird.f32 %v3223
    %vm3230 = vmor %vm3228, %vm3229
    %v3231 = vsel %vm3230, %v3223, %v3227
    %v3232 = vand.u32 2147483647, %v3165
    %vm3233 = vcmp.eq.f32.partialorder %v3232, 8.507059e+37
    %v3234 = vand.u32 %v3165, 2147483648
    %v3235 = vor.u32 1.1754944e-38, %v3234
    %v3236 = vsel %vm3233, %v3235, %v3231
    %v3237 = vmul.f32 %v3145, %v3236
    %v3238 = vrcp.pop %v3168
    %v3239 = vmul.f32 %v3168, %v3238
    %v3240 = vsub.f32 1.0, %v3239
    %v3241 = vmul.f32 %v3238, %v3240
    %v3242 = vadd.f32 %v3238, %v3241
    %vm3243 = vweird.f32 %v3168
    %vm3244 = vweird.f32 %v3238
    %vm3245 = vmor %vm3243, %vm3244
    %v3246 = vsel %vm3245, %v3238, %v3242
    %v3247 = vand.u32 2147483647, %v3168
    %vm3248 = vcmp.eq.f32.partialorder %v3247, 8.507059e+37
    %v3249 = vand.u32 %v3168, 2147483648
    %v3250 = vor.u32 1.1754944e-38, %v3249
    %v3251 = vsel %vm3248, %v3250, %v3246
    %v3252 = vmul.f32 %v3147, %v3251
    %v3253 = vrcp.pop %v3171
    %v3254 = vmul.f32 %v3171, %v3253
    %v3255 = vsub.f32 1.0, %v3254
    %v3256 = vmul.f32 %v3253, %v3255
    %v3257 = vadd.f32 %v3253, %v3256
    %vm3258 = vweird.f32 %v3171
    %vm3259 = vweird.f32 %v3253
    %vm3260 = vmor %vm3258, %vm3259
    %v3261 = vsel %vm3260, %v3253, %v3257
    %v3262 = vand.u32 2147483647, %v3171
    %vm3263 = vcmp.eq.f32.partialorder %v3262, 8.507059e+37
    %v3264 = vand.u32 %v3171, 2147483648
    %v3265 = vor.u32 1.1754944e-38, %v3264
    %v3266 = vsel %vm3263, %v3265, %v3261
    %v3267 = vmul.f32 %v3149, %v3266
    %v3268 = vrcp.pop %v3174
    %v3269 = vmul.f32 %v3174, %v3268
    %v3270 = vsub.f32 1.0, %v3269
    %v3271 = vmul.f32 %v3268, %v3270
    %v3272 = vadd.f32 %v3268, %v3271
    %vm3273 = vweird.f32 %v3174
    %vm3274 = vweird.f32 %v3268
    %vm3275 = vmor %vm3273, %vm3274
    %v3276 = vsel %vm3275, %v3268, %v3272
    %v3277 = vand.u32 2147483647, %v3174
    %vm3278 = vcmp.eq.f32.partialorder %v3277, 8.507059e+37
    %v3279 = vand.u32 %v3174, 2147483648
    %v3280 = vor.u32 1.1754944e-38, %v3279
    %v3281 = vsel %vm3278, %v3280, %v3276
    %v3282 = vmul.f32 %v3151, %v3281
    %v3283 = vrcp.pop %v3177
    %v3284 = vmul.f32 %v3177, %v3283
    %v3285 = vsub.f32 1.0, %v3284
    %v3286 = vmul.f32 %v3283, %v3285
    %v3287 = vadd.f32 %v3283, %v3286
    %vm3288 = vweird.f32 %v3177
    %vm3289 = vweird.f32 %v3283
    %vm3290 = vmor %vm3288, %vm3289
    %v3291 = vsel %vm3290, %v3283, %v3287
    %v3292 = vand.u32 2147483647, %v3177
    %vm3293 = vcmp.eq.f32.partialorder %v3292, 8.507059e+37
    %v3294 = vand.u32 %v3177, 2147483648
    %v3295 = vor.u32 1.1754944e-38, %v3294
    %v3296 = vsel %vm3293, %v3295, %v3291
    %v3297 = vmul.f32 %v3153, %v3296
    %3298 = vrot.lane.b32.xlu0 %v2879, 112
    %v3299 = vpop.permute.xlu0 %3298
    %v3302 = vsel %vm201, %v3192, 0
    %3304 = vmatpush.msra.mxu0 0.0
    %3305 = vmatpush.msra.mxu0 0.0
    %3306 = vmatpush.msra.mxu0 0.0
    %3307 = vmatpush.msra.mxu0 0.0
    %3308 = vmatpush.msra.mxu0 0.0
    %3309 = vmatpush.msra.mxu0 0.0
    %3310 = vmatpush.msra.mxu0 0.0
    %3311 = vmatpush.msra.mxu0 0.0
    %3312 = vmatpush.msra.mxu0 0.0
    %3313 = vmatpush.msra.mxu0 0.0
    %3314 = vmatpush.msra.mxu0 0.0
    %3315 = vmatpush.msra.mxu0 0.0
    %3316 = vmatpush.msra.mxu0 0.0
    %3317 = vmatpush.msra.mxu0 0.0
    %3318 = vmatpush.msra.mxu0 0.0
    %3319 = vmatpush.msra.mxu0 %v3299
    %3320 = vmatmul.f32.gmra.mxu0 %v3302
    %v3321 = vpop.f32.mrf.mxu0
    %v3322 = vadd.f32 0.0, %v3321
    %3323 = vdwg.mxu0
    %3324 = vrot.lane.b32.xlu0 %v2882, 112
    %v3325 = vpop.permute.xlu0 %3324
    %v3328 = vsel %vm201, %v3207, 0
    %3330 = vmatpush.msra.mxu0 0.0
    %3331 = vmatpush.msra.mxu0 0.0
    %3332 = vmatpush.msra.mxu0 0.0
    %3333 = vmatpush.msra.mxu0 0.0
    %3334 = vmatpush.msra.mxu0 0.0
    %3335 = vmatpush.msra.mxu0 0.0
    %3336 = vmatpush.msra.mxu0 0.0
    %3337 = vmatpush.msra.mxu0 0.0
    %3338 = vmatpush.msra.mxu0 0.0
    %3339 = vmatpush.msra.mxu0 0.0
    %3340 = vmatpush.msra.mxu0 0.0
    %3341 = vmatpush.msra.mxu0 0.0
    %3342 = vmatpush.msra.mxu0 0.0
    %3343 = vmatpush.msra.mxu0 0.0
    %3344 = vmatpush.msra.mxu0 0.0
    %3345 = vmatpush.msra.mxu0 %v3325
    %3346 = vmatmul.f32.gmra.mxu0 %v3328
    %v3347 = vpop.f32.mrf.mxu0
    %v3348 = vadd.f32 0.0, %v3347
    %3349 = vdwg.mxu0
    %3350 = vrot.lane.b32.xlu0 %v2887, 112
    %v3351 = vpop.permute.xlu0 %3350
    %v3354 = vsel %vm201, %v3222, 0
    %3356 = vmatpush.msra.mxu0 0.0
    %3357 = vmatpush.msra.mxu0 0.0
    %3358 = vmatpush.msra.mxu0 0.0
    %3359 = vmatpush.msra.mxu0 0.0
    %3360 = vmatpush.msra.mxu0 0.0
    %3361 = vmatpush.msra.mxu0 0.0
    %3362 = vmatpush.msra.mxu0 0.0
    %3363 = vmatpush.msra.mxu0 0.0
    %3364 = vmatpush.msra.mxu0 0.0
    %3365 = vmatpush.msra.mxu0 0.0
    %3366 = vmatpush.msra.mxu0 0.0
    %3367 = vmatpush.msra.mxu0 0.0
    %3368 = vmatpush.msra.mxu0 0.0
    %3369 = vmatpush.msra.mxu0 0.0
    %3370 = vmatpush.msra.mxu0 0.0
    %3371 = vmatpush.msra.mxu0 %v3351
    %3372 = vmatmul.f32.gmra.mxu0 %v3354
    %v3373 = vpop.f32.mrf.mxu0
    %v3374 = vadd.f32 0.0, %v3373
    %3375 = vdwg.mxu0
    %3376 = vrot.lane.b32.xlu0 %v2889, 112
    %v3377 = vpop.permute.xlu0 %3376
    %v3380 = vsel %vm201, %v3237, 0
    %3382 = vmatpush.msra.mxu0 0.0
    %3383 = vmatpush.msra.mxu0 0.0
    %3384 = vmatpush.msra.mxu0 0.0
    %3385 = vmatpush.msra.mxu0 0.0
    %3386 = vmatpush.msra.mxu0 0.0
    %3387 = vmatpush.msra.mxu0 0.0
    %3388 = vmatpush.msra.mxu0 0.0
    %3389 = vmatpush.msra.mxu0 0.0
    %3390 = vmatpush.msra.mxu0 0.0
    %3391 = vmatpush.msra.mxu0 0.0
    %3392 = vmatpush.msra.mxu0 0.0
    %3393 = vmatpush.msra.mxu0 0.0
    %3394 = vmatpush.msra.mxu0 0.0
    %3395 = vmatpush.msra.mxu0 0.0
    %3396 = vmatpush.msra.mxu0 0.0
    %3397 = vmatpush.msra.mxu0 %v3377
    %3398 = vmatmul.f32.gmra.mxu0 %v3380
    %v3399 = vpop.f32.mrf.mxu0
    %v3400 = vadd.f32 0.0, %v3399
    %3401 = vdwg.mxu0
    %3402 = vrot.lane.b32.xlu0 %v2891, 112
    %v3403 = vpop.permute.xlu0 %3402
    %v3406 = vsel %vm201, %v3252, 0
    %3408 = vmatpush.msra.mxu0 0.0
    %3409 = vmatpush.msra.mxu0 0.0
    %3410 = vmatpush.msra.mxu0 0.0
    %3411 = vmatpush.msra.mxu0 0.0
    %3412 = vmatpush.msra.mxu0 0.0
    %3413 = vmatpush.msra.mxu0 0.0
    %3414 = vmatpush.msra.mxu0 0.0
    %3415 = vmatpush.msra.mxu0 0.0
    %3416 = vmatpush.msra.mxu0 0.0
    %3417 = vmatpush.msra.mxu0 0.0
    %3418 = vmatpush.msra.mxu0 0.0
    %3419 = vmatpush.msra.mxu0 0.0
    %3420 = vmatpush.msra.mxu0 0.0
    %3421 = vmatpush.msra.mxu0 0.0
    %3422 = vmatpush.msra.mxu0 0.0
    %3423 = vmatpush.msra.mxu0 %v3403
    %3424 = vmatmul.f32.gmra.mxu0 %v3406
    %v3425 = vpop.f32.mrf.mxu0
    %v3426 = vadd.f32 0.0, %v3425
    %3427 = vdwg.mxu0
    %3428 = vrot.lane.b32.xlu0 %v2893, 112
    %v3429 = vpop.permute.xlu0 %3428
    %v3432 = vsel %vm201, %v3267, 0
    %3434 = vmatpush.msra.mxu0 0.0
    %3435 = vmatpush.msra.mxu0 0.0
    %3436 = vmatpush.msra.mxu0 0.0
    %3437 = vmatpush.msra.mxu0 0.0
    %3438 = vmatpush.msra.mxu0 0.0
    %3439 = vmatpush.msra.mxu0 0.0
    %3440 = vmatpush.msra.mxu0 0.0
    %3441 = vmatpush.msra.mxu0 0.0
    %3442 = vmatpush.msra.mxu0 0.0
    %3443 = vmatpush.msra.mxu0 0.0
    %3444 = vmatpush.msra.mxu0 0.0
    %3445 = vmatpush.msra.mxu0 0.0
    %3446 = vmatpush.msra.mxu0 0.0
    %3447 = vmatpush.msra.mxu0 0.0
    %3448 = vmatpush.msra.mxu0 0.0
    %3449 = vmatpush.msra.mxu0 %v3429
    %3450 = vmatmul.f32.gmra.mxu0 %v3432
    %v3451 = vpop.f32.mrf.mxu0
    %v3452 = vadd.f32 0.0, %v3451
    %3453 = vdwg.mxu0
    %3454 = vrot.lane.b32.xlu0 %v2895, 112
    %v3455 = vpop.permute.xlu0 %3454
    %v3458 = vsel %vm201, %v3282, 0
    %3460 = vmatpush.msra.mxu0 0.0
    %3461 = vmatpush.msra.mxu0 0.0
    %3462 = vmatpush.msra.mxu0 0.0
    %3463 = vmatpush.msra.mxu0 0.0
    %3464 = vmatpush.msra.mxu0 0.0
    %3465 = vmatpush.msra.mxu0 0.0
    %3466 = vmatpush.msra.mxu0 0.0
    %3467 = vmatpush.msra.mxu0 0.0
    %3468 = vmatpush.msra.mxu0 0.0
    %3469 = vmatpush.msra.mxu0 0.0
    %3470 = vmatpush.msra.mxu0 0.0
    %3471 = vmatpush.msra.mxu0 0.0
    %3472 = vmatpush.msra.mxu0 0.0
    %3473 = vmatpush.msra.mxu0 0.0
    %3474 = vmatpush.msra.mxu0 0.0
    %3475 = vmatpush.msra.mxu0 %v3455
    %3476 = vmatmul.f32.gmra.mxu0 %v3458
    %v3477 = vpop.f32.mrf.mxu0
    %v3478 = vadd.f32 0.0, %v3477
    %3479 = vdwg.mxu0
    %3480 = vrot.lane.b32.xlu0 %v2897, 112
    %v3481 = vpop.permute.xlu0 %3480
    %v3484 = vsel %vm201, %v3297, 0
    %3486 = vmatpush.msra.mxu0 0.0
    %3487 = vmatpush.msra.mxu0 0.0
    %3488 = vmatpush.msra.mxu0 0.0
    %3489 = vmatpush.msra.mxu0 0.0
    %3490 = vmatpush.msra.mxu0 0.0
    %3491 = vmatpush.msra.mxu0 0.0
    %3492 = vmatpush.msra.mxu0 0.0
    %3493 = vmatpush.msra.mxu0 0.0
    %3494 = vmatpush.msra.mxu0 0.0
    %3495 = vmatpush.msra.mxu0 0.0
    %3496 = vmatpush.msra.mxu0 0.0
    %3497 = vmatpush.msra.mxu0 0.0
    %3498 = vmatpush.msra.mxu0 0.0
    %3499 = vmatpush.msra.mxu0 0.0
    %3500 = vmatpush.msra.mxu0 0.0
    %3501 = vmatpush.msra.mxu0 %v3481
    %3502 = vmatmul.f32.gmra.mxu0 %v3484
    %v3503 = vpop.f32.mrf.mxu0
    %v3504 = vadd.f32 0.0, %v3503
    %3505 = vdwg.mxu0
    %3508 = vrot.lane.b32.xlu0 %v3374, 8
    %v3509 = vpop.permute.xlu0 %3508
    %3510 = vrot.lane.b32.xlu0 %v3400, 8
    %v3511 = vpop.permute.xlu0 %3510
    %3516 = vrot.lane.b32.xlu0 %v3426, 16
    %v3517 = vpop.permute.xlu0 %3516
    %3518 = vrot.lane.b32.xlu0 %v3452, 16
    %v3519 = vpop.permute.xlu0 %3518
    %3524 = vrot.lane.b32.xlu0 %v3478, 24
    %v3525 = vpop.permute.xlu0 %3524
    %3526 = vrot.lane.b32.xlu0 %v3504, 24
    %v3527 = vpop.permute.xlu0 %3526
    %v3530 = vsel %vm201, %v3322, %v3509
    %v3531 = vsel %vm201, %v3348, %v3511
    %v3532 = vsel %vm834, %v3530, %v3517
    %v3533 = vsel %vm834, %v3531, %v3519
    %v3534 = vsel %vm837, %v3532, %v3525
    %v3535 = vsel %vm837, %v3533, %v3527
    %v3536 = vperm.slane %v2851, 0
    %v3538 = vsel %vm157, %v3534, 0
    %v3541 = vsel %vm157, %v3535, 0
    %3543 = vmatpush.msra.mxu0 0.0
    %3544 = vmatpush.msra.mxu0 0.0
    %3545 = vmatpush.msra.mxu0 0.0
    %3546 = vmatpush.msra.mxu0 0.0
    %3547 = vmatpush.msra.mxu0 0.0
    %3548 = vmatpush.msra.mxu0 0.0
    %3549 = vmatpush.msra.mxu0 0.0
    %3550 = vmatpush.msra.mxu0 0.0
    %3551 = vmatpush.msra.mxu0 0.0
    %3552 = vmatpush.msra.mxu0 0.0
    %3553 = vmatpush.msra.mxu0 0.0
    %3554 = vmatpush.msra.mxu0 0.0
    %3555 = vmatpush.msra.mxu0 %v2850
    %3556 = vmatpush.msra.mxu0 %v2849
    %3557 = vmatpush.msra.mxu0 %v2848
    %3558 = vmatpush.msra.mxu0 %v2847
    %3559 = vmatmul.f32.gmra.mxu0 %v3538
    %v3560 = vpop.f32.mrf.mxu0
    %v3561 = vadd.f32 %v3536, %v3560
    %3562 = vmatmul.f32.gmra.mxu0 %v3541
    %v3563 = vpop.f32.mrf.mxu0
    %v3564 = vadd.f32 %v3536, %v3563
    %3565 = vdwg.mxu0
    %v3566 = vadd.f32 %v2840, %v3561
    %v3567 = vadd.f32 %v2841, %v3564
    %v3568 = vsel %vm157, %v3566, 0.0
    %3569 = vadd.xlane.f32.xlu0 %v3568
    %v3570 = vpop.xlane.xlu0 %3569
    %v3571 = vsel %vm157, %v3567, 0.0
    %3572 = vadd.xlane.f32.xlu0 %v3571
    %v3573 = vpop.xlane.xlu0 %3572
    %v3574 = vmul.f32 %v3570, %v976
    %v3575 = vmul.f32 %v3573, %v976
    %v3576 = vmul.f32 %v3566, %v3566
    %v3577 = vmul.f32 %v3567, %v3567
    %v3578 = vsel %vm157, %v3576, 0.0
    %3579 = vadd.xlane.f32.xlu0 %v3578
    %v3580 = vpop.xlane.xlu0 %3579
    %v3581 = vsel %vm157, %v3577, 0.0
    %3582 = vadd.xlane.f32.xlu0 %v3581
    %v3583 = vpop.xlane.xlu0 %3582
    %v3584 = vmul.f32 %v3580, %v976
    %v3585 = vmul.f32 %v3583, %v976
    %v3586 = vmul.f32 %v3574, %v3574
    %v3587 = vmul.f32 %v3575, %v3575
    %v3588 = vsub.f32 %v3584, %v3586
    %v3589 = vsub.f32 %v3585, %v3587
    %v3590 = vsub.f32 %v3566, %v3574
    %v3591 = vsub.f32 %v3567, %v3575
    %v3592 = vadd.f32 %v3588, 1e-05
    %v3593 = vadd.f32 %v3589, 1e-05
    %v3594 = vrsqrt.pop %v3592
    %v3595 = vmul.f32 %v3594, %v3592
    %v3596 = vmul.f32 %v3595, %v3594
    %v3597 = vmul.f32 0.5, %v3596
    %v3598 = vsub.f32 1.5, %v3597
    %v3599 = vmul.f32 %v3594, %v3598
    %vm3600 = vweird.f32 %v3592
    %vm3601 = vweird.f32 %v3594
    %vm3602 = vmor %vm3600, %vm3601
    %v3603 = vsel %vm3602, %v3594, %v3599
    %v3604 = vrsqrt.pop %v3593
    %v3605 = vmul.f32 %v3604, %v3593
    %v3606 = vmul.f32 %v3605, %v3604
    %v3607 = vmul.f32 0.5, %v3606
    %v3608 = vsub.f32 1.5, %v3607
    %v3609 = vmul.f32 %v3604, %v3608
    %vm3610 = vweird.f32 %v3593
    %vm3611 = vweird.f32 %v3604
    %vm3612 = vmor %vm3610, %vm3611
    %v3613 = vsel %vm3612, %v3604, %v3609
    %v3614 = vmul.f32 %v3590, %v3603
    %v3615 = vmul.f32 %v3591, %v3613
    %v3616 = vperm.slane %v2852, 0
    %v3617 = vmul.f32 %v3614, %v3616
    %v3618 = vmul.f32 %v3615, %v3616
    %v3619 = vperm.slane %v2853, 0
    %v3620 = vadd.f32 %v3617, %v3619
    %v3621 = vadd.f32 %v3618, %v3619
    %v3622 = vld [vmem:[#allocation5 + $0x8] sm:$0xff]
    %v3623 = vld [vmem:[#allocation5 + $0x10] sm:$0xff]
    %v3624 = vld [vmem:[#allocation5 + $0x18] sm:$0xff]
    %v3625 = vld [vmem:[#allocation5 + $0x20] sm:$0xff]
    %v3626 = vld [vmem:[#allocation5 + $0x28] sm:$0x1]
    %v3627 = vld [vmem:[#allocation5 + $0x30] sm:$0xff]
    %v3628 = vld [vmem:[#allocation5 + $0x38] sm:$0xff]
    %v3629 = vld [vmem:[#allocation5 + $0x40] sm:$0xff]
    %v3630 = vld [vmem:[#allocation5 + $0x48] sm:$0xff]
    %v3631 = vld [vmem:[#allocation5 + $0x50] sm:$0x1]
    %v3632 = vld [vmem:[#allocation5 + $0x58] sm:$0x1]
    %v3633 = vld [vmem:[#allocation5 + $0x60] sm:$0x1]
    %v3634 = vperm.slane %v3626, 0
    %v3636 = vsel %vm157, %v3620, 0
    %v3639 = vsel %vm157, %v3621, 0
    %3641 = vmatpush.msra.mxu0 0.0
    %3642 = vmatpush.msra.mxu0 0.0
    %3643 = vmatpush.msra.mxu0 0.0
    %3644 = vmatpush.msra.mxu0 0.0
    %3645 = vmatpush.msra.mxu0 0.0
    %3646 = vmatpush.msra.mxu0 0.0
    %3647 = vmatpush.msra.mxu0 0.0
    %3648 = vmatpush.msra.mxu0 0.0
    %3649 = vmatpush.msra.mxu0 0.0
    %3650 = vmatpush.msra.mxu0 0.0
    %3651 = vmatpush.msra.mxu0 0.0
    %3652 = vmatpush.msra.mxu0 0.0
    %3653 = vmatpush.msra.mxu0 %v3625
    %3654 = vmatpush.msra.mxu0 %v3624
    %3655 = vmatpush.msra.mxu0 %v3623
    %3656 = vmatpush.msra.mxu0 %v3622
    %3657 = vmatmul.f32.gmra.mxu0 %v3636
    %v3658 = vpop.f32.mrf.mxu0
    %v3659 = vadd.f32 %v3634, %v3658
    %3660 = vmatmul.f32.gmra.mxu0 %v3639
    %v3661 = vpop.f32.mrf.mxu0
    %v3662 = vadd.f32 %v3634, %v3661
    %3663 = vdwg.mxu0
    %3666 = vrot.lane.b32.xlu0 %v3659, 104
    %v3667 = vpop.permute.xlu0 %3666
    %3668 = vrot.lane.b32.xlu0 %v3662, 104
    %v3669 = vpop.permute.xlu0 %3668
    %3670 = vrot.lane.b32.xlu0 %v3659, 80
    %v3671 = vpop.permute.xlu0 %3670
    %3672 = vrot.lane.b32.xlu0 %v3662, 80
    %v3673 = vpop.permute.xlu0 %3672
    %3674 = vrot.lane.b32.xlu0 %v3659, 56
    %v3675 = vpop.permute.xlu0 %3674
    %3676 = vrot.lane.b32.xlu0 %v3662, 56
    %v3677 = vpop.permute.xlu0 %3676
    %3678 = vrot.lane.b32.xlu0 %v3659, 120
    %v3679 = vpop.permute.xlu0 %3678
    %v3680 = vsel %vm201, %v3659, 0
    %v3682 = vsel %vm201, %v3679, 0
    %3684 = vmatpush.xpose.msra.mxu0 0.0
    %3685 = vmatpush.xpose.msra.mxu0 0.0
    %3686 = vmatpush.xpose.msra.mxu0 0.0
    %3687 = vmatpush.xpose.msra.mxu0 0.0
    %3688 = vmatpush.xpose.msra.mxu0 0.0
    %3689 = vmatpush.xpose.msra.mxu0 0.0
    %3690 = vmatpush.xpose.msra.mxu0 0.0
    %3691 = vmatpush.xpose.msra.mxu0 0.0
    %3692 = vmatpush.xpose.msra.mxu0 0.0
    %3693 = vmatpush.xpose.msra.mxu0 0.0
    %3694 = vmatpush.xpose.msra.mxu0 0.0
    %3695 = vmatpush.xpose.msra.mxu0 0.0
    %3696 = vmatpush.xpose.msra.mxu0 0.0
    %3697 = vmatpush.xpose.msra.mxu0 0.0
    %3698 = vmatpush.xpose.msra.mxu0 0.0
    %3699 = vmatpush.xpose.msra.mxu0 %v3682
    %3700 = vmatmul.f32.gmra.mxu0 %v3680
    %v3701 = vpop.f32.mrf.mxu0
    %v3702 = vadd.f32 0.0, %v3701
    %3703 = vdwg.mxu0
    %3704 = vrot.lane.b32.xlu0 %v3662, 120
    %v3705 = vpop.permute.xlu0 %3704
    %v3706 = vsel %vm201, %v3662, 0
    %v3708 = vsel %vm201, %v3705, 0
    %3710 = vmatpush.xpose.msra.mxu0 0.0
    %3711 = vmatpush.xpose.msra.mxu0 0.0
    %3712 = vmatpush.xpose.msra.mxu0 0.0
    %3713 = vmatpush.xpose.msra.mxu0 0.0
    %3714 = vmatpush.xpose.msra.mxu0 0.0
    %3715 = vmatpush.xpose.msra.mxu0 0.0
    %3716 = vmatpush.xpose.msra.mxu0 0.0
    %3717 = vmatpush.xpose.msra.mxu0 0.0
    %3718 = vmatpush.xpose.msra.mxu0 0.0
    %3719 = vmatpush.xpose.msra.mxu0 0.0
    %3720 = vmatpush.xpose.msra.mxu0 0.0
    %3721 = vmatpush.xpose.msra.mxu0 0.0
    %3722 = vmatpush.xpose.msra.mxu0 0.0
    %3723 = vmatpush.xpose.msra.mxu0 0.0
    %3724 = vmatpush.xpose.msra.mxu0 0.0
    %3725 = vmatpush.xpose.msra.mxu0 %v3708
    %3726 = vmatmul.f32.gmra.mxu0 %v3706
    %v3727 = vpop.f32.mrf.mxu0
    %v3728 = vadd.f32 0.0, %v3727
    %3729 = vdwg.mxu0
    %3730 = vrot.lane.b32.xlu0 %v3667, 120
    %v3731 = vpop.permute.xlu0 %3730
    %v3732 = vsel %vm201, %v3667, 0
    %v3734 = vsel %vm201, %v3731, 0
    %3736 = vmatpush.xpose.msra.mxu0 0.0
    %3737 = vmatpush.xpose.msra.mxu0 0.0
    %3738 = vmatpush.xpose.msra.mxu0 0.0
    %3739 = vmatpush.xpose.msra.mxu0 0.0
    %3740 = vmatpush.xpose.msra.mxu0 0.0
    %3741 = vmatpush.xpose.msra.mxu0 0.0
    %3742 = vmatpush.xpose.msra.mxu0 0.0
    %3743 = vmatpush.xpose.msra.mxu0 0.0
    %3744 = vmatpush.xpose.msra.mxu0 0.0
    %3745 = vmatpush.xpose.msra.mxu0 0.0
    %3746 = vmatpush.xpose.msra.mxu0 0.0
    %3747 = vmatpush.xpose.msra.mxu0 0.0
    %3748 = vmatpush.xpose.msra.mxu0 0.0
    %3749 = vmatpush.xpose.msra.mxu0 0.0
    %3750 = vmatpush.xpose.msra.mxu0 0.0
    %3751 = vmatpush.xpose.msra.mxu0 %v3734
    %3752 = vmatmul.f32.gmra.mxu0 %v3732
    %v3753 = vpop.f32.mrf.mxu0
    %v3754 = vadd.f32 0.0, %v3753
    %3755 = vdwg.mxu0
    %3756 = vrot.lane.b32.xlu0 %v3669, 120
    %v3757 = vpop.permute.xlu0 %3756
    %v3758 = vsel %vm201, %v3669, 0
    %v3760 = vsel %vm201, %v3757, 0
    %3762 = vmatpush.xpose.msra.mxu0 0.0
    %3763 = vmatpush.xpose.msra.mxu0 0.0
    %3764 = vmatpush.xpose.msra.mxu0 0.0
    %3765 = vmatpush.xpose.msra.mxu0 0.0
    %3766 = vmatpush.xpose.msra.mxu0 0.0
    %3767 = vmatpush.xpose.msra.mxu0 0.0
    %3768 = vmatpush.xpose.msra.mxu0 0.0
    %3769 = vmatpush.xpose.msra.mxu0 0.0
    %3770 = vmatpush.xpose.msra.mxu0 0.0
    %3771 = vmatpush.xpose.msra.mxu0 0.0
    %3772 = vmatpush.xpose.msra.mxu0 0.0
    %3773 = vmatpush.xpose.msra.mxu0 0.0
    %3774 = vmatpush.xpose.msra.mxu0 0.0
    %3775 = vmatpush.xpose.msra.mxu0 0.0
    %3776 = vmatpush.xpose.msra.mxu0 0.0
    %3777 = vmatpush.xpose.msra.mxu0 %v3760
    %3778 = vmatmul.f32.gmra.mxu0 %v3758
    %v3779 = vpop.f32.mrf.mxu0
    %v3780 = vadd.f32 0.0, %v3779
    %3781 = vdwg.mxu0
    %3782 = vrot.lane.b32.xlu0 %v3671, 120
    %v3783 = vpop.permute.xlu0 %3782
    %v3784 = vsel %vm201, %v3671, 0
    %v3786 = vsel %vm201, %v3783, 0
    %3788 = vmatpush.xpose.msra.mxu0 0.0
    %3789 = vmatpush.xpose.msra.mxu0 0.0
    %3790 = vmatpush.xpose.msra.mxu0 0.0
    %3791 = vmatpush.xpose.msra.mxu0 0.0
    %3792 = vmatpush.xpose.msra.mxu0 0.0
    %3793 = vmatpush.xpose.msra.mxu0 0.0
    %3794 = vmatpush.xpose.msra.mxu0 0.0
    %3795 = vmatpush.xpose.msra.mxu0 0.0
    %3796 = vmatpush.xpose.msra.mxu0 0.0
    %3797 = vmatpush.xpose.msra.mxu0 0.0
    %3798 = vmatpush.xpose.msra.mxu0 0.0
    %3799 = vmatpush.xpose.msra.mxu0 0.0
    %3800 = vmatpush.xpose.msra.mxu0 0.0
    %3801 = vmatpush.xpose.msra.mxu0 0.0
    %3802 = vmatpush.xpose.msra.mxu0 0.0
    %3803 = vmatpush.xpose.msra.mxu0 %v3786
    %3804 = vmatmul.f32.gmra.mxu0 %v3784
    %v3805 = vpop.f32.mrf.mxu0
    %v3806 = vadd.f32 0.0, %v3805
    %3807 = vdwg.mxu0
    %3808 = vrot.lane.b32.xlu0 %v3673, 120
    %v3809 = vpop.permute.xlu0 %3808
    %v3810 = vsel %vm201, %v3673, 0
    %v3812 = vsel %vm201, %v3809, 0
    %3814 = vmatpush.xpose.msra.mxu0 0.0
    %3815 = vmatpush.xpose.msra.mxu0 0.0
    %3816 = vmatpush.xpose.msra.mxu0 0.0
    %3817 = vmatpush.xpose.msra.mxu0 0.0
    %3818 = vmatpush.xpose.msra.mxu0 0.0
    %3819 = vmatpush.xpose.msra.mxu0 0.0
    %3820 = vmatpush.xpose.msra.mxu0 0.0
    %3821 = vmatpush.xpose.msra.mxu0 0.0
    %3822 = vmatpush.xpose.msra.mxu0 0.0
    %3823 = vmatpush.xpose.msra.mxu0 0.0
    %3824 = vmatpush.xpose.msra.mxu0 0.0
    %3825 = vmatpush.xpose.msra.mxu0 0.0
    %3826 = vmatpush.xpose.msra.mxu0 0.0
    %3827 = vmatpush.xpose.msra.mxu0 0.0
    %3828 = vmatpush.xpose.msra.mxu0 0.0
    %3829 = vmatpush.xpose.msra.mxu0 %v3812
    %3830 = vmatmul.f32.gmra.mxu0 %v3810
    %v3831 = vpop.f32.mrf.mxu0
    %v3832 = vadd.f32 0.0, %v3831
    %3833 = vdwg.mxu0
    %3834 = vrot.lane.b32.xlu0 %v3675, 120
    %v3835 = vpop.permute.xlu0 %3834
    %v3836 = vsel %vm201, %v3675, 0
    %v3838 = vsel %vm201, %v3835, 0
    %3840 = vmatpush.xpose.msra.mxu0 0.0
    %3841 = vmatpush.xpose.msra.mxu0 0.0
    %3842 = vmatpush.xpose.msra.mxu0 0.0
    %3843 = vmatpush.xpose.msra.mxu0 0.0
    %3844 = vmatpush.xpose.msra.mxu0 0.0
    %3845 = vmatpush.xpose.msra.mxu0 0.0
    %3846 = vmatpush.xpose.msra.mxu0 0.0
    %3847 = vmatpush.xpose.msra.mxu0 0.0
    %3848 = vmatpush.xpose.msra.mxu0 0.0
    %3849 = vmatpush.xpose.msra.mxu0 0.0
    %3850 = vmatpush.xpose.msra.mxu0 0.0
    %3851 = vmatpush.xpose.msra.mxu0 0.0
    %3852 = vmatpush.xpose.msra.mxu0 0.0
    %3853 = vmatpush.xpose.msra.mxu0 0.0
    %3854 = vmatpush.xpose.msra.mxu0 0.0
    %3855 = vmatpush.xpose.msra.mxu0 %v3838
    %3856 = vmatmul.f32.gmra.mxu0 %v3836
    %v3857 = vpop.f32.mrf.mxu0
    %v3858 = vadd.f32 0.0, %v3857
    %3859 = vdwg.mxu0
    %3860 = vrot.lane.b32.xlu0 %v3677, 120
    %v3861 = vpop.permute.xlu0 %3860
    %v3862 = vsel %vm201, %v3677, 0
    %v3864 = vsel %vm201, %v3861, 0
    %3866 = vmatpush.xpose.msra.mxu0 0.0
    %3867 = vmatpush.xpose.msra.mxu0 0.0
    %3868 = vmatpush.xpose.msra.mxu0 0.0
    %3869 = vmatpush.xpose.msra.mxu0 0.0
    %3870 = vmatpush.xpose.msra.mxu0 0.0
    %3871 = vmatpush.xpose.msra.mxu0 0.0
    %3872 = vmatpush.xpose.msra.mxu0 0.0
    %3873 = vmatpush.xpose.msra.mxu0 0.0
    %3874 = vmatpush.xpose.msra.mxu0 0.0
    %3875 = vmatpush.xpose.msra.mxu0 0.0
    %3876 = vmatpush.xpose.msra.mxu0 0.0
    %3877 = vmatpush.xpose.msra.mxu0 0.0
    %3878 = vmatpush.xpose.msra.mxu0 0.0
    %3879 = vmatpush.xpose.msra.mxu0 0.0
    %3880 = vmatpush.xpose.msra.mxu0 0.0
    %3881 = vmatpush.xpose.msra.mxu0 %v3864
    %3882 = vmatmul.f32.gmra.mxu0 %v3862
    %v3883 = vpop.f32.mrf.mxu0
    %v3884 = vadd.f32 0.0, %v3883
    %3885 = vdwg.mxu0
    %v3886 = vsel %vm201, %v3702, -inf
    %3887 = vmax.xlane.f32.xlu0 %v3886
    %v3888 = vpop.xlane.xlu0 %3887
    %v3889 = vsel %vm201, %v3728, -inf
    %3890 = vmax.xlane.f32.xlu0 %v3889
    %v3891 = vpop.xlane.xlu0 %3890
    %v3892 = vsel %vm201, %v3754, -inf
    %3893 = vmax.xlane.f32.xlu0 %v3892
    %v3894 = vpop.xlane.xlu0 %3893
    %v3895 = vsel %vm201, %v3780, -inf
    %3896 = vmax.xlane.f32.xlu0 %v3895
    %v3897 = vpop.xlane.xlu0 %3896
    %v3898 = vsel %vm201, %v3806, -inf
    %3899 = vmax.xlane.f32.xlu0 %v3898
    %v3900 = vpop.xlane.xlu0 %3899
    %v3901 = vsel %vm201, %v3832, -inf
    %3902 = vmax.xlane.f32.xlu0 %v3901
    %v3903 = vpop.xlane.xlu0 %3902
    %v3904 = vsel %vm201, %v3858, -inf
    %3905 = vmax.xlane.f32.xlu0 %v3904
    %v3906 = vpop.xlane.xlu0 %3905
    %v3907 = vsel %vm201, %v3884, -inf
    %3908 = vmax.xlane.f32.xlu0 %v3907
    %v3909 = vpop.xlane.xlu0 %3908
    %v3910 = vsub.f32 %v3702, %v3888
    %v3911 = vsub.f32 %v3728, %v3891
    %v3912 = vsub.f32 %v3754, %v3894
    %v3913 = vsub.f32 %v3780, %v3897
    %v3914 = vsub.f32 %v3806, %v3900
    %v3915 = vsub.f32 %v3832, %v3903
    %v3916 = vsub.f32 %v3858, %v3906
    %v3917 = vsub.f32 %v3884, %v3909
    %v3918 = vmul.f32 %v3910, 1.442695
    %v3919 = vpow.pop %v3918
    %v3920 = vmul.f32 %v3911, 1.442695
    %v3921 = vpow.pop %v3920
    %v3922 = vmul.f32 %v3912, 1.442695
    %v3923 = vpow.pop %v3922
    %v3924 = vmul.f32 %v3913, 1.442695
    %v3925 = vpow.pop %v3924
    %v3926 = vmul.f32 %v3914, 1.442695
    %v3927 = vpow.pop %v3926
    %v3928 = vmul.f32 %v3915, 1.442695
    %v3929 = vpow.pop %v3928
    %v3930 = vmul.f32 %v3916, 1.442695
    %v3931 = vpow.pop %v3930
    %v3932 = vmul.f32 %v3917, 1.442695
    %v3933 = vpow.pop %v3932
    %v3934 = vsel %vm201, %v3919, 0.0
    %3935 = vadd.xlane.f32.xlu0 %v3934
    %v3936 = vpop.xlane.xlu0 %3935
    %v3937 = vsel %vm201, %v3921, 0.0
    %3938 = vadd.xlane.f32.xlu0 %v3937
    %v3939 = vpop.xlane.xlu0 %3938
    %v3940 = vsel %vm201, %v3923, 0.0
    %3941 = vadd.xlane.f32.xlu0 %v3940
    %v3942 = vpop.xlane.xlu0 %3941
    %v3943 = vsel %vm201, %v3925, 0.0
    %3944 = vadd.xlane.f32.xlu0 %v3943
    %v3945 = vpop.xlane.xlu0 %3944
    %v3946 = vsel %vm201, %v3927, 0.0
    %3947 = vadd.xlane.f32.xlu0 %v3946
    %v3948 = vpop.xlane.xlu0 %3947
    %v3949 = vsel %vm201, %v3929, 0.0
    %3950 = vadd.xlane.f32.xlu0 %v3949
    %v3951 = vpop.xlane.xlu0 %3950
    %v3952 = vsel %vm201, %v3931, 0.0
    %3953 = vadd.xlane.f32.xlu0 %v3952
    %v3954 = vpop.xlane.xlu0 %3953
    %v3955 = vsel %vm201, %v3933, 0.0
    %3956 = vadd.xlane.f32.xlu0 %v3955
    %v3957 = vpop.xlane.xlu0 %3956
    %v3958 = vrcp.pop %v3936
    %v3959 = vmul.f32 %v3936, %v3958
    %v3960 = vsub.f32 1.0, %v3959
    %v3961 = vmul.f32 %v3958, %v3960
    %v3962 = vadd.f32 %v3958, %v3961
    %vm3963 = vweird.f32 %v3936
    %vm3964 = vweird.f32 %v3958
    %vm3965 = vmor %vm3963, %vm3964
    %v3966 = vsel %vm3965, %v3958, %v3962
    %v3967 = vand.u32 2147483647, %v3936
    %vm3968 = vcmp.eq.f32.partialorder %v3967, 8.507059e+37
    %v3969 = vand.u32 %v3936, 2147483648
    %v3970 = vor.u32 1.1754944e-38, %v3969
    %v3971 = vsel %vm3968, %v3970, %v3966
    %v3972 = vmul.f32 %v3919, %v3971
    %v3973 = vrcp.pop %v3939
    %v3974 = vmul.f32 %v3939, %v3973
    %v3975 = vsub.f32 1.0, %v3974
    %v3976 = vmul.f32 %v3973, %v3975
    %v3977 = vadd.f32 %v3973, %v3976
    %vm3978 = vweird.f32 %v3939
    %vm3979 = vweird.f32 %v3973
    %vm3980 = vmor %vm3978, %vm3979
    %v3981 = vsel %vm3980, %v3973, %v3977
    %v3982 = vand.u32 2147483647, %v3939
    %vm3983 = vcmp.eq.f32.partialorder %v3982, 8.507059e+37
    %v3984 = vand.u32 %v3939, 2147483648
    %v3985 = vor.u32 1.1754944e-38, %v3984
    %v3986 = vsel %vm3983, %v3985, %v3981
    %v3987 = vmul.f32 %v3921, %v3986
    %v3988 = vrcp.pop %v3942
    %v3989 = vmul.f32 %v3942, %v3988
    %v3990 = vsub.f32 1.0, %v3989
    %v3991 = vmul.f32 %v3988, %v3990
    %v3992 = vadd.f32 %v3988, %v3991
    %vm3993 = vweird.f32 %v3942
    %vm3994 = vweird.f32 %v3988
    %vm3995 = vmor %vm3993, %vm3994
    %v3996 = vsel %vm3995, %v3988, %v3992
    %v3997 = vand.u32 2147483647, %v3942
    %vm3998 = vcmp.eq.f32.partialorder %v3997, 8.507059e+37
    %v3999 = vand.u32 %v3942, 2147483648
    %v4000 = vor.u32 1.1754944e-38, %v3999
    %v4001 = vsel %vm3998, %v4000, %v3996
    %v4002 = vmul.f32 %v3923, %v4001
    %v4003 = vrcp.pop %v3945
    %v4004 = vmul.f32 %v3945, %v4003
    %v4005 = vsub.f32 1.0, %v4004
    %v4006 = vmul.f32 %v4003, %v4005
    %v4007 = vadd.f32 %v4003, %v4006
    %vm4008 = vweird.f32 %v3945
    %vm4009 = vweird.f32 %v4003
    %vm4010 = vmor %vm4008, %vm4009
    %v4011 = vsel %vm4010, %v4003, %v4007
    %v4012 = vand.u32 2147483647, %v3945
    %vm4013 = vcmp.eq.f32.partialorder %v4012, 8.507059e+37
    %v4014 = vand.u32 %v3945, 2147483648
    %v4015 = vor.u32 1.1754944e-38, %v4014
    %v4016 = vsel %vm4013, %v4015, %v4011
    %v4017 = vmul.f32 %v3925, %v4016
    %v4018 = vrcp.pop %v3948
    %v4019 = vmul.f32 %v3948, %v4018
    %v4020 = vsub.f32 1.0, %v4019
    %v4021 = vmul.f32 %v4018, %v4020
    %v4022 = vadd.f32 %v4018, %v4021
    %vm4023 = vweird.f32 %v3948
    %vm4024 = vweird.f32 %v4018
    %vm4025 = vmor %vm4023, %vm4024
    %v4026 = vsel %vm4025, %v4018, %v4022
    %v4027 = vand.u32 2147483647, %v3948
    %vm4028 = vcmp.eq.f32.partialorder %v4027, 8.507059e+37
    %v4029 = vand.u32 %v3948, 2147483648
    %v4030 = vor.u32 1.1754944e-38, %v4029
    %v4031 = vsel %vm4028, %v4030, %v4026
    %v4032 = vmul.f32 %v3927, %v4031
    %v4033 = vrcp.pop %v3951
    %v4034 = vmul.f32 %v3951, %v4033
    %v4035 = vsub.f32 1.0, %v4034
    %v4036 = vmul.f32 %v4033, %v4035
    %v4037 = vadd.f32 %v4033, %v4036
    %vm4038 = vweird.f32 %v3951
    %vm4039 = vweird.f32 %v4033
    %vm4040 = vmor %vm4038, %vm4039
    %v4041 = vsel %vm4040, %v4033, %v4037
    %v4042 = vand.u32 2147483647, %v3951
    %vm4043 = vcmp.eq.f32.partialorder %v4042, 8.507059e+37
    %v4044 = vand.u32 %v3951, 2147483648
    %v4045 = vor.u32 1.1754944e-38, %v4044
    %v4046 = vsel %vm4043, %v4045, %v4041
    %v4047 = vmul.f32 %v3929, %v4046
    %v4048 = vrcp.pop %v3954
    %v4049 = vmul.f32 %v3954, %v4048
    %v4050 = vsub.f32 1.0, %v4049
    %v4051 = vmul.f32 %v4048, %v4050
    %v4052 = vadd.f32 %v4048, %v4051
    %vm4053 = vweird.f32 %v3954
    %vm4054 = vweird.f32 %v4048
    %vm4055 = vmor %vm4053, %vm4054
    %v4056 = vsel %vm4055, %v4048, %v4052
    %v4057 = vand.u32 2147483647, %v3954
    %vm4058 = vcmp.eq.f32.partialorder %v4057, 8.507059e+37
    %v4059 = vand.u32 %v3954, 2147483648
    %v4060 = vor.u32 1.1754944e-38, %v4059
    %v4061 = vsel %vm4058, %v4060, %v4056
    %v4062 = vmul.f32 %v3931, %v4061
    %v4063 = vrcp.pop %v3957
    %v4064 = vmul.f32 %v3957, %v4063
    %v4065 = vsub.f32 1.0, %v4064
    %v4066 = vmul.f32 %v4063, %v4065
    %v4067 = vadd.f32 %v4063, %v4066
    %vm4068 = vweird.f32 %v3957
    %vm4069 = vweird.f32 %v4063
    %vm4070 = vmor %vm4068, %vm4069
    %v4071 = vsel %vm4070, %v4063, %v4067
    %v4072 = vand.u32 2147483647, %v3957
    %vm4073 = vcmp.eq.f32.partialorder %v4072, 8.507059e+37
    %v4074 = vand.u32 %v3957, 2147483648
    %v4075 = vor.u32 1.1754944e-38, %v4074
    %v4076 = vsel %vm4073, %v4075, %v4071
    %v4077 = vmul.f32 %v3933, %v4076
    %4078 = vrot.lane.b32.xlu0 %v3659, 112
    %v4079 = vpop.permute.xlu0 %4078
    %v4082 = vsel %vm201, %v3972, 0
    %4084 = vmatpush.msra.mxu0 0.0
    %4085 = vmatpush.msra.mxu0 0.0
    %4086 = vmatpush.msra.mxu0 0.0
    %4087 = vmatpush.msra.mxu0 0.0
    %4088 = vmatpush.msra.mxu0 0.0
    %4089 = vmatpush.msra.mxu0 0.0
    %4090 = vmatpush.msra.mxu0 0.0
    %4091 = vmatpush.msra.mxu0 0.0
    %4092 = vmatpush.msra.mxu0 0.0
    %4093 = vmatpush.msra.mxu0 0.0
    %4094 = vmatpush.msra.mxu0 0.0
    %4095 = vmatpush.msra.mxu0 0.0
    %4096 = vmatpush.msra.mxu0 0.0
    %4097 = vmatpush.msra.mxu0 0.0
    %4098 = vmatpush.msra.mxu0 0.0
    %4099 = vmatpush.msra.mxu0 %v4079
    %4100 = vmatmul.f32.gmra.mxu0 %v4082
    %v4101 = vpop.f32.mrf.mxu0
    %v4102 = vadd.f32 0.0, %v4101
    %4103 = vdwg.mxu0
    %4104 = vrot.lane.b32.xlu0 %v3662, 112
    %v4105 = vpop.permute.xlu0 %4104
    %v4108 = vsel %vm201, %v3987, 0
    %4110 = vmatpush.msra.mxu0 0.0
    %4111 = vmatpush.msra.mxu0 0.0
    %4112 = vmatpush.msra.mxu0 0.0
    %4113 = vmatpush.msra.mxu0 0.0
    %4114 = vmatpush.msra.mxu0 0.0
    %4115 = vmatpush.msra.mxu0 0.0
    %4116 = vmatpush.msra.mxu0 0.0
    %4117 = vmatpush.msra.mxu0 0.0
    %4118 = vmatpush.msra.mxu0 0.0
    %4119 = vmatpush.msra.mxu0 0.0
    %4120 = vmatpush.msra.mxu0 0.0
    %4121 = vmatpush.msra.mxu0 0.0
    %4122 = vmatpush.msra.mxu0 0.0
    %4123 = vmatpush.msra.mxu0 0.0
    %4124 = vmatpush.msra.mxu0 0.0
    %4125 = vmatpush.msra.mxu0 %v4105
    %4126 = vmatmul.f32.gmra.mxu0 %v4108
    %v4127 = vpop.f32.mrf.mxu0
    %v4128 = vadd.f32 0.0, %v4127
    %4129 = vdwg.mxu0
    %4130 = vrot.lane.b32.xlu0 %v3667, 112
    %v4131 = vpop.permute.xlu0 %4130
    %v4134 = vsel %vm201, %v4002, 0
    %4136 = vmatpush.msra.mxu0 0.0
    %4137 = vmatpush.msra.mxu0 0.0
    %4138 = vmatpush.msra.mxu0 0.0
    %4139 = vmatpush.msra.mxu0 0.0
    %4140 = vmatpush.msra.mxu0 0.0
    %4141 = vmatpush.msra.mxu0 0.0
    %4142 = vmatpush.msra.mxu0 0.0
    %4143 = vmatpush.msra.mxu0 0.0
    %4144 = vmatpush.msra.mxu0 0.0
    %4145 = vmatpush.msra.mxu0 0.0
    %4146 = vmatpush.msra.mxu0 0.0
    %4147 = vmatpush.msra.mxu0 0.0
    %4148 = vmatpush.msra.mxu0 0.0
    %4149 = vmatpush.msra.mxu0 0.0
    %4150 = vmatpush.msra.mxu0 0.0
    %4151 = vmatpush.msra.mxu0 %v4131
    %4152 = vmatmul.f32.gmra.mxu0 %v4134
    %v4153 = vpop.f32.mrf.mxu0
    %v4154 = vadd.f32 0.0, %v4153
    %4155 = vdwg.mxu0
    %4156 = vrot.lane.b32.xlu0 %v3669, 112
    %v4157 = vpop.permute.xlu0 %4156
    %v4160 = vsel %vm201, %v4017, 0
    %4162 = vmatpush.msra.mxu0 0.0
    %4163 = vmatpush.msra.mxu0 0.0
    %4164 = vmatpush.msra.mxu0 0.0
    %4165 = vmatpush.msra.mxu0 0.0
    %4166 = vmatpush.msra.mxu0 0.0
    %4167 = vmatpush.msra.mxu0 0.0
    %4168 = vmatpush.msra.mxu0 0.0
    %4169 = vmatpush.msra.mxu0 0.0
    %4170 = vmatpush.msra.mxu0 0.0
    %4171 = vmatpush.msra.mxu0 0.0
    %4172 = vmatpush.msra.mxu0 0.0
    %4173 = vmatpush.msra.mxu0 0.0
    %4174 = vmatpush.msra.mxu0 0.0
    %4175 = vmatpush.msra.mxu0 0.0
    %4176 = vmatpush.msra.mxu0 0.0
    %4177 = vmatpush.msra.mxu0 %v4157
    %4178 = vmatmul.f32.gmra.mxu0 %v4160
    %v4179 = vpop.f32.mrf.mxu0
    %v4180 = vadd.f32 0.0, %v4179
    %4181 = vdwg.mxu0
    %4182 = vrot.lane.b32.xlu0 %v3671, 112
    %v4183 = vpop.permute.xlu0 %4182
    %v4186 = vsel %vm201, %v4032, 0
    %4188 = vmatpush.msra.mxu0 0.0
    %4189 = vmatpush.msra.mxu0 0.0
    %4190 = vmatpush.msra.mxu0 0.0
    %4191 = vmatpush.msra.mxu0 0.0
    %4192 = vmatpush.msra.mxu0 0.0
    %4193 = vmatpush.msra.mxu0 0.0
    %4194 = vmatpush.msra.mxu0 0.0
    %4195 = vmatpush.msra.mxu0 0.0
    %4196 = vmatpush.msra.mxu0 0.0
    %4197 = vmatpush.msra.mxu0 0.0
    %4198 = vmatpush.msra.mxu0 0.0
    %4199 = vmatpush.msra.mxu0 0.0
    %4200 = vmatpush.msra.mxu0 0.0
    %4201 = vmatpush.msra.mxu0 0.0
    %4202 = vmatpush.msra.mxu0 0.0
    %4203 = vmatpush.msra.mxu0 %v4183
    %4204 = vmatmul.f32.gmra.mxu0 %v4186
    %v4205 = vpop.f32.mrf.mxu0
    %v4206 = vadd.f32 0.0, %v4205
    %4207 = vdwg.mxu0
    %4208 = vrot.lane.b32.xlu0 %v3673, 112
    %v4209 = vpop.permute.xlu0 %4208
    %v4212 = vsel %vm201, %v4047, 0
    %4214 = vmatpush.msra.mxu0 0.0
    %4215 = vmatpush.msra.mxu0 0.0
    %4216 = vmatpush.msra.mxu0 0.0
    %4217 = vmatpush.msra.mxu0 0.0
    %4218 = vmatpush.msra.mxu0 0.0
    %4219 = vmatpush.msra.mxu0 0.0
    %4220 = vmatpush.msra.mxu0 0.0
    %4221 = vmatpush.msra.mxu0 0.0
    %4222 = vmatpush.msra.mxu0 0.0
    %4223 = vmatpush.msra.mxu0 0.0
    %4224 = vmatpush.msra.mxu0 0.0
    %4225 = vmatpush.msra.mxu0 0.0
    %4226 = vmatpush.msra.mxu0 0.0
    %4227 = vmatpush.msra.mxu0 0.0
    %4228 = vmatpush.msra.mxu0 0.0
    %4229 = vmatpush.msra.mxu0 %v4209
    %4230 = vmatmul.f32.gmra.mxu0 %v4212
    %v4231 = vpop.f32.mrf.mxu0
    %v4232 = vadd.f32 0.0, %v4231
    %4233 = vdwg.mxu0
    %4234 = vrot.lane.b32.xlu0 %v3675, 112
    %v4235 = vpop.permute.xlu0 %4234
    %v4238 = vsel %vm201, %v4062, 0
    %4240 = vmatpush.msra.mxu0 0.0
    %4241 = vmatpush.msra.mxu0 0.0
    %4242 = vmatpush.msra.mxu0 0.0
    %4243 = vmatpush.msra.mxu0 0.0
    %4244 = vmatpush.msra.mxu0 0.0
    %4245 = vmatpush.msra.mxu0 0.0
    %4246 = vmatpush.msra.mxu0 0.0
    %4247 = vmatpush.msra.mxu0 0.0
    %4248 = vmatpush.msra.mxu0 0.0
    %4249 = vmatpush.msra.mxu0 0.0
    %4250 = vmatpush.msra.mxu0 0.0
    %4251 = vmatpush.msra.mxu0 0.0
    %4252 = vmatpush.msra.mxu0 0.0
    %4253 = vmatpush.msra.mxu0 0.0
    %4254 = vmatpush.msra.mxu0 0.0
    %4255 = vmatpush.msra.mxu0 %v4235
    %4256 = vmatmul.f32.gmra.mxu0 %v4238
    %v4257 = vpop.f32.mrf.mxu0
    %v4258 = vadd.f32 0.0, %v4257
    %4259 = vdwg.mxu0
    %4260 = vrot.lane.b32.xlu0 %v3677, 112
    %v4261 = vpop.permute.xlu0 %4260
    %v4264 = vsel %vm201, %v4077, 0
    %4266 = vmatpush.msra.mxu0 0.0
    %4267 = vmatpush.msra.mxu0 0.0
    %4268 = vmatpush.msra.mxu0 0.0
    %4269 = vmatpush.msra.mxu0 0.0
    %4270 = vmatpush.msra.mxu0 0.0
    %4271 = vmatpush.msra.mxu0 0.0
    %4272 = vmatpush.msra.mxu0 0.0
    %4273 = vmatpush.msra.mxu0 0.0
    %4274 = vmatpush.msra.mxu0 0.0
    %4275 = vmatpush.msra.mxu0 0.0
    %4276 = vmatpush.msra.mxu0 0.0
    %4277 = vmatpush.msra.mxu0 0.0
    %4278 = vmatpush.msra.mxu0 0.0
    %4279 = vmatpush.msra.mxu0 0.0
    %4280 = vmatpush.msra.mxu0 0.0
    %4281 = vmatpush.msra.mxu0 %v4261
    %4282 = vmatmul.f32.gmra.mxu0 %v4264
    %v4283 = vpop.f32.mrf.mxu0
    %v4284 = vadd.f32 0.0, %v4283
    %4285 = vdwg.mxu0
    %4288 = vrot.lane.b32.xlu0 %v4154, 8
    %v4289 = vpop.permute.xlu0 %4288
    %4290 = vrot.lane.b32.xlu0 %v4180, 8
    %v4291 = vpop.permute.xlu0 %4290
    %4296 = vrot.lane.b32.xlu0 %v4206, 16
    %v4297 = vpop.permute.xlu0 %4296
    %4298 = vrot.lane.b32.xlu0 %v4232, 16
    %v4299 = vpop.permute.xlu0 %4298
    %4304 = vrot.lane.b32.xlu0 %v4258, 24
    %v4305 = vpop.permute.xlu0 %4304
    %4306 = vrot.lane.b32.xlu0 %v4284, 24
    %v4307 = vpop.permute.xlu0 %4306
    %v4310 = vsel %vm201, %v4102, %v4289
    %v4311 = vsel %vm201, %v4128, %v4291
    %v4312 = vsel %vm834, %v4310, %v4297
    %v4313 = vsel %vm834, %v4311, %v4299
    %v4314 = vsel %vm837, %v4312, %v4305
    %v4315 = vsel %vm837, %v4313, %v4307
    %v4316 = vperm.slane %v3631, 0
    %v4318 = vsel %vm157, %v4314, 0
    %v4321 = vsel %vm157, %v4315, 0
    %4323 = vmatpush.msra.mxu0 0.0
    %4324 = vmatpush.msra.mxu0 0.0
    %4325 = vmatpush.msra.mxu0 0.0
    %4326 = vmatpush.msra.mxu0 0.0
    %4327 = vmatpush.msra.mxu0 0.0
    %4328 = vmatpush.msra.mxu0 0.0
    %4329 = vmatpush.msra.mxu0 0.0
    %4330 = vmatpush.msra.mxu0 0.0
    %4331 = vmatpush.msra.mxu0 0.0
    %4332 = vmatpush.msra.mxu0 0.0
    %4333 = vmatpush.msra.mxu0 0.0
    %4334 = vmatpush.msra.mxu0 0.0
    %4335 = vmatpush.msra.mxu0 %v3630
    %4336 = vmatpush.msra.mxu0 %v3629
    %4337 = vmatpush.msra.mxu0 %v3628
    %4338 = vmatpush.msra.mxu0 %v3627
    %4339 = vmatmul.f32.gmra.mxu0 %v4318
    %v4340 = vpop.f32.mrf.mxu0
    %v4341 = vadd.f32 %v4316, %v4340
    %4342 = vmatmul.f32.gmra.mxu0 %v4321
    %v4343 = vpop.f32.mrf.mxu0
    %v4344 = vadd.f32 %v4316, %v4343
    %4345 = vdwg.mxu0
    %v4346 = vadd.f32 %v3620, %v4341
    %v4347 = vadd.f32 %v3621, %v4344
    %v4348 = vsel %vm157, %v4346, 0.0
    %4349 = vadd.xlane.f32.xlu0 %v4348
    %v4350 = vpop.xlane.xlu0 %4349
    %v4351 = vsel %vm157, %v4347, 0.0
    %4352 = vadd.xlane.f32.xlu0 %v4351
    %v4353 = vpop.xlane.xlu0 %4352
    %v4354 = vmul.f32 %v4350, %v976
    %v4355 = vmul.f32 %v4353, %v976
    %v4356 = vmul.f32 %v4346, %v4346
    %v4357 = vmul.f32 %v4347, %v4347
    %v4358 = vsel %vm157, %v4356, 0.0
    %4359 = vadd.xlane.f32.xlu0 %v4358
    %v4360 = vpop.xlane.xlu0 %4359
    %v4361 = vsel %vm157, %v4357, 0.0
    %4362 = vadd.xlane.f32.xlu0 %v4361
    %v4363 = vpop.xlane.xlu0 %4362
    %v4364 = vmul.f32 %v4360, %v976
    %v4365 = vmul.f32 %v4363, %v976
    %v4366 = vmul.f32 %v4354, %v4354
    %v4367 = vmul.f32 %v4355, %v4355
    %v4368 = vsub.f32 %v4364, %v4366
    %v4369 = vsub.f32 %v4365, %v4367
    %v4370 = vsub.f32 %v4346, %v4354
    %v4371 = vsub.f32 %v4347, %v4355
    %v4372 = vadd.f32 %v4368, 1e-05
    %v4373 = vadd.f32 %v4369, 1e-05
    %v4374 = vrsqrt.pop %v4372
    %v4375 = vmul.f32 %v4374, %v4372
    %v4376 = vmul.f32 %v4375, %v4374
    %v4377 = vmul.f32 0.5, %v4376
    %v4378 = vsub.f32 1.5, %v4377
    %v4379 = vmul.f32 %v4374, %v4378
    %vm4380 = vweird.f32 %v4372
    %vm4381 = vweird.f32 %v4374
    %vm4382 = vmor %vm4380, %vm4381
    %v4383 = vsel %vm4382, %v4374, %v4379
    %v4384 = vrsqrt.pop %v4373
    %v4385 = vmul.f32 %v4384, %v4373
    %v4386 = vmul.f32 %v4385, %v4384
    %v4387 = vmul.f32 0.5, %v4386
    %v4388 = vsub.f32 1.5, %v4387
    %v4389 = vmul.f32 %v4384, %v4388
    %vm4390 = vweird.f32 %v4373
    %vm4391 = vweird.f32 %v4384
    %vm4392 = vmor %vm4390, %vm4391
    %v4393 = vsel %vm4392, %v4384, %v4389
    %v4394 = vmul.f32 %v4370, %v4383
    %v4395 = vmul.f32 %v4371, %v4393
    %v4396 = vperm.slane %v3632, 0
    %v4397 = vmul.f32 %v4394, %v4396
    %v4398 = vmul.f32 %v4395, %v4396
    %v4399 = vperm.slane %v3633, 0
    %v4400 = vadd.f32 %v4397, %v4399
    %v4401 = vadd.f32 %v4398, %v4399
    %v4402 = vld [vmem:[#allocation5 + $0x68] sm:$0xff]
    %v4403 = vld [vmem:[#allocation5 + $0x70] sm:$0xff]
    %v4404 = vld [vmem:[#allocation5 + $0x78] sm:$0xff]
    %v4405 = vld [vmem:[#allocation5 + $0x80] sm:$0xff]
    %v4406 = vld [vmem:[#allocation5 + $0x88] sm:$0x1]
    %v4407 = vperm.slane %v4406, 0
    %v4409 = vsel %vm157, %v4400, 0
    %v4412 = vsel %vm157, %v4401, 0
    %4414 = vmatpush.msra.mxu0 0.0
    %4415 = vmatpush.msra.mxu0 0.0
    %4416 = vmatpush.msra.mxu0 0.0
    %4417 = vmatpush.msra.mxu0 0.0
    %4418 = vmatpush.msra.mxu0 0.0
    %4419 = vmatpush.msra.mxu0 0.0
    %4420 = vmatpush.msra.mxu0 0.0
    %4421 = vmatpush.msra.mxu0 0.0
    %4422 = vmatpush.msra.mxu0 0.0
    %4423 = vmatpush.msra.mxu0 0.0
    %4424 = vmatpush.msra.mxu0 0.0
    %4425 = vmatpush.msra.mxu0 0.0
    %4426 = vmatpush.msra.mxu0 %v4405
    %4427 = vmatpush.msra.mxu0 %v4404
    %4428 = vmatpush.msra.mxu0 %v4403
    %4429 = vmatpush.msra.mxu0 %v4402
    %4430 = vmatmul.f32.gmra.mxu0 %v4409
    %v4431 = vpop.f32.mrf.mxu0
    %v4432 = vadd.f32 %v4407, %v4431
    %4433 = vmatmul.f32.gmra.mxu0 %v4412
    %v4434 = vpop.f32.mrf.mxu0
    %v4435 = vadd.f32 %v4407, %v4434
    %4436 = vdwg.mxu0
    %v4437 = vmax.f32 %v4432, 0.0
    %v4438 = vmax.f32 %v4435, 0.0
    %v4439 = vld [vmem:[#allocation5 + $0x90] sm:$0xff]
    %v4440 = vld [vmem:[#allocation5 + $0x98] sm:$0xff]
    %v4441 = vld [vmem:[#allocation5 + $0xa0] sm:$0x1]
    %v4442 = vld [vmem:[#allocation5 + $0xa8] sm:$0xff]
    %v4443 = vld [vmem:[#allocation5 + $0xb0] sm:$0xff]
    %v4444 = vld [vmem:[#allocation5 + $0xb8] sm:$0x1]
    %v4445 = vld [vmem:[#allocation5 + $0xc0] sm:$0x1]
    %v4446 = vld [vmem:[#allocation5 + $0xc8] sm:$0x1]
    %v4447 = vperm.slane %v4441, 0
    %v4449 = vsel %vm834, %v4437, 0
    %v4452 = vsel %vm834, %v4438, 0
    %4454 = vmatpush.msra.mxu0 0.0
    %4455 = vmatpush.msra.mxu0 0.0
    %4456 = vmatpush.msra.mxu0 0.0
    %4457 = vmatpush.msra.mxu0 0.0
    %4458 = vmatpush.msra.mxu0 0.0
    %4459 = vmatpush.msra.mxu0 0.0
    %4460 = vmatpush.msra.mxu0 0.0
    %4461 = vmatpush.msra.mxu0 0.0
    %4462 = vmatpush.msra.mxu0 0.0
    %4463 = vmatpush.msra.mxu0 0.0
    %4464 = vmatpush.msra.mxu0 0.0
    %4465 = vmatpush.msra.mxu0 0.0
    %4466 = vmatpush.msra.mxu0 0.0
    %4467 = vmatpush.msra.mxu0 0.0
    %4468 = vmatpush.msra.mxu0 %v4440
    %4469 = vmatpush.msra.mxu0 %v4439
    %4470 = vmatmul.f32.gmra.mxu0 %v4449
    %v4471 = vpop.f32.mrf.mxu0
    %v4472 = vadd.f32 %v4447, %v4471
    %4473 = vmatmul.f32.gmra.mxu0 %v4452
    %v4474 = vpop.f32.mrf.mxu0
    %v4475 = vadd.f32 %v4447, %v4474
    %4476 = vdwg.mxu0
    %4479 = vrot.lane.b32.xlu0 %v4472, 104
    %v4480 = vpop.permute.xlu0 %4479
    %4481 = vrot.lane.b32.xlu0 %v4475, 104
    %v4482 = vpop.permute.xlu0 %4481
    %4483 = vrot.lane.b32.xlu0 %v4472, 120
    %v4484 = vpop.permute.xlu0 %4483
    %v4485 = vsel %vm201, %v4472, 0
    %v4487 = vsel %vm201, %v4484, 0
    %4489 = vmatpush.xpose.msra.mxu0 0.0
    %4490 = vmatpush.xpose.msra.mxu0 0.0
    %4491 = vmatpush.xpose.msra.mxu0 0.0
    %4492 = vmatpush.xpose.msra.mxu0 0.0
    %4493 = vmatpush.xpose.msra.mxu0 0.0
    %4494 = vmatpush.xpose.msra.mxu0 0.0
    %4495 = vmatpush.xpose.msra.mxu0 0.0
    %4496 = vmatpush.xpose.msra.mxu0 0.0
    %4497 = vmatpush.xpose.msra.mxu0 0.0
    %4498 = vmatpush.xpose.msra.mxu0 0.0
    %4499 = vmatpush.xpose.msra.mxu0 0.0
    %4500 = vmatpush.xpose.msra.mxu0 0.0
    %4501 = vmatpush.xpose.msra.mxu0 0.0
    %4502 = vmatpush.xpose.msra.mxu0 0.0
    %4503 = vmatpush.xpose.msra.mxu0 0.0
    %4504 = vmatpush.xpose.msra.mxu0 %v4487
    %4505 = vmatmul.f32.gmra.mxu0 %v4485
    %v4506 = vpop.f32.mrf.mxu0
    %v4507 = vadd.f32 0.0, %v4506
    %4508 = vdwg.mxu0
    %4509 = vrot.lane.b32.xlu0 %v4475, 120
    %v4510 = vpop.permute.xlu0 %4509
    %v4511 = vsel %vm201, %v4475, 0
    %v4513 = vsel %vm201, %v4510, 0
    %4515 = vmatpush.xpose.msra.mxu0 0.0
    %4516 = vmatpush.xpose.msra.mxu0 0.0
    %4517 = vmatpush.xpose.msra.mxu0 0.0
    %4518 = vmatpush.xpose.msra.mxu0 0.0
    %4519 = vmatpush.xpose.msra.mxu0 0.0
    %4520 = vmatpush.xpose.msra.mxu0 0.0
    %4521 = vmatpush.xpose.msra.mxu0 0.0
    %4522 = vmatpush.xpose.msra.mxu0 0.0
    %4523 = vmatpush.xpose.msra.mxu0 0.0
    %4524 = vmatpush.xpose.msra.mxu0 0.0
    %4525 = vmatpush.xpose.msra.mxu0 0.0
    %4526 = vmatpush.xpose.msra.mxu0 0.0
    %4527 = vmatpush.xpose.msra.mxu0 0.0
    %4528 = vmatpush.xpose.msra.mxu0 0.0
    %4529 = vmatpush.xpose.msra.mxu0 0.0
    %4530 = vmatpush.xpose.msra.mxu0 %v4513
    %4531 = vmatmul.f32.gmra.mxu0 %v4511
    %v4532 = vpop.f32.mrf.mxu0
    %v4533 = vadd.f32 0.0, %v4532
    %4534 = vdwg.mxu0
    %4535 = vrot.lane.b32.xlu0 %v4480, 120
    %v4536 = vpop.permute.xlu0 %4535
    %v4537 = vsel %vm201, %v4480, 0
    %v4539 = vsel %vm201, %v4536, 0
    %4541 = vmatpush.xpose.msra.mxu0 0.0
    %4542 = vmatpush.xpose.msra.mxu0 0.0
    %4543 = vmatpush.xpose.msra.mxu0 0.0
    %4544 = vmatpush.xpose.msra.mxu0 0.0
    %4545 = vmatpush.xpose.msra.mxu0 0.0
    %4546 = vmatpush.xpose.msra.mxu0 0.0
    %4547 = vmatpush.xpose.msra.mxu0 0.0
    %4548 = vmatpush.xpose.msra.mxu0 0.0
    %4549 = vmatpush.xpose.msra.mxu0 0.0
    %4550 = vmatpush.xpose.msra.mxu0 0.0
    %4551 = vmatpush.xpose.msra.mxu0 0.0
    %4552 = vmatpush.xpose.msra.mxu0 0.0
    %4553 = vmatpush.xpose.msra.mxu0 0.0
    %4554 = vmatpush.xpose.msra.mxu0 0.0
    %4555 = vmatpush.xpose.msra.mxu0 0.0
    %4556 = vmatpush.xpose.msra.mxu0 %v4539
    %4557 = vmatmul.f32.gmra.mxu0 %v4537
    %v4558 = vpop.f32.mrf.mxu0
    %v4559 = vadd.f32 0.0, %v4558
    %4560 = vdwg.mxu0
    %4561 = vrot.lane.b32.xlu0 %v4482, 120
    %v4562 = vpop.permute.xlu0 %4561
    %v4563 = vsel %vm201, %v4482, 0
    %v4565 = vsel %vm201, %v4562, 0
    %4567 = vmatpush.xpose.msra.mxu0 0.0
    %4568 = vmatpush.xpose.msra.mxu0 0.0
    %4569 = vmatpush.xpose.msra.mxu0 0.0
    %4570 = vmatpush.xpose.msra.mxu0 0.0
    %4571 = vmatpush.xpose.msra.mxu0 0.0
    %4572 = vmatpush.xpose.msra.mxu0 0.0
    %4573 = vmatpush.xpose.msra.mxu0 0.0
    %4574 = vmatpush.xpose.msra.mxu0 0.0
    %4575 = vmatpush.xpose.msra.mxu0 0.0
    %4576 = vmatpush.xpose.msra.mxu0 0.0
    %4577 = vmatpush.xpose.msra.mxu0 0.0
    %4578 = vmatpush.xpose.msra.mxu0 0.0
    %4579 = vmatpush.xpose.msra.mxu0 0.0
    %4580 = vmatpush.xpose.msra.mxu0 0.0
    %4581 = vmatpush.xpose.msra.mxu0 0.0
    %4582 = vmatpush.xpose.msra.mxu0 %v4565
    %4583 = vmatmul.f32.gmra.mxu0 %v4563
    %v4584 = vpop.f32.mrf.mxu0
    %v4585 = vadd.f32 0.0, %v4584
    %4586 = vdwg.mxu0
    %v4587 = vsel %vm201, %v4507, -inf
    %4588 = vmax.xlane.f32.xlu0 %v4587
    %v4589 = vpop.xlane.xlu0 %4588
    %v4590 = vsel %vm201, %v4533, -inf
    %4591 = vmax.xlane.f32.xlu0 %v4590
    %v4592 = vpop.xlane.xlu0 %4591
    %v4593 = vsel %vm201, %v4559, -inf
    %4594 = vmax.xlane.f32.xlu0 %v4593
    %v4595 = vpop.xlane.xlu0 %4594
    %v4596 = vsel %vm201, %v4585, -inf
    %4597 = vmax.xlane.f32.xlu0 %v4596
    %v4598 = vpop.xlane.xlu0 %4597
    %v4599 = vsub.f32 %v4507, %v4589
    %v4600 = vsub.f32 %v4533, %v4592
    %v4601 = vsub.f32 %v4559, %v4595
    %v4602 = vsub.f32 %v4585, %v4598
    %v4603 = vmul.f32 %v4599, 1.442695
    %v4604 = vpow.pop %v4603
    %v4605 = vmul.f32 %v4600, 1.442695
    %v4606 = vpow.pop %v4605
    %v4607 = vmul.f32 %v4601, 1.442695
    %v4608 = vpow.pop %v4607
    %v4609 = vmul.f32 %v4602, 1.442695
    %v4610 = vpow.pop %v4609
    %v4611 = vsel %vm201, %v4604, 0.0
    %4612 = vadd.xlane.f32.xlu0 %v4611
    %v4613 = vpop.xlane.xlu0 %4612
    %v4614 = vsel %vm201, %v4606, 0.0
    %4615 = vadd.xlane.f32.xlu0 %v4614
    %v4616 = vpop.xlane.xlu0 %4615
    %v4617 = vsel %vm201, %v4608, 0.0
    %4618 = vadd.xlane.f32.xlu0 %v4617
    %v4619 = vpop.xlane.xlu0 %4618
    %v4620 = vsel %vm201, %v4610, 0.0
    %4621 = vadd.xlane.f32.xlu0 %v4620
    %v4622 = vpop.xlane.xlu0 %4621
    %v4623 = vrcp.pop %v4613
    %v4624 = vmul.f32 %v4613, %v4623
    %v4625 = vsub.f32 1.0, %v4624
    %v4626 = vmul.f32 %v4623, %v4625
    %v4627 = vadd.f32 %v4623, %v4626
    %vm4628 = vweird.f32 %v4613
    %vm4629 = vweird.f32 %v4623
    %vm4630 = vmor %vm4628, %vm4629
    %v4631 = vsel %vm4630, %v4623, %v4627
    %v4632 = vand.u32 2147483647, %v4613
    %vm4633 = vcmp.eq.f32.partialorder %v4632, 8.507059e+37
    %v4634 = vand.u32 %v4613, 2147483648
    %v4635 = vor.u32 1.1754944e-38, %v4634
    %v4636 = vsel %vm4633, %v4635, %v4631
    %v4637 = vmul.f32 %v4604, %v4636
    %v4638 = vrcp.pop %v4616
    %v4639 = vmul.f32 %v4616, %v4638
    %v4640 = vsub.f32 1.0, %v4639
    %v4641 = vmul.f32 %v4638, %v4640
    %v4642 = vadd.f32 %v4638, %v4641
    %vm4643 = vweird.f32 %v4616
    %vm4644 = vweird.f32 %v4638
    %vm4645 = vmor %vm4643, %vm4644
    %v4646 = vsel %vm4645, %v4638, %v4642
    %v4647 = vand.u32 2147483647, %v4616
    %vm4648 = vcmp.eq.f32.partialorder %v4647, 8.507059e+37
    %v4649 = vand.u32 %v4616, 2147483648
    %v4650 = vor.u32 1.1754944e-38, %v4649
    %v4651 = vsel %vm4648, %v4650, %v4646
    %v4652 = vmul.f32 %v4606, %v4651
    %v4653 = vrcp.pop %v4619
    %v4654 = vmul.f32 %v4619, %v4653
    %v4655 = vsub.f32 1.0, %v4654
    %v4656 = vmul.f32 %v4653, %v4655
    %v4657 = vadd.f32 %v4653, %v4656
    %vm4658 = vweird.f32 %v4619
    %vm4659 = vweird.f32 %v4653
    %vm4660 = vmor %vm4658, %vm4659
    %v4661 = vsel %vm4660, %v4653, %v4657
    %v4662 = vand.u32 2147483647, %v4619
    %vm4663 = vcmp.eq.f32.partialorder %v4662, 8.507059e+37
    %v4664 = vand.u32 %v4619, 2147483648
    %v4665 = vor.u32 1.1754944e-38, %v4664
    %v4666 = vsel %vm4663, %v4665, %v4661
    %v4667 = vmul.f32 %v4608, %v4666
    %v4668 = vrcp.pop %v4622
    %v4669 = vmul.f32 %v4622, %v4668
    %v4670 = vsub.f32 1.0, %v4669
    %v4671 = vmul.f32 %v4668, %v4670
    %v4672 = vadd.f32 %v4668, %v4671
    %vm4673 = vweird.f32 %v4622
    %vm4674 = vweird.f32 %v4668
    %vm4675 = vmor %vm4673, %vm4674
    %v4676 = vsel %vm4675, %v4668, %v4672
    %v4677 = vand.u32 2147483647, %v4622
    %vm4678 = vcmp.eq.f32.partialorder %v4677, 8.507059e+37
    %v4679 = vand.u32 %v4622, 2147483648
    %v4680 = vor.u32 1.1754944e-38, %v4679
    %v4681 = vsel %vm4678, %v4680, %v4676
    %v4682 = vmul.f32 %v4610, %v4681
    %4683 = vrot.lane.b32.xlu0 %v4472, 112
    %v4684 = vpop.permute.xlu0 %4683
    %v4687 = vsel %vm201, %v4637, 0
    %4689 = vmatpush.msra.mxu0 0.0
    %4690 = vmatpush.msra.mxu0 0.0
    %4691 = vmatpush.msra.mxu0 0.0
    %4692 = vmatpush.msra.mxu0 0.0
    %4693 = vmatpush.msra.mxu0 0.0
    %4694 = vmatpush.msra.mxu0 0.0
    %4695 = vmatpush.msra.mxu0 0.0
    %4696 = vmatpush.msra.mxu0 0.0
    %4697 = vmatpush.msra.mxu0 0.0
    %4698 = vmatpush.msra.mxu0 0.0
    %4699 = vmatpush.msra.mxu0 0.0
    %4700 = vmatpush.msra.mxu0 0.0
    %4701 = vmatpush.msra.mxu0 0.0
    %4702 = vmatpush.msra.mxu0 0.0
    %4703 = vmatpush.msra.mxu0 0.0
    %4704 = vmatpush.msra.mxu0 %v4684
    %4705 = vmatmul.f32.gmra.mxu0 %v4687
    %v4706 = vpop.f32.mrf.mxu0
    %v4707 = vadd.f32 0.0, %v4706
    %4708 = vdwg.mxu0
    %4709 = vrot.lane.b32.xlu0 %v4475, 112
    %v4710 = vpop.permute.xlu0 %4709
    %v4713 = vsel %vm201, %v4652, 0
    %4715 = vmatpush.msra.mxu0 0.0
    %4716 = vmatpush.msra.mxu0 0.0
    %4717 = vmatpush.msra.mxu0 0.0
    %4718 = vmatpush.msra.mxu0 0.0
    %4719 = vmatpush.msra.mxu0 0.0
    %4720 = vmatpush.msra.mxu0 0.0
    %4721 = vmatpush.msra.mxu0 0.0
    %4722 = vmatpush.msra.mxu0 0.0
    %4723 = vmatpush.msra.mxu0 0.0
    %4724 = vmatpush.msra.mxu0 0.0
    %4725 = vmatpush.msra.mxu0 0.0
    %4726 = vmatpush.msra.mxu0 0.0
    %4727 = vmatpush.msra.mxu0 0.0
    %4728 = vmatpush.msra.mxu0 0.0
    %4729 = vmatpush.msra.mxu0 0.0
    %4730 = vmatpush.msra.mxu0 %v4710
    %4731 = vmatmul.f32.gmra.mxu0 %v4713
    %v4732 = vpop.f32.mrf.mxu0
    %v4733 = vadd.f32 0.0, %v4732
    %4734 = vdwg.mxu0
    %4735 = vrot.lane.b32.xlu0 %v4480, 112
    %v4736 = vpop.permute.xlu0 %4735
    %v4739 = vsel %vm201, %v4667, 0
    %4741 = vmatpush.msra.mxu0 0.0
    %4742 = vmatpush.msra.mxu0 0.0
    %4743 = vmatpush.msra.mxu0 0.0
    %4744 = vmatpush.msra.mxu0 0.0
    %4745 = vmatpush.msra.mxu0 0.0
    %4746 = vmatpush.msra.mxu0 0.0
    %4747 = vmatpush.msra.mxu0 0.0
    %4748 = vmatpush.msra.mxu0 0.0
    %4749 = vmatpush.msra.mxu0 0.0
    %4750 = vmatpush.msra.mxu0 0.0
    %4751 = vmatpush.msra.mxu0 0.0
    %4752 = vmatpush.msra.mxu0 0.0
    %4753 = vmatpush.msra.mxu0 0.0
    %4754 = vmatpush.msra.mxu0 0.0
    %4755 = vmatpush.msra.mxu0 0.0
    %4756 = vmatpush.msra.mxu0 %v4736
    %4757 = vmatmul.f32.gmra.mxu0 %v4739
    %v4758 = vpop.f32.mrf.mxu0
    %v4759 = vadd.f32 0.0, %v4758
    %4760 = vdwg.mxu0
    %4761 = vrot.lane.b32.xlu0 %v4482, 112
    %v4762 = vpop.permute.xlu0 %4761
    %v4765 = vsel %vm201, %v4682, 0
    %4767 = vmatpush.msra.mxu0 0.0
    %4768 = vmatpush.msra.mxu0 0.0
    %4769 = vmatpush.msra.mxu0 0.0
    %4770 = vmatpush.msra.mxu0 0.0
    %4771 = vmatpush.msra.mxu0 0.0
    %4772 = vmatpush.msra.mxu0 0.0
    %4773 = vmatpush.msra.mxu0 0.0
    %4774 = vmatpush.msra.mxu0 0.0
    %4775 = vmatpush.msra.mxu0 0.0
    %4776 = vmatpush.msra.mxu0 0.0
    %4777 = vmatpush.msra.mxu0 0.0
    %4778 = vmatpush.msra.mxu0 0.0
    %4779 = vmatpush.msra.mxu0 0.0
    %4780 = vmatpush.msra.mxu0 0.0
    %4781 = vmatpush.msra.mxu0 0.0
    %4782 = vmatpush.msra.mxu0 %v4762
    %4783 = vmatmul.f32.gmra.mxu0 %v4765
    %v4784 = vpop.f32.mrf.mxu0
    %v4785 = vadd.f32 0.0, %v4784
    %4786 = vdwg.mxu0
    %4789 = vrot.lane.b32.xlu0 %v4759, 8
    %v4790 = vpop.permute.xlu0 %4789
    %4791 = vrot.lane.b32.xlu0 %v4785, 8
    %v4792 = vpop.permute.xlu0 %4791
    %v4795 = vsel %vm201, %v4707, %v4790
    %v4796 = vsel %vm201, %v4733, %v4792
    %v4797 = vperm.slane %v4444, 0
    %v4799 = vsel %vm834, %v4795, 0
    %v4802 = vsel %vm834, %v4796, 0
    %4804 = vmatpush.msra.mxu0 0.0
    %4805 = vmatpush.msra.mxu0 0.0
    %4806 = vmatpush.msra.mxu0 0.0
    %4807 = vmatpush.msra.mxu0 0.0
    %4808 = vmatpush.msra.mxu0 0.0
    %4809 = vmatpush.msra.mxu0 0.0
    %4810 = vmatpush.msra.mxu0 0.0
    %4811 = vmatpush.msra.mxu0 0.0
    %4812 = vmatpush.msra.mxu0 0.0
    %4813 = vmatpush.msra.mxu0 0.0
    %4814 = vmatpush.msra.mxu0 0.0
    %4815 = vmatpush.msra.mxu0 0.0
    %4816 = vmatpush.msra.mxu0 0.0
    %4817 = vmatpush.msra.mxu0 0.0
    %4818 = vmatpush.msra.mxu0 %v4443
    %4819 = vmatpush.msra.mxu0 %v4442
    %4820 = vmatmul.f32.gmra.mxu0 %v4799
    %v4821 = vpop.f32.mrf.mxu0
    %v4822 = vadd.f32 %v4797, %v4821
    %4823 = vmatmul.f32.gmra.mxu0 %v4802
    %v4824 = vpop.f32.mrf.mxu0
    %v4825 = vadd.f32 %v4797, %v4824
    %4826 = vdwg.mxu0
    %v4827 = vadd.f32 %v4437, %v4822
    %v4828 = vadd.f32 %v4438, %v4825
    %v4829 = vsel %vm834, %v4827, 0.0
    %4830 = vadd.xlane.f32.xlu0 %v4829
    %v4831 = vpop.xlane.xlu0 %4830
    %v4832 = vsel %vm834, %v4828, 0.0
    %4833 = vadd.xlane.f32.xlu0 %v4832
    %v4834 = vpop.xlane.xlu0 %4833
    %v4835 = vmul.f32 %v4831, %v1686
    %v4836 = vmul.f32 %v4834, %v1686
    %v4837 = vmul.f32 %v4827, %v4827
    %v4838 = vmul.f32 %v4828, %v4828
    %v4839 = vsel %vm834, %v4837, 0.0
    %4840 = vadd.xlane.f32.xlu0 %v4839
    %v4841 = vpop.xlane.xlu0 %4840
    %v4842 = vsel %vm834, %v4838, 0.0
    %4843 = vadd.xlane.f32.xlu0 %v4842
    %v4844 = vpop.xlane.xlu0 %4843
    %v4845 = vmul.f32 %v4841, %v1686
    %v4846 = vmul.f32 %v4844, %v1686
    %v4847 = vmul.f32 %v4835, %v4835
    %v4848 = vmul.f32 %v4836, %v4836
    %v4849 = vsub.f32 %v4845, %v4847
    %v4850 = vsub.f32 %v4846, %v4848
    %v4851 = vsub.f32 %v4827, %v4835
    %v4852 = vsub.f32 %v4828, %v4836
    %v4853 = vadd.f32 %v4849, 1e-05
    %v4854 = vadd.f32 %v4850, 1e-05
    %v4855 = vrsqrt.pop %v4853
    %v4856 = vmul.f32 %v4855, %v4853
    %v4857 = vmul.f32 %v4856, %v4855
    %v4858 = vmul.f32 0.5, %v4857
    %v4859 = vsub.f32 1.5, %v4858
    %v4860 = vmul.f32 %v4855, %v4859
    %vm4861 = vweird.f32 %v4853
    %vm4862 = vweird.f32 %v4855
    %vm4863 = vmor %vm4861, %vm4862
    %v4864 = vsel %vm4863, %v4855, %v4860
    %v4865 = vrsqrt.pop %v4854
    %v4866 = vmul.f32 %v4865, %v4854
    %v4867 = vmul.f32 %v4866, %v4865
    %v4868 = vmul.f32 0.5, %v4867
    %v4869 = vsub.f32 1.5, %v4868
    %v4870 = vmul.f32 %v4865, %v4869
    %vm4871 = vweird.f32 %v4854
    %vm4872 = vweird.f32 %v4865
    %vm4873 = vmor %vm4871, %vm4872
    %v4874 = vsel %vm4873, %v4865, %v4870
    %v4875 = vmul.f32 %v4851, %v4864
    %v4876 = vmul.f32 %v4852, %v4874
    %v4877 = vperm.slane %v4445, 0
    %v4878 = vmul.f32 %v4875, %v4877
    %v4879 = vmul.f32 %v4876, %v4877
    %v4880 = vperm.slane %v4446, 0
    %v4881 = vadd.f32 %v4878, %v4880
    %v4882 = vadd.f32 %v4879, %v4880
    %v4883 = vld [vmem:[#allocation5 + $0xd0] sm:$0xff]
    %v4884 = vld [vmem:[#allocation5 + $0xd8] sm:$0xff]
    %v4885 = vld [vmem:[#allocation5 + $0xe0] sm:$0x1]
    %v4886 = vperm.slane %v4885, 0
    %v4888 = vsel %vm834, %v4881, 0
    %v4891 = vsel %vm834, %v4882, 0
    %4893 = vmatpush.msra.mxu0 0.0
    %4894 = vmatpush.msra.mxu0 0.0
    %4895 = vmatpush.msra.mxu0 0.0
    %4896 = vmatpush.msra.mxu0 0.0
    %4897 = vmatpush.msra.mxu0 0.0
    %4898 = vmatpush.msra.mxu0 0.0
    %4899 = vmatpush.msra.mxu0 0.0
    %4900 = vmatpush.msra.mxu0 0.0
    %4901 = vmatpush.msra.mxu0 0.0
    %4902 = vmatpush.msra.mxu0 0.0
    %4903 = vmatpush.msra.mxu0 0.0
    %4904 = vmatpush.msra.mxu0 0.0
    %4905 = vmatpush.msra.mxu0 0.0
    %4906 = vmatpush.msra.mxu0 0.0
    %4907 = vmatpush.msra.mxu0 %v4884
    %4908 = vmatpush.msra.mxu0 %v4883
    %4909 = vmatmul.f32.gmra.mxu0 %v4888
    %v4910 = vpop.f32.mrf.mxu0
    %v4911 = vadd.f32 %v4886, %v4910
    %4912 = vmatmul.f32.gmra.mxu0 %v4891
    %v4913 = vpop.f32.mrf.mxu0
    %v4914 = vadd.f32 %v4886, %v4913
    %4915 = vdwg.mxu0
    %v4916 = vmax.f32 %v4911, 0.0
    %v4917 = vmax.f32 %v4914, 0.0
    %v4918 = vld [vmem:[#allocation5 + $0xe8] sm:$0xff]
    %v4919 = vld [vmem:[#allocation5 + $0xf0] sm:$0x1]
    %v4920 = vld [vmem:[#allocation5 + $0xf8] sm:$0xff]
    %v4921 = vld [vmem:[#allocation5 + $0x100] sm:$0x1]
    %v4922 = vld [vmem:[#allocation5 + $0x108] sm:$0x1]
    %v4923 = vld [vmem:[#allocation5 + $0x110] sm:$0x1]
    %v4924 = vperm.slane %v4919, 0
    %v4926 = vsel %vm201, %v4916, 0
    %v4929 = vsel %vm201, %v4917, 0
    %4931 = vmatpush.msra.mxu0 0.0
    %4932 = vmatpush.msra.mxu0 0.0
    %4933 = vmatpush.msra.mxu0 0.0
    %4934 = vmatpush.msra.mxu0 0.0
    %4935 = vmatpush.msra.mxu0 0.0
    %4936 = vmatpush.msra.mxu0 0.0
    %4937 = vmatpush.msra.mxu0 0.0
    %4938 = vmatpush.msra.mxu0 0.0
    %4939 = vmatpush.msra.mxu0 0.0
    %4940 = vmatpush.msra.mxu0 0.0
    %4941 = vmatpush.msra.mxu0 0.0
    %4942 = vmatpush.msra.mxu0 0.0
    %4943 = vmatpush.msra.mxu0 0.0
    %4944 = vmatpush.msra.mxu0 0.0
    %4945 = vmatpush.msra.mxu0 0.0
    %4946 = vmatpush.msra.mxu0 %v4918
    %4947 = vmatmul.f32.gmra.mxu0 %v4926
    %v4948 = vpop.f32.mrf.mxu0
    %v4949 = vadd.f32 %v4924, %v4948
    %4950 = vmatmul.f32.gmra.mxu0 %v4929
    %v4951 = vpop.f32.mrf.mxu0
    %v4952 = vadd.f32 %v4924, %v4951
    %4953 = vdwg.mxu0
    %4955 = vrot.lane.b32.xlu0 %v4949, 120
    %v4956 = vpop.permute.xlu0 %4955
    %v4957 = vsel %vm201, %v4949, 0
    %v4959 = vsel %vm201, %v4956, 0
    %4961 = vmatpush.xpose.msra.mxu0 0.0
    %4962 = vmatpush.xpose.msra.mxu0 0.0
    %4963 = vmatpush.xpose.msra.mxu0 0.0
    %4964 = vmatpush.xpose.msra.mxu0 0.0
    %4965 = vmatpush.xpose.msra.mxu0 0.0
    %4966 = vmatpush.xpose.msra.mxu0 0.0
    %4967 = vmatpush.xpose.msra.mxu0 0.0
    %4968 = vmatpush.xpose.msra.mxu0 0.0
    %4969 = vmatpush.xpose.msra.mxu0 0.0
    %4970 = vmatpush.xpose.msra.mxu0 0.0
    %4971 = vmatpush.xpose.msra.mxu0 0.0
    %4972 = vmatpush.xpose.msra.mxu0 0.0
    %4973 = vmatpush.xpose.msra.mxu0 0.0
    %4974 = vmatpush.xpose.msra.mxu0 0.0
    %4975 = vmatpush.xpose.msra.mxu0 0.0
    %4976 = vmatpush.xpose.msra.mxu0 %v4959
    %4977 = vmatmul.f32.gmra.mxu0 %v4957
    %v4978 = vpop.f32.mrf.mxu0
    %v4979 = vadd.f32 0.0, %v4978
    %4980 = vdwg.mxu0
    %4982 = vrot.lane.b32.xlu0 %v4952, 120
    %v4983 = vpop.permute.xlu0 %4982
    %v4984 = vsel %vm201, %v4952, 0
    %v4986 = vsel %vm201, %v4983, 0
    %4988 = vmatpush.xpose.msra.mxu0 0.0
    %4989 = vmatpush.xpose.msra.mxu0 0.0
    %4990 = vmatpush.xpose.msra.mxu0 0.0
    %4991 = vmatpush.xpose.msra.mxu0 0.0
    %4992 = vmatpush.xpose.msra.mxu0 0.0
    %4993 = vmatpush.xpose.msra.mxu0 0.0
    %4994 = vmatpush.xpose.msra.mxu0 0.0
    %4995 = vmatpush.xpose.msra.mxu0 0.0
    %4996 = vmatpush.xpose.msra.mxu0 0.0
    %4997 = vmatpush.xpose.msra.mxu0 0.0
    %4998 = vmatpush.xpose.msra.mxu0 0.0
    %4999 = vmatpush.xpose.msra.mxu0 0.0
    %5000 = vmatpush.xpose.msra.mxu0 0.0
    %5001 = vmatpush.xpose.msra.mxu0 0.0
    %5002 = vmatpush.xpose.msra.mxu0 0.0
    %5003 = vmatpush.xpose.msra.mxu0 %v4986
    %5004 = vmatmul.f32.gmra.mxu0 %v4984
    %v5005 = vpop.f32.mrf.mxu0
    %v5006 = vadd.f32 0.0, %v5005
    %5007 = vdwg.mxu0
    %v5008 = vsel %vm201, %v4979, -inf
    %5009 = vmax.xlane.f32.xlu0 %v5008
    %v5010 = vpop.xlane.xlu0 %5009
    %v5011 = vsel %vm201, %v5006, -inf
    %5012 = vmax.xlane.f32.xlu0 %v5011
    %v5013 = vpop.xlane.xlu0 %5012
    %v5014 = vsub.f32 %v4979, %v5010
    %v5015 = vsub.f32 %v5006, %v5013
    %v5016 = vmul.f32 %v5014, 1.442695
    %v5017 = vpow.pop %v5016
    %v5018 = vmul.f32 %v5015, 1.442695
    %v5019 = vpow.pop %v5018
    %v5020 = vsel %vm201, %v5017, 0.0
    %5021 = vadd.xlane.f32.xlu0 %v5020
    %v5022 = vpop.xlane.xlu0 %5021
    %v5023 = vsel %vm201, %v5019, 0.0
    %5024 = vadd.xlane.f32.xlu0 %v5023
    %v5025 = vpop.xlane.xlu0 %5024
    %v5026 = vrcp.pop %v5022
    %v5027 = vmul.f32 %v5022, %v5026
    %v5028 = vsub.f32 1.0, %v5027
    %v5029 = vmul.f32 %v5026, %v5028
    %v5030 = vadd.f32 %v5026, %v5029
    %vm5031 = vweird.f32 %v5022
    %vm5032 = vweird.f32 %v5026
    %vm5033 = vmor %vm5031, %vm5032
    %v5034 = vsel %vm5033, %v5026, %v5030
    %v5035 = vand.u32 2147483647, %v5022
    %vm5036 = vcmp.eq.f32.partialorder %v5035, 8.507059e+37
    %v5037 = vand.u32 %v5022, 2147483648
    %v5038 = vor.u32 1.1754944e-38, %v5037
    %v5039 = vsel %vm5036, %v5038, %v5034
    %v5040 = vmul.f32 %v5017, %v5039
    %v5041 = vrcp.pop %v5025
    %v5042 = vmul.f32 %v5025, %v5041
    %v5043 = vsub.f32 1.0, %v5042
    %v5044 = vmul.f32 %v5041, %v5043
    %v5045 = vadd.f32 %v5041, %v5044
    %vm5046 = vweird.f32 %v5025
    %vm5047 = vweird.f32 %v5041
    %vm5048 = vmor %vm5046, %vm5047
    %v5049 = vsel %vm5048, %v5041, %v5045
    %v5050 = vand.u32 2147483647, %v5025
    %vm5051 = vcmp.eq.f32.partialorder %v5050, 8.507059e+37
    %v5052 = vand.u32 %v5025, 2147483648
    %v5053 = vor.u32 1.1754944e-38, %v5052
    %v5054 = vsel %vm5051, %v5053, %v5049
    %v5055 = vmul.f32 %v5019, %v5054
    %5056 = vrot.lane.b32.xlu0 %v4949, 112
    %v5057 = vpop.permute.xlu0 %5056
    %v5060 = vsel %vm201, %v5040, 0
    %5062 = vmatpush.msra.mxu0 0.0
    %5063 = vmatpush.msra.mxu0 0.0
    %5064 = vmatpush.msra.mxu0 0.0
    %5065 = vmatpush.msra.mxu0 0.0
    %5066 = vmatpush.msra.mxu0 0.0
    %5067 = vmatpush.msra.mxu0 0.0
    %5068 = vmatpush.msra.mxu0 0.0
    %5069 = vmatpush.msra.mxu0 0.0
    %5070 = vmatpush.msra.mxu0 0.0
    %5071 = vmatpush.msra.mxu0 0.0
    %5072 = vmatpush.msra.mxu0 0.0
    %5073 = vmatpush.msra.mxu0 0.0
    %5074 = vmatpush.msra.mxu0 0.0
    %5075 = vmatpush.msra.mxu0 0.0
    %5076 = vmatpush.msra.mxu0 0.0
    %5077 = vmatpush.msra.mxu0 %v5057
    %5078 = vmatmul.f32.gmra.mxu0 %v5060
    %v5079 = vpop.f32.mrf.mxu0
    %v5080 = vadd.f32 0.0, %v5079
    %5081 = vdwg.mxu0
    %5082 = vrot.lane.b32.xlu0 %v4952, 112
    %v5083 = vpop.permute.xlu0 %5082
    %v5086 = vsel %vm201, %v5055, 0
    %5088 = vmatpush.msra.mxu0 0.0
    %5089 = vmatpush.msra.mxu0 0.0
    %5090 = vmatpush.msra.mxu0 0.0
    %5091 = vmatpush.msra.mxu0 0.0
    %5092 = vmatpush.msra.mxu0 0.0
    %5093 = vmatpush.msra.mxu0 0.0
    %5094 = vmatpush.msra.mxu0 0.0
    %5095 = vmatpush.msra.mxu0 0.0
    %5096 = vmatpush.msra.mxu0 0.0
    %5097 = vmatpush.msra.mxu0 0.0
    %5098 = vmatpush.msra.mxu0 0.0
    %5099 = vmatpush.msra.mxu0 0.0
    %5100 = vmatpush.msra.mxu0 0.0
    %5101 = vmatpush.msra.mxu0 0.0
    %5102 = vmatpush.msra.mxu0 0.0
    %5103 = vmatpush.msra.mxu0 %v5083
    %5104 = vmatmul.f32.gmra.mxu0 %v5086
    %v5105 = vpop.f32.mrf.mxu0
    %v5106 = vadd.f32 0.0, %v5105
    %5107 = vdwg.mxu0
    %v5108 = vperm.slane %v4921, 0
    %v5110 = vsel %vm201, %v5080, 0
    %v5113 = vsel %vm201, %v5106, 0
    %5115 = vmatpush.msra.mxu0 0.0
    %5116 = vmatpush.msra.mxu0 0.0
    %5117 = vmatpush.msra.mxu0 0.0
    %5118 = vmatpush.msra.mxu0 0.0
    %5119 = vmatpush.msra.mxu0 0.0
    %5120 = vmatpush.msra.mxu0 0.0
    %5121 = vmatpush.msra.mxu0 0.0
    %5122 = vmatpush.msra.mxu0 0.0
    %5123 = vmatpush.msra.mxu0 0.0
    %5124 = vmatpush.msra.mxu0 0.0
    %5125 = vmatpush.msra.mxu0 0.0
    %5126 = vmatpush.msra.mxu0 0.0
    %5127 = vmatpush.msra.mxu0 0.0
    %5128 = vmatpush.msra.mxu0 0.0
    %5129 = vmatpush.msra.mxu0 0.0
    %5130 = vmatpush.msra.mxu0 %v4920
    %5131 = vmatmul.f32.gmra.mxu0 %v5110
    %v5132 = vpop.f32.mrf.mxu0
    %v5133 = vadd.f32 %v5108, %v5132
    %5134 = vmatmul.f32.gmra.mxu0 %v5113
    %v5135 = vpop.f32.mrf.mxu0
    %v5136 = vadd.f32 %v5108, %v5135
    %5137 = vdwg.mxu0
    %v5138 = vadd.f32 %v4916, %v5133
    %v5139 = vadd.f32 %v4917, %v5136
    %v5140 = vsel %vm201, %v5138, 0.0
    %5141 = vadd.xlane.f32.xlu0 %v5140
    %v5142 = vpop.xlane.xlu0 %5141
    %v5143 = vsel %vm201, %v5139, 0.0
    %5144 = vadd.xlane.f32.xlu0 %v5143
    %v5145 = vpop.xlane.xlu0 %5144
    %v5146 = vmul.f32 %v5142, %v2004
    %v5147 = vmul.f32 %v5145, %v2004
    %v5148 = vmul.f32 %v5138, %v5138
    %v5149 = vmul.f32 %v5139, %v5139
    %v5150 = vsel %vm201, %v5148, 0.0
    %5151 = vadd.xlane.f32.xlu0 %v5150
    %v5152 = vpop.xlane.xlu0 %5151
    %v5153 = vsel %vm201, %v5149, 0.0
    %5154 = vadd.xlane.f32.xlu0 %v5153
    %v5155 = vpop.xlane.xlu0 %5154
    %v5156 = vmul.f32 %v5152, %v2004
    %v5157 = vmul.f32 %v5155, %v2004
    %v5158 = vmul.f32 %v5146, %v5146
    %v5159 = vmul.f32 %v5147, %v5147
    %v5160 = vsub.f32 %v5156, %v5158
    %v5161 = vsub.f32 %v5157, %v5159
    %v5162 = vsub.f32 %v5138, %v5146
    %v5163 = vsub.f32 %v5139, %v5147
    %v5164 = vadd.f32 %v5160, 1e-05
    %v5165 = vadd.f32 %v5161, 1e-05
    %v5166 = vrsqrt.pop %v5164
    %v5167 = vmul.f32 %v5166, %v5164
    %v5168 = vmul.f32 %v5167, %v5166
    %v5169 = vmul.f32 0.5, %v5168
    %v5170 = vsub.f32 1.5, %v5169
    %v5171 = vmul.f32 %v5166, %v5170
    %vm5172 = vweird.f32 %v5164
    %vm5173 = vweird.f32 %v5166
    %vm5174 = vmor %vm5172, %vm5173
    %v5175 = vsel %vm5174, %v5166, %v5171
    %v5176 = vrsqrt.pop %v5165
    %v5177 = vmul.f32 %v5176, %v5165
    %v5178 = vmul.f32 %v5177, %v5176
    %v5179 = vmul.f32 0.5, %v5178
    %v5180 = vsub.f32 1.5, %v5179
    %v5181 = vmul.f32 %v5176, %v5180
    %vm5182 = vweird.f32 %v5165
    %vm5183 = vweird.f32 %v5176
    %vm5184 = vmor %vm5182, %vm5183
    %v5185 = vsel %vm5184, %v5176, %v5181
    %v5186 = vmul.f32 %v5162, %v5175
    %v5187 = vmul.f32 %v5163, %v5185
    %v5188 = vperm.slane %v4922, 0
    %v5189 = vmul.f32 %v5186, %v5188
    %v5190 = vmul.f32 %v5187, %v5188
    %v5191 = vperm.slane %v4923, 0
    %v5192 = vadd.f32 %v5189, %v5191
    %v5193 = vadd.f32 %v5190, %v5191
    %v5194 = vld [vmem:[#allocation5 + $0x210] sm:$0xff]
    %v5195 = vld [vmem:[#allocation5 + $0x218] sm:$0x1]
    %v5196 = vld [vmem:[#allocation5 + $0x220] sm:$0xff]
    %v5197 = vld [vmem:[#allocation5 + $0x228] sm:$0x1]
    %v5198 = vld [vmem:[#allocation5 + $0x230] sm:$0x1]
    %v5199 = vld [vmem:[#allocation5 + $0x238] sm:$0x1]
    %v5200 = vperm.slane %v5195, 0
    %v5202 = vsel %vm201, %v5192, 0
    %v5205 = vsel %vm201, %v5193, 0
    %5207 = vmatpush.msra.mxu0 0.0
    %5208 = vmatpush.msra.mxu0 0.0
    %5209 = vmatpush.msra.mxu0 0.0
    %5210 = vmatpush.msra.mxu0 0.0
    %5211 = vmatpush.msra.mxu0 0.0
    %5212 = vmatpush.msra.mxu0 0.0
    %5213 = vmatpush.msra.mxu0 0.0
    %5214 = vmatpush.msra.mxu0 0.0
    %5215 = vmatpush.msra.mxu0 0.0
    %5216 = vmatpush.msra.mxu0 0.0
    %5217 = vmatpush.msra.mxu0 0.0
    %5218 = vmatpush.msra.mxu0 0.0
    %5219 = vmatpush.msra.mxu0 0.0
    %5220 = vmatpush.msra.mxu0 0.0
    %5221 = vmatpush.msra.mxu0 0.0
    %5222 = vmatpush.msra.mxu0 %v5194
    %5223 = vmatmul.f32.gmra.mxu0 %v5202
    %v5224 = vpop.f32.mrf.mxu0
    %v5225 = vadd.f32 %v5200, %v5224
    %5226 = vmatmul.f32.gmra.mxu0 %v5205
    %v5227 = vpop.f32.mrf.mxu0
    %v5228 = vadd.f32 %v5200, %v5227
    %5229 = vdwg.mxu0
    %5231 = vrot.lane.b32.xlu0 %v5225, 120
    %v5232 = vpop.permute.xlu0 %5231
    %v5233 = vsel %vm201, %v5225, 0
    %v5235 = vsel %vm201, %v5232, 0
    %5237 = vmatpush.xpose.msra.mxu0 0.0
    %5238 = vmatpush.xpose.msra.mxu0 0.0
    %5239 = vmatpush.xpose.msra.mxu0 0.0
    %5240 = vmatpush.xpose.msra.mxu0 0.0
    %5241 = vmatpush.xpose.msra.mxu0 0.0
    %5242 = vmatpush.xpose.msra.mxu0 0.0
    %5243 = vmatpush.xpose.msra.mxu0 0.0
    %5244 = vmatpush.xpose.msra.mxu0 0.0
    %5245 = vmatpush.xpose.msra.mxu0 0.0
    %5246 = vmatpush.xpose.msra.mxu0 0.0
    %5247 = vmatpush.xpose.msra.mxu0 0.0
    %5248 = vmatpush.xpose.msra.mxu0 0.0
    %5249 = vmatpush.xpose.msra.mxu0 0.0
    %5250 = vmatpush.xpose.msra.mxu0 0.0
    %5251 = vmatpush.xpose.msra.mxu0 0.0
    %5252 = vmatpush.xpose.msra.mxu0 %v5235
    %5253 = vmatmul.f32.gmra.mxu0 %v5233
    %v5254 = vpop.f32.mrf.mxu0
    %v5255 = vadd.f32 0.0, %v5254
    %5256 = vdwg.mxu0
    %5258 = vrot.lane.b32.xlu0 %v5228, 120
    %v5259 = vpop.permute.xlu0 %5258
    %v5260 = vsel %vm201, %v5228, 0
    %v5262 = vsel %vm201, %v5259, 0
    %5264 = vmatpush.xpose.msra.mxu0 0.0
    %5265 = vmatpush.xpose.msra.mxu0 0.0
    %5266 = vmatpush.xpose.msra.mxu0 0.0
    %5267 = vmatpush.xpose.msra.mxu0 0.0
    %5268 = vmatpush.xpose.msra.mxu0 0.0
    %5269 = vmatpush.xpose.msra.mxu0 0.0
    %5270 = vmatpush.xpose.msra.mxu0 0.0
    %5271 = vmatpush.xpose.msra.mxu0 0.0
    %5272 = vmatpush.xpose.msra.mxu0 0.0
    %5273 = vmatpush.xpose.msra.mxu0 0.0
    %5274 = vmatpush.xpose.msra.mxu0 0.0
    %5275 = vmatpush.xpose.msra.mxu0 0.0
    %5276 = vmatpush.xpose.msra.mxu0 0.0
    %5277 = vmatpush.xpose.msra.mxu0 0.0
    %5278 = vmatpush.xpose.msra.mxu0 0.0
    %5279 = vmatpush.xpose.msra.mxu0 %v5262
    %5280 = vmatmul.f32.gmra.mxu0 %v5260
    %v5281 = vpop.f32.mrf.mxu0
    %v5282 = vadd.f32 0.0, %v5281
    %5283 = vdwg.mxu0
    %v5284 = vsel %vm201, %v5255, -inf
    %5285 = vmax.xlane.f32.xlu0 %v5284
    %v5286 = vpop.xlane.xlu0 %5285
    %v5287 = vsel %vm201, %v5282, -inf
    %5288 = vmax.xlane.f32.xlu0 %v5287
    %v5289 = vpop.xlane.xlu0 %5288
    %v5290 = vsub.f32 %v5255, %v5286
    %v5291 = vsub.f32 %v5282, %v5289
    %v5292 = vmul.f32 %v5290, 1.442695
    %v5293 = vpow.pop %v5292
    %v5294 = vmul.f32 %v5291, 1.442695
    %v5295 = vpow.pop %v5294
    %v5296 = vsel %vm201, %v5293, 0.0
    %5297 = vadd.xlane.f32.xlu0 %v5296
    %v5298 = vpop.xlane.xlu0 %5297
    %v5299 = vsel %vm201, %v5295, 0.0
    %5300 = vadd.xlane.f32.xlu0 %v5299
    %v5301 = vpop.xlane.xlu0 %5300
    %v5302 = vrcp.pop %v5298
    %v5303 = vmul.f32 %v5298, %v5302
    %v5304 = vsub.f32 1.0, %v5303
    %v5305 = vmul.f32 %v5302, %v5304
    %v5306 = vadd.f32 %v5302, %v5305
    %vm5307 = vweird.f32 %v5298
    %vm5308 = vweird.f32 %v5302
    %vm5309 = vmor %vm5307, %vm5308
    %v5310 = vsel %vm5309, %v5302, %v5306
    %v5311 = vand.u32 2147483647, %v5298
    %vm5312 = vcmp.eq.f32.partialorder %v5311, 8.507059e+37
    %v5313 = vand.u32 %v5298, 2147483648
    %v5314 = vor.u32 1.1754944e-38, %v5313
    %v5315 = vsel %vm5312, %v5314, %v5310
    %v5316 = vmul.f32 %v5293, %v5315
    %v5317 = vrcp.pop %v5301
    %v5318 = vmul.f32 %v5301, %v5317
    %v5319 = vsub.f32 1.0, %v5318
    %v5320 = vmul.f32 %v5317, %v5319
    %v5321 = vadd.f32 %v5317, %v5320
    %vm5322 = vweird.f32 %v5301
    %vm5323 = vweird.f32 %v5317
    %vm5324 = vmor %vm5322, %vm5323
    %v5325 = vsel %vm5324, %v5317, %v5321
    %v5326 = vand.u32 2147483647, %v5301
    %vm5327 = vcmp.eq.f32.partialorder %v5326, 8.507059e+37
    %v5328 = vand.u32 %v5301, 2147483648
    %v5329 = vor.u32 1.1754944e-38, %v5328
    %v5330 = vsel %vm5327, %v5329, %v5325
    %v5331 = vmul.f32 %v5295, %v5330
    %5332 = vrot.lane.b32.xlu0 %v5225, 112
    %v5333 = vpop.permute.xlu0 %5332
    %v5336 = vsel %vm201, %v5316, 0
    %5338 = vmatpush.msra.mxu0 0.0
    %5339 = vmatpush.msra.mxu0 0.0
    %5340 = vmatpush.msra.mxu0 0.0
    %5341 = vmatpush.msra.mxu0 0.0
    %5342 = vmatpush.msra.mxu0 0.0
    %5343 = vmatpush.msra.mxu0 0.0
    %5344 = vmatpush.msra.mxu0 0.0
    %5345 = vmatpush.msra.mxu0 0.0
    %5346 = vmatpush.msra.mxu0 0.0
    %5347 = vmatpush.msra.mxu0 0.0
    %5348 = vmatpush.msra.mxu0 0.0
    %5349 = vmatpush.msra.mxu0 0.0
    %5350 = vmatpush.msra.mxu0 0.0
    %5351 = vmatpush.msra.mxu0 0.0
    %5352 = vmatpush.msra.mxu0 0.0
    %5353 = vmatpush.msra.mxu0 %v5333
    %5354 = vmatmul.f32.gmra.mxu0 %v5336
    %v5355 = vpop.f32.mrf.mxu0
    %v5356 = vadd.f32 0.0, %v5355
    %5357 = vdwg.mxu0
    %5358 = vrot.lane.b32.xlu0 %v5228, 112
    %v5359 = vpop.permute.xlu0 %5358
    %v5362 = vsel %vm201, %v5331, 0
    %5364 = vmatpush.msra.mxu0 0.0
    %5365 = vmatpush.msra.mxu0 0.0
    %5366 = vmatpush.msra.mxu0 0.0
    %5367 = vmatpush.msra.mxu0 0.0
    %5368 = vmatpush.msra.mxu0 0.0
    %5369 = vmatpush.msra.mxu0 0.0
    %5370 = vmatpush.msra.mxu0 0.0
    %5371 = vmatpush.msra.mxu0 0.0
    %5372 = vmatpush.msra.mxu0 0.0
    %5373 = vmatpush.msra.mxu0 0.0
    %5374 = vmatpush.msra.mxu0 0.0
    %5375 = vmatpush.msra.mxu0 0.0
    %5376 = vmatpush.msra.mxu0 0.0
    %5377 = vmatpush.msra.mxu0 0.0
    %5378 = vmatpush.msra.mxu0 0.0
    %5379 = vmatpush.msra.mxu0 %v5359
    %5380 = vmatmul.f32.gmra.mxu0 %v5362
    %v5381 = vpop.f32.mrf.mxu0
    %v5382 = vadd.f32 0.0, %v5381
    %5383 = vdwg.mxu0
    %v5384 = vperm.slane %v5197, 0
    %v5386 = vsel %vm201, %v5356, 0
    %v5389 = vsel %vm201, %v5382, 0
    %5391 = vmatpush.msra.mxu0 0.0
    %5392 = vmatpush.msra.mxu0 0.0
    %5393 = vmatpush.msra.mxu0 0.0
    %5394 = vmatpush.msra.mxu0 0.0
    %5395 = vmatpush.msra.mxu0 0.0
    %5396 = vmatpush.msra.mxu0 0.0
    %5397 = vmatpush.msra.mxu0 0.0
    %5398 = vmatpush.msra.mxu0 0.0
    %5399 = vmatpush.msra.mxu0 0.0
    %5400 = vmatpush.msra.mxu0 0.0
    %5401 = vmatpush.msra.mxu0 0.0
    %5402 = vmatpush.msra.mxu0 0.0
    %5403 = vmatpush.msra.mxu0 0.0
    %5404 = vmatpush.msra.mxu0 0.0
    %5405 = vmatpush.msra.mxu0 0.0
    %5406 = vmatpush.msra.mxu0 %v5196
    %5407 = vmatmul.f32.gmra.mxu0 %v5386
    %v5408 = vpop.f32.mrf.mxu0
    %v5409 = vadd.f32 %v5384, %v5408
    %5410 = vmatmul.f32.gmra.mxu0 %v5389
    %v5411 = vpop.f32.mrf.mxu0
    %v5412 = vadd.f32 %v5384, %v5411
    %5413 = vdwg.mxu0
    %v5414 = vadd.f32 %v5192, %v5409
    %v5415 = vadd.f32 %v5193, %v5412
    %v5416 = vsel %vm201, %v5414, 0.0
    %5417 = vadd.xlane.f32.xlu0 %v5416
    %v5418 = vpop.xlane.xlu0 %5417
    %v5419 = vsel %vm201, %v5415, 0.0
    %5420 = vadd.xlane.f32.xlu0 %v5419
    %v5421 = vpop.xlane.xlu0 %5420
    %v5422 = vmul.f32 %v5418, %v2004
    %v5423 = vmul.f32 %v5421, %v2004
    %v5424 = vmul.f32 %v5414, %v5414
    %v5425 = vmul.f32 %v5415, %v5415
    %v5426 = vsel %vm201, %v5424, 0.0
    %5427 = vadd.xlane.f32.xlu0 %v5426
    %v5428 = vpop.xlane.xlu0 %5427
    %v5429 = vsel %vm201, %v5425, 0.0
    %5430 = vadd.xlane.f32.xlu0 %v5429
    %v5431 = vpop.xlane.xlu0 %5430
    %v5432 = vmul.f32 %v5428, %v2004
    %v5433 = vmul.f32 %v5431, %v2004
    %v5434 = vmul.f32 %v5422, %v5422
    %v5435 = vmul.f32 %v5423, %v5423
    %v5436 = vsub.f32 %v5432, %v5434
    %v5437 = vsub.f32 %v5433, %v5435
    %v5438 = vsub.f32 %v5414, %v5422
    %v5439 = vsub.f32 %v5415, %v5423
    %v5440 = vadd.f32 %v5436, 1e-05
    %v5441 = vadd.f32 %v5437, 1e-05
    %v5442 = vrsqrt.pop %v5440
    %v5443 = vmul.f32 %v5442, %v5440
    %v5444 = vmul.f32 %v5443, %v5442
    %v5445 = vmul.f32 0.5, %v5444
    %v5446 = vsub.f32 1.5, %v5445
    %v5447 = vmul.f32 %v5442, %v5446
    %vm5448 = vweird.f32 %v5440
    %vm5449 = vweird.f32 %v5442
    %vm5450 = vmor %vm5448, %vm5449
    %v5451 = vsel %vm5450, %v5442, %v5447
    %v5452 = vrsqrt.pop %v5441
    %v5453 = vmul.f32 %v5452, %v5441
    %v5454 = vmul.f32 %v5453, %v5452
    %v5455 = vmul.f32 0.5, %v5454
    %v5456 = vsub.f32 1.5, %v5455
    %v5457 = vmul.f32 %v5452, %v5456
    %vm5458 = vweird.f32 %v5441
    %vm5459 = vweird.f32 %v5452
    %vm5460 = vmor %vm5458, %vm5459
    %v5461 = vsel %vm5460, %v5452, %v5457
    %v5462 = vmul.f32 %v5438, %v5451
    %v5463 = vmul.f32 %v5439, %v5461
    %v5464 = vperm.slane %v5198, 0
    %v5465 = vmul.f32 %v5462, %v5464
    %v5466 = vmul.f32 %v5463, %v5464
    %v5467 = vperm.slane %v5199, 0
    %v5468 = vadd.f32 %v5465, %v5467
    %v5469 = vadd.f32 %v5466, %v5467
    %v5470 = vld [vmem:[#allocation5 + $0x240] sm:$0xff]
    %v5471 = vld [vmem:[#allocation5 + $0x248] sm:$0x1]
    %v5472 = vperm.slane %v5471, 0
    %v5474 = vsel %vm201, %v5468, 0
    %v5477 = vsel %vm201, %v5469, 0
    %5479 = vmatpush.msra.mxu0 0.0
    %5480 = vmatpush.msra.mxu0 0.0
    %5481 = vmatpush.msra.mxu0 0.0
    %5482 = vmatpush.msra.mxu0 0.0
    %5483 = vmatpush.msra.mxu0 0.0
    %5484 = vmatpush.msra.mxu0 0.0
    %5485 = vmatpush.msra.mxu0 0.0
    %5486 = vmatpush.msra.mxu0 0.0
    %5487 = vmatpush.msra.mxu0 0.0
    %5488 = vmatpush.msra.mxu0 0.0
    %5489 = vmatpush.msra.mxu0 0.0
    %5490 = vmatpush.msra.mxu0 0.0
    %5491 = vmatpush.msra.mxu0 0.0
    %5492 = vmatpush.msra.mxu0 0.0
    %5493 = vmatpush.msra.mxu0 0.0
    %5494 = vmatpush.msra.mxu0 %v5470
    %5495 = vmatmul.f32.gmra.mxu0 %v5474
    %v5496 = vpop.f32.mrf.mxu0
    %v5497 = vadd.f32 %v5472, %v5496
    %5498 = vmatmul.f32.gmra.mxu0 %v5477
    %v5499 = vpop.f32.mrf.mxu0
    %v5500 = vadd.f32 %v5472, %v5499
    %5501 = vdwg.mxu0
    %v5502 = vmax.f32 %v5497, 0.0
    %v5503 = vmax.f32 %v5500, 0.0
    %v5504 = vld [vmem:[#allocation5 + $0x250] sm:$0xff]
    %v5505 = vld [vmem:[#allocation5 + $0x258] sm:$0xff]
    %v5506 = vld [vmem:[#allocation5 + $0x260] sm:$0x1]
    %v5507 = vld [vmem:[#allocation5 + $0x268] sm:$0xff]
    %v5508 = vld [vmem:[#allocation5 + $0x270] sm:$0xff]
    %v5509 = vld [vmem:[#allocation5 + $0x278] sm:$0x1]
    %v5510 = vld [vmem:[#allocation5 + $0x280] sm:$0x1]
    %v5511 = vld [vmem:[#allocation5 + $0x288] sm:$0x1]
    %v5512 = vperm.slane %v5506, 0
    %v5514 = vsel %vm834, %v5502, 0
    %v5517 = vsel %vm834, %v5503, 0
    %5519 = vmatpush.msra.mxu0 0.0
    %5520 = vmatpush.msra.mxu0 0.0
    %5521 = vmatpush.msra.mxu0 0.0
    %5522 = vmatpush.msra.mxu0 0.0
    %5523 = vmatpush.msra.mxu0 0.0
    %5524 = vmatpush.msra.mxu0 0.0
    %5525 = vmatpush.msra.mxu0 0.0
    %5526 = vmatpush.msra.mxu0 0.0
    %5527 = vmatpush.msra.mxu0 0.0
    %5528 = vmatpush.msra.mxu0 0.0
    %5529 = vmatpush.msra.mxu0 0.0
    %5530 = vmatpush.msra.mxu0 0.0
    %5531 = vmatpush.msra.mxu0 0.0
    %5532 = vmatpush.msra.mxu0 0.0
    %5533 = vmatpush.msra.mxu0 %v5505
    %5534 = vmatpush.msra.mxu0 %v5504
    %5535 = vmatmul.f32.gmra.mxu0 %v5514
    %v5536 = vpop.f32.mrf.mxu0
    %v5537 = vadd.f32 %v5512, %v5536
    %5538 = vmatmul.f32.gmra.mxu0 %v5517
    %v5539 = vpop.f32.mrf.mxu0
    %v5540 = vadd.f32 %v5512, %v5539
    %5541 = vdwg.mxu0
    %5544 = vrot.lane.b32.xlu0 %v5537, 104
    %v5545 = vpop.permute.xlu0 %5544
    %5546 = vrot.lane.b32.xlu0 %v5540, 104
    %v5547 = vpop.permute.xlu0 %5546
    %5548 = vrot.lane.b32.xlu0 %v5537, 120
    %v5549 = vpop.permute.xlu0 %5548
    %v5550 = vsel %vm201, %v5537, 0
    %v5552 = vsel %vm201, %v5549, 0
    %5554 = vmatpush.xpose.msra.mxu0 0.0
    %5555 = vmatpush.xpose.msra.mxu0 0.0
    %5556 = vmatpush.xpose.msra.mxu0 0.0
    %5557 = vmatpush.xpose.msra.mxu0 0.0
    %5558 = vmatpush.xpose.msra.mxu0 0.0
    %5559 = vmatpush.xpose.msra.mxu0 0.0
    %5560 = vmatpush.xpose.msra.mxu0 0.0
    %5561 = vmatpush.xpose.msra.mxu0 0.0
    %5562 = vmatpush.xpose.msra.mxu0 0.0
    %5563 = vmatpush.xpose.msra.mxu0 0.0
    %5564 = vmatpush.xpose.msra.mxu0 0.0
    %5565 = vmatpush.xpose.msra.mxu0 0.0
    %5566 = vmatpush.xpose.msra.mxu0 0.0
    %5567 = vmatpush.xpose.msra.mxu0 0.0
    %5568 = vmatpush.xpose.msra.mxu0 0.0
    %5569 = vmatpush.xpose.msra.mxu0 %v5552
    %5570 = vmatmul.f32.gmra.mxu0 %v5550
    %v5571 = vpop.f32.mrf.mxu0
    %v5572 = vadd.f32 0.0, %v5571
    %5573 = vdwg.mxu0
    %5574 = vrot.lane.b32.xlu0 %v5540, 120
    %v5575 = vpop.permute.xlu0 %5574
    %v5576 = vsel %vm201, %v5540, 0
    %v5578 = vsel %vm201, %v5575, 0
    %5580 = vmatpush.xpose.msra.mxu0 0.0
    %5581 = vmatpush.xpose.msra.mxu0 0.0
    %5582 = vmatpush.xpose.msra.mxu0 0.0
    %5583 = vmatpush.xpose.msra.mxu0 0.0
    %5584 = vmatpush.xpose.msra.mxu0 0.0
    %5585 = vmatpush.xpose.msra.mxu0 0.0
    %5586 = vmatpush.xpose.msra.mxu0 0.0
    %5587 = vmatpush.xpose.msra.mxu0 0.0
    %5588 = vmatpush.xpose.msra.mxu0 0.0
    %5589 = vmatpush.xpose.msra.mxu0 0.0
    %5590 = vmatpush.xpose.msra.mxu0 0.0
    %5591 = vmatpush.xpose.msra.mxu0 0.0
    %5592 = vmatpush.xpose.msra.mxu0 0.0
    %5593 = vmatpush.xpose.msra.mxu0 0.0
    %5594 = vmatpush.xpose.msra.mxu0 0.0
    %5595 = vmatpush.xpose.msra.mxu0 %v5578
    %5596 = vmatmul.f32.gmra.mxu0 %v5576
    %v5597 = vpop.f32.mrf.mxu0
    %v5598 = vadd.f32 0.0, %v5597
    %5599 = vdwg.mxu0
    %5600 = vrot.lane.b32.xlu0 %v5545, 120
    %v5601 = vpop.permute.xlu0 %5600
    %v5602 = vsel %vm201, %v5545, 0
    %v5604 = vsel %vm201, %v5601, 0
    %5606 = vmatpush.xpose.msra.mxu0 0.0
    %5607 = vmatpush.xpose.msra.mxu0 0.0
    %5608 = vmatpush.xpose.msra.mxu0 0.0
    %5609 = vmatpush.xpose.msra.mxu0 0.0
    %5610 = vmatpush.xpose.msra.mxu0 0.0
    %5611 = vmatpush.xpose.msra.mxu0 0.0
    %5612 = vmatpush.xpose.msra.mxu0 0.0
    %5613 = vmatpush.xpose.msra.mxu0 0.0
    %5614 = vmatpush.xpose.msra.mxu0 0.0
    %5615 = vmatpush.xpose.msra.mxu0 0.0
    %5616 = vmatpush.xpose.msra.mxu0 0.0
    %5617 = vmatpush.xpose.msra.mxu0 0.0
    %5618 = vmatpush.xpose.msra.mxu0 0.0
    %5619 = vmatpush.xpose.msra.mxu0 0.0
    %5620 = vmatpush.xpose.msra.mxu0 0.0
    %5621 = vmatpush.xpose.msra.mxu0 %v5604
    %5622 = vmatmul.f32.gmra.mxu0 %v5602
    %v5623 = vpop.f32.mrf.mxu0
    %v5624 = vadd.f32 0.0, %v5623
    %5625 = vdwg.mxu0
    %5626 = vrot.lane.b32.xlu0 %v5547, 120
    %v5627 = vpop.permute.xlu0 %5626
    %v5628 = vsel %vm201, %v5547, 0
    %v5630 = vsel %vm201, %v5627, 0
    %5632 = vmatpush.xpose.msra.mxu0 0.0
    %5633 = vmatpush.xpose.msra.mxu0 0.0
    %5634 = vmatpush.xpose.msra.mxu0 0.0
    %5635 = vmatpush.xpose.msra.mxu0 0.0
    %5636 = vmatpush.xpose.msra.mxu0 0.0
    %5637 = vmatpush.xpose.msra.mxu0 0.0
    %5638 = vmatpush.xpose.msra.mxu0 0.0
    %5639 = vmatpush.xpose.msra.mxu0 0.0
    %5640 = vmatpush.xpose.msra.mxu0 0.0
    %5641 = vmatpush.xpose.msra.mxu0 0.0
    %5642 = vmatpush.xpose.msra.mxu0 0.0
    %5643 = vmatpush.xpose.msra.mxu0 0.0
    %5644 = vmatpush.xpose.msra.mxu0 0.0
    %5645 = vmatpush.xpose.msra.mxu0 0.0
    %5646 = vmatpush.xpose.msra.mxu0 0.0
    %5647 = vmatpush.xpose.msra.mxu0 %v5630
    %5648 = vmatmul.f32.gmra.mxu0 %v5628
    %v5649 = vpop.f32.mrf.mxu0
    %v5650 = vadd.f32 0.0, %v5649
    %5651 = vdwg.mxu0
    %v5652 = vsel %vm201, %v5572, -inf
    %5653 = vmax.xlane.f32.xlu0 %v5652
    %v5654 = vpop.xlane.xlu0 %5653
    %v5655 = vsel %vm201, %v5598, -inf
    %5656 = vmax.xlane.f32.xlu0 %v5655
    %v5657 = vpop.xlane.xlu0 %5656
    %v5658 = vsel %vm201, %v5624, -inf
    %5659 = vmax.xlane.f32.xlu0 %v5658
    %v5660 = vpop.xlane.xlu0 %5659
    %v5661 = vsel %vm201, %v5650, -inf
    %5662 = vmax.xlane.f32.xlu0 %v5661
    %v5663 = vpop.xlane.xlu0 %5662
    %v5664 = vsub.f32 %v5572, %v5654
    %v5665 = vsub.f32 %v5598, %v5657
    %v5666 = vsub.f32 %v5624, %v5660
    %v5667 = vsub.f32 %v5650, %v5663
    %v5668 = vmul.f32 %v5664, 1.442695
    %v5669 = vpow.pop %v5668
    %v5670 = vmul.f32 %v5665, 1.442695
    %v5671 = vpow.pop %v5670
    %v5672 = vmul.f32 %v5666, 1.442695
    %v5673 = vpow.pop %v5672
    %v5674 = vmul.f32 %v5667, 1.442695
    %v5675 = vpow.pop %v5674
    %v5676 = vsel %vm201, %v5669, 0.0
    %5677 = vadd.xlane.f32.xlu0 %v5676
    %v5678 = vpop.xlane.xlu0 %5677
    %v5679 = vsel %vm201, %v5671, 0.0
    %5680 = vadd.xlane.f32.xlu0 %v5679
    %v5681 = vpop.xlane.xlu0 %5680
    %v5682 = vsel %vm201, %v5673, 0.0
    %5683 = vadd.xlane.f32.xlu0 %v5682
    %v5684 = vpop.xlane.xlu0 %5683
    %v5685 = vsel %vm201, %v5675, 0.0
    %5686 = vadd.xlane.f32.xlu0 %v5685
    %v5687 = vpop.xlane.xlu0 %5686
    %v5688 = vrcp.pop %v5678
    %v5689 = vmul.f32 %v5678, %v5688
    %v5690 = vsub.f32 1.0, %v5689
    %v5691 = vmul.f32 %v5688, %v5690
    %v5692 = vadd.f32 %v5688, %v5691
    %vm5693 = vweird.f32 %v5678
    %vm5694 = vweird.f32 %v5688
    %vm5695 = vmor %vm5693, %vm5694
    %v5696 = vsel %vm5695, %v5688, %v5692
    %v5697 = vand.u32 2147483647, %v5678
    %vm5698 = vcmp.eq.f32.partialorder %v5697, 8.507059e+37
    %v5699 = vand.u32 %v5678, 2147483648
    %v5700 = vor.u32 1.1754944e-38, %v5699
    %v5701 = vsel %vm5698, %v5700, %v5696
    %v5702 = vmul.f32 %v5669, %v5701
    %v5703 = vrcp.pop %v5681
    %v5704 = vmul.f32 %v5681, %v5703
    %v5705 = vsub.f32 1.0, %v5704
    %v5706 = vmul.f32 %v5703, %v5705
    %v5707 = vadd.f32 %v5703, %v5706
    %vm5708 = vweird.f32 %v5681
    %vm5709 = vweird.f32 %v5703
    %vm5710 = vmor %vm5708, %vm5709
    %v5711 = vsel %vm5710, %v5703, %v5707
    %v5712 = vand.u32 2147483647, %v5681
    %vm5713 = vcmp.eq.f32.partialorder %v5712, 8.507059e+37
    %v5714 = vand.u32 %v5681, 2147483648
    %v5715 = vor.u32 1.1754944e-38, %v5714
    %v5716 = vsel %vm5713, %v5715, %v5711
    %v5717 = vmul.f32 %v5671, %v5716
    %v5718 = vrcp.pop %v5684
    %v5719 = vmul.f32 %v5684, %v5718
    %v5720 = vsub.f32 1.0, %v5719
    %v5721 = vmul.f32 %v5718, %v5720
    %v5722 = vadd.f32 %v5718, %v5721
    %vm5723 = vweird.f32 %v5684
    %vm5724 = vweird.f32 %v5718
    %vm5725 = vmor %vm5723, %vm5724
    %v5726 = vsel %vm5725, %v5718, %v5722
    %v5727 = vand.u32 2147483647, %v5684
    %vm5728 = vcmp.eq.f32.partialorder %v5727, 8.507059e+37
    %v5729 = vand.u32 %v5684, 2147483648
    %v5730 = vor.u32 1.1754944e-38, %v5729
    %v5731 = vsel %vm5728, %v5730, %v5726
    %v5732 = vmul.f32 %v5673, %v5731
    %v5733 = vrcp.pop %v5687
    %v5734 = vmul.f32 %v5687, %v5733
    %v5735 = vsub.f32 1.0, %v5734
    %v5736 = vmul.f32 %v5733, %v5735
    %v5737 = vadd.f32 %v5733, %v5736
    %vm5738 = vweird.f32 %v5687
    %vm5739 = vweird.f32 %v5733
    %vm5740 = vmor %vm5738, %vm5739
    %v5741 = vsel %vm5740, %v5733, %v5737
    %v5742 = vand.u32 2147483647, %v5687
    %vm5743 = vcmp.eq.f32.partialorder %v5742, 8.507059e+37
    %v5744 = vand.u32 %v5687, 2147483648
    %v5745 = vor.u32 1.1754944e-38, %v5744
    %v5746 = vsel %vm5743, %v5745, %v5741
    %v5747 = vmul.f32 %v5675, %v5746
    %5748 = vrot.lane.b32.xlu0 %v5537, 112
    %v5749 = vpop.permute.xlu0 %5748
    %v5752 = vsel %vm201, %v5702, 0
    %5754 = vmatpush.msra.mxu0 0.0
    %5755 = vmatpush.msra.mxu0 0.0
    %5756 = vmatpush.msra.mxu0 0.0
    %5757 = vmatpush.msra.mxu0 0.0
    %5758 = vmatpush.msra.mxu0 0.0
    %5759 = vmatpush.msra.mxu0 0.0
    %5760 = vmatpush.msra.mxu0 0.0
    %5761 = vmatpush.msra.mxu0 0.0
    %5762 = vmatpush.msra.mxu0 0.0
    %5763 = vmatpush.msra.mxu0 0.0
    %5764 = vmatpush.msra.mxu0 0.0
    %5765 = vmatpush.msra.mxu0 0.0
    %5766 = vmatpush.msra.mxu0 0.0
    %5767 = vmatpush.msra.mxu0 0.0
    %5768 = vmatpush.msra.mxu0 0.0
    %5769 = vmatpush.msra.mxu0 %v5749
    %5770 = vmatmul.f32.gmra.mxu0 %v5752
    %v5771 = vpop.f32.mrf.mxu0
    %v5772 = vadd.f32 0.0, %v5771
    %5773 = vdwg.mxu0
    %5774 = vrot.lane.b32.xlu0 %v5540, 112
    %v5775 = vpop.permute.xlu0 %5774
    %v5778 = vsel %vm201, %v5717, 0
    %5780 = vmatpush.msra.mxu0 0.0
    %5781 = vmatpush.msra.mxu0 0.0
    %5782 = vmatpush.msra.mxu0 0.0
    %5783 = vmatpush.msra.mxu0 0.0
    %5784 = vmatpush.msra.mxu0 0.0
    %5785 = vmatpush.msra.mxu0 0.0
    %5786 = vmatpush.msra.mxu0 0.0
    %5787 = vmatpush.msra.mxu0 0.0
    %5788 = vmatpush.msra.mxu0 0.0
    %5789 = vmatpush.msra.mxu0 0.0
    %5790 = vmatpush.msra.mxu0 0.0
    %5791 = vmatpush.msra.mxu0 0.0
    %5792 = vmatpush.msra.mxu0 0.0
    %5793 = vmatpush.msra.mxu0 0.0
    %5794 = vmatpush.msra.mxu0 0.0
    %5795 = vmatpush.msra.mxu0 %v5775
    %5796 = vmatmul.f32.gmra.mxu0 %v5778
    %v5797 = vpop.f32.mrf.mxu0
    %v5798 = vadd.f32 0.0, %v5797
    %5799 = vdwg.mxu0
    %5800 = vrot.lane.b32.xlu0 %v5545, 112
    %v5801 = vpop.permute.xlu0 %5800
    %v5804 = vsel %vm201, %v5732, 0
    %5806 = vmatpush.msra.mxu0 0.0
    %5807 = vmatpush.msra.mxu0 0.0
    %5808 = vmatpush.msra.mxu0 0.0
    %5809 = vmatpush.msra.mxu0 0.0
    %5810 = vmatpush.msra.mxu0 0.0
    %5811 = vmatpush.msra.mxu0 0.0
    %5812 = vmatpush.msra.mxu0 0.0
    %5813 = vmatpush.msra.mxu0 0.0
    %5814 = vmatpush.msra.mxu0 0.0
    %5815 = vmatpush.msra.mxu0 0.0
    %5816 = vmatpush.msra.mxu0 0.0
    %5817 = vmatpush.msra.mxu0 0.0
    %5818 = vmatpush.msra.mxu0 0.0
    %5819 = vmatpush.msra.mxu0 0.0
    %5820 = vmatpush.msra.mxu0 0.0
    %5821 = vmatpush.msra.mxu0 %v5801
    %5822 = vmatmul.f32.gmra.mxu0 %v5804
    %v5823 = vpop.f32.mrf.mxu0
    %v5824 = vadd.f32 0.0, %v5823
    %5825 = vdwg.mxu0
    %5826 = vrot.lane.b32.xlu0 %v5547, 112
    %v5827 = vpop.permute.xlu0 %5826
    %v5830 = vsel %vm201, %v5747, 0
    %5832 = vmatpush.msra.mxu0 0.0
    %5833 = vmatpush.msra.mxu0 0.0
    %5834 = vmatpush.msra.mxu0 0.0
    %5835 = vmatpush.msra.mxu0 0.0
    %5836 = vmatpush.msra.mxu0 0.0
    %5837 = vmatpush.msra.mxu0 0.0
    %5838 = vmatpush.msra.mxu0 0.0
    %5839 = vmatpush.msra.mxu0 0.0
    %5840 = vmatpush.msra.mxu0 0.0
    %5841 = vmatpush.msra.mxu0 0.0
    %5842 = vmatpush.msra.mxu0 0.0
    %5843 = vmatpush.msra.mxu0 0.0
    %5844 = vmatpush.msra.mxu0 0.0
    %5845 = vmatpush.msra.mxu0 0.0
    %5846 = vmatpush.msra.mxu0 0.0
    %5847 = vmatpush.msra.mxu0 %v5827
    %5848 = vmatmul.f32.gmra.mxu0 %v5830
    %v5849 = vpop.f32.mrf.mxu0
    %v5850 = vadd.f32 0.0, %v5849
    %5851 = vdwg.mxu0
    %5854 = vrot.lane.b32.xlu0 %v5824, 8
    %v5855 = vpop.permute.xlu0 %5854
    %5856 = vrot.lane.b32.xlu0 %v5850, 8
    %v5857 = vpop.permute.xlu0 %5856
    %v5860 = vsel %vm201, %v5772, %v5855
    %v5861 = vsel %vm201, %v5798, %v5857
    %v5862 = vperm.slane %v5509, 0
    %v5864 = vsel %vm834, %v5860, 0
    %v5867 = vsel %vm834, %v5861, 0
    %5869 = vmatpush.msra.mxu0 0.0
    %5870 = vmatpush.msra.mxu0 0.0
    %5871 = vmatpush.msra.mxu0 0.0
    %5872 = vmatpush.msra.mxu0 0.0
    %5873 = vmatpush.msra.mxu0 0.0
    %5874 = vmatpush.msra.mxu0 0.0
    %5875 = vmatpush.msra.mxu0 0.0
    %5876 = vmatpush.msra.mxu0 0.0
    %5877 = vmatpush.msra.mxu0 0.0
    %5878 = vmatpush.msra.mxu0 0.0
    %5879 = vmatpush.msra.mxu0 0.0
    %5880 = vmatpush.msra.mxu0 0.0
    %5881 = vmatpush.msra.mxu0 0.0
    %5882 = vmatpush.msra.mxu0 0.0
    %5883 = vmatpush.msra.mxu0 %v5508
    %5884 = vmatpush.msra.mxu0 %v5507
    %5885 = vmatmul.f32.gmra.mxu0 %v5864
    %v5886 = vpop.f32.mrf.mxu0
    %v5887 = vadd.f32 %v5862, %v5886
    %5888 = vmatmul.f32.gmra.mxu0 %v5867
    %v5889 = vpop.f32.mrf.mxu0
    %v5890 = vadd.f32 %v5862, %v5889
    %5891 = vdwg.mxu0
    %v5892 = vadd.f32 %v5502, %v5887
    %v5893 = vadd.f32 %v5503, %v5890
    %v5894 = vsel %vm834, %v5892, 0.0
    %5895 = vadd.xlane.f32.xlu0 %v5894
    %v5896 = vpop.xlane.xlu0 %5895
    %v5897 = vsel %vm834, %v5893, 0.0
    %5898 = vadd.xlane.f32.xlu0 %v5897
    %v5899 = vpop.xlane.xlu0 %5898
    %v5900 = vmul.f32 %v5896, %v1686
    %v5901 = vmul.f32 %v5899, %v1686
    %v5902 = vmul.f32 %v5892, %v5892
    %v5903 = vmul.f32 %v5893, %v5893
    %v5904 = vsel %vm834, %v5902, 0.0
    %5905 = vadd.xlane.f32.xlu0 %v5904
    %v5906 = vpop.xlane.xlu0 %5905
    %v5907 = vsel %vm834, %v5903, 0.0
    %5908 = vadd.xlane.f32.xlu0 %v5907
    %v5909 = vpop.xlane.xlu0 %5908
    %v5910 = vmul.f32 %v5906, %v1686
    %v5911 = vmul.f32 %v5909, %v1686
    %v5912 = vmul.f32 %v5900, %v5900
    %v5913 = vmul.f32 %v5901, %v5901
    %v5914 = vsub.f32 %v5910, %v5912
    %v5915 = vsub.f32 %v5911, %v5913
    %v5916 = vsub.f32 %v5892, %v5900
    %v5917 = vsub.f32 %v5893, %v5901
    %v5918 = vadd.f32 %v5914, 1e-05
    %v5919 = vadd.f32 %v5915, 1e-05
    %v5920 = vrsqrt.pop %v5918
    %v5921 = vmul.f32 %v5920, %v5918
    %v5922 = vmul.f32 %v5921, %v5920
    %v5923 = vmul.f32 0.5, %v5922
    %v5924 = vsub.f32 1.5, %v5923
    %v5925 = vmul.f32 %v5920, %v5924
    %vm5926 = vweird.f32 %v5918
    %vm5927 = vweird.f32 %v5920
    %vm5928 = vmor %vm5926, %vm5927
    %v5929 = vsel %vm5928, %v5920, %v5925
    %v5930 = vrsqrt.pop %v5919
    %v5931 = vmul.f32 %v5930, %v5919
    %v5932 = vmul.f32 %v5931, %v5930
    %v5933 = vmul.f32 0.5, %v5932
    %v5934 = vsub.f32 1.5, %v5933
    %v5935 = vmul.f32 %v5930, %v5934
    %vm5936 = vweird.f32 %v5919
    %vm5937 = vweird.f32 %v5930
    %vm5938 = vmor %vm5936, %vm5937
    %v5939 = vsel %vm5938, %v5930, %v5935
    %v5940 = vmul.f32 %v5916, %v5929
    %v5941 = vmul.f32 %v5917, %v5939
    %v5942 = vperm.slane %v5510, 0
    %v5943 = vmul.f32 %v5940, %v5942
    %v5944 = vmul.f32 %v5941, %v5942
    %v5945 = vperm.slane %v5511, 0
    %v5946 = vadd.f32 %v5943, %v5945
    %v5947 = vadd.f32 %v5944, %v5945
    %v5948 = vld [vmem:[#allocation5 + $0x290] sm:$0xff]
    %v5949 = vld [vmem:[#allocation5 + $0x298] sm:$0xff]
    %v5950 = vld [vmem:[#allocation5 + $0x2a0] sm:$0x1]
    %v5951 = vperm.slane %v5950, 0
    %v5953 = vsel %vm834, %v5946, 0
    %v5956 = vsel %vm834, %v5947, 0
    %5958 = vmatpush.msra.mxu0 0.0
    %5959 = vmatpush.msra.mxu0 0.0
    %5960 = vmatpush.msra.mxu0 0.0
    %5961 = vmatpush.msra.mxu0 0.0
    %5962 = vmatpush.msra.mxu0 0.0
    %5963 = vmatpush.msra.mxu0 0.0
    %5964 = vmatpush.msra.mxu0 0.0
    %5965 = vmatpush.msra.mxu0 0.0
    %5966 = vmatpush.msra.mxu0 0.0
    %5967 = vmatpush.msra.mxu0 0.0
    %5968 = vmatpush.msra.mxu0 0.0
    %5969 = vmatpush.msra.mxu0 0.0
    %5970 = vmatpush.msra.mxu0 0.0
    %5971 = vmatpush.msra.mxu0 0.0
    %5972 = vmatpush.msra.mxu0 %v5949
    %5973 = vmatpush.msra.mxu0 %v5948
    %5974 = vmatmul.f32.gmra.mxu0 %v5953
    %v5975 = vpop.f32.mrf.mxu0
    %v5976 = vadd.f32 %v5951, %v5975
    %5977 = vmatmul.f32.gmra.mxu0 %v5956
    %v5978 = vpop.f32.mrf.mxu0
    %v5979 = vadd.f32 %v5951, %v5978
    %5980 = vdwg.mxu0
    %v5981 = vmax.f32 %v5976, 0.0
    %v5982 = vmax.f32 %v5979, 0.0
    %v5983 = vld [vmem:[#allocation5 + $0x2a8] sm:$0xff]
    %v5984 = vld [vmem:[#allocation5 + $0x2b0] sm:$0xff]
    %v5985 = vld [vmem:[#allocation5 + $0x2b8] sm:$0xff]
    %v5986 = vld [vmem:[#allocation5 + $0x2c0] sm:$0xff]
    %v5987 = vld [vmem:[#allocation5 + $0x2c8] sm:$0x1]
    %v5988 = vld [vmem:[#allocation5 + $0x2d0] sm:$0xff]
    %v5989 = vld [vmem:[#allocation5 + $0x2d8] sm:$0xff]
    %v5990 = vld [vmem:[#allocation5 + $0x2e0] sm:$0xff]
    %v5991 = vld [vmem:[#allocation5 + $0x2e8] sm:$0xff]
    %v5992 = vld [vmem:[#allocation5 + $0x2f0] sm:$0x1]
    %v5993 = vld [vmem:[#allocation5 + $0x2f8] sm:$0x1]
    %v5994 = vld [vmem:[#allocation5 + $0x300] sm:$0x1]
    %v5995 = vperm.slane %v5987, 0
    %v5997 = vsel %vm157, %v5981, 0
    %v6000 = vsel %vm157, %v5982, 0
    %6002 = vmatpush.msra.mxu0 0.0
    %6003 = vmatpush.msra.mxu0 0.0
    %6004 = vmatpush.msra.mxu0 0.0
    %6005 = vmatpush.msra.mxu0 0.0
    %6006 = vmatpush.msra.mxu0 0.0
    %6007 = vmatpush.msra.mxu0 0.0
    %6008 = vmatpush.msra.mxu0 0.0
    %6009 = vmatpush.msra.mxu0 0.0
    %6010 = vmatpush.msra.mxu0 0.0
    %6011 = vmatpush.msra.mxu0 0.0
    %6012 = vmatpush.msra.mxu0 0.0
    %6013 = vmatpush.msra.mxu0 0.0
    %6014 = vmatpush.msra.mxu0 %v5986
    %6015 = vmatpush.msra.mxu0 %v5985
    %6016 = vmatpush.msra.mxu0 %v5984
    %6017 = vmatpush.msra.mxu0 %v5983
    %6018 = vmatmul.f32.gmra.mxu0 %v5997
    %v6019 = vpop.f32.mrf.mxu0
    %v6020 = vadd.f32 %v5995, %v6019
    %6021 = vmatmul.f32.gmra.mxu0 %v6000
    %v6022 = vpop.f32.mrf.mxu0
    %v6023 = vadd.f32 %v5995, %v6022
    %6024 = vdwg.mxu0
    %6027 = vrot.lane.b32.xlu0 %v6020, 104
    %v6028 = vpop.permute.xlu0 %6027
    %6029 = vrot.lane.b32.xlu0 %v6023, 104
    %v6030 = vpop.permute.xlu0 %6029
    %6031 = vrot.lane.b32.xlu0 %v6020, 80
    %v6032 = vpop.permute.xlu0 %6031
    %6033 = vrot.lane.b32.xlu0 %v6023, 80
    %v6034 = vpop.permute.xlu0 %6033
    %6035 = vrot.lane.b32.xlu0 %v6020, 56
    %v6036 = vpop.permute.xlu0 %6035
    %6037 = vrot.lane.b32.xlu0 %v6023, 56
    %v6038 = vpop.permute.xlu0 %6037
    %6039 = vrot.lane.b32.xlu0 %v6020, 120
    %v6040 = vpop.permute.xlu0 %6039
    %v6041 = vsel %vm201, %v6020, 0
    %v6043 = vsel %vm201, %v6040, 0
    %6045 = vmatpush.xpose.msra.mxu0 0.0
    %6046 = vmatpush.xpose.msra.mxu0 0.0
    %6047 = vmatpush.xpose.msra.mxu0 0.0
    %6048 = vmatpush.xpose.msra.mxu0 0.0
    %6049 = vmatpush.xpose.msra.mxu0 0.0
    %6050 = vmatpush.xpose.msra.mxu0 0.0
    %6051 = vmatpush.xpose.msra.mxu0 0.0
    %6052 = vmatpush.xpose.msra.mxu0 0.0
    %6053 = vmatpush.xpose.msra.mxu0 0.0
    %6054 = vmatpush.xpose.msra.mxu0 0.0
    %6055 = vmatpush.xpose.msra.mxu0 0.0
    %6056 = vmatpush.xpose.msra.mxu0 0.0
    %6057 = vmatpush.xpose.msra.mxu0 0.0
    %6058 = vmatpush.xpose.msra.mxu0 0.0
    %6059 = vmatpush.xpose.msra.mxu0 0.0
    %6060 = vmatpush.xpose.msra.mxu0 %v6043
    %6061 = vmatmul.f32.gmra.mxu0 %v6041
    %v6062 = vpop.f32.mrf.mxu0
    %v6063 = vadd.f32 0.0, %v6062
    %6064 = vdwg.mxu0
    %6065 = vrot.lane.b32.xlu0 %v6023, 120
    %v6066 = vpop.permute.xlu0 %6065
    %v6067 = vsel %vm201, %v6023, 0
    %v6069 = vsel %vm201, %v6066, 0
    %6071 = vmatpush.xpose.msra.mxu0 0.0
    %6072 = vmatpush.xpose.msra.mxu0 0.0
    %6073 = vmatpush.xpose.msra.mxu0 0.0
    %6074 = vmatpush.xpose.msra.mxu0 0.0
    %6075 = vmatpush.xpose.msra.mxu0 0.0
    %6076 = vmatpush.xpose.msra.mxu0 0.0
    %6077 = vmatpush.xpose.msra.mxu0 0.0
    %6078 = vmatpush.xpose.msra.mxu0 0.0
    %6079 = vmatpush.xpose.msra.mxu0 0.0
    %6080 = vmatpush.xpose.msra.mxu0 0.0
    %6081 = vmatpush.xpose.msra.mxu0 0.0
    %6082 = vmatpush.xpose.msra.mxu0 0.0
    %6083 = vmatpush.xpose.msra.mxu0 0.0
    %6084 = vmatpush.xpose.msra.mxu0 0.0
    %6085 = vmatpush.xpose.msra.mxu0 0.0
    %6086 = vmatpush.xpose.msra.mxu0 %v6069
    %6087 = vmatmul.f32.gmra.mxu0 %v6067
    %v6088 = vpop.f32.mrf.mxu0
    %v6089 = vadd.f32 0.0, %v6088
    %6090 = vdwg.mxu0
    %6091 = vrot.lane.b32.xlu0 %v6028, 120
    %v6092 = vpop.permute.xlu0 %6091
    %v6093 = vsel %vm201, %v6028, 0
    %v6095 = vsel %vm201, %v6092, 0
    %6097 = vmatpush.xpose.msra.mxu0 0.0
    %6098 = vmatpush.xpose.msra.mxu0 0.0
    %6099 = vmatpush.xpose.msra.mxu0 0.0
    %6100 = vmatpush.xpose.msra.mxu0 0.0
    %6101 = vmatpush.xpose.msra.mxu0 0.0
    %6102 = vmatpush.xpose.msra.mxu0 0.0
    %6103 = vmatpush.xpose.msra.mxu0 0.0
    %6104 = vmatpush.xpose.msra.mxu0 0.0
    %6105 = vmatpush.xpose.msra.mxu0 0.0
    %6106 = vmatpush.xpose.msra.mxu0 0.0
    %6107 = vmatpush.xpose.msra.mxu0 0.0
    %6108 = vmatpush.xpose.msra.mxu0 0.0
    %6109 = vmatpush.xpose.msra.mxu0 0.0
    %6110 = vmatpush.xpose.msra.mxu0 0.0
    %6111 = vmatpush.xpose.msra.mxu0 0.0
    %6112 = vmatpush.xpose.msra.mxu0 %v6095
    %6113 = vmatmul.f32.gmra.mxu0 %v6093
    %v6114 = vpop.f32.mrf.mxu0
    %v6115 = vadd.f32 0.0, %v6114
    %6116 = vdwg.mxu0
    %6117 = vrot.lane.b32.xlu0 %v6030, 120
    %v6118 = vpop.permute.xlu0 %6117
    %v6119 = vsel %vm201, %v6030, 0
    %v6121 = vsel %vm201, %v6118, 0
    %6123 = vmatpush.xpose.msra.mxu0 0.0
    %6124 = vmatpush.xpose.msra.mxu0 0.0
    %6125 = vmatpush.xpose.msra.mxu0 0.0
    %6126 = vmatpush.xpose.msra.mxu0 0.0
    %6127 = vmatpush.xpose.msra.mxu0 0.0
    %6128 = vmatpush.xpose.msra.mxu0 0.0
    %6129 = vmatpush.xpose.msra.mxu0 0.0
    %6130 = vmatpush.xpose.msra.mxu0 0.0
    %6131 = vmatpush.xpose.msra.mxu0 0.0
    %6132 = vmatpush.xpose.msra.mxu0 0.0
    %6133 = vmatpush.xpose.msra.mxu0 0.0
    %6134 = vmatpush.xpose.msra.mxu0 0.0
    %6135 = vmatpush.xpose.msra.mxu0 0.0
    %6136 = vmatpush.xpose.msra.mxu0 0.0
    %6137 = vmatpush.xpose.msra.mxu0 0.0
    %6138 = vmatpush.xpose.msra.mxu0 %v6121
    %6139 = vmatmul.f32.gmra.mxu0 %v6119
    %v6140 = vpop.f32.mrf.mxu0
    %v6141 = vadd.f32 0.0, %v6140
    %6142 = vdwg.mxu0
    %6143 = vrot.lane.b32.xlu0 %v6032, 120
    %v6144 = vpop.permute.xlu0 %6143
    %v6145 = vsel %vm201, %v6032, 0
    %v6147 = vsel %vm201, %v6144, 0
    %6149 = vmatpush.xpose.msra.mxu0 0.0
    %6150 = vmatpush.xpose.msra.mxu0 0.0
    %6151 = vmatpush.xpose.msra.mxu0 0.0
    %6152 = vmatpush.xpose.msra.mxu0 0.0
    %6153 = vmatpush.xpose.msra.mxu0 0.0
    %6154 = vmatpush.xpose.msra.mxu0 0.0
    %6155 = vmatpush.xpose.msra.mxu0 0.0
    %6156 = vmatpush.xpose.msra.mxu0 0.0
    %6157 = vmatpush.xpose.msra.mxu0 0.0
    %6158 = vmatpush.xpose.msra.mxu0 0.0
    %6159 = vmatpush.xpose.msra.mxu0 0.0
    %6160 = vmatpush.xpose.msra.mxu0 0.0
    %6161 = vmatpush.xpose.msra.mxu0 0.0
    %6162 = vmatpush.xpose.msra.mxu0 0.0
    %6163 = vmatpush.xpose.msra.mxu0 0.0
    %6164 = vmatpush.xpose.msra.mxu0 %v6147
    %6165 = vmatmul.f32.gmra.mxu0 %v6145
    %v6166 = vpop.f32.mrf.mxu0
    %v6167 = vadd.f32 0.0, %v6166
    %6168 = vdwg.mxu0
    %6169 = vrot.lane.b32.xlu0 %v6034, 120
    %v6170 = vpop.permute.xlu0 %6169
    %v6171 = vsel %vm201, %v6034, 0
    %v6173 = vsel %vm201, %v6170, 0
    %6175 = vmatpush.xpose.msra.mxu0 0.0
    %6176 = vmatpush.xpose.msra.mxu0 0.0
    %6177 = vmatpush.xpose.msra.mxu0 0.0
    %6178 = vmatpush.xpose.msra.mxu0 0.0
    %6179 = vmatpush.xpose.msra.mxu0 0.0
    %6180 = vmatpush.xpose.msra.mxu0 0.0
    %6181 = vmatpush.xpose.msra.mxu0 0.0
    %6182 = vmatpush.xpose.msra.mxu0 0.0
    %6183 = vmatpush.xpose.msra.mxu0 0.0
    %6184 = vmatpush.xpose.msra.mxu0 0.0
    %6185 = vmatpush.xpose.msra.mxu0 0.0
    %6186 = vmatpush.xpose.msra.mxu0 0.0
    %6187 = vmatpush.xpose.msra.mxu0 0.0
    %6188 = vmatpush.xpose.msra.mxu0 0.0
    %6189 = vmatpush.xpose.msra.mxu0 0.0
    %6190 = vmatpush.xpose.msra.mxu0 %v6173
    %6191 = vmatmul.f32.gmra.mxu0 %v6171
    %v6192 = vpop.f32.mrf.mxu0
    %v6193 = vadd.f32 0.0, %v6192
    %6194 = vdwg.mxu0
    %6195 = vrot.lane.b32.xlu0 %v6036, 120
    %v6196 = vpop.permute.xlu0 %6195
    %v6197 = vsel %vm201, %v6036, 0
    %v6199 = vsel %vm201, %v6196, 0
    %6201 = vmatpush.xpose.msra.mxu0 0.0
    %6202 = vmatpush.xpose.msra.mxu0 0.0
    %6203 = vmatpush.xpose.msra.mxu0 0.0
    %6204 = vmatpush.xpose.msra.mxu0 0.0
    %6205 = vmatpush.xpose.msra.mxu0 0.0
    %6206 = vmatpush.xpose.msra.mxu0 0.0
    %6207 = vmatpush.xpose.msra.mxu0 0.0
    %6208 = vmatpush.xpose.msra.mxu0 0.0
    %6209 = vmatpush.xpose.msra.mxu0 0.0
    %6210 = vmatpush.xpose.msra.mxu0 0.0
    %6211 = vmatpush.xpose.msra.mxu0 0.0
    %6212 = vmatpush.xpose.msra.mxu0 0.0
    %6213 = vmatpush.xpose.msra.mxu0 0.0
    %6214 = vmatpush.xpose.msra.mxu0 0.0
    %6215 = vmatpush.xpose.msra.mxu0 0.0
    %6216 = vmatpush.xpose.msra.mxu0 %v6199
    %6217 = vmatmul.f32.gmra.mxu0 %v6197
    %v6218 = vpop.f32.mrf.mxu0
    %v6219 = vadd.f32 0.0, %v6218
    %6220 = vdwg.mxu0
    %6221 = vrot.lane.b32.xlu0 %v6038, 120
    %v6222 = vpop.permute.xlu0 %6221
    %v6223 = vsel %vm201, %v6038, 0
    %v6225 = vsel %vm201, %v6222, 0
    %6227 = vmatpush.xpose.msra.mxu0 0.0
    %6228 = vmatpush.xpose.msra.mxu0 0.0
    %6229 = vmatpush.xpose.msra.mxu0 0.0
    %6230 = vmatpush.xpose.msra.mxu0 0.0
    %6231 = vmatpush.xpose.msra.mxu0 0.0
    %6232 = vmatpush.xpose.msra.mxu0 0.0
    %6233 = vmatpush.xpose.msra.mxu0 0.0
    %6234 = vmatpush.xpose.msra.mxu0 0.0
    %6235 = vmatpush.xpose.msra.mxu0 0.0
    %6236 = vmatpush.xpose.msra.mxu0 0.0
    %6237 = vmatpush.xpose.msra.mxu0 0.0
    %6238 = vmatpush.xpose.msra.mxu0 0.0
    %6239 = vmatpush.xpose.msra.mxu0 0.0
    %6240 = vmatpush.xpose.msra.mxu0 0.0
    %6241 = vmatpush.xpose.msra.mxu0 0.0
    %6242 = vmatpush.xpose.msra.mxu0 %v6225
    %6243 = vmatmul.f32.gmra.mxu0 %v6223
    %v6244 = vpop.f32.mrf.mxu0
    %v6245 = vadd.f32 0.0, %v6244
    %6246 = vdwg.mxu0
    %v6247 = vsel %vm201, %v6063, -inf
    %6248 = vmax.xlane.f32.xlu0 %v6247
    %v6249 = vpop.xlane.xlu0 %6248
    %v6250 = vsel %vm201, %v6089, -inf
    %6251 = vmax.xlane.f32.xlu0 %v6250
    %v6252 = vpop.xlane.xlu0 %6251
    %v6253 = vsel %vm201, %v6115, -inf
    %6254 = vmax.xlane.f32.xlu0 %v6253
    %v6255 = vpop.xlane.xlu0 %6254
    %v6256 = vsel %vm201, %v6141, -inf
    %6257 = vmax.xlane.f32.xlu0 %v6256
    %v6258 = vpop.xlane.xlu0 %6257
    %v6259 = vsel %vm201, %v6167, -inf
    %6260 = vmax.xlane.f32.xlu0 %v6259
    %v6261 = vpop.xlane.xlu0 %6260
    %v6262 = vsel %vm201, %v6193, -inf
    %6263 = vmax.xlane.f32.xlu0 %v6262
    %v6264 = vpop.xlane.xlu0 %6263
    %v6265 = vsel %vm201, %v6219, -inf
    %6266 = vmax.xlane.f32.xlu0 %v6265
    %v6267 = vpop.xlane.xlu0 %6266
    %v6268 = vsel %vm201, %v6245, -inf
    %6269 = vmax.xlane.f32.xlu0 %v6268
    %v6270 = vpop.xlane.xlu0 %6269
    %v6271 = vsub.f32 %v6063, %v6249
    %v6272 = vsub.f32 %v6089, %v6252
    %v6273 = vsub.f32 %v6115, %v6255
    %v6274 = vsub.f32 %v6141, %v6258
    %v6275 = vsub.f32 %v6167, %v6261
    %v6276 = vsub.f32 %v6193, %v6264
    %v6277 = vsub.f32 %v6219, %v6267
    %v6278 = vsub.f32 %v6245, %v6270
    %v6279 = vmul.f32 %v6271, 1.442695
    %v6280 = vpow.pop %v6279
    %v6281 = vmul.f32 %v6272, 1.442695
    %v6282 = vpow.pop %v6281
    %v6283 = vmul.f32 %v6273, 1.442695
    %v6284 = vpow.pop %v6283
    %v6285 = vmul.f32 %v6274, 1.442695
    %v6286 = vpow.pop %v6285
    %v6287 = vmul.f32 %v6275, 1.442695
    %v6288 = vpow.pop %v6287
    %v6289 = vmul.f32 %v6276, 1.442695
    %v6290 = vpow.pop %v6289
    %v6291 = vmul.f32 %v6277, 1.442695
    %v6292 = vpow.pop %v6291
    %v6293 = vmul.f32 %v6278, 1.442695
    %v6294 = vpow.pop %v6293
    %v6295 = vsel %vm201, %v6280, 0.0
    %6296 = vadd.xlane.f32.xlu0 %v6295
    %v6297 = vpop.xlane.xlu0 %6296
    %v6298 = vsel %vm201, %v6282, 0.0
    %6299 = vadd.xlane.f32.xlu0 %v6298
    %v6300 = vpop.xlane.xlu0 %6299
    %v6301 = vsel %vm201, %v6284, 0.0
    %6302 = vadd.xlane.f32.xlu0 %v6301
    %v6303 = vpop.xlane.xlu0 %6302
    %v6304 = vsel %vm201, %v6286, 0.0
    %6305 = vadd.xlane.f32.xlu0 %v6304
    %v6306 = vpop.xlane.xlu0 %6305
    %v6307 = vsel %vm201, %v6288, 0.0
    %6308 = vadd.xlane.f32.xlu0 %v6307
    %v6309 = vpop.xlane.xlu0 %6308
    %v6310 = vsel %vm201, %v6290, 0.0
    %6311 = vadd.xlane.f32.xlu0 %v6310
    %v6312 = vpop.xlane.xlu0 %6311
    %v6313 = vsel %vm201, %v6292, 0.0
    %6314 = vadd.xlane.f32.xlu0 %v6313
    %v6315 = vpop.xlane.xlu0 %6314
    %v6316 = vsel %vm201, %v6294, 0.0
    %6317 = vadd.xlane.f32.xlu0 %v6316
    %v6318 = vpop.xlane.xlu0 %6317
    %v6319 = vrcp.pop %v6297
    %v6320 = vmul.f32 %v6297, %v6319
    %v6321 = vsub.f32 1.0, %v6320
    %v6322 = vmul.f32 %v6319, %v6321
    %v6323 = vadd.f32 %v6319, %v6322
    %vm6324 = vweird.f32 %v6297
    %vm6325 = vweird.f32 %v6319
    %vm6326 = vmor %vm6324, %vm6325
    %v6327 = vsel %vm6326, %v6319, %v6323
    %v6328 = vand.u32 2147483647, %v6297
    %vm6329 = vcmp.eq.f32.partialorder %v6328, 8.507059e+37
    %v6330 = vand.u32 %v6297, 2147483648
    %v6331 = vor.u32 1.1754944e-38, %v6330
    %v6332 = vsel %vm6329, %v6331, %v6327
    %v6333 = vmul.f32 %v6280, %v6332
    %v6334 = vrcp.pop %v6300
    %v6335 = vmul.f32 %v6300, %v6334
    %v6336 = vsub.f32 1.0, %v6335
    %v6337 = vmul.f32 %v6334, %v6336
    %v6338 = vadd.f32 %v6334, %v6337
    %vm6339 = vweird.f32 %v6300
    %vm6340 = vweird.f32 %v6334
    %vm6341 = vmor %vm6339, %vm6340
    %v6342 = vsel %vm6341, %v6334, %v6338
    %v6343 = vand.u32 2147483647, %v6300
    %vm6344 = vcmp.eq.f32.partialorder %v6343, 8.507059e+37
    %v6345 = vand.u32 %v6300, 2147483648
    %v6346 = vor.u32 1.1754944e-38, %v6345
    %v6347 = vsel %vm6344, %v6346, %v6342
    %v6348 = vmul.f32 %v6282, %v6347
    %v6349 = vrcp.pop %v6303
    %v6350 = vmul.f32 %v6303, %v6349
    %v6351 = vsub.f32 1.0, %v6350
    %v6352 = vmul.f32 %v6349, %v6351
    %v6353 = vadd.f32 %v6349, %v6352
    %vm6354 = vweird.f32 %v6303
    %vm6355 = vweird.f32 %v6349
    %vm6356 = vmor %vm6354, %vm6355
    %v6357 = vsel %vm6356, %v6349, %v6353
    %v6358 = vand.u32 2147483647, %v6303
    %vm6359 = vcmp.eq.f32.partialorder %v6358, 8.507059e+37
    %v6360 = vand.u32 %v6303, 2147483648
    %v6361 = vor.u32 1.1754944e-38, %v6360
    %v6362 = vsel %vm6359, %v6361, %v6357
    %v6363 = vmul.f32 %v6284, %v6362
    %v6364 = vrcp.pop %v6306
    %v6365 = vmul.f32 %v6306, %v6364
    %v6366 = vsub.f32 1.0, %v6365
    %v6367 = vmul.f32 %v6364, %v6366
    %v6368 = vadd.f32 %v6364, %v6367
    %vm6369 = vweird.f32 %v6306
    %vm6370 = vweird.f32 %v6364
    %vm6371 = vmor %vm6369, %vm6370
    %v6372 = vsel %vm6371, %v6364, %v6368
    %v6373 = vand.u32 2147483647, %v6306
    %vm6374 = vcmp.eq.f32.partialorder %v6373, 8.507059e+37
    %v6375 = vand.u32 %v6306, 2147483648
    %v6376 = vor.u32 1.1754944e-38, %v6375
    %v6377 = vsel %vm6374, %v6376, %v6372
    %v6378 = vmul.f32 %v6286, %v6377
    %v6379 = vrcp.pop %v6309
    %v6380 = vmul.f32 %v6309, %v6379
    %v6381 = vsub.f32 1.0, %v6380
    %v6382 = vmul.f32 %v6379, %v6381
    %v6383 = vadd.f32 %v6379, %v6382
    %vm6384 = vweird.f32 %v6309
    %vm6385 = vweird.f32 %v6379
    %vm6386 = vmor %vm6384, %vm6385
    %v6387 = vsel %vm6386, %v6379, %v6383
    %v6388 = vand.u32 2147483647, %v6309
    %vm6389 = vcmp.eq.f32.partialorder %v6388, 8.507059e+37
    %v6390 = vand.u32 %v6309, 2147483648
    %v6391 = vor.u32 1.1754944e-38, %v6390
    %v6392 = vsel %vm6389, %v6391, %v6387
    %v6393 = vmul.f32 %v6288, %v6392
    %v6394 = vrcp.pop %v6312
    %v6395 = vmul.f32 %v6312, %v6394
    %v6396 = vsub.f32 1.0, %v6395
    %v6397 = vmul.f32 %v6394, %v6396
    %v6398 = vadd.f32 %v6394, %v6397
    %vm6399 = vweird.f32 %v6312
    %vm6400 = vweird.f32 %v6394
    %vm6401 = vmor %vm6399, %vm6400
    %v6402 = vsel %vm6401, %v6394, %v6398
    %v6403 = vand.u32 2147483647, %v6312
    %vm6404 = vcmp.eq.f32.partialorder %v6403, 8.507059e+37
    %v6405 = vand.u32 %v6312, 2147483648
    %v6406 = vor.u32 1.1754944e-38, %v6405
    %v6407 = vsel %vm6404, %v6406, %v6402
    %v6408 = vmul.f32 %v6290, %v6407
    %v6409 = vrcp.pop %v6315
    %v6410 = vmul.f32 %v6315, %v6409
    %v6411 = vsub.f32 1.0, %v6410
    %v6412 = vmul.f32 %v6409, %v6411
    %v6413 = vadd.f32 %v6409, %v6412
    %vm6414 = vweird.f32 %v6315
    %vm6415 = vweird.f32 %v6409
    %vm6416 = vmor %vm6414, %vm6415
    %v6417 = vsel %vm6416, %v6409, %v6413
    %v6418 = vand.u32 2147483647, %v6315
    %vm6419 = vcmp.eq.f32.partialorder %v6418, 8.507059e+37
    %v6420 = vand.u32 %v6315, 2147483648
    %v6421 = vor.u32 1.1754944e-38, %v6420
    %v6422 = vsel %vm6419, %v6421, %v6417
    %v6423 = vmul.f32 %v6292, %v6422
    %v6424 = vrcp.pop %v6318
    %v6425 = vmul.f32 %v6318, %v6424
    %v6426 = vsub.f32 1.0, %v6425
    %v6427 = vmul.f32 %v6424, %v6426
    %v6428 = vadd.f32 %v6424, %v6427
    %vm6429 = vweird.f32 %v6318
    %vm6430 = vweird.f32 %v6424
    %vm6431 = vmor %vm6429, %vm6430
    %v6432 = vsel %vm6431, %v6424, %v6428
    %v6433 = vand.u32 2147483647, %v6318
    %vm6434 = vcmp.eq.f32.partialorder %v6433, 8.507059e+37
    %v6435 = vand.u32 %v6318, 2147483648
    %v6436 = vor.u32 1.1754944e-38, %v6435
    %v6437 = vsel %vm6434, %v6436, %v6432
    %v6438 = vmul.f32 %v6294, %v6437
    %6439 = vrot.lane.b32.xlu0 %v6020, 112
    %v6440 = vpop.permute.xlu0 %6439
    %v6443 = vsel %vm201, %v6333, 0
    %6445 = vmatpush.msra.mxu0 0.0
    %6446 = vmatpush.msra.mxu0 0.0
    %6447 = vmatpush.msra.mxu0 0.0
    %6448 = vmatpush.msra.mxu0 0.0
    %6449 = vmatpush.msra.mxu0 0.0
    %6450 = vmatpush.msra.mxu0 0.0
    %6451 = vmatpush.msra.mxu0 0.0
    %6452 = vmatpush.msra.mxu0 0.0
    %6453 = vmatpush.msra.mxu0 0.0
    %6454 = vmatpush.msra.mxu0 0.0
    %6455 = vmatpush.msra.mxu0 0.0
    %6456 = vmatpush.msra.mxu0 0.0
    %6457 = vmatpush.msra.mxu0 0.0
    %6458 = vmatpush.msra.mxu0 0.0
    %6459 = vmatpush.msra.mxu0 0.0
    %6460 = vmatpush.msra.mxu0 %v6440
    %6461 = vmatmul.f32.gmra.mxu0 %v6443
    %v6462 = vpop.f32.mrf.mxu0
    %v6463 = vadd.f32 0.0, %v6462
    %6464 = vdwg.mxu0
    %6465 = vrot.lane.b32.xlu0 %v6023, 112
    %v6466 = vpop.permute.xlu0 %6465
    %v6469 = vsel %vm201, %v6348, 0
    %6471 = vmatpush.msra.mxu0 0.0
    %6472 = vmatpush.msra.mxu0 0.0
    %6473 = vmatpush.msra.mxu0 0.0
    %6474 = vmatpush.msra.mxu0 0.0
    %6475 = vmatpush.msra.mxu0 0.0
    %6476 = vmatpush.msra.mxu0 0.0
    %6477 = vmatpush.msra.mxu0 0.0
    %6478 = vmatpush.msra.mxu0 0.0
    %6479 = vmatpush.msra.mxu0 0.0
    %6480 = vmatpush.msra.mxu0 0.0
    %6481 = vmatpush.msra.mxu0 0.0
    %6482 = vmatpush.msra.mxu0 0.0
    %6483 = vmatpush.msra.mxu0 0.0
    %6484 = vmatpush.msra.mxu0 0.0
    %6485 = vmatpush.msra.mxu0 0.0
    %6486 = vmatpush.msra.mxu0 %v6466
    %6487 = vmatmul.f32.gmra.mxu0 %v6469
    %v6488 = vpop.f32.mrf.mxu0
    %v6489 = vadd.f32 0.0, %v6488
    %6490 = vdwg.mxu0
    %6491 = vrot.lane.b32.xlu0 %v6028, 112
    %v6492 = vpop.permute.xlu0 %6491
    %v6495 = vsel %vm201, %v6363, 0
    %6497 = vmatpush.msra.mxu0 0.0
    %6498 = vmatpush.msra.mxu0 0.0
    %6499 = vmatpush.msra.mxu0 0.0
    %6500 = vmatpush.msra.mxu0 0.0
    %6501 = vmatpush.msra.mxu0 0.0
    %6502 = vmatpush.msra.mxu0 0.0
    %6503 = vmatpush.msra.mxu0 0.0
    %6504 = vmatpush.msra.mxu0 0.0
    %6505 = vmatpush.msra.mxu0 0.0
    %6506 = vmatpush.msra.mxu0 0.0
    %6507 = vmatpush.msra.mxu0 0.0
    %6508 = vmatpush.msra.mxu0 0.0
    %6509 = vmatpush.msra.mxu0 0.0
    %6510 = vmatpush.msra.mxu0 0.0
    %6511 = vmatpush.msra.mxu0 0.0
    %6512 = vmatpush.msra.mxu0 %v6492
    %6513 = vmatmul.f32.gmra.mxu0 %v6495
    %v6514 = vpop.f32.mrf.mxu0
    %v6515 = vadd.f32 0.0, %v6514
    %6516 = vdwg.mxu0
    %6517 = vrot.lane.b32.xlu0 %v6030, 112
    %v6518 = vpop.permute.xlu0 %6517
    %v6521 = vsel %vm201, %v6378, 0
    %6523 = vmatpush.msra.mxu0 0.0
    %6524 = vmatpush.msra.mxu0 0.0
    %6525 = vmatpush.msra.mxu0 0.0
    %6526 = vmatpush.msra.mxu0 0.0
    %6527 = vmatpush.msra.mxu0 0.0
    %6528 = vmatpush.msra.mxu0 0.0
    %6529 = vmatpush.msra.mxu0 0.0
    %6530 = vmatpush.msra.mxu0 0.0
    %6531 = vmatpush.msra.mxu0 0.0
    %6532 = vmatpush.msra.mxu0 0.0
    %6533 = vmatpush.msra.mxu0 0.0
    %6534 = vmatpush.msra.mxu0 0.0
    %6535 = vmatpush.msra.mxu0 0.0
    %6536 = vmatpush.msra.mxu0 0.0
    %6537 = vmatpush.msra.mxu0 0.0
    %6538 = vmatpush.msra.mxu0 %v6518
    %6539 = vmatmul.f32.gmra.mxu0 %v6521
    %v6540 = vpop.f32.mrf.mxu0
    %v6541 = vadd.f32 0.0, %v6540
    %6542 = vdwg.mxu0
    %6543 = vrot.lane.b32.xlu0 %v6032, 112
    %v6544 = vpop.permute.xlu0 %6543
    %v6547 = vsel %vm201, %v6393, 0
    %6549 = vmatpush.msra.mxu0 0.0
    %6550 = vmatpush.msra.mxu0 0.0
    %6551 = vmatpush.msra.mxu0 0.0
    %6552 = vmatpush.msra.mxu0 0.0
    %6553 = vmatpush.msra.mxu0 0.0
    %6554 = vmatpush.msra.mxu0 0.0
    %6555 = vmatpush.msra.mxu0 0.0
    %6556 = vmatpush.msra.mxu0 0.0
    %6557 = vmatpush.msra.mxu0 0.0
    %6558 = vmatpush.msra.mxu0 0.0
    %6559 = vmatpush.msra.mxu0 0.0
    %6560 = vmatpush.msra.mxu0 0.0
    %6561 = vmatpush.msra.mxu0 0.0
    %6562 = vmatpush.msra.mxu0 0.0
    %6563 = vmatpush.msra.mxu0 0.0
    %6564 = vmatpush.msra.mxu0 %v6544
    %6565 = vmatmul.f32.gmra.mxu0 %v6547
    %v6566 = vpop.f32.mrf.mxu0
    %v6567 = vadd.f32 0.0, %v6566
    %6568 = vdwg.mxu0
    %6569 = vrot.lane.b32.xlu0 %v6034, 112
    %v6570 = vpop.permute.xlu0 %6569
    %v6573 = vsel %vm201, %v6408, 0
    %6575 = vmatpush.msra.mxu0 0.0
    %6576 = vmatpush.msra.mxu0 0.0
    %6577 = vmatpush.msra.mxu0 0.0
    %6578 = vmatpush.msra.mxu0 0.0
    %6579 = vmatpush.msra.mxu0 0.0
    %6580 = vmatpush.msra.mxu0 0.0
    %6581 = vmatpush.msra.mxu0 0.0
    %6582 = vmatpush.msra.mxu0 0.0
    %6583 = vmatpush.msra.mxu0 0.0
    %6584 = vmatpush.msra.mxu0 0.0
    %6585 = vmatpush.msra.mxu0 0.0
    %6586 = vmatpush.msra.mxu0 0.0
    %6587 = vmatpush.msra.mxu0 0.0
    %6588 = vmatpush.msra.mxu0 0.0
    %6589 = vmatpush.msra.mxu0 0.0
    %6590 = vmatpush.msra.mxu0 %v6570
    %6591 = vmatmul.f32.gmra.mxu0 %v6573
    %v6592 = vpop.f32.mrf.mxu0
    %v6593 = vadd.f32 0.0, %v6592
    %6594 = vdwg.mxu0
    %6595 = vrot.lane.b32.xlu0 %v6036, 112
    %v6596 = vpop.permute.xlu0 %6595
    %v6599 = vsel %vm201, %v6423, 0
    %6601 = vmatpush.msra.mxu0 0.0
    %6602 = vmatpush.msra.mxu0 0.0
    %6603 = vmatpush.msra.mxu0 0.0
    %6604 = vmatpush.msra.mxu0 0.0
    %6605 = vmatpush.msra.mxu0 0.0
    %6606 = vmatpush.msra.mxu0 0.0
    %6607 = vmatpush.msra.mxu0 0.0
    %6608 = vmatpush.msra.mxu0 0.0
    %6609 = vmatpush.msra.mxu0 0.0
    %6610 = vmatpush.msra.mxu0 0.0
    %6611 = vmatpush.msra.mxu0 0.0
    %6612 = vmatpush.msra.mxu0 0.0
    %6613 = vmatpush.msra.mxu0 0.0
    %6614 = vmatpush.msra.mxu0 0.0
    %6615 = vmatpush.msra.mxu0 0.0
    %6616 = vmatpush.msra.mxu0 %v6596
    %6617 = vmatmul.f32.gmra.mxu0 %v6599
    %v6618 = vpop.f32.mrf.mxu0
    %v6619 = vadd.f32 0.0, %v6618
    %6620 = vdwg.mxu0
    %6621 = vrot.lane.b32.xlu0 %v6038, 112
    %v6622 = vpop.permute.xlu0 %6621
    %v6625 = vsel %vm201, %v6438, 0
    %6627 = vmatpush.msra.mxu0 0.0
    %6628 = vmatpush.msra.mxu0 0.0
    %6629 = vmatpush.msra.mxu0 0.0
    %6630 = vmatpush.msra.mxu0 0.0
    %6631 = vmatpush.msra.mxu0 0.0
    %6632 = vmatpush.msra.mxu0 0.0
    %6633 = vmatpush.msra.mxu0 0.0
    %6634 = vmatpush.msra.mxu0 0.0
    %6635 = vmatpush.msra.mxu0 0.0
    %6636 = vmatpush.msra.mxu0 0.0
    %6637 = vmatpush.msra.mxu0 0.0
    %6638 = vmatpush.msra.mxu0 0.0
    %6639 = vmatpush.msra.mxu0 0.0
    %6640 = vmatpush.msra.mxu0 0.0
    %6641 = vmatpush.msra.mxu0 0.0
    %6642 = vmatpush.msra.mxu0 %v6622
    %6643 = vmatmul.f32.gmra.mxu0 %v6625
    %v6644 = vpop.f32.mrf.mxu0
    %v6645 = vadd.f32 0.0, %v6644
    %6646 = vdwg.mxu0
    %6649 = vrot.lane.b32.xlu0 %v6515, 8
    %v6650 = vpop.permute.xlu0 %6649
    %6651 = vrot.lane.b32.xlu0 %v6541, 8
    %v6652 = vpop.permute.xlu0 %6651
    %6657 = vrot.lane.b32.xlu0 %v6567, 16
    %v6658 = vpop.permute.xlu0 %6657
    %6659 = vrot.lane.b32.xlu0 %v6593, 16
    %v6660 = vpop.permute.xlu0 %6659
    %6665 = vrot.lane.b32.xlu0 %v6619, 24
    %v6666 = vpop.permute.xlu0 %6665
    %6667 = vrot.lane.b32.xlu0 %v6645, 24
    %v6668 = vpop.permute.xlu0 %6667
    %v6671 = vsel %vm201, %v6463, %v6650
    %v6672 = vsel %vm201, %v6489, %v6652
    %v6673 = vsel %vm834, %v6671, %v6658
    %v6674 = vsel %vm834, %v6672, %v6660
    %v6675 = vsel %vm837, %v6673, %v6666
    %v6676 = vsel %vm837, %v6674, %v6668
    %v6677 = vperm.slane %v5992, 0
    %v6679 = vsel %vm157, %v6675, 0
    %v6682 = vsel %vm157, %v6676, 0
    %6684 = vmatpush.msra.mxu0 0.0
    %6685 = vmatpush.msra.mxu0 0.0
    %6686 = vmatpush.msra.mxu0 0.0
    %6687 = vmatpush.msra.mxu0 0.0
    %6688 = vmatpush.msra.mxu0 0.0
    %6689 = vmatpush.msra.mxu0 0.0
    %6690 = vmatpush.msra.mxu0 0.0
    %6691 = vmatpush.msra.mxu0 0.0
    %6692 = vmatpush.msra.mxu0 0.0
    %6693 = vmatpush.msra.mxu0 0.0
    %6694 = vmatpush.msra.mxu0 0.0
    %6695 = vmatpush.msra.mxu0 0.0
    %6696 = vmatpush.msra.mxu0 %v5991
    %6697 = vmatpush.msra.mxu0 %v5990
    %6698 = vmatpush.msra.mxu0 %v5989
    %6699 = vmatpush.msra.mxu0 %v5988
    %6700 = vmatmul.f32.gmra.mxu0 %v6679
    %v6701 = vpop.f32.mrf.mxu0
    %v6702 = vadd.f32 %v6677, %v6701
    %6703 = vmatmul.f32.gmra.mxu0 %v6682
    %v6704 = vpop.f32.mrf.mxu0
    %v6705 = vadd.f32 %v6677, %v6704
    %6706 = vdwg.mxu0
    %v6707 = vadd.f32 %v5981, %v6702
    %v6708 = vadd.f32 %v5982, %v6705
    %v6709 = vsel %vm157, %v6707, 0.0
    %6710 = vadd.xlane.f32.xlu0 %v6709
    %v6711 = vpop.xlane.xlu0 %6710
    %v6712 = vsel %vm157, %v6708, 0.0
    %6713 = vadd.xlane.f32.xlu0 %v6712
    %v6714 = vpop.xlane.xlu0 %6713
    %v6715 = vmul.f32 %v6711, %v976
    %v6716 = vmul.f32 %v6714, %v976
    %v6717 = vmul.f32 %v6707, %v6707
    %v6718 = vmul.f32 %v6708, %v6708
    %v6719 = vsel %vm157, %v6717, 0.0
    %6720 = vadd.xlane.f32.xlu0 %v6719
    %v6721 = vpop.xlane.xlu0 %6720
    %v6722 = vsel %vm157, %v6718, 0.0
    %6723 = vadd.xlane.f32.xlu0 %v6722
    %v6724 = vpop.xlane.xlu0 %6723
    %v6725 = vmul.f32 %v6721, %v976
    %v6726 = vmul.f32 %v6724, %v976
    %v6727 = vmul.f32 %v6715, %v6715
    %v6728 = vmul.f32 %v6716, %v6716
    %v6729 = vsub.f32 %v6725, %v6727
    %v6730 = vsub.f32 %v6726, %v6728
    %v6731 = vsub.f32 %v6707, %v6715
    %v6732 = vsub.f32 %v6708, %v6716
    %v6733 = vadd.f32 %v6729, 1e-05
    %v6734 = vadd.f32 %v6730, 1e-05
    %v6735 = vrsqrt.pop %v6733
    %v6736 = vmul.f32 %v6735, %v6733
    %v6737 = vmul.f32 %v6736, %v6735
    %v6738 = vmul.f32 0.5, %v6737
    %v6739 = vsub.f32 1.5, %v6738
    %v6740 = vmul.f32 %v6735, %v6739
    %vm6741 = vweird.f32 %v6733
    %vm6742 = vweird.f32 %v6735
    %vm6743 = vmor %vm6741, %vm6742
    %v6744 = vsel %vm6743, %v6735, %v6740
    %v6745 = vrsqrt.pop %v6734
    %v6746 = vmul.f32 %v6745, %v6734
    %v6747 = vmul.f32 %v6746, %v6745
    %v6748 = vmul.f32 0.5, %v6747
    %v6749 = vsub.f32 1.5, %v6748
    %v6750 = vmul.f32 %v6745, %v6749
    %vm6751 = vweird.f32 %v6734
    %vm6752 = vweird.f32 %v6745
    %vm6753 = vmor %vm6751, %vm6752
    %v6754 = vsel %vm6753, %v6745, %v6750
    %v6755 = vmul.f32 %v6731, %v6744
    %v6756 = vmul.f32 %v6732, %v6754
    %v6757 = vperm.slane %v5993, 0
    %v6758 = vmul.f32 %v6755, %v6757
    %v6759 = vmul.f32 %v6756, %v6757
    %v6760 = vperm.slane %v5994, 0
    %v6761 = vadd.f32 %v6758, %v6760
    %v6762 = vadd.f32 %v6759, %v6760
    %v6764 = vrot.slane %v6761, 1
    %v6765 = vrot.slane %v6761, 2
    %v6766 = vrot.slane %v6761, 3
    %v6767 = vrot.slane %v6761, 4
    %v6768 = vrot.slane %v6761, 5
    %v6769 = vrot.slane %v6761, 6
    %v6770 = vrot.slane %v6761, 7
    %vm6778 = vcmask 253952
    %6779 = vst.msk [vmem:[#allocation7] sm:$0x1] %vm6778, %v6761
    %6780 = vst.msk [vmem:[#allocation7 + $0x2] sm:$0x1] %vm6778, %v6764
    %6781 = vst.msk [vmem:[#allocation7 + $0x4] sm:$0x1] %vm6778, %v6765
    %6782 = vst.msk [vmem:[#allocation7 + $0x6] sm:$0x1] %vm6778, %v6766
    %6783 = vst.msk [vmem:[#allocation7 + $0x8] sm:$0x1] %vm6778, %v6767
    %6784 = vst.msk [vmem:[#allocation7 + $0xa] sm:$0x1] %vm6778, %v6768
    %6785 = vst.msk [vmem:[#allocation7 + $0xc] sm:$0x1] %vm6778, %v6769
    %6786 = vst.msk [vmem:[#allocation7 + $0xe] sm:$0x1] %vm6778, %v6770
    %v6788 = vrot.slane %v6762, 1
    %v6789 = vrot.slane %v6762, 2
    %v6790 = vrot.slane %v6762, 3
    %v6791 = vrot.slane %v6762, 4
    %v6792 = vrot.slane %v6762, 5
    %v6793 = vrot.slane %v6762, 6
    %v6794 = vrot.slane %v6762, 7
    %6802 = vst.msk [vmem:[#allocation7 + $0x1] sm:$0x1] %vm6778, %v6762
    %6803 = vst.msk [vmem:[#allocation7 + $0x3] sm:$0x1] %vm6778, %v6788
    %6804 = vst.msk [vmem:[#allocation7 + $0x5] sm:$0x1] %vm6778, %v6789
    %6805 = vst.msk [vmem:[#allocation7 + $0x7] sm:$0x1] %vm6778, %v6790
    %6806 = vst.msk [vmem:[#allocation7 + $0x9] sm:$0x1] %vm6778, %v6791
    %6807 = vst.msk [vmem:[#allocation7 + $0xb] sm:$0x1] %vm6778, %v6792
    %6808 = vst.msk [vmem:[#allocation7 + $0xd] sm:$0x1] %vm6778, %v6793
    %6809 = vst.msk [vmem:[#allocation7 + $0xf] sm:$0x1] %vm6778, %v6794
    // Predicated region
    $region18: #{fwd.1} parent=1 // pred_check
      _
    $region19: #{fwd.1} parent=1 // pred_check_branch
      %6811 = sbr.rel (0) target = $region21
    $region20: #{fwd.1} parent=1 // pred_region
      %6813 = vsyncadd [#allocation4], 0
      %s6814 = sshll.u32 [#allocation7], 4
      %s6815 = int_to_ptr.vmem [resolvable:$true] %s6814
      %s6816 = sshll.u32 %s2, 4
      %s6817 = int_to_ptr.hbm [resolvable:$true] %s6816
      %6822 = dma.vmem_to_hbm [thread:$0]  %s6815, 256, %s6817, [#allocation4], 32, 32, 2
    $region21: #{fwd.1} parent=1 // pred_fallthru
      _
    // Predicated region
    $region22: #{fwd.1} parent=1 // pred_check
      _
    $region23: #{fwd.1} parent=1 // pred_check_branch
      %6824 = sbr.rel (0) target = $region25
    $region24: #{fwd.1} parent=1 // pred_region
      %6826 = dma.done [#allocation4], 256
    $region25: #{fwd.1} parent=1 // pred_fallthru
      _
    %6827 = vsyncpa [#allocation3], 1
    %6828 = vsyncpa [#allocation6], 1
    %6829 = vsyncpa [#allocation4], 1

</llo_original>
